<compile_context>
chip_gen: v7x
topology: tpu7x:2x2x1
jax: 0.10.0
libtpu: 0.0.40
codegen_flags: <defaults>
</compile_context>

<pallas_src>
import functools

import jax
import jax.numpy as jnp
from jax.experimental import pallas as pl
from jax.experimental.pallas import tpu as pltpu

EPS = 1e-5


def bottleneck_kernel(x_ref, w1_ref, g1_ref, b1_ref, w2_ref, g2_ref, b2_ref,
                      w3_ref, g3_ref, b3_ref, o_ref, pad_ref):
    NHW, _ = x_ref.shape
    N, Hp2, Wp2, P = pad_ref.shape
    H, W = Hp2 - 2, Wp2 - 2
    mm_dtype = w1_ref.dtype            # bf16 fast path / f32 debug path

    ones_row = jnp.ones((1, NHW), jnp.float32)     # hoisted; shared by all 3 BNs
    inv_m = 1.0 / float(NHW)

    def bn(h, g_ref, b_ref):
        # Training-mode BatchNorm folded to a single scale+bias pass.
        # One fused MXU stats matmul: dot(1s, [h | h*h]) -> (1, 2C).
        C = h.shape[-1]
        stats = jnp.dot(ones_row, jnp.concatenate([h, h * h], axis=-1),
                        preferred_element_type=jnp.float32)          # (1, 2C)
        mu = stats[:, :C] * inv_m
        var = jnp.maximum(stats[:, C:] * inv_m - mu * mu, 0.0)
        scale = g_ref[...] * jax.lax.rsqrt(var + EPS)                 # (1, C)
        shift = b_ref[...] - mu * scale                               # (1, C)
        return h * scale + shift                                      # 2 ops/elem

    # ---- conv1 (1x1) + bn1 + relu ---------------------------------------
    h = jnp.dot(x_ref[...].astype(mm_dtype), w1_ref[...],
                preferred_element_type=jnp.float32)                   # (NHW, P)
    h = jnp.maximum(bn(h, g1_ref, b1_ref), 0.0)

    # ---- conv2 (3x3, stride 1, pad 1) -----------------------------------
    # Zero ONLY the 1-pixel border of the padded scratch (interior is fully
    # overwritten right below), then write the bn1/relu output once.
    zrow = jnp.zeros((N, 1, Wp2, P), pad_ref.dtype)
    pad_ref[:, 0:1, :, :] = zrow
    pad_ref[:, H + 1:H + 2, :, :] = zrow
    zcol = jnp.zeros((N, Hp2, 1, P), pad_ref.dtype)
    pad_ref[:, :, 0:1, :] = zcol
    pad_ref[:, :, W + 1:W + 2, :] = zcol
    pad_ref[:, 1:H + 1, 1:W + 1, :] = h.reshape(N, H, W, P).astype(pad_ref.dtype)

    # Nine statically-shifted taps, each a (NHW,P)@(P,P) MXU matmul with f32
    # accumulation.  No lane concat, no (NHW, 9P) temporary.  Taps are cast
    # to the matmul dtype at read time (scratch stays f32; see header).
    acc = jnp.zeros((NHW, P), jnp.float32)
    for ky in (0, 1, 2):
        for kx in (0, 1, 2):
            k = ky * 3 + kx                                  # matches w2 layout
            tap = pad_ref[:, ky:ky + H, kx:kx + W, :].reshape(NHW, P)
            acc = acc + jnp.dot(tap.astype(mm_dtype), w2_ref[k],
                                preferred_element_type=jnp.float32)
    h = jnp.maximum(bn(acc, g2_ref, b2_ref), 0.0)

    # ---- conv3 (1x1) + bn3 + residual + relu -----------------------------
    h = jnp.dot(h.astype(mm_dtype), w3_ref[...],
                preferred_element_type=jnp.float32)                   # (NHW, Cout)
    h = bn(h, g3_ref, b3_ref)
    # Residual re-read from x_ref (no full f32 copy kept live across kernel).
    o_ref[...] = jnp.maximum(h + x_ref[...], 0.0)


@functools.partial(jax.jit, static_argnames=("use_bf16",))
def bottleneck_forward(x, w1, g1, b1, w2, g2, b2, w3, g3, b3, *, use_bf16=True):
    """Bottleneck forward (stride=1, downsample=None), NHWC layout.

    use_bf16=True : bf16 MXU operands, f32 accumulation (fast path).
    use_bf16=False: f32-operand debug path for tight-tolerance checking.
    """
    N, H, W, Cin = x.shape
    P = w1.shape[1]
    Cout = w3.shape[1]
    NHW = N * H * W
    mm_dtype = jnp.bfloat16 if use_bf16 else jnp.float32
    vmem = pl.BlockSpec(memory_space=pltpu.MemorySpace.VMEM)

    out2d = pl.pallas_call(
        bottleneck_kernel,
        out_shape=jax.ShapeDtypeStruct((NHW, Cout), jnp.float32),
        in_specs=[vmem] * 10,
        out_specs=vmem,
        scratch_shapes=[pltpu.VMEM((N, H + 2, W + 2, P), jnp.float32)],
        compiler_params=pltpu.CompilerParams(vmem_limit_bytes=32 * 1024 * 1024),
    )(x.reshape(NHW, Cin),
      w1.astype(mm_dtype), g1.reshape(1, -1), b1.reshape(1, -1),
      w2.astype(mm_dtype), g2.reshape(1, -1), b2.reshape(1, -1),
      w3.astype(mm_dtype), g3.reshape(1, -1), b3.reshape(1, -1))
    return out2d.reshape(N, H, W, Cout)


def bottleneck_reference(x, w1, g1, b1, w2, g2, b2, w3, g3, b3):
    """Pure-JAX reference (same semantics) for correctness checking."""
    P = w1.shape[1]

    def bn(h, g, b):
        mu = jnp.mean(h, axis=(0, 1, 2), keepdims=True)
        var = jnp.mean((h - mu) ** 2, axis=(0, 1, 2), keepdims=True)
        return ((h - mu) * jax.lax.rsqrt(var + EPS)
                * g.reshape(1, 1, 1, -1) + b.reshape(1, 1, 1, -1))

    hp = jax.lax.Precision.HIGHEST
    h = jnp.einsum('nhwc,cp->nhwp', x, w1, precision=hp)
    h = jax.nn.relu(bn(h, g1, b1))
    h = jax.lax.conv_general_dilated(
        h, w2.reshape(3, 3, P, P), window_strides=(1, 1), padding='SAME',
        dimension_numbers=('NHWC', 'HWIO', 'NHWC'), precision=hp)
    h = jax.nn.relu(bn(h, g2, b2))
    h = jnp.einsum('nhwp,pc->nhwc', h, w3, precision=hp)
    h = bn(h, g3, b3)
    return jax.nn.relu(h + x)


if __name__ == "__main__":
    # Small shapes consistent with Bottleneck(inplanes=16, planes=4),
    # downsample=None => inplanes must equal planes * expansion (4*4 = 16).
    N, H, W = 2, 16, 16
    planes = 4
    inplanes = planes * 4          # 16
    cout = planes * 4              # 16

    key = jax.random.PRNGKey(0)
    ks = jax.random.split(key, 8)

    x = jax.random.normal(ks[0], (N, H, W, inplanes), jnp.float32)

    w1 = jax.random.normal(ks[1], (inplanes, planes), jnp.float32) / jnp.sqrt(inplanes)
    w2 = jax.random.normal(ks[2], (9, planes, planes), jnp.float32) / jnp.sqrt(9 * planes)
    w3 = jax.random.normal(ks[3], (planes, cout), jnp.float32) / jnp.sqrt(planes)

    g1 = 1.0 + 0.1 * jax.random.normal(ks[4], (planes,), jnp.float32)
    b1 = 0.1 * jax.random.normal(ks[5], (planes,), jnp.float32)
    g2 = 1.0 + 0.1 * jax.random.normal(ks[6], (planes,), jnp.float32)
    b2 = 0.1 * jax.random.normal(ks[7], (planes,), jnp.float32)
    g3 = jnp.ones((cout,), jnp.float32)
    b3 = jnp.zeros((cout,), jnp.float32)

    out = bottleneck_forward(x, w1, g1, b1, w2, g2, b2, w3, g3, b3)
    out = jax.block_until_ready(out)

    ref = bottleneck_reference(x, w1, g1, b1, w2, g2, b2, w3, g3, b3)
    ref = jax.block_until_ready(ref)

    assert out.shape == (N, H, W, cout), out.shape
    # bf16 MXU operands (f32 accumulation) vs an f32 HIGHEST-precision
    # reference => ~1-2% relative error is expected.  For a tight-tolerance
    # structural check (tap ordering / lane packing), run locally with
    # bottleneck_forward(..., use_bf16=False) and rtol/atol ~1e-4.
    assert jnp.allclose(out, ref, rtol=3e-2, atol=3e-2), (
        float(jnp.max(jnp.abs(out - ref))))

    print("KERNEL_OK")
</pallas_src>

<mosaic_0001>
module attributes {stable_mosaic.version = 11 : i64} {
  func.func @bottleneck_kernel(%arg0: memref<512x16xf32, #tpu.memory_space<vmem>>, %arg1: memref<16x4xbf16, #tpu.memory_space<vmem>>, %arg2: memref<1x4xf32, #tpu.memory_space<vmem>>, %arg3: memref<1x4xf32, #tpu.memory_space<vmem>>, %arg4: memref<9x4x4xbf16, #tpu.memory_space<vmem>>, %arg5: memref<1x4xf32, #tpu.memory_space<vmem>>, %arg6: memref<1x4xf32, #tpu.memory_space<vmem>>, %arg7: memref<4x16xbf16, #tpu.memory_space<vmem>>, %arg8: memref<1x16xf32, #tpu.memory_space<vmem>>, %arg9: memref<1x16xf32, #tpu.memory_space<vmem>>, %arg10: memref<512x16xf32, #tpu.memory_space<vmem>>, %arg11: memref<2x18x18x4xf32, #tpu.memory_space<vmem>>) attributes {dimension_semantics = [], scalar_prefetch = 0 : i64, scratch_operands = 1 : i64, tpu.core_type = #tpu.core_type<tc>} {
    %cst = arith.constant 1.000000e+00 : f32
    %0 = vector.broadcast %cst : f32 to vector<1x512xf32>
    %c0 = arith.constant 0 : index
    %c0_0 = arith.constant 0 : index
    %1 = vector.load %arg0[%c0, %c0_0] : memref<512x16xf32, #tpu.memory_space<vmem>>, vector<512x16xf32>
    %2 = arith.truncf %1 : vector<512x16xf32> to vector<512x16xbf16>
    %c0_1 = arith.constant 0 : index
    %c0_2 = arith.constant 0 : index
    %3 = vector.load %arg1[%c0_1, %c0_2] : memref<16x4xbf16, #tpu.memory_space<vmem>>, vector<16x4xbf16>
    %cst_3 = arith.constant dense<0.000000e+00> : vector<512x4xf32>
    %4 = tpu.matmul %2, %3, %cst_3 {dimension_numbers = #tpu.dot_dimension_numbers<[1], [0], [0], [1], [0, 0, 1, 1], [], []>} : vector<512x16xbf16>, vector<16x4xbf16>, vector<512x4xf32> -> vector<512x4xf32>
    %5 = arith.mulf %4, %4 : vector<512x4xf32>
    %6 = tpu.concatenate %4, %5 in 1 : vector<512x4xf32>, vector<512x4xf32> -> vector<512x8xf32>
    %cst_4 = arith.constant dense<0.000000e+00> : vector<1x8xf32>
    %7 = tpu.matmul %0, %6, %cst_4 {dimension_numbers = #tpu.dot_dimension_numbers<[1], [0], [0], [1], [0, 0, 1, 1], [], []>} : vector<1x512xf32>, vector<512x8xf32>, vector<1x8xf32> -> vector<1x8xf32>
    %8 = vector.extract_strided_slice %7 {offsets = [0, 0], sizes = [1, 4], strides = [1, 1]} : vector<1x8xf32> to vector<1x4xf32>
    %cst_5 = arith.constant 0.001953125 : f32
    %9 = vector.broadcast %cst_5 : f32 to vector<1x4xf32>
    %10 = arith.mulf %8, %9 : vector<1x4xf32>
    %11 = vector.extract_strided_slice %7 {offsets = [0, 4], sizes = [1, 4], strides = [1, 1]} : vector<1x8xf32> to vector<1x4xf32>
    %cst_6 = arith.constant 0.001953125 : f32
    %12 = vector.broadcast %cst_6 : f32 to vector<1x4xf32>
    %13 = arith.mulf %11, %12 : vector<1x4xf32>
    %14 = arith.mulf %10, %10 : vector<1x4xf32>
    %15 = arith.subf %13, %14 : vector<1x4xf32>
    %cst_7 = arith.constant 0.000000e+00 : f32
    %16 = vector.broadcast %cst_7 : f32 to vector<1x4xf32>
    %17 = arith.maximumf %15, %16 : vector<1x4xf32>
    %c0_8 = arith.constant 0 : index
    %c0_9 = arith.constant 0 : index
    %18 = vector.load %arg2[%c0_8, %c0_9] : memref<1x4xf32, #tpu.memory_space<vmem>>, vector<1x4xf32>
    %cst_10 = arith.constant 9.99999974E-6 : f32
    %19 = vector.broadcast %cst_10 : f32 to vector<1x4xf32>
    %20 = arith.addf %17, %19 : vector<1x4xf32>
    %21 = math.rsqrt %20 : vector<1x4xf32>
    %22 = arith.mulf %18, %21 : vector<1x4xf32>
    %c0_11 = arith.constant 0 : index
    %c0_12 = arith.constant 0 : index
    %23 = vector.load %arg3[%c0_11, %c0_12] : memref<1x4xf32, #tpu.memory_space<vmem>>, vector<1x4xf32>
    %24 = arith.mulf %10, %22 : vector<1x4xf32>
    %25 = arith.subf %23, %24 : vector<1x4xf32>
    %26 = vector.broadcast %22 : vector<1x4xf32> to vector<512x4xf32>
    %27 = arith.mulf %4, %26 : vector<512x4xf32>
    %28 = vector.broadcast %25 : vector<1x4xf32> to vector<512x4xf32>
    %29 = arith.addf %27, %28 : vector<512x4xf32>
    %cst_13 = arith.constant 0.000000e+00 : f32
    %30 = vector.broadcast %cst_13 : f32 to vector<512x4xf32>
    %31 = arith.maximumf %29, %30 : vector<512x4xf32>
    %cst_14 = arith.constant 0.000000e+00 : f32
    %32 = vector.broadcast %cst_14 : f32 to vector<2x1x18x4xf32>
    %c0_15 = arith.constant 0 : index
    %c0_16 = arith.constant 0 : index
    %c0_17 = arith.constant 0 : index
    %c0_18 = arith.constant 0 : index
    %33 = vector.load %arg11[%c0_15, %c0_16, %c0_17, %c0_18] : memref<2x18x18x4xf32, #tpu.memory_space<vmem>>, vector<2x1x18x4xf32>
    tpu.vector_store %arg11[%c0_15, %c0_16, %c0_17, %c0_18], %32 {strides = array<i32>} : memref<2x18x18x4xf32, #tpu.memory_space<vmem>>, vector<2x1x18x4xf32>,
    %c0_19 = arith.constant 0 : index
    %c17 = arith.constant 17 : index
    %c0_20 = arith.constant 0 : index
    %c0_21 = arith.constant 0 : index
    %34 = vector.load %arg11[%c0_19, %c17, %c0_20, %c0_21] : memref<2x18x18x4xf32, #tpu.memory_space<vmem>>, vector<2x1x18x4xf32>
    tpu.vector_store %arg11[%c0_19, %c17, %c0_20, %c0_21], %32 {strides = array<i32>} : memref<2x18x18x4xf32, #tpu.memory_space<vmem>>, vector<2x1x18x4xf32>,
    %cst_22 = arith.constant 0.000000e+00 : f32
    %35 = vector.broadcast %cst_22 : f32 to vector<2x18x1x4xf32>
    %c0_23 = arith.constant 0 : index
    %c0_24 = arith.constant 0 : index
    %c0_25 = arith.constant 0 : index
    %c0_26 = arith.constant 0 : index
    %36 = vector.load %arg11[%c0_23, %c0_24, %c0_25, %c0_26] : memref<2x18x18x4xf32, #tpu.memory_space<vmem>>, vector<2x18x1x4xf32>
    tpu.vector_store %arg11[%c0_23, %c0_24, %c0_25, %c0_26], %35 {strides = array<i32>} : memref<2x18x18x4xf32, #tpu.memory_space<vmem>>, vector<2x18x1x4xf32>,
    %c0_27 = arith.constant 0 : index
    %c0_28 = arith.constant 0 : index
    %c17_29 = arith.constant 17 : index
    %c0_30 = arith.constant 0 : index
    %37 = vector.load %arg11[%c0_27, %c0_28, %c17_29, %c0_30] : memref<2x18x18x4xf32, #tpu.memory_space<vmem>>, vector<2x18x1x4xf32>
    tpu.vector_store %arg11[%c0_27, %c0_28, %c17_29, %c0_30], %35 {strides = array<i32>} : memref<2x18x18x4xf32, #tpu.memory_space<vmem>>, vector<2x18x1x4xf32>,
    %38 = vector.shape_cast %31 : vector<512x4xf32> to vector<2x16x16x4xf32>
    %c0_31 = arith.constant 0 : index
    %c1 = arith.constant 1 : index
    %c1_32 = arith.constant 1 : index
    %c0_33 = arith.constant 0 : index
    %39 = vector.load %arg11[%c0_31, %c1, %c1_32, %c0_33] : memref<2x18x18x4xf32, #tpu.memory_space<vmem>>, vector<2x16x16x4xf32>
    tpu.vector_store %arg11[%c0_31, %c1, %c1_32, %c0_33], %38 {strides = array<i32>} : memref<2x18x18x4xf32, #tpu.memory_space<vmem>>, vector<2x16x16x4xf32>,
    %cst_34 = arith.constant 0.000000e+00 : f32
    %40 = vector.broadcast %cst_34 : f32 to vector<512x4xf32>
    %c0_35 = arith.constant 0 : index
    %c0_36 = arith.constant 0 : index
    %c0_37 = arith.constant 0 : index
    %c0_38 = arith.constant 0 : index
    %41 = vector.load %arg11[%c0_35, %c0_36, %c0_37, %c0_38] : memref<2x18x18x4xf32, #tpu.memory_space<vmem>>, vector<2x16x16x4xf32>
    %42 = vector.shape_cast %41 : vector<2x16x16x4xf32> to vector<512x4xf32>
    %43 = arith.truncf %42 : vector<512x4xf32> to vector<512x4xbf16>
    %c0_39 = arith.constant 0 : index
    %c0_40 = arith.constant 0 : index
    %c0_41 = arith.constant 0 : index
    %44 = vector.load %arg4[%c0_39, %c0_40, %c0_41] : memref<9x4x4xbf16, #tpu.memory_space<vmem>>, vector<1x4x4xbf16>
    %45 = vector.shape_cast %44 : vector<1x4x4xbf16> to vector<4x4xbf16>
    %cst_42 = arith.constant dense<0.000000e+00> : vector<512x4xf32>
    %46 = tpu.matmul %43, %45, %cst_42 {dimension_numbers = #tpu.dot_dimension_numbers<[1], [0], [0], [1], [0, 0, 1, 1], [], []>} : vector<512x4xbf16>, vector<4x4xbf16>, vector<512x4xf32> -> vector<512x4xf32>
    %47 = arith.addf %40, %46 : vector<512x4xf32>
    %c0_43 = arith.constant 0 : index
    %c0_44 = arith.constant 0 : index
    %c1_45 = arith.constant 1 : index
    %c0_46 = arith.constant 0 : index
    %48 = vector.load %arg11[%c0_43, %c0_44, %c1_45, %c0_46] : memref<2x18x18x4xf32, #tpu.memory_space<vmem>>, vector<2x16x16x4xf32>
    %49 = vector.shape_cast %48 : vector<2x16x16x4xf32> to vector<512x4xf32>
    %50 = arith.truncf %49 : vector<512x4xf32> to vector<512x4xbf16>
    %c1_47 = arith.constant 1 : index
    %c0_48 = arith.constant 0 : index
    %c0_49 = arith.constant 0 : index
    %51 = vector.load %arg4[%c1_47, %c0_48, %c0_49] : memref<9x4x4xbf16, #tpu.memory_space<vmem>>, vector<1x4x4xbf16>
    %52 = vector.shape_cast %51 : vector<1x4x4xbf16> to vector<4x4xbf16>
    %cst_50 = arith.constant dense<0.000000e+00> : vector<512x4xf32>
    %53 = tpu.matmul %50, %52, %cst_50 {dimension_numbers = #tpu.dot_dimension_numbers<[1], [0], [0], [1], [0, 0, 1, 1], [], []>} : vector<512x4xbf16>, vector<4x4xbf16>, vector<512x4xf32> -> vector<512x4xf32>
    %54 = arith.addf %47, %53 : vector<512x4xf32>
    %c0_51 = arith.constant 0 : index
    %c0_52 = arith.constant 0 : index
    %c2 = arith.constant 2 : index
    %c0_53 = arith.constant 0 : index
    %55 = vector.load %arg11[%c0_51, %c0_52, %c2, %c0_53] : memref<2x18x18x4xf32, #tpu.memory_space<vmem>>, vector<2x16x16x4xf32>
    %56 = vector.shape_cast %55 : vector<2x16x16x4xf32> to vector<512x4xf32>
    %57 = arith.truncf %56 : vector<512x4xf32> to vector<512x4xbf16>
    %c2_54 = arith.constant 2 : index
    %c0_55 = arith.constant 0 : index
    %c0_56 = arith.constant 0 : index
    %58 = vector.load %arg4[%c2_54, %c0_55, %c0_56] : memref<9x4x4xbf16, #tpu.memory_space<vmem>>, vector<1x4x4xbf16>
    %59 = vector.shape_cast %58 : vector<1x4x4xbf16> to vector<4x4xbf16>
    %cst_57 = arith.constant dense<0.000000e+00> : vector<512x4xf32>
    %60 = tpu.matmul %57, %59, %cst_57 {dimension_numbers = #tpu.dot_dimension_numbers<[1], [0], [0], [1], [0, 0, 1, 1], [], []>} : vector<512x4xbf16>, vector<4x4xbf16>, vector<512x4xf32> -> vector<512x4xf32>
    %61 = arith.addf %54, %60 : vector<512x4xf32>
    %c0_58 = arith.constant 0 : index
    %c1_59 = arith.constant 1 : index
    %c0_60 = arith.constant 0 : index
    %c0_61 = arith.constant 0 : index
    %62 = vector.load %arg11[%c0_58, %c1_59, %c0_60, %c0_61] : memref<2x18x18x4xf32, #tpu.memory_space<vmem>>, vector<2x16x16x4xf32>
    %63 = vector.shape_cast %62 : vector<2x16x16x4xf32> to vector<512x4xf32>
    %64 = arith.truncf %63 : vector<512x4xf32> to vector<512x4xbf16>
    %c3 = arith.constant 3 : index
    %c0_62 = arith.constant 0 : index
    %c0_63 = arith.constant 0 : index
    %65 = vector.load %arg4[%c3, %c0_62, %c0_63] : memref<9x4x4xbf16, #tpu.memory_space<vmem>>, vector<1x4x4xbf16>
    %66 = vector.shape_cast %65 : vector<1x4x4xbf16> to vector<4x4xbf16>
    %cst_64 = arith.constant dense<0.000000e+00> : vector<512x4xf32>
    %67 = tpu.matmul %64, %66, %cst_64 {dimension_numbers = #tpu.dot_dimension_numbers<[1], [0], [0], [1], [0, 0, 1, 1], [], []>} : vector<512x4xbf16>, vector<4x4xbf16>, vector<512x4xf32> -> vector<512x4xf32>
    %68 = arith.addf %61, %67 : vector<512x4xf32>
    %c0_65 = arith.constant 0 : index
    %c1_66 = arith.constant 1 : index
    %c1_67 = arith.constant 1 : index
    %c0_68 = arith.constant 0 : index
    %69 = vector.load %arg11[%c0_65, %c1_66, %c1_67, %c0_68] : memref<2x18x18x4xf32, #tpu.memory_space<vmem>>, vector<2x16x16x4xf32>
    %70 = vector.shape_cast %69 : vector<2x16x16x4xf32> to vector<512x4xf32>
    %71 = arith.truncf %70 : vector<512x4xf32> to vector<512x4xbf16>
    %c4 = arith.constant 4 : index
    %c0_69 = arith.constant 0 : index
    %c0_70 = arith.constant 0 : index
    %72 = vector.load %arg4[%c4, %c0_69, %c0_70] : memref<9x4x4xbf16, #tpu.memory_space<vmem>>, vector<1x4x4xbf16>
    %73 = vector.shape_cast %72 : vector<1x4x4xbf16> to vector<4x4xbf16>
    %cst_71 = arith.constant dense<0.000000e+00> : vector<512x4xf32>
    %74 = tpu.matmul %71, %73, %cst_71 {dimension_numbers = #tpu.dot_dimension_numbers<[1], [0], [0], [1], [0, 0, 1, 1], [], []>} : vector<512x4xbf16>, vector<4x4xbf16>, vector<512x4xf32> -> vector<512x4xf32>
    %75 = arith.addf %68, %74 : vector<512x4xf32>
    %c0_72 = arith.constant 0 : index
    %c1_73 = arith.constant 1 : index
    %c2_74 = arith.constant 2 : index
    %c0_75 = arith.constant 0 : index
    %76 = vector.load %arg11[%c0_72, %c1_73, %c2_74, %c0_75] : memref<2x18x18x4xf32, #tpu.memory_space<vmem>>, vector<2x16x16x4xf32>
    %77 = vector.shape_cast %76 : vector<2x16x16x4xf32> to vector<512x4xf32>
    %78 = arith.truncf %77 : vector<512x4xf32> to vector<512x4xbf16>
    %c5 = arith.constant 5 : index
    %c0_76 = arith.constant 0 : index
    %c0_77 = arith.constant 0 : index
    %79 = vector.load %arg4[%c5, %c0_76, %c0_77] : memref<9x4x4xbf16, #tpu.memory_space<vmem>>, vector<1x4x4xbf16>
    %80 = vector.shape_cast %79 : vector<1x4x4xbf16> to vector<4x4xbf16>
    %cst_78 = arith.constant dense<0.000000e+00> : vector<512x4xf32>
    %81 = tpu.matmul %78, %80, %cst_78 {dimension_numbers = #tpu.dot_dimension_numbers<[1], [0], [0], [1], [0, 0, 1, 1], [], []>} : vector<512x4xbf16>, vector<4x4xbf16>, vector<512x4xf32> -> vector<512x4xf32>
    %82 = arith.addf %75, %81 : vector<512x4xf32>
    %c0_79 = arith.constant 0 : index
    %c2_80 = arith.constant 2 : index
    %c0_81 = arith.constant 0 : index
    %c0_82 = arith.constant 0 : index
    %83 = vector.load %arg11[%c0_79, %c2_80, %c0_81, %c0_82] : memref<2x18x18x4xf32, #tpu.memory_space<vmem>>, vector<2x16x16x4xf32>
    %84 = vector.shape_cast %83 : vector<2x16x16x4xf32> to vector<512x4xf32>
    %85 = arith.truncf %84 : vector<512x4xf32> to vector<512x4xbf16>
    %c6 = arith.constant 6 : index
    %c0_83 = arith.constant 0 : index
    %c0_84 = arith.constant 0 : index
    %86 = vector.load %arg4[%c6, %c0_83, %c0_84] : memref<9x4x4xbf16, #tpu.memory_space<vmem>>, vector<1x4x4xbf16>
    %87 = vector.shape_cast %86 : vector<1x4x4xbf16> to vector<4x4xbf16>
    %cst_85 = arith.constant dense<0.000000e+00> : vector<512x4xf32>
    %88 = tpu.matmul %85, %87, %cst_85 {dimension_numbers = #tpu.dot_dimension_numbers<[1], [0], [0], [1], [0, 0, 1, 1], [], []>} : vector<512x4xbf16>, vector<4x4xbf16>, vector<512x4xf32> -> vector<512x4xf32>
    %89 = arith.addf %82, %88 : vector<512x4xf32>
    %c0_86 = arith.constant 0 : index
    %c2_87 = arith.constant 2 : index
    %c1_88 = arith.constant 1 : index
    %c0_89 = arith.constant 0 : index
    %90 = vector.load %arg11[%c0_86, %c2_87, %c1_88, %c0_89] : memref<2x18x18x4xf32, #tpu.memory_space<vmem>>, vector<2x16x16x4xf32>
    %91 = vector.shape_cast %90 : vector<2x16x16x4xf32> to vector<512x4xf32>
    %92 = arith.truncf %91 : vector<512x4xf32> to vector<512x4xbf16>
    %c7 = arith.constant 7 : index
    %c0_90 = arith.constant 0 : index
    %c0_91 = arith.constant 0 : index
    %93 = vector.load %arg4[%c7, %c0_90, %c0_91] : memref<9x4x4xbf16, #tpu.memory_space<vmem>>, vector<1x4x4xbf16>
    %94 = vector.shape_cast %93 : vector<1x4x4xbf16> to vector<4x4xbf16>
    %cst_92 = arith.constant dense<0.000000e+00> : vector<512x4xf32>
    %95 = tpu.matmul %92, %94, %cst_92 {dimension_numbers = #tpu.dot_dimension_numbers<[1], [0], [0], [1], [0, 0, 1, 1], [], []>} : vector<512x4xbf16>, vector<4x4xbf16>, vector<512x4xf32> -> vector<512x4xf32>
    %96 = arith.addf %89, %95 : vector<512x4xf32>
    %c0_93 = arith.constant 0 : index
    %c2_94 = arith.constant 2 : index
    %c2_95 = arith.constant 2 : index
    %c0_96 = arith.constant 0 : index
    %97 = vector.load %arg11[%c0_93, %c2_94, %c2_95, %c0_96] : memref<2x18x18x4xf32, #tpu.memory_space<vmem>>, vector<2x16x16x4xf32>
    %98 = vector.shape_cast %97 : vector<2x16x16x4xf32> to vector<512x4xf32>
    %99 = arith.truncf %98 : vector<512x4xf32> to vector<512x4xbf16>
    %c8 = arith.constant 8 : index
    %c0_97 = arith.constant 0 : index
    %c0_98 = arith.constant 0 : index
    %100 = vector.load %arg4[%c8, %c0_97, %c0_98] : memref<9x4x4xbf16, #tpu.memory_space<vmem>>, vector<1x4x4xbf16>
    %101 = vector.shape_cast %100 : vector<1x4x4xbf16> to vector<4x4xbf16>
    %cst_99 = arith.constant dense<0.000000e+00> : vector<512x4xf32>
    %102 = tpu.matmul %99, %101, %cst_99 {dimension_numbers = #tpu.dot_dimension_numbers<[1], [0], [0], [1], [0, 0, 1, 1], [], []>} : vector<512x4xbf16>, vector<4x4xbf16>, vector<512x4xf32> -> vector<512x4xf32>
    %103 = arith.addf %96, %102 : vector<512x4xf32>
    %104 = arith.mulf %103, %103 : vector<512x4xf32>
    %105 = tpu.concatenate %103, %104 in 1 : vector<512x4xf32>, vector<512x4xf32> -> vector<512x8xf32>
    %cst_100 = arith.constant dense<0.000000e+00> : vector<1x8xf32>
    %106 = tpu.matmul %0, %105, %cst_100 {dimension_numbers = #tpu.dot_dimension_numbers<[1], [0], [0], [1], [0, 0, 1, 1], [], []>} : vector<1x512xf32>, vector<512x8xf32>, vector<1x8xf32> -> vector<1x8xf32>
    %107 = vector.extract_strided_slice %106 {offsets = [0, 0], sizes = [1, 4], strides = [1, 1]} : vector<1x8xf32> to vector<1x4xf32>
    %cst_101 = arith.constant 0.001953125 : f32
    %108 = vector.broadcast %cst_101 : f32 to vector<1x4xf32>
    %109 = arith.mulf %107, %108 : vector<1x4xf32>
    %110 = vector.extract_strided_slice %106 {offsets = [0, 4], sizes = [1, 4], strides = [1, 1]} : vector<1x8xf32> to vector<1x4xf32>
    %cst_102 = arith.constant 0.001953125 : f32
    %111 = vector.broadcast %cst_102 : f32 to vector<1x4xf32>
    %112 = arith.mulf %110, %111 : vector<1x4xf32>
    %113 = arith.mulf %109, %109 : vector<1x4xf32>
    %114 = arith.subf %112, %113 : vector<1x4xf32>
    %cst_103 = arith.constant 0.000000e+00 : f32
    %115 = vector.broadcast %cst_103 : f32 to vector<1x4xf32>
    %116 = arith.maximumf %114, %115 : vector<1x4xf32>
    %c0_104 = arith.constant 0 : index
    %c0_105 = arith.constant 0 : index
    %117 = vector.load %arg5[%c0_104, %c0_105] : memref<1x4xf32, #tpu.memory_space<vmem>>, vector<1x4xf32>
    %cst_106 = arith.constant 9.99999974E-6 : f32
    %118 = vector.broadcast %cst_106 : f32 to vector<1x4xf32>
    %119 = arith.addf %116, %118 : vector<1x4xf32>
    %120 = math.rsqrt %119 : vector<1x4xf32>
    %121 = arith.mulf %117, %120 : vector<1x4xf32>
    %c0_107 = arith.constant 0 : index
    %c0_108 = arith.constant 0 : index
    %122 = vector.load %arg6[%c0_107, %c0_108] : memref<1x4xf32, #tpu.memory_space<vmem>>, vector<1x4xf32>
    %123 = arith.mulf %109, %121 : vector<1x4xf32>
    %124 = arith.subf %122, %123 : vector<1x4xf32>
    %125 = vector.broadcast %121 : vector<1x4xf32> to vector<512x4xf32>
    %126 = arith.mulf %103, %125 : vector<512x4xf32>
    %127 = vector.broadcast %124 : vector<1x4xf32> to vector<512x4xf32>
    %128 = arith.addf %126, %127 : vector<512x4xf32>
    %cst_109 = arith.constant 0.000000e+00 : f32
    %129 = vector.broadcast %cst_109 : f32 to vector<512x4xf32>
    %130 = arith.maximumf %128, %129 : vector<512x4xf32>
    %131 = arith.truncf %130 : vector<512x4xf32> to vector<512x4xbf16>
    %c0_110 = arith.constant 0 : index
    %c0_111 = arith.constant 0 : index
    %132 = vector.load %arg7[%c0_110, %c0_111] : memref<4x16xbf16, #tpu.memory_space<vmem>>, vector<4x16xbf16>
    %cst_112 = arith.constant dense<0.000000e+00> : vector<512x16xf32>
    %133 = tpu.matmul %131, %132, %cst_112 {dimension_numbers = #tpu.dot_dimension_numbers<[1], [0], [0], [1], [0, 0, 1, 1], [], []>} : vector<512x4xbf16>, vector<4x16xbf16>, vector<512x16xf32> -> vector<512x16xf32>
    %134 = arith.mulf %133, %133 : vector<512x16xf32>
    %135 = tpu.concatenate %133, %134 in 1 : vector<512x16xf32>, vector<512x16xf32> -> vector<512x32xf32>
    %cst_113 = arith.constant dense<0.000000e+00> : vector<1x32xf32>
    %136 = tpu.matmul %0, %135, %cst_113 {dimension_numbers = #tpu.dot_dimension_numbers<[1], [0], [0], [1], [0, 0, 1, 1], [], []>} : vector<1x512xf32>, vector<512x32xf32>, vector<1x32xf32> -> vector<1x32xf32>
    %137 = vector.extract_strided_slice %136 {offsets = [0, 0], sizes = [1, 16], strides = [1, 1]} : vector<1x32xf32> to vector<1x16xf32>
    %cst_114 = arith.constant 0.001953125 : f32
    %138 = vector.broadcast %cst_114 : f32 to vector<1x16xf32>
    %139 = arith.mulf %137, %138 : vector<1x16xf32>
    %140 = vector.extract_strided_slice %136 {offsets = [0, 16], sizes = [1, 16], strides = [1, 1]} : vector<1x32xf32> to vector<1x16xf32>
    %cst_115 = arith.constant 0.001953125 : f32
    %141 = vector.broadcast %cst_115 : f32 to vector<1x16xf32>
    %142 = arith.mulf %140, %141 : vector<1x16xf32>
    %143 = arith.mulf %139, %139 : vector<1x16xf32>
    %144 = arith.subf %142, %143 : vector<1x16xf32>
    %cst_116 = arith.constant 0.000000e+00 : f32
    %145 = vector.broadcast %cst_116 : f32 to vector<1x16xf32>
    %146 = arith.maximumf %144, %145 : vector<1x16xf32>
    %c0_117 = arith.constant 0 : index
    %c0_118 = arith.constant 0 : index
    %147 = vector.load %arg8[%c0_117, %c0_118] : memref<1x16xf32, #tpu.memory_space<vmem>>, vector<1x16xf32>
    %cst_119 = arith.constant 9.99999974E-6 : f32
    %148 = vector.broadcast %cst_119 : f32 to vector<1x16xf32>
    %149 = arith.addf %146, %148 : vector<1x16xf32>
    %150 = math.rsqrt %149 : vector<1x16xf32>
    %151 = arith.mulf %147, %150 : vector<1x16xf32>
    %c0_120 = arith.constant 0 : index
    %c0_121 = arith.constant 0 : index
    %152 = vector.load %arg9[%c0_120, %c0_121] : memref<1x16xf32, #tpu.memory_space<vmem>>, vector<1x16xf32>
    %153 = arith.mulf %139, %151 : vector<1x16xf32>
    %154 = arith.subf %152, %153 : vector<1x16xf32>
    %155 = vector.broadcast %151 : vector<1x16xf32> to vector<512x16xf32>
    %156 = arith.mulf %133, %155 : vector<512x16xf32>
    %157 = vector.broadcast %154 : vector<1x16xf32> to vector<512x16xf32>
    %158 = arith.addf %156, %157 : vector<512x16xf32>
    %c0_122 = arith.constant 0 : index
    %c0_123 = arith.constant 0 : index
    %159 = vector.load %arg0[%c0_122, %c0_123] : memref<512x16xf32, #tpu.memory_space<vmem>>, vector<512x16xf32>
    %160 = arith.addf %158, %159 : vector<512x16xf32>
    %cst_124 = arith.constant 0.000000e+00 : f32
    %161 = vector.broadcast %cst_124 : f32 to vector<512x16xf32>
    %162 = arith.maximumf %160, %161 : vector<512x16xf32>
    %c0_125 = arith.constant 0 : index
    %c0_126 = arith.constant 0 : index
    %163 = vector.load %arg10[%c0_125, %c0_126] : memref<512x16xf32, #tpu.memory_space<vmem>>, vector<512x16xf32>
    tpu.vector_store %arg10[%c0_125, %c0_126], %162 {strides = array<i32>} : memref<512x16xf32, #tpu.memory_space<vmem>>, vector<512x16xf32>,
    return
  }
}

</mosaic_0001>

<llo_original>
// kernel: bottleneck_forward.1
$region0: #{bottleneck_forward.1}
  #allocation0 [shape = 'u32[]', space=smem, size = 0x4, offset = 0x4, fixed_abs, tag = 'smem constant byte address 0x4 - core index']
  #allocation1 [shape = 'u32[144,128]{1,0:T(1,128)}', space=vmem, size = 0x12000, scoped, tag = 'internal scratch']
  #allocation2 [shape = 'f32[2,18,18,4]{3,2,1,0:T(8,128)}', space=vmem, size = 0x6c000, scoped, tag = 'scratch operand']
  %s0 = inlined_call_operand.hbm [shape: f32[512,16], index: 0, kind: input, shape index: {}]
  %s1 = inlined_call_operand.vmem [shape: bf16[16,4], index: 1, kind: input, shape index: {}]
  %s2 = inlined_call_operand.vmem [shape: f32[1,4], index: 2, kind: input, shape index: {}]
  %s3 = inlined_call_operand.vmem [shape: f32[1,4], index: 3, kind: input, shape index: {}]
  %s4 = inlined_call_operand.vmem [shape: bf16[9,4,4], index: 4, kind: input, shape index: {}]
  %s5 = inlined_call_operand.vmem [shape: f32[1,4], index: 5, kind: input, shape index: {}]
  %s6 = inlined_call_operand.vmem [shape: f32[1,4], index: 6, kind: input, shape index: {}]
  %s7 = inlined_call_operand.vmem [shape: bf16[4,16], index: 7, kind: input, shape index: {}]
  %s8 = inlined_call_operand.vmem [shape: f32[1,16], index: 8, kind: input, shape index: {}]
  %s9 = inlined_call_operand.vmem [shape: f32[1,16], index: 9, kind: input, shape index: {}]
  %s10 = inlined_call_operand.hbm [shape: f32[512,16], index: 10, kind: output, shape index: {}]
  %s11 = sld [smem:[#allocation0]]
  $region54: #{bottleneck_forward.1} parent=0
    _
  %s13 = ssub.s32 1, %s11
  %s14 = scalar_select 0, %s13, %s11
  $region1: #{bottleneck_forward.1} parent=0
    #allocation3 [shape = 'u8[262144]{0}', space=vmem, size = 0x40000, scoped, tag = 'input window, operand 0, single buffered']
    #allocation4 [shape = 's32[1]{0}', space=sflag, size = 0x4, scoped, tag = 'scoped memory for bottleneck_forward.1']
    #allocation5 [shape = 's32[1]{0}', space=sflag, size = 0x4, scoped, tag = 'scoped memory for bottleneck_forward.1']
    #allocation6 [shape = 'u8[262144]{0}', space=vmem, size = 0x40000, scoped, tag = 'output window, operand 0, single buffered']
    %15 = vsyncpa [#allocation4], 0
    %16 = vsyncpa [#allocation5], 0
    // Predicated region
    $region2: #{bottleneck_forward.1} parent=1 // pred_check
      _
    $region3: #{bottleneck_forward.1} parent=1 // pred_check_branch
      %18 = sbr.rel (0) target = $region5
    $region4: #{bottleneck_forward.1} parent=1 // pred_region
      %s20 = ssub.s32 8192, 8192
      %21 = vsyncadd [#allocation4], %s20
      %s22 = sshll.u32 [#allocation3], 4
      %s23 = int_to_ptr.vmem [resolvable:$true] %s22
      %28 = dma.hbm_to_vmem [thread:$0]  %s0, 8192, %s23, [#allocation4], 128, 128, 8
    $region5: #{bottleneck_forward.1} parent=1 // pred_fallthru
      _
    // Predicated region
    $region6: #{bottleneck_forward.1} parent=1 // pred_check
      _
    $region7: #{bottleneck_forward.1} parent=1 // pred_check_branch
      %30 = sbr.rel (0) target = $region9
    $region8: #{bottleneck_forward.1} parent=1 // pred_region
      _
    $region9: #{bottleneck_forward.1} parent=1 // pred_fallthru
      _
    // Predicated region
    $region10: #{bottleneck_forward.1} parent=1 // pred_check
      _
    $region11: #{bottleneck_forward.1} parent=1 // pred_check_branch
      %32 = sbr.rel (0) target = $region13
    $region12: #{bottleneck_forward.1} parent=1 // pred_region
      _
    $region13: #{bottleneck_forward.1} parent=1 // pred_fallthru
      _
    // Predicated region
    $region14: #{bottleneck_forward.1} parent=1 // pred_check
      _
    $region15: #{bottleneck_forward.1} parent=1 // pred_check_branch
      %34 = sbr.rel (0) target = $region17
    $region16: #{bottleneck_forward.1} parent=1 // pred_region
      _
    $region17: #{bottleneck_forward.1} parent=1 // pred_fallthru
      _
    // Predicated region
    $region18: #{bottleneck_forward.1} parent=1 // pred_check
      _
    $region19: #{bottleneck_forward.1} parent=1 // pred_check_branch
      %36 = sbr.rel (0) target = $region21
    $region20: #{bottleneck_forward.1} parent=1 // pred_region
      _
    $region21: #{bottleneck_forward.1} parent=1 // pred_fallthru
      _
    // Predicated region
    $region22: #{bottleneck_forward.1} parent=1 // pred_check
      _
    $region23: #{bottleneck_forward.1} parent=1 // pred_check_branch
      %38 = sbr.rel (0) target = $region25
    $region24: #{bottleneck_forward.1} parent=1 // pred_region
      _
    $region25: #{bottleneck_forward.1} parent=1 // pred_fallthru
      _
    // Predicated region
    $region26: #{bottleneck_forward.1} parent=1 // pred_check
      _
    $region27: #{bottleneck_forward.1} parent=1 // pred_check_branch
      %40 = sbr.rel (0) target = $region29
    $region28: #{bottleneck_forward.1} parent=1 // pred_region
      _
    $region29: #{bottleneck_forward.1} parent=1 // pred_fallthru
      _
    // Predicated region
    $region30: #{bottleneck_forward.1} parent=1 // pred_check
      _
    $region31: #{bottleneck_forward.1} parent=1 // pred_check_branch
      %42 = sbr.rel (0) target = $region33
    $region32: #{bottleneck_forward.1} parent=1 // pred_region
      _
    $region33: #{bottleneck_forward.1} parent=1 // pred_fallthru
      _
    // Predicated region
    $region34: #{bottleneck_forward.1} parent=1 // pred_check
      _
    $region35: #{bottleneck_forward.1} parent=1 // pred_check_branch
      %44 = sbr.rel (0) target = $region37
    $region36: #{bottleneck_forward.1} parent=1 // pred_region
      _
    $region37: #{bottleneck_forward.1} parent=1 // pred_fallthru
      _
    // Predicated region
    $region38: #{bottleneck_forward.1} parent=1 // pred_check
      _
    $region39: #{bottleneck_forward.1} parent=1 // pred_check_branch
      %46 = sbr.rel (0) target = $region41
    $region40: #{bottleneck_forward.1} parent=1 // pred_region
      _
    $region41: #{bottleneck_forward.1} parent=1 // pred_fallthru
      _
    // Predicated region
    $region42: #{bottleneck_forward.1} parent=1 // pred_check
      _
    $region43: #{bottleneck_forward.1} parent=1 // pred_check_branch
      %48 = sbr.rel (0) target = $region45
    $region44: #{bottleneck_forward.1} parent=1 // pred_region
      %49 = dma.done [#allocation4], 8192
    $region45: #{bottleneck_forward.1} parent=1 // pred_fallthru
      _
    %v51 = vld [vmem:[#allocation3] sm:$0xff]
    %v52 = vld [vmem:[#allocation3 + $0x8] sm:$0xff]
    %v53 = vld [vmem:[#allocation3 + $0x10] sm:$0xff]
    %v54 = vld [vmem:[#allocation3 + $0x18] sm:$0xff]
    %v55 = vld [vmem:[#allocation3 + $0x20] sm:$0xff]
    %v56 = vld [vmem:[#allocation3 + $0x28] sm:$0xff]
    %v57 = vld [vmem:[#allocation3 + $0x30] sm:$0xff]
    %v58 = vld [vmem:[#allocation3 + $0x38] sm:$0xff]
    %v59 = vld [vmem:[#allocation3 + $0x40] sm:$0xff]
    %v60 = vld [vmem:[#allocation3 + $0x48] sm:$0xff]
    %v61 = vld [vmem:[#allocation3 + $0x50] sm:$0xff]
    %v62 = vld [vmem:[#allocation3 + $0x58] sm:$0xff]
    %v63 = vld [vmem:[#allocation3 + $0x60] sm:$0xff]
    %v64 = vld [vmem:[#allocation3 + $0x68] sm:$0xff]
    %v65 = vld [vmem:[#allocation3 + $0x70] sm:$0xff]
    %v66 = vld [vmem:[#allocation3 + $0x78] sm:$0xff]
    %v67 = vld [vmem:[#allocation3 + $0x80] sm:$0xff]
    %v68 = vld [vmem:[#allocation3 + $0x88] sm:$0xff]
    %v69 = vld [vmem:[#allocation3 + $0x90] sm:$0xff]
    %v70 = vld [vmem:[#allocation3 + $0x98] sm:$0xff]
    %v71 = vld [vmem:[#allocation3 + $0xa0] sm:$0xff]
    %v72 = vld [vmem:[#allocation3 + $0xa8] sm:$0xff]
    %v73 = vld [vmem:[#allocation3 + $0xb0] sm:$0xff]
    %v74 = vld [vmem:[#allocation3 + $0xb8] sm:$0xff]
    %v75 = vld [vmem:[#allocation3 + $0xc0] sm:$0xff]
    %v76 = vld [vmem:[#allocation3 + $0xc8] sm:$0xff]
    %v77 = vld [vmem:[#allocation3 + $0xd0] sm:$0xff]
    %v78 = vld [vmem:[#allocation3 + $0xd8] sm:$0xff]
    %v79 = vld [vmem:[#allocation3 + $0xe0] sm:$0xff]
    %v80 = vld [vmem:[#allocation3 + $0xe8] sm:$0xff]
    %v81 = vld [vmem:[#allocation3 + $0xf0] sm:$0xff]
    %v82 = vld [vmem:[#allocation3 + $0xf8] sm:$0xff]
    %v83 = vld [vmem:[#allocation3 + $0x100] sm:$0xff]
    %v84 = vld [vmem:[#allocation3 + $0x108] sm:$0xff]
    %v85 = vld [vmem:[#allocation3 + $0x110] sm:$0xff]
    %v86 = vld [vmem:[#allocation3 + $0x118] sm:$0xff]
    %v87 = vld [vmem:[#allocation3 + $0x120] sm:$0xff]
    %v88 = vld [vmem:[#allocation3 + $0x128] sm:$0xff]
    %v89 = vld [vmem:[#allocation3 + $0x130] sm:$0xff]
    %v90 = vld [vmem:[#allocation3 + $0x138] sm:$0xff]
    %v91 = vld [vmem:[#allocation3 + $0x140] sm:$0xff]
    %v92 = vld [vmem:[#allocation3 + $0x148] sm:$0xff]
    %v93 = vld [vmem:[#allocation3 + $0x150] sm:$0xff]
    %v94 = vld [vmem:[#allocation3 + $0x158] sm:$0xff]
    %v95 = vld [vmem:[#allocation3 + $0x160] sm:$0xff]
    %v96 = vld [vmem:[#allocation3 + $0x168] sm:$0xff]
    %v97 = vld [vmem:[#allocation3 + $0x170] sm:$0xff]
    %v98 = vld [vmem:[#allocation3 + $0x178] sm:$0xff]
    %v99 = vld [vmem:[#allocation3 + $0x180] sm:$0xff]
    %v100 = vld [vmem:[#allocation3 + $0x188] sm:$0xff]
    %v101 = vld [vmem:[#allocation3 + $0x190] sm:$0xff]
    %v102 = vld [vmem:[#allocation3 + $0x198] sm:$0xff]
    %v103 = vld [vmem:[#allocation3 + $0x1a0] sm:$0xff]
    %v104 = vld [vmem:[#allocation3 + $0x1a8] sm:$0xff]
    %v105 = vld [vmem:[#allocation3 + $0x1b0] sm:$0xff]
    %v106 = vld [vmem:[#allocation3 + $0x1b8] sm:$0xff]
    %v107 = vld [vmem:[#allocation3 + $0x1c0] sm:$0xff]
    %v108 = vld [vmem:[#allocation3 + $0x1c8] sm:$0xff]
    %v109 = vld [vmem:[#allocation3 + $0x1d0] sm:$0xff]
    %v110 = vld [vmem:[#allocation3 + $0x1d8] sm:$0xff]
    %v111 = vld [vmem:[#allocation3 + $0x1e0] sm:$0xff]
    %v112 = vld [vmem:[#allocation3 + $0x1e8] sm:$0xff]
    %v113 = vld [vmem:[#allocation3 + $0x1f0] sm:$0xff]
    %v114 = vld [vmem:[#allocation3 + $0x1f8] sm:$0xff]
    %v115 = vpack.c.bf16 %v52, %v51
    %v116 = vpack.c.bf16 %v54, %v53
    %v117 = vpack.c.bf16 %v56, %v55
    %v118 = vpack.c.bf16 %v58, %v57
    %v119 = vpack.c.bf16 %v60, %v59
    %v120 = vpack.c.bf16 %v62, %v61
    %v121 = vpack.c.bf16 %v64, %v63
    %v122 = vpack.c.bf16 %v66, %v65
    %v123 = vpack.c.bf16 %v68, %v67
    %v124 = vpack.c.bf16 %v70, %v69
    %v125 = vpack.c.bf16 %v72, %v71
    %v126 = vpack.c.bf16 %v74, %v73
    %v127 = vpack.c.bf16 %v76, %v75
    %v128 = vpack.c.bf16 %v78, %v77
    %v129 = vpack.c.bf16 %v80, %v79
    %v130 = vpack.c.bf16 %v82, %v81
    %v131 = vpack.c.bf16 %v84, %v83
    %v132 = vpack.c.bf16 %v86, %v85
    %v133 = vpack.c.bf16 %v88, %v87
    %v134 = vpack.c.bf16 %v90, %v89
    %v135 = vpack.c.bf16 %v92, %v91
    %v136 = vpack.c.bf16 %v94, %v93
    %v137 = vpack.c.bf16 %v96, %v95
    %v138 = vpack.c.bf16 %v98, %v97
    %v139 = vpack.c.bf16 %v100, %v99
    %v140 = vpack.c.bf16 %v102, %v101
    %v141 = vpack.c.bf16 %v104, %v103
    %v142 = vpack.c.bf16 %v106, %v105
    %v143 = vpack.c.bf16 %v108, %v107
    %v144 = vpack.c.bf16 %v110, %v109
    %v145 = vpack.c.bf16 %v112, %v111
    %v146 = vpack.c.bf16 %v114, %v113
    %v147 = vld [vmem:[%s1] sm:$0xf]
    %v148 = vld [vmem:[%s1 + $0x4] sm:$0xf]
    %v151 = vunpack.c.l.b16 %v147
    %v152 = vunpack.c.l.b16 %v148
    %v153 = vpack.c.b16 %v152, %v151
    %vm155 = vcmask 130048
    %v157 = vsel %vm155, %v115, 0
    %v160 = vsel %vm155, %v116, 0
    %v163 = vsel %vm155, %v117, 0
    %v166 = vsel %vm155, %v118, 0
    %v169 = vsel %vm155, %v119, 0
    %v172 = vsel %vm155, %v120, 0
    %v175 = vsel %vm155, %v121, 0
    %v178 = vsel %vm155, %v122, 0
    %v181 = vsel %vm155, %v123, 0
    %v184 = vsel %vm155, %v124, 0
    %v187 = vsel %vm155, %v125, 0
    %v190 = vsel %vm155, %v126, 0
    %v193 = vsel %vm155, %v127, 0
    %v196 = vsel %vm155, %v128, 0
    %v199 = vsel %vm155, %v129, 0
    %v202 = vsel %vm155, %v130, 0
    %v205 = vsel %vm155, %v131, 0
    %v208 = vsel %vm155, %v132, 0
    %v211 = vsel %vm155, %v133, 0
    %v214 = vsel %vm155, %v134, 0
    %v217 = vsel %vm155, %v135, 0
    %v220 = vsel %vm155, %v136, 0
    %v223 = vsel %vm155, %v137, 0
    %v226 = vsel %vm155, %v138, 0
    %v229 = vsel %vm155, %v139, 0
    %v232 = vsel %vm155, %v140, 0
    %v235 = vsel %vm155, %v141, 0
    %v238 = vsel %vm155, %v142, 0
    %v241 = vsel %vm155, %v143, 0
    %v244 = vsel %vm155, %v144, 0
    %v247 = vsel %vm155, %v145, 0
    %v250 = vsel %vm155, %v146, 0
    %252 = vmatprep.subr.bf16.mxu0 0
    %253 = vmatpush1.bf16.msra.mxu0 %v153
    %254 = vmatprep.subr.bf16.mxu0 0
    %255 = vmatpush1.bf16.msra.mxu0 0
    %256 = vmatprep.subr.bf16.mxu0 0
    %257 = vmatpush1.bf16.msra.mxu0 0
    %258 = vmatprep.subr.bf16.mxu0 0
    %259 = vmatpush1.bf16.msra.mxu0 0
    %260 = vmatprep.subr.bf16.mxu0 0
    %261 = vmatpush1.bf16.msra.mxu0 0
    %262 = vmatprep.subr.bf16.mxu0 0
    %263 = vmatpush1.bf16.msra.mxu0 0
    %264 = vmatprep.subr.bf16.mxu0 0
    %265 = vmatpush1.bf16.msra.mxu0 0
    %266 = vmatprep.subr.bf16.mxu0 0
    %267 = vmatpush1.bf16.msra.mxu0 0
    %268 = vmatprep.subr.bf16.mxu0 0
    %269 = vmatpush1.bf16.msra.mxu0 0
    %270 = vmatprep.subr.bf16.mxu0 0
    %271 = vmatpush1.bf16.msra.mxu0 0
    %272 = vmatprep.subr.bf16.mxu0 0
    %273 = vmatpush1.bf16.msra.mxu0 0
    %274 = vmatprep.subr.bf16.mxu0 0
    %275 = vmatpush1.bf16.msra.mxu0 0
    %276 = vmatprep.subr.bf16.mxu0 0
    %277 = vmatpush1.bf16.msra.mxu0 0
    %278 = vmatprep.subr.bf16.mxu0 0
    %279 = vmatpush1.bf16.msra.mxu0 0
    %280 = vmatprep.subr.bf16.mxu0 0
    %281 = vmatpush1.bf16.msra.mxu0 0
    %282 = vmatprep.subr.bf16.mxu0 0
    %283 = vmatpush1.bf16.msra.mxu0 0
    %284 = vmatprep.mubr.bf16.mxu0 0
    %285 = vmatmul.mubr.bf16.gmra.mrb[0].mxu0 %v157
    %v286 = vpop.f32.mrb[0].mxu0
    %v287 = vadd.f32 0.0, %v286
    %v288 = vpop.f32.mrb[0].mxu0
    %v289 = vpop.f32.mrb[0].mxu0
    %v290 = vadd.f32 0.0, %v289
    %v291 = vpop.f32.mrb[0].mxu0
    %292 = vmatprep.mubr.bf16.mxu0 0
    %293 = vmatmul.mubr.bf16.gmra.mrb[0].mxu0 %v160
    %v294 = vpop.f32.mrb[0].mxu0
    %v295 = vadd.f32 0.0, %v294
    %v296 = vpop.f32.mrb[0].mxu0
    %v297 = vpop.f32.mrb[0].mxu0
    %v298 = vadd.f32 0.0, %v297
    %v299 = vpop.f32.mrb[0].mxu0
    %300 = vmatprep.mubr.bf16.mxu0 0
    %301 = vmatmul.mubr.bf16.gmra.mrb[0].mxu0 %v163
    %v302 = vpop.f32.mrb[0].mxu0
    %v303 = vadd.f32 0.0, %v302
    %v304 = vpop.f32.mrb[0].mxu0
    %v305 = vpop.f32.mrb[0].mxu0
    %v306 = vadd.f32 0.0, %v305
    %v307 = vpop.f32.mrb[0].mxu0
    %308 = vmatprep.mubr.bf16.mxu0 0
    %309 = vmatmul.mubr.bf16.gmra.mrb[0].mxu0 %v166
    %v310 = vpop.f32.mrb[0].mxu0
    %v311 = vadd.f32 0.0, %v310
    %v312 = vpop.f32.mrb[0].mxu0
    %v313 = vpop.f32.mrb[0].mxu0
    %v314 = vadd.f32 0.0, %v313
    %v315 = vpop.f32.mrb[0].mxu0
    %316 = vmatprep.mubr.bf16.mxu0 0
    %317 = vmatmul.mubr.bf16.gmra.mrb[0].mxu0 %v169
    %v318 = vpop.f32.mrb[0].mxu0
    %v319 = vadd.f32 0.0, %v318
    %v320 = vpop.f32.mrb[0].mxu0
    %v321 = vpop.f32.mrb[0].mxu0
    %v322 = vadd.f32 0.0, %v321
    %v323 = vpop.f32.mrb[0].mxu0
    %324 = vmatprep.mubr.bf16.mxu0 0
    %325 = vmatmul.mubr.bf16.gmra.mrb[0].mxu0 %v172
    %v326 = vpop.f32.mrb[0].mxu0
    %v327 = vadd.f32 0.0, %v326
    %v328 = vpop.f32.mrb[0].mxu0
    %v329 = vpop.f32.mrb[0].mxu0
    %v330 = vadd.f32 0.0, %v329
    %v331 = vpop.f32.mrb[0].mxu0
    %332 = vmatprep.mubr.bf16.mxu0 0
    %333 = vmatmul.mubr.bf16.gmra.mrb[0].mxu0 %v175
    %v334 = vpop.f32.mrb[0].mxu0
    %v335 = vadd.f32 0.0, %v334
    %v336 = vpop.f32.mrb[0].mxu0
    %v337 = vpop.f32.mrb[0].mxu0
    %v338 = vadd.f32 0.0, %v337
    %v339 = vpop.f32.mrb[0].mxu0
    %340 = vmatprep.mubr.bf16.mxu0 0
    %341 = vmatmul.mubr.bf16.gmra.mrb[0].mxu0 %v178
    %v342 = vpop.f32.mrb[0].mxu0
    %v343 = vadd.f32 0.0, %v342
    %v344 = vpop.f32.mrb[0].mxu0
    %v345 = vpop.f32.mrb[0].mxu0
    %v346 = vadd.f32 0.0, %v345
    %v347 = vpop.f32.mrb[0].mxu0
    %348 = vmatprep.mubr.bf16.mxu0 0
    %349 = vmatmul.mubr.bf16.gmra.mrb[0].mxu0 %v181
    %v350 = vpop.f32.mrb[0].mxu0
    %v351 = vadd.f32 0.0, %v350
    %v352 = vpop.f32.mrb[0].mxu0
    %v353 = vpop.f32.mrb[0].mxu0
    %v354 = vadd.f32 0.0, %v353
    %v355 = vpop.f32.mrb[0].mxu0
    %356 = vmatprep.mubr.bf16.mxu0 0
    %357 = vmatmul.mubr.bf16.gmra.mrb[0].mxu0 %v184
    %v358 = vpop.f32.mrb[0].mxu0
    %v359 = vadd.f32 0.0, %v358
    %v360 = vpop.f32.mrb[0].mxu0
    %v361 = vpop.f32.mrb[0].mxu0
    %v362 = vadd.f32 0.0, %v361
    %v363 = vpop.f32.mrb[0].mxu0
    %364 = vmatprep.mubr.bf16.mxu0 0
    %365 = vmatmul.mubr.bf16.gmra.mrb[0].mxu0 %v187
    %v366 = vpop.f32.mrb[0].mxu0
    %v367 = vadd.f32 0.0, %v366
    %v368 = vpop.f32.mrb[0].mxu0
    %v369 = vpop.f32.mrb[0].mxu0
    %v370 = vadd.f32 0.0, %v369
    %v371 = vpop.f32.mrb[0].mxu0
    %372 = vmatprep.mubr.bf16.mxu0 0
    %373 = vmatmul.mubr.bf16.gmra.mrb[0].mxu0 %v190
    %v374 = vpop.f32.mrb[0].mxu0
    %v375 = vadd.f32 0.0, %v374
    %v376 = vpop.f32.mrb[0].mxu0
    %v377 = vpop.f32.mrb[0].mxu0
    %v378 = vadd.f32 0.0, %v377
    %v379 = vpop.f32.mrb[0].mxu0
    %380 = vmatprep.mubr.bf16.mxu0 0
    %381 = vmatmul.mubr.bf16.gmra.mrb[0].mxu0 %v193
    %v382 = vpop.f32.mrb[0].mxu0
    %v383 = vadd.f32 0.0, %v382
    %v384 = vpop.f32.mrb[0].mxu0
    %v385 = vpop.f32.mrb[0].mxu0
    %v386 = vadd.f32 0.0, %v385
    %v387 = vpop.f32.mrb[0].mxu0
    %388 = vmatprep.mubr.bf16.mxu0 0
    %389 = vmatmul.mubr.bf16.gmra.mrb[0].mxu0 %v196
    %v390 = vpop.f32.mrb[0].mxu0
    %v391 = vadd.f32 0.0, %v390
    %v392 = vpop.f32.mrb[0].mxu0
    %v393 = vpop.f32.mrb[0].mxu0
    %v394 = vadd.f32 0.0, %v393
    %v395 = vpop.f32.mrb[0].mxu0
    %396 = vmatprep.mubr.bf16.mxu0 0
    %397 = vmatmul.mubr.bf16.gmra.mrb[0].mxu0 %v199
    %v398 = vpop.f32.mrb[0].mxu0
    %v399 = vadd.f32 0.0, %v398
    %v400 = vpop.f32.mrb[0].mxu0
    %v401 = vpop.f32.mrb[0].mxu0
    %v402 = vadd.f32 0.0, %v401
    %v403 = vpop.f32.mrb[0].mxu0
    %404 = vmatprep.mubr.bf16.mxu0 0
    %405 = vmatmul.mubr.bf16.gmra.mrb[0].mxu0 %v202
    %v406 = vpop.f32.mrb[0].mxu0
    %v407 = vadd.f32 0.0, %v406
    %v408 = vpop.f32.mrb[0].mxu0
    %v409 = vpop.f32.mrb[0].mxu0
    %v410 = vadd.f32 0.0, %v409
    %v411 = vpop.f32.mrb[0].mxu0
    %412 = vmatprep.mubr.bf16.mxu0 0
    %413 = vmatmul.mubr.bf16.gmra.mrb[0].mxu0 %v205
    %v414 = vpop.f32.mrb[0].mxu0
    %v415 = vadd.f32 0.0, %v414
    %v416 = vpop.f32.mrb[0].mxu0
    %v417 = vpop.f32.mrb[0].mxu0
    %v418 = vadd.f32 0.0, %v417
    %v419 = vpop.f32.mrb[0].mxu0
    %420 = vmatprep.mubr.bf16.mxu0 0
    %421 = vmatmul.mubr.bf16.gmra.mrb[0].mxu0 %v208
    %v422 = vpop.f32.mrb[0].mxu0
    %v423 = vadd.f32 0.0, %v422
    %v424 = vpop.f32.mrb[0].mxu0
    %v425 = vpop.f32.mrb[0].mxu0
    %v426 = vadd.f32 0.0, %v425
    %v427 = vpop.f32.mrb[0].mxu0
    %428 = vmatprep.mubr.bf16.mxu0 0
    %429 = vmatmul.mubr.bf16.gmra.mrb[0].mxu0 %v211
    %v430 = vpop.f32.mrb[0].mxu0
    %v431 = vadd.f32 0.0, %v430
    %v432 = vpop.f32.mrb[0].mxu0
    %v433 = vpop.f32.mrb[0].mxu0
    %v434 = vadd.f32 0.0, %v433
    %v435 = vpop.f32.mrb[0].mxu0
    %436 = vmatprep.mubr.bf16.mxu0 0
    %437 = vmatmul.mubr.bf16.gmra.mrb[0].mxu0 %v214
    %v438 = vpop.f32.mrb[0].mxu0
    %v439 = vadd.f32 0.0, %v438
    %v440 = vpop.f32.mrb[0].mxu0
    %v441 = vpop.f32.mrb[0].mxu0
    %v442 = vadd.f32 0.0, %v441
    %v443 = vpop.f32.mrb[0].mxu0
    %444 = vmatprep.mubr.bf16.mxu0 0
    %445 = vmatmul.mubr.bf16.gmra.mrb[0].mxu0 %v217
    %v446 = vpop.f32.mrb[0].mxu0
    %v447 = vadd.f32 0.0, %v446
    %v448 = vpop.f32.mrb[0].mxu0
    %v449 = vpop.f32.mrb[0].mxu0
    %v450 = vadd.f32 0.0, %v449
    %v451 = vpop.f32.mrb[0].mxu0
    %452 = vmatprep.mubr.bf16.mxu0 0
    %453 = vmatmul.mubr.bf16.gmra.mrb[0].mxu0 %v220
    %v454 = vpop.f32.mrb[0].mxu0
    %v455 = vadd.f32 0.0, %v454
    %v456 = vpop.f32.mrb[0].mxu0
    %v457 = vpop.f32.mrb[0].mxu0
    %v458 = vadd.f32 0.0, %v457
    %v459 = vpop.f32.mrb[0].mxu0
    %460 = vmatprep.mubr.bf16.mxu0 0
    %461 = vmatmul.mubr.bf16.gmra.mrb[0].mxu0 %v223
    %v462 = vpop.f32.mrb[0].mxu0
    %v463 = vadd.f32 0.0, %v462
    %v464 = vpop.f32.mrb[0].mxu0
    %v465 = vpop.f32.mrb[0].mxu0
    %v466 = vadd.f32 0.0, %v465
    %v467 = vpop.f32.mrb[0].mxu0
    %468 = vmatprep.mubr.bf16.mxu0 0
    %469 = vmatmul.mubr.bf16.gmra.mrb[0].mxu0 %v226
    %v470 = vpop.f32.mrb[0].mxu0
    %v471 = vadd.f32 0.0, %v470
    %v472 = vpop.f32.mrb[0].mxu0
    %v473 = vpop.f32.mrb[0].mxu0
    %v474 = vadd.f32 0.0, %v473
    %v475 = vpop.f32.mrb[0].mxu0
    %476 = vmatprep.mubr.bf16.mxu0 0
    %477 = vmatmul.mubr.bf16.gmra.mrb[0].mxu0 %v229
    %v478 = vpop.f32.mrb[0].mxu0
    %v479 = vadd.f32 0.0, %v478
    %v480 = vpop.f32.mrb[0].mxu0
    %v481 = vpop.f32.mrb[0].mxu0
    %v482 = vadd.f32 0.0, %v481
    %v483 = vpop.f32.mrb[0].mxu0
    %484 = vmatprep.mubr.bf16.mxu0 0
    %485 = vmatmul.mubr.bf16.gmra.mrb[0].mxu0 %v232
    %v486 = vpop.f32.mrb[0].mxu0
    %v487 = vadd.f32 0.0, %v486
    %v488 = vpop.f32.mrb[0].mxu0
    %v489 = vpop.f32.mrb[0].mxu0
    %v490 = vadd.f32 0.0, %v489
    %v491 = vpop.f32.mrb[0].mxu0
    %492 = vmatprep.mubr.bf16.mxu0 0
    %493 = vmatmul.mubr.bf16.gmra.mrb[0].mxu0 %v235
    %v494 = vpop.f32.mrb[0].mxu0
    %v495 = vadd.f32 0.0, %v494
    %v496 = vpop.f32.mrb[0].mxu0
    %v497 = vpop.f32.mrb[0].mxu0
    %v498 = vadd.f32 0.0, %v497
    %v499 = vpop.f32.mrb[0].mxu0
    %500 = vmatprep.mubr.bf16.mxu0 0
    %501 = vmatmul.mubr.bf16.gmra.mrb[0].mxu0 %v238
    %v502 = vpop.f32.mrb[0].mxu0
    %v503 = vadd.f32 0.0, %v502
    %v504 = vpop.f32.mrb[0].mxu0
    %v505 = vpop.f32.mrb[0].mxu0
    %v506 = vadd.f32 0.0, %v505
    %v507 = vpop.f32.mrb[0].mxu0
    %508 = vmatprep.mubr.bf16.mxu0 0
    %509 = vmatmul.mubr.bf16.gmra.mrb[0].mxu0 %v241
    %v510 = vpop.f32.mrb[0].mxu0
    %v511 = vadd.f32 0.0, %v510
    %v512 = vpop.f32.mrb[0].mxu0
    %v513 = vpop.f32.mrb[0].mxu0
    %v514 = vadd.f32 0.0, %v513
    %v515 = vpop.f32.mrb[0].mxu0
    %516 = vmatprep.mubr.bf16.mxu0 0
    %517 = vmatmul.mubr.bf16.gmra.mrb[0].mxu0 %v244
    %v518 = vpop.f32.mrb[0].mxu0
    %v519 = vadd.f32 0.0, %v518
    %v520 = vpop.f32.mrb[0].mxu0
    %v521 = vpop.f32.mrb[0].mxu0
    %v522 = vadd.f32 0.0, %v521
    %v523 = vpop.f32.mrb[0].mxu0
    %524 = vmatprep.mubr.bf16.mxu0 0
    %525 = vmatmul.mubr.bf16.gmra.mrb[0].mxu0 %v247
    %v526 = vpop.f32.mrb[0].mxu0
    %v527 = vadd.f32 0.0, %v526
    %v528 = vpop.f32.mrb[0].mxu0
    %v529 = vpop.f32.mrb[0].mxu0
    %v530 = vadd.f32 0.0, %v529
    %v531 = vpop.f32.mrb[0].mxu0
    %532 = vmatprep.mubr.bf16.mxu0 0
    %533 = vmatmul.mubr.bf16.gmra.mrb[0].mxu0 %v250
    %v534 = vpop.f32.mrb[0].mxu0
    %v535 = vadd.f32 0.0, %v534
    %v536 = vpop.f32.mrb[0].mxu0
    %v537 = vpop.f32.mrb[0].mxu0
    %v538 = vadd.f32 0.0, %v537
    %v539 = vpop.f32.mrb[0].mxu0
    %540 = vdwg.mxu0
    %v541 = vmul.f32 %v287, %v287
    %v542 = vmul.f32 %v290, %v290
    %v543 = vmul.f32 %v295, %v295
    %v544 = vmul.f32 %v298, %v298
    %v545 = vmul.f32 %v303, %v303
    %v546 = vmul.f32 %v306, %v306
    %v547 = vmul.f32 %v311, %v311
    %v548 = vmul.f32 %v314, %v314
    %v549 = vmul.f32 %v319, %v319
    %v550 = vmul.f32 %v322, %v322
    %v551 = vmul.f32 %v327, %v327
    %v552 = vmul.f32 %v330, %v330
    %v553 = vmul.f32 %v335, %v335
    %v554 = vmul.f32 %v338, %v338
    %v555 = vmul.f32 %v343, %v343
    %v556 = vmul.f32 %v346, %v346
    %v557 = vmul.f32 %v351, %v351
    %v558 = vmul.f32 %v354, %v354
    %v559 = vmul.f32 %v359, %v359
    %v560 = vmul.f32 %v362, %v362
    %v561 = vmul.f32 %v367, %v367
    %v562 = vmul.f32 %v370, %v370
    %v563 = vmul.f32 %v375, %v375
    %v564 = vmul.f32 %v378, %v378
    %v565 = vmul.f32 %v383, %v383
    %v566 = vmul.f32 %v386, %v386
    %v567 = vmul.f32 %v391, %v391
    %v568 = vmul.f32 %v394, %v394
    %v569 = vmul.f32 %v399, %v399
    %v570 = vmul.f32 %v402, %v402
    %v571 = vmul.f32 %v407, %v407
    %v572 = vmul.f32 %v410, %v410
    %v573 = vmul.f32 %v415, %v415
    %v574 = vmul.f32 %v418, %v418
    %v575 = vmul.f32 %v423, %v423
    %v576 = vmul.f32 %v426, %v426
    %v577 = vmul.f32 %v431, %v431
    %v578 = vmul.f32 %v434, %v434
    %v579 = vmul.f32 %v439, %v439
    %v580 = vmul.f32 %v442, %v442
    %v581 = vmul.f32 %v447, %v447
    %v582 = vmul.f32 %v450, %v450
    %v583 = vmul.f32 %v455, %v455
    %v584 = vmul.f32 %v458, %v458
    %v585 = vmul.f32 %v463, %v463
    %v586 = vmul.f32 %v466, %v466
    %v587 = vmul.f32 %v471, %v471
    %v588 = vmul.f32 %v474, %v474
    %v589 = vmul.f32 %v479, %v479
    %v590 = vmul.f32 %v482, %v482
    %v591 = vmul.f32 %v487, %v487
    %v592 = vmul.f32 %v490, %v490
    %v593 = vmul.f32 %v495, %v495
    %v594 = vmul.f32 %v498, %v498
    %v595 = vmul.f32 %v503, %v503
    %v596 = vmul.f32 %v506, %v506
    %v597 = vmul.f32 %v511, %v511
    %v598 = vmul.f32 %v514, %v514
    %v599 = vmul.f32 %v519, %v519
    %v600 = vmul.f32 %v522, %v522
    %v601 = vmul.f32 %v527, %v527
    %v602 = vmul.f32 %v530, %v530
    %v603 = vmul.f32 %v535, %v535
    %v604 = vmul.f32 %v538, %v538
    %669 = vrot.lane.b32.xlu0 %v541, 4
    %v670 = vpop.permute.xlu0 %669
    %671 = vrot.lane.b32.xlu0 %v542, 4
    %v672 = vpop.permute.xlu0 %671
    %673 = vrot.lane.b32.xlu0 %v543, 4
    %v674 = vpop.permute.xlu0 %673
    %675 = vrot.lane.b32.xlu0 %v544, 4
    %v676 = vpop.permute.xlu0 %675
    %677 = vrot.lane.b32.xlu0 %v545, 4
    %v678 = vpop.permute.xlu0 %677
    %679 = vrot.lane.b32.xlu0 %v546, 4
    %v680 = vpop.permute.xlu0 %679
    %681 = vrot.lane.b32.xlu0 %v547, 4
    %v682 = vpop.permute.xlu0 %681
    %683 = vrot.lane.b32.xlu0 %v548, 4
    %v684 = vpop.permute.xlu0 %683
    %685 = vrot.lane.b32.xlu0 %v549, 4
    %v686 = vpop.permute.xlu0 %685
    %687 = vrot.lane.b32.xlu0 %v550, 4
    %v688 = vpop.permute.xlu0 %687
    %689 = vrot.lane.b32.xlu0 %v551, 4
    %v690 = vpop.permute.xlu0 %689
    %691 = vrot.lane.b32.xlu0 %v552, 4
    %v692 = vpop.permute.xlu0 %691
    %693 = vrot.lane.b32.xlu0 %v553, 4
    %v694 = vpop.permute.xlu0 %693
    %695 = vrot.lane.b32.xlu0 %v554, 4
    %v696 = vpop.permute.xlu0 %695
    %697 = vrot.lane.b32.xlu0 %v555, 4
    %v698 = vpop.permute.xlu0 %697
    %699 = vrot.lane.b32.xlu0 %v556, 4
    %v700 = vpop.permute.xlu0 %699
    %701 = vrot.lane.b32.xlu0 %v557, 4
    %v702 = vpop.permute.xlu0 %701
    %703 = vrot.lane.b32.xlu0 %v558, 4
    %v704 = vpop.permute.xlu0 %703
    %705 = vrot.lane.b32.xlu0 %v559, 4
    %v706 = vpop.permute.xlu0 %705
    %707 = vrot.lane.b32.xlu0 %v560, 4
    %v708 = vpop.permute.xlu0 %707
    %709 = vrot.lane.b32.xlu0 %v561, 4
    %v710 = vpop.permute.xlu0 %709
    %711 = vrot.lane.b32.xlu0 %v562, 4
    %v712 = vpop.permute.xlu0 %711
    %713 = vrot.lane.b32.xlu0 %v563, 4
    %v714 = vpop.permute.xlu0 %713
    %715 = vrot.lane.b32.xlu0 %v564, 4
    %v716 = vpop.permute.xlu0 %715
    %717 = vrot.lane.b32.xlu0 %v565, 4
    %v718 = vpop.permute.xlu0 %717
    %719 = vrot.lane.b32.xlu0 %v566, 4
    %v720 = vpop.permute.xlu0 %719
    %721 = vrot.lane.b32.xlu0 %v567, 4
    %v722 = vpop.permute.xlu0 %721
    %723 = vrot.lane.b32.xlu0 %v568, 4
    %v724 = vpop.permute.xlu0 %723
    %725 = vrot.lane.b32.xlu0 %v569, 4
    %v726 = vpop.permute.xlu0 %725
    %727 = vrot.lane.b32.xlu0 %v570, 4
    %v728 = vpop.permute.xlu0 %727
    %729 = vrot.lane.b32.xlu0 %v571, 4
    %v730 = vpop.permute.xlu0 %729
    %731 = vrot.lane.b32.xlu0 %v572, 4
    %v732 = vpop.permute.xlu0 %731
    %733 = vrot.lane.b32.xlu0 %v573, 4
    %v734 = vpop.permute.xlu0 %733
    %735 = vrot.lane.b32.xlu0 %v574, 4
    %v736 = vpop.permute.xlu0 %735
    %737 = vrot.lane.b32.xlu0 %v575, 4
    %v738 = vpop.permute.xlu0 %737
    %739 = vrot.lane.b32.xlu0 %v576, 4
    %v740 = vpop.permute.xlu0 %739
    %741 = vrot.lane.b32.xlu0 %v577, 4
    %v742 = vpop.permute.xlu0 %741
    %743 = vrot.lane.b32.xlu0 %v578, 4
    %v744 = vpop.permute.xlu0 %743
    %745 = vrot.lane.b32.xlu0 %v579, 4
    %v746 = vpop.permute.xlu0 %745
    %747 = vrot.lane.b32.xlu0 %v580, 4
    %v748 = vpop.permute.xlu0 %747
    %749 = vrot.lane.b32.xlu0 %v581, 4
    %v750 = vpop.permute.xlu0 %749
    %751 = vrot.lane.b32.xlu0 %v582, 4
    %v752 = vpop.permute.xlu0 %751
    %753 = vrot.lane.b32.xlu0 %v583, 4
    %v754 = vpop.permute.xlu0 %753
    %755 = vrot.lane.b32.xlu0 %v584, 4
    %v756 = vpop.permute.xlu0 %755
    %757 = vrot.lane.b32.xlu0 %v585, 4
    %v758 = vpop.permute.xlu0 %757
    %759 = vrot.lane.b32.xlu0 %v586, 4
    %v760 = vpop.permute.xlu0 %759
    %761 = vrot.lane.b32.xlu0 %v587, 4
    %v762 = vpop.permute.xlu0 %761
    %763 = vrot.lane.b32.xlu0 %v588, 4
    %v764 = vpop.permute.xlu0 %763
    %765 = vrot.lane.b32.xlu0 %v589, 4
    %v766 = vpop.permute.xlu0 %765
    %767 = vrot.lane.b32.xlu0 %v590, 4
    %v768 = vpop.permute.xlu0 %767
    %769 = vrot.lane.b32.xlu0 %v591, 4
    %v770 = vpop.permute.xlu0 %769
    %771 = vrot.lane.b32.xlu0 %v592, 4
    %v772 = vpop.permute.xlu0 %771
    %773 = vrot.lane.b32.xlu0 %v593, 4
    %v774 = vpop.permute.xlu0 %773
    %775 = vrot.lane.b32.xlu0 %v594, 4
    %v776 = vpop.permute.xlu0 %775
    %777 = vrot.lane.b32.xlu0 %v595, 4
    %v778 = vpop.permute.xlu0 %777
    %779 = vrot.lane.b32.xlu0 %v596, 4
    %v780 = vpop.permute.xlu0 %779
    %781 = vrot.lane.b32.xlu0 %v597, 4
    %v782 = vpop.permute.xlu0 %781
    %783 = vrot.lane.b32.xlu0 %v598, 4
    %v784 = vpop.permute.xlu0 %783
    %785 = vrot.lane.b32.xlu0 %v599, 4
    %v786 = vpop.permute.xlu0 %785
    %787 = vrot.lane.b32.xlu0 %v600, 4
    %v788 = vpop.permute.xlu0 %787
    %789 = vrot.lane.b32.xlu0 %v601, 4
    %v790 = vpop.permute.xlu0 %789
    %791 = vrot.lane.b32.xlu0 %v602, 4
    %v792 = vpop.permute.xlu0 %791
    %793 = vrot.lane.b32.xlu0 %v603, 4
    %v794 = vpop.permute.xlu0 %793
    %795 = vrot.lane.b32.xlu0 %v604, 4
    %v796 = vpop.permute.xlu0 %795
    %vm861 = vcmask 31744
    %v862 = vsel %vm861, %v287, %v670
    %v863 = vsel %vm861, %v290, %v672
    %v864 = vsel %vm861, %v295, %v674
    %v865 = vsel %vm861, %v298, %v676
    %v866 = vsel %vm861, %v303, %v678
    %v867 = vsel %vm861, %v306, %v680
    %v868 = vsel %vm861, %v311, %v682
    %v869 = vsel %vm861, %v314, %v684
    %v870 = vsel %vm861, %v319, %v686
    %v871 = vsel %vm861, %v322, %v688
    %v872 = vsel %vm861, %v327, %v690
    %v873 = vsel %vm861, %v330, %v692
    %v874 = vsel %vm861, %v335, %v694
    %v875 = vsel %vm861, %v338, %v696
    %v876 = vsel %vm861, %v343, %v698
    %v877 = vsel %vm861, %v346, %v700
    %v878 = vsel %vm861, %v351, %v702
    %v879 = vsel %vm861, %v354, %v704
    %v880 = vsel %vm861, %v359, %v706
    %v881 = vsel %vm861, %v362, %v708
    %v882 = vsel %vm861, %v367, %v710
    %v883 = vsel %vm861, %v370, %v712
    %v884 = vsel %vm861, %v375, %v714
    %v885 = vsel %vm861, %v378, %v716
    %v886 = vsel %vm861, %v383, %v718
    %v887 = vsel %vm861, %v386, %v720
    %v888 = vsel %vm861, %v391, %v722
    %v889 = vsel %vm861, %v394, %v724
    %v890 = vsel %vm861, %v399, %v726
    %v891 = vsel %vm861, %v402, %v728
    %v892 = vsel %vm861, %v407, %v730
    %v893 = vsel %vm861, %v410, %v732
    %v894 = vsel %vm861, %v415, %v734
    %v895 = vsel %vm861, %v418, %v736
    %v896 = vsel %vm861, %v423, %v738
    %v897 = vsel %vm861, %v426, %v740
    %v898 = vsel %vm861, %v431, %v742
    %v899 = vsel %vm861, %v434, %v744
    %v900 = vsel %vm861, %v439, %v746
    %v901 = vsel %vm861, %v442, %v748
    %v902 = vsel %vm861, %v447, %v750
    %v903 = vsel %vm861, %v450, %v752
    %v904 = vsel %vm861, %v455, %v754
    %v905 = vsel %vm861, %v458, %v756
    %v906 = vsel %vm861, %v463, %v758
    %v907 = vsel %vm861, %v466, %v760
    %v908 = vsel %vm861, %v471, %v762
    %v909 = vsel %vm861, %v474, %v764
    %v910 = vsel %vm861, %v479, %v766
    %v911 = vsel %vm861, %v482, %v768
    %v912 = vsel %vm861, %v487, %v770
    %v913 = vsel %vm861, %v490, %v772
    %v914 = vsel %vm861, %v495, %v774
    %v915 = vsel %vm861, %v498, %v776
    %v916 = vsel %vm861, %v503, %v778
    %v917 = vsel %vm861, %v506, %v780
    %v918 = vsel %vm861, %v511, %v782
    %v919 = vsel %vm861, %v514, %v784
    %v920 = vsel %vm861, %v519, %v786
    %v921 = vsel %vm861, %v522, %v788
    %v922 = vsel %vm861, %v527, %v790
    %v923 = vsel %vm861, %v530, %v792
    %v924 = vsel %vm861, %v535, %v794
    %v925 = vsel %vm861, %v538, %v796
    %926 = vmatprep.subr.mxu0 0.0
    %927 = vmatpush1.msra.mxu0 %v862
    %928 = vmatprep.subr.mxu0 0.0
    %929 = vmatpush1.msra.mxu0 %v863
    %930 = vmatprep.subr.mxu0 0.0
    %931 = vmatpush1.msra.mxu0 %v864
    %932 = vmatprep.subr.mxu0 0.0
    %933 = vmatpush1.msra.mxu0 %v865
    %934 = vmatprep.subr.mxu0 0.0
    %935 = vmatpush1.msra.mxu0 %v866
    %936 = vmatprep.subr.mxu0 0.0
    %937 = vmatpush1.msra.mxu0 %v867
    %938 = vmatprep.subr.mxu0 0.0
    %939 = vmatpush1.msra.mxu0 %v868
    %940 = vmatprep.subr.mxu0 0.0
    %941 = vmatpush1.msra.mxu0 %v869
    %942 = vmatprep.subr.mxu0 0.0
    %943 = vmatpush1.msra.mxu0 %v870
    %944 = vmatprep.subr.mxu0 0.0
    %945 = vmatpush1.msra.mxu0 %v871
    %946 = vmatprep.subr.mxu0 0.0
    %947 = vmatpush1.msra.mxu0 %v872
    %948 = vmatprep.subr.mxu0 0.0
    %949 = vmatpush1.msra.mxu0 %v873
    %950 = vmatprep.subr.mxu0 0.0
    %951 = vmatpush1.msra.mxu0 %v874
    %952 = vmatprep.subr.mxu0 0.0
    %953 = vmatpush1.msra.mxu0 %v875
    %954 = vmatprep.subr.mxu0 0.0
    %955 = vmatpush1.msra.mxu0 %v876
    %956 = vmatprep.subr.mxu0 0.0
    %957 = vmatpush1.msra.mxu0 %v877
    %958 = vmatprep.subr.mxu0 0.0
    %959 = vmatpush1.msra.mxu0 %v878
    %960 = vmatprep.subr.mxu0 0.0
    %961 = vmatpush1.msra.mxu0 %v879
    %962 = vmatprep.subr.mxu0 0.0
    %963 = vmatpush1.msra.mxu0 %v880
    %964 = vmatprep.subr.mxu0 0.0
    %965 = vmatpush1.msra.mxu0 %v881
    %966 = vmatprep.subr.mxu0 0.0
    %967 = vmatpush1.msra.mxu0 %v882
    %968 = vmatprep.subr.mxu0 0.0
    %969 = vmatpush1.msra.mxu0 %v883
    %970 = vmatprep.subr.mxu0 0.0
    %971 = vmatpush1.msra.mxu0 %v884
    %972 = vmatprep.subr.mxu0 0.0
    %973 = vmatpush1.msra.mxu0 %v885
    %974 = vmatprep.subr.mxu0 0.0
    %975 = vmatpush1.msra.mxu0 %v886
    %976 = vmatprep.subr.mxu0 0.0
    %977 = vmatpush1.msra.mxu0 %v887
    %978 = vmatprep.subr.mxu0 0.0
    %979 = vmatpush1.msra.mxu0 %v888
    %980 = vmatprep.subr.mxu0 0.0
    %981 = vmatpush1.msra.mxu0 %v889
    %982 = vmatprep.subr.mxu0 0.0
    %983 = vmatpush1.msra.mxu0 %v890
    %984 = vmatprep.subr.mxu0 0.0
    %985 = vmatpush1.msra.mxu0 %v891
    %986 = vmatprep.subr.mxu0 0.0
    %987 = vmatpush1.msra.mxu0 %v892
    %988 = vmatprep.subr.mxu0 0.0
    %989 = vmatpush1.msra.mxu0 %v893
    %990 = vmatprep.mubr.f32.mxu0 1.0
    %991 = vmatmul.mubr.f32.gmra.mrb[0].mxu0 1.0
    %v992 = vpop.f32.mrb[0].mxu0
    %v993 = vadd.f32 0.0, %v992
    %v994 = vpop.f32.mrb[0].mxu0
    %995 = vdwg.mxu0
    %996 = vmatprep.subr.mxu0 0.0
    %997 = vmatpush1.msra.mxu0 %v894
    %998 = vmatprep.subr.mxu0 0.0
    %999 = vmatpush1.msra.mxu0 %v895
    %1000 = vmatprep.subr.mxu0 0.0
    %1001 = vmatpush1.msra.mxu0 %v896
    %1002 = vmatprep.subr.mxu0 0.0
    %1003 = vmatpush1.msra.mxu0 %v897
    %1004 = vmatprep.subr.mxu0 0.0
    %1005 = vmatpush1.msra.mxu0 %v898
    %1006 = vmatprep.subr.mxu0 0.0
    %1007 = vmatpush1.msra.mxu0 %v899
    %1008 = vmatprep.subr.mxu0 0.0
    %1009 = vmatpush1.msra.mxu0 %v900
    %1010 = vmatprep.subr.mxu0 0.0
    %1011 = vmatpush1.msra.mxu0 %v901
    %1012 = vmatprep.subr.mxu0 0.0
    %1013 = vmatpush1.msra.mxu0 %v902
    %1014 = vmatprep.subr.mxu0 0.0
    %1015 = vmatpush1.msra.mxu0 %v903
    %1016 = vmatprep.subr.mxu0 0.0
    %1017 = vmatpush1.msra.mxu0 %v904
    %1018 = vmatprep.subr.mxu0 0.0
    %1019 = vmatpush1.msra.mxu0 %v905
    %1020 = vmatprep.subr.mxu0 0.0
    %1021 = vmatpush1.msra.mxu0 %v906
    %1022 = vmatprep.subr.mxu0 0.0
    %1023 = vmatpush1.msra.mxu0 %v907
    %1024 = vmatprep.subr.mxu0 0.0
    %1025 = vmatpush1.msra.mxu0 %v908
    %1026 = vmatprep.subr.mxu0 0.0
    %1027 = vmatpush1.msra.mxu0 %v909
    %1028 = vmatprep.subr.mxu0 0.0
    %1029 = vmatpush1.msra.mxu0 %v910
    %1030 = vmatprep.subr.mxu0 0.0
    %1031 = vmatpush1.msra.mxu0 %v911
    %1032 = vmatprep.subr.mxu0 0.0
    %1033 = vmatpush1.msra.mxu0 %v912
    %1034 = vmatprep.subr.mxu0 0.0
    %1035 = vmatpush1.msra.mxu0 %v913
    %1036 = vmatprep.subr.mxu0 0.0
    %1037 = vmatpush1.msra.mxu0 %v914
    %1038 = vmatprep.subr.mxu0 0.0
    %1039 = vmatpush1.msra.mxu0 %v915
    %1040 = vmatprep.subr.mxu0 0.0
    %1041 = vmatpush1.msra.mxu0 %v916
    %1042 = vmatprep.subr.mxu0 0.0
    %1043 = vmatpush1.msra.mxu0 %v917
    %1044 = vmatprep.subr.mxu0 0.0
    %1045 = vmatpush1.msra.mxu0 %v918
    %1046 = vmatprep.subr.mxu0 0.0
    %1047 = vmatpush1.msra.mxu0 %v919
    %1048 = vmatprep.subr.mxu0 0.0
    %1049 = vmatpush1.msra.mxu0 %v920
    %1050 = vmatprep.subr.mxu0 0.0
    %1051 = vmatpush1.msra.mxu0 %v921
    %1052 = vmatprep.subr.mxu0 0.0
    %1053 = vmatpush1.msra.mxu0 %v922
    %1054 = vmatprep.subr.mxu0 0.0
    %1055 = vmatpush1.msra.mxu0 %v923
    %1056 = vmatprep.subr.mxu0 0.0
    %1057 = vmatpush1.msra.mxu0 %v924
    %1058 = vmatprep.subr.mxu0 0.0
    %1059 = vmatpush1.msra.mxu0 %v925
    %1060 = vmatprep.mubr.f32.mxu0 1.0
    %1061 = vmatmul.mubr.f32.gmra.mrb[0].mxu0 1.0
    %v1062 = vpop.f32.mrb[0].mxu0
    %v1063 = vadd.f32 %v993, %v1062
    %v1064 = vpop.f32.mrb[0].mxu0
    %1065 = vdwg.mxu0
    %v1066 = vmul.f32 %v1063, 0.001953125
    %v1067 = vmul.f32 %v1066, %v1066
    %1069 = vrot.lane.b32.xlu0 %v1067, 4
    %v1070 = vpop.permute.xlu0 %1069
    %v1072 = vsub.f32 %v1066, %v1070
    %v1073 = vmax.f32 %v1072, 0.0
    %v1074 = vld [vmem:[%s2] sm:$0x1]
    %v1075 = vadd.f32 %v1073, 1e-05
    %v1076 = vrsqrt.pop %v1075
    %v1079 = vunpack.c.l.s4 1966171168
    %v1080 = vunpack.c.0.s8 %v1079
    %v1081 = vlaneseq
    %v1082 = vshrl.u32 %v1081, 7
    %v1083 = vsub.s32 %v1080, %v1082
    %v1084 = vrot.slane %v1076, %v1083
    %v1086 = vunpack.c.l.s4 1966171168
    %v1087 = vunpack.c.0.s8 %v1086
    %v1088 = vlaneseq
    %v1089 = vshrl.u32 %v1088, 7
    %v1090 = vsub.s32 %v1087, %v1089
    %v1091 = vrot.slane %v1084, %v1090
    %1092 = vrot.lane.b32.xlu0 %v1091, 124
    %v1093 = vpop.permute.xlu0 %1092
    %v1095 = vmul.f32 %v1074, %v1093
    %v1096 = vld [vmem:[%s3] sm:$0x1]
    %v1097 = vmul.f32 %v1066, %v1095
    %v1098 = vsub.f32 %v1096, %v1097
    %v1100 = vlaneseq
    %v1101 = vshrl.u32 %v1100, 7
    %v1102 = vsub.s32 0, %v1101
    %v1103 = vrot.slane %v1095, %v1102
    %v1105 = vmul.f32 %v287, %v1103
    %v1106 = vmul.f32 %v290, %v1103
    %v1107 = vmul.f32 %v295, %v1103
    %v1108 = vmul.f32 %v298, %v1103
    %v1109 = vmul.f32 %v303, %v1103
    %v1110 = vmul.f32 %v306, %v1103
    %v1111 = vmul.f32 %v311, %v1103
    %v1112 = vmul.f32 %v314, %v1103
    %v1113 = vmul.f32 %v319, %v1103
    %v1114 = vmul.f32 %v322, %v1103
    %v1115 = vmul.f32 %v327, %v1103
    %v1116 = vmul.f32 %v330, %v1103
    %v1117 = vmul.f32 %v335, %v1103
    %v1118 = vmul.f32 %v338, %v1103
    %v1119 = vmul.f32 %v343, %v1103
    %v1120 = vmul.f32 %v346, %v1103
    %v1121 = vmul.f32 %v351, %v1103
    %v1122 = vmul.f32 %v354, %v1103
    %v1123 = vmul.f32 %v359, %v1103
    %v1124 = vmul.f32 %v362, %v1103
    %v1125 = vmul.f32 %v367, %v1103
    %v1126 = vmul.f32 %v370, %v1103
    %v1127 = vmul.f32 %v375, %v1103
    %v1128 = vmul.f32 %v378, %v1103
    %v1129 = vmul.f32 %v383, %v1103
    %v1130 = vmul.f32 %v386, %v1103
    %v1131 = vmul.f32 %v391, %v1103
    %v1132 = vmul.f32 %v394, %v1103
    %v1133 = vmul.f32 %v399, %v1103
    %v1134 = vmul.f32 %v402, %v1103
    %v1135 = vmul.f32 %v407, %v1103
    %v1136 = vmul.f32 %v410, %v1103
    %v1137 = vmul.f32 %v415, %v1103
    %v1138 = vmul.f32 %v418, %v1103
    %v1139 = vmul.f32 %v423, %v1103
    %v1140 = vmul.f32 %v426, %v1103
    %v1141 = vmul.f32 %v431, %v1103
    %v1142 = vmul.f32 %v434, %v1103
    %v1143 = vmul.f32 %v439, %v1103
    %v1144 = vmul.f32 %v442, %v1103
    %v1145 = vmul.f32 %v447, %v1103
    %v1146 = vmul.f32 %v450, %v1103
    %v1147 = vmul.f32 %v455, %v1103
    %v1148 = vmul.f32 %v458, %v1103
    %v1149 = vmul.f32 %v463, %v1103
    %v1150 = vmul.f32 %v466, %v1103
    %v1151 = vmul.f32 %v471, %v1103
    %v1152 = vmul.f32 %v474, %v1103
    %v1153 = vmul.f32 %v479, %v1103
    %v1154 = vmul.f32 %v482, %v1103
    %v1155 = vmul.f32 %v487, %v1103
    %v1156 = vmul.f32 %v490, %v1103
    %v1157 = vmul.f32 %v495, %v1103
    %v1158 = vmul.f32 %v498, %v1103
    %v1159 = vmul.f32 %v503, %v1103
    %v1160 = vmul.f32 %v506, %v1103
    %v1161 = vmul.f32 %v511, %v1103
    %v1162 = vmul.f32 %v514, %v1103
    %v1163 = vmul.f32 %v519, %v1103
    %v1164 = vmul.f32 %v522, %v1103
    %v1165 = vmul.f32 %v527, %v1103
    %v1166 = vmul.f32 %v530, %v1103
    %v1167 = vmul.f32 %v535, %v1103
    %v1168 = vmul.f32 %v538, %v1103
    %v1170 = vlaneseq
    %v1171 = vshrl.u32 %v1170, 7
    %v1172 = vsub.s32 0, %v1171
    %v1173 = vrot.slane %v1098, %v1172
    %v1175 = vadd.f32 %v1105, %v1173
    %v1176 = vadd.f32 %v1106, %v1173
    %v1177 = vadd.f32 %v1107, %v1173
    %v1178 = vadd.f32 %v1108, %v1173
    %v1179 = vadd.f32 %v1109, %v1173
    %v1180 = vadd.f32 %v1110, %v1173
    %v1181 = vadd.f32 %v1111, %v1173
    %v1182 = vadd.f32 %v1112, %v1173
    %v1183 = vadd.f32 %v1113, %v1173
    %v1184 = vadd.f32 %v1114, %v1173
    %v1185 = vadd.f32 %v1115, %v1173
    %v1186 = vadd.f32 %v1116, %v1173
    %v1187 = vadd.f32 %v1117, %v1173
    %v1188 = vadd.f32 %v1118, %v1173
    %v1189 = vadd.f32 %v1119, %v1173
    %v1190 = vadd.f32 %v1120, %v1173
    %v1191 = vadd.f32 %v1121, %v1173
    %v1192 = vadd.f32 %v1122, %v1173
    %v1193 = vadd.f32 %v1123, %v1173
    %v1194 = vadd.f32 %v1124, %v1173
    %v1195 = vadd.f32 %v1125, %v1173
    %v1196 = vadd.f32 %v1126, %v1173
    %v1197 = vadd.f32 %v1127, %v1173
    %v1198 = vadd.f32 %v1128, %v1173
    %v1199 = vadd.f32 %v1129, %v1173
    %v1200 = vadd.f32 %v1130, %v1173
    %v1201 = vadd.f32 %v1131, %v1173
    %v1202 = vadd.f32 %v1132, %v1173
    %v1203 = vadd.f32 %v1133, %v1173
    %v1204 = vadd.f32 %v1134, %v1173
    %v1205 = vadd.f32 %v1135, %v1173
    %v1206 = vadd.f32 %v1136, %v1173
    %v1207 = vadd.f32 %v1137, %v1173
    %v1208 = vadd.f32 %v1138, %v1173
    %v1209 = vadd.f32 %v1139, %v1173
    %v1210 = vadd.f32 %v1140, %v1173
    %v1211 = vadd.f32 %v1141, %v1173
    %v1212 = vadd.f32 %v1142, %v1173
    %v1213 = vadd.f32 %v1143, %v1173
    %v1214 = vadd.f32 %v1144, %v1173
    %v1215 = vadd.f32 %v1145, %v1173
    %v1216 = vadd.f32 %v1146, %v1173
    %v1217 = vadd.f32 %v1147, %v1173
    %v1218 = vadd.f32 %v1148, %v1173
    %v1219 = vadd.f32 %v1149, %v1173
    %v1220 = vadd.f32 %v1150, %v1173
    %v1221 = vadd.f32 %v1151, %v1173
    %v1222 = vadd.f32 %v1152, %v1173
    %v1223 = vadd.f32 %v1153, %v1173
    %v1224 = vadd.f32 %v1154, %v1173
    %v1225 = vadd.f32 %v1155, %v1173
    %v1226 = vadd.f32 %v1156, %v1173
    %v1227 = vadd.f32 %v1157, %v1173
    %v1228 = vadd.f32 %v1158, %v1173
    %v1229 = vadd.f32 %v1159, %v1173
    %v1230 = vadd.f32 %v1160, %v1173
    %v1231 = vadd.f32 %v1161, %v1173
    %v1232 = vadd.f32 %v1162, %v1173
    %v1233 = vadd.f32 %v1163, %v1173
    %v1234 = vadd.f32 %v1164, %v1173
    %v1235 = vadd.f32 %v1165, %v1173
    %v1236 = vadd.f32 %v1166, %v1173
    %v1237 = vadd.f32 %v1167, %v1173
    %v1238 = vadd.f32 %v1168, %v1173
    %v1239 = vmax.f32 %v1175, 0.0
    %v1240 = vmax.f32 %v1176, 0.0
    %v1241 = vmax.f32 %v1177, 0.0
    %v1242 = vmax.f32 %v1178, 0.0
    %v1243 = vmax.f32 %v1179, 0.0
    %v1244 = vmax.f32 %v1180, 0.0
    %v1245 = vmax.f32 %v1181, 0.0
    %v1246 = vmax.f32 %v1182, 0.0
    %v1247 = vmax.f32 %v1183, 0.0
    %v1248 = vmax.f32 %v1184, 0.0
    %v1249 = vmax.f32 %v1185, 0.0
    %v1250 = vmax.f32 %v1186, 0.0
    %v1251 = vmax.f32 %v1187, 0.0
    %v1252 = vmax.f32 %v1188, 0.0
    %v1253 = vmax.f32 %v1189, 0.0
    %v1254 = vmax.f32 %v1190, 0.0
    %v1255 = vmax.f32 %v1191, 0.0
    %v1256 = vmax.f32 %v1192, 0.0
    %v1257 = vmax.f32 %v1193, 0.0
    %v1258 = vmax.f32 %v1194, 0.0
    %v1259 = vmax.f32 %v1195, 0.0
    %v1260 = vmax.f32 %v1196, 0.0
    %v1261 = vmax.f32 %v1197, 0.0
    %v1262 = vmax.f32 %v1198, 0.0
    %v1263 = vmax.f32 %v1199, 0.0
    %v1264 = vmax.f32 %v1200, 0.0
    %v1265 = vmax.f32 %v1201, 0.0
    %v1266 = vmax.f32 %v1202, 0.0
    %v1267 = vmax.f32 %v1203, 0.0
    %v1268 = vmax.f32 %v1204, 0.0
    %v1269 = vmax.f32 %v1205, 0.0
    %v1270 = vmax.f32 %v1206, 0.0
    %v1271 = vmax.f32 %v1207, 0.0
    %v1272 = vmax.f32 %v1208, 0.0
    %v1273 = vmax.f32 %v1209, 0.0
    %v1274 = vmax.f32 %v1210, 0.0
    %v1275 = vmax.f32 %v1211, 0.0
    %v1276 = vmax.f32 %v1212, 0.0
    %v1277 = vmax.f32 %v1213, 0.0
    %v1278 = vmax.f32 %v1214, 0.0
    %v1279 = vmax.f32 %v1215, 0.0
    %v1280 = vmax.f32 %v1216, 0.0
    %v1281 = vmax.f32 %v1217, 0.0
    %v1282 = vmax.f32 %v1218, 0.0
    %v1283 = vmax.f32 %v1219, 0.0
    %v1284 = vmax.f32 %v1220, 0.0
    %v1285 = vmax.f32 %v1221, 0.0
    %v1286 = vmax.f32 %v1222, 0.0
    %v1287 = vmax.f32 %v1223, 0.0
    %v1288 = vmax.f32 %v1224, 0.0
    %v1289 = vmax.f32 %v1225, 0.0
    %v1290 = vmax.f32 %v1226, 0.0
    %v1291 = vmax.f32 %v1227, 0.0
    %v1292 = vmax.f32 %v1228, 0.0
    %v1293 = vmax.f32 %v1229, 0.0
    %v1294 = vmax.f32 %v1230, 0.0
    %v1295 = vmax.f32 %v1231, 0.0
    %v1296 = vmax.f32 %v1232, 0.0
    %v1297 = vmax.f32 %v1233, 0.0
    %v1298 = vmax.f32 %v1234, 0.0
    %v1299 = vmax.f32 %v1235, 0.0
    %v1300 = vmax.f32 %v1236, 0.0
    %v1301 = vmax.f32 %v1237, 0.0
    %v1302 = vmax.f32 %v1238, 0.0
    %1303 = vst.msk [vmem:[#allocation2] sm:$0xff] %vm861, 0.0
    %1304 = vst.msk [vmem:[#allocation2 + $0x8] sm:$0xff] %vm861, 0.0
    %vm1305 = vcmask 25600
    %1306 = vst.msk [vmem:[#allocation2 + $0x10] sm:$0x3] %vm1305, 0.0
    %1307 = vst.msk [vmem:[#allocation2 + $0x1b0] sm:$0xff] %vm861, 0.0
    %1308 = vst.msk [vmem:[#allocation2 + $0x1b8] sm:$0xff] %vm861, 0.0
    %1309 = vst.msk [vmem:[#allocation2 + $0x1c0] sm:$0x3] %vm1305, 0.0
    %s1310 = scalar_lea.vmem [#allocation2], 408
    %1311 = vst.msk [vmem:[%s1310] sm:$0xff] %vm861, 0.0
    %1312 = vst.msk [vmem:[%s1310 + $0x8] sm:$0xff] %vm861, 0.0
    %1313 = vst.msk [vmem:[%s1310 + $0x10] sm:$0x3] %vm1305, 0.0
    %1314 = vst.msk [vmem:[%s1310 + $0x1b0] sm:$0xff] %vm861, 0.0
    %1315 = vst.msk [vmem:[%s1310 + $0x1b8] sm:$0xff] %vm861, 0.0
    %1316 = vst.msk [vmem:[%s1310 + $0x1c0] sm:$0x3] %vm1305, 0.0
    %vm1317 = vcmask 24576
    %1318 = vst.msk [vmem:[#allocation2] sm:$0x1] %vm1317, 0.0
    %1319 = vst.msk [vmem:[#allocation2 + $0x18] sm:$0x1] %vm1317, 0.0
    %1320 = vst.msk [vmem:[#allocation2 + $0x30] sm:$0x1] %vm1317, 0.0
    %1321 = vst.msk [vmem:[#allocation2 + $0x48] sm:$0x1] %vm1317, 0.0
    %1322 = vst.msk [vmem:[#allocation2 + $0x60] sm:$0x1] %vm1317, 0.0
    %1323 = vst.msk [vmem:[#allocation2 + $0x78] sm:$0x1] %vm1317, 0.0
    %1324 = vst.msk [vmem:[#allocation2 + $0x90] sm:$0x1] %vm1317, 0.0
    %1325 = vst.msk [vmem:[#allocation2 + $0xa8] sm:$0x1] %vm1317, 0.0
    %1326 = vst.msk [vmem:[#allocation2 + $0xc0] sm:$0x1] %vm1317, 0.0
    %1327 = vst.msk [vmem:[#allocation2 + $0xd8] sm:$0x1] %vm1317, 0.0
    %1328 = vst.msk [vmem:[#allocation2 + $0xf0] sm:$0x1] %vm1317, 0.0
    %1329 = vst.msk [vmem:[#allocation2 + $0x108] sm:$0x1] %vm1317, 0.0
    %1330 = vst.msk [vmem:[#allocation2 + $0x120] sm:$0x1] %vm1317, 0.0
    %1331 = vst.msk [vmem:[#allocation2 + $0x138] sm:$0x1] %vm1317, 0.0
    %1332 = vst.msk [vmem:[#allocation2 + $0x150] sm:$0x1] %vm1317, 0.0
    %1333 = vst.msk [vmem:[#allocation2 + $0x168] sm:$0x1] %vm1317, 0.0
    %1334 = vst.msk [vmem:[#allocation2 + $0x180] sm:$0x1] %vm1317, 0.0
    %1335 = vst.msk [vmem:[#allocation2 + $0x198] sm:$0x1] %vm1317, 0.0
    %1336 = vst.msk [vmem:[#allocation2 + $0x1b0] sm:$0x1] %vm1317, 0.0
    %1337 = vst.msk [vmem:[#allocation2 + $0x1c8] sm:$0x1] %vm1317, 0.0
    %1338 = vst.msk [vmem:[#allocation2 + $0x1e0] sm:$0x1] %vm1317, 0.0
    %1339 = vst.msk [vmem:[#allocation2 + $0x1f8] sm:$0x1] %vm1317, 0.0
    %1340 = vst.msk [vmem:[#allocation2 + $0x210] sm:$0x1] %vm1317, 0.0
    %1341 = vst.msk [vmem:[#allocation2 + $0x228] sm:$0x1] %vm1317, 0.0
    %1342 = vst.msk [vmem:[#allocation2 + $0x240] sm:$0x1] %vm1317, 0.0
    %1343 = vst.msk [vmem:[#allocation2 + $0x258] sm:$0x1] %vm1317, 0.0
    %1344 = vst.msk [vmem:[#allocation2 + $0x270] sm:$0x1] %vm1317, 0.0
    %1345 = vst.msk [vmem:[#allocation2 + $0x288] sm:$0x1] %vm1317, 0.0
    %1346 = vst.msk [vmem:[#allocation2 + $0x2a0] sm:$0x1] %vm1317, 0.0
    %1347 = vst.msk [vmem:[#allocation2 + $0x2b8] sm:$0x1] %vm1317, 0.0
    %1348 = vst.msk [vmem:[#allocation2 + $0x2d0] sm:$0x1] %vm1317, 0.0
    %1349 = vst.msk [vmem:[#allocation2 + $0x2e8] sm:$0x1] %vm1317, 0.0
    %1350 = vst.msk [vmem:[#allocation2 + $0x300] sm:$0x1] %vm1317, 0.0
    %1351 = vst.msk [vmem:[#allocation2 + $0x318] sm:$0x1] %vm1317, 0.0
    %1352 = vst.msk [vmem:[#allocation2 + $0x330] sm:$0x1] %vm1317, 0.0
    %1353 = vst.msk [vmem:[#allocation2 + $0x348] sm:$0x1] %vm1317, 0.0
    %1354 = vst.msk [vmem:[#allocation2 + $0x11] sm:$0x1] %vm1317, 0.0
    %1355 = vst.msk [vmem:[#allocation2 + $0x29] sm:$0x1] %vm1317, 0.0
    %1356 = vst.msk [vmem:[#allocation2 + $0x41] sm:$0x1] %vm1317, 0.0
    %1357 = vst.msk [vmem:[#allocation2 + $0x59] sm:$0x1] %vm1317, 0.0
    %1358 = vst.msk [vmem:[#allocation2 + $0x71] sm:$0x1] %vm1317, 0.0
    %1359 = vst.msk [vmem:[#allocation2 + $0x89] sm:$0x1] %vm1317, 0.0
    %1360 = vst.msk [vmem:[#allocation2 + $0xa1] sm:$0x1] %vm1317, 0.0
    %1361 = vst.msk [vmem:[#allocation2 + $0xb9] sm:$0x1] %vm1317, 0.0
    %1362 = vst.msk [vmem:[#allocation2 + $0xd1] sm:$0x1] %vm1317, 0.0
    %1363 = vst.msk [vmem:[#allocation2 + $0xe9] sm:$0x1] %vm1317, 0.0
    %1364 = vst.msk [vmem:[#allocation2 + $0x101] sm:$0x1] %vm1317, 0.0
    %1365 = vst.msk [vmem:[#allocation2 + $0x119] sm:$0x1] %vm1317, 0.0
    %1366 = vst.msk [vmem:[#allocation2 + $0x131] sm:$0x1] %vm1317, 0.0
    %1367 = vst.msk [vmem:[#allocation2 + $0x149] sm:$0x1] %vm1317, 0.0
    %1368 = vst.msk [vmem:[#allocation2 + $0x161] sm:$0x1] %vm1317, 0.0
    %1369 = vst.msk [vmem:[#allocation2 + $0x179] sm:$0x1] %vm1317, 0.0
    %1370 = vst.msk [vmem:[#allocation2 + $0x191] sm:$0x1] %vm1317, 0.0
    %1371 = vst.msk [vmem:[#allocation2 + $0x1a9] sm:$0x1] %vm1317, 0.0
    %1372 = vst.msk [vmem:[#allocation2 + $0x1c1] sm:$0x1] %vm1317, 0.0
    %1373 = vst.msk [vmem:[#allocation2 + $0x1d9] sm:$0x1] %vm1317, 0.0
    %1374 = vst.msk [vmem:[#allocation2 + $0x1f1] sm:$0x1] %vm1317, 0.0
    %1375 = vst.msk [vmem:[#allocation2 + $0x209] sm:$0x1] %vm1317, 0.0
    %1376 = vst.msk [vmem:[#allocation2 + $0x221] sm:$0x1] %vm1317, 0.0
    %1377 = vst.msk [vmem:[#allocation2 + $0x239] sm:$0x1] %vm1317, 0.0
    %1378 = vst.msk [vmem:[#allocation2 + $0x251] sm:$0x1] %vm1317, 0.0
    %1379 = vst.msk [vmem:[#allocation2 + $0x269] sm:$0x1] %vm1317, 0.0
    %1380 = vst.msk [vmem:[#allocation2 + $0x281] sm:$0x1] %vm1317, 0.0
    %1381 = vst.msk [vmem:[#allocation2 + $0x299] sm:$0x1] %vm1317, 0.0
    %1382 = vst.msk [vmem:[#allocation2 + $0x2b1] sm:$0x1] %vm1317, 0.0
    %1383 = vst.msk [vmem:[#allocation2 + $0x2c9] sm:$0x1] %vm1317, 0.0
    %1384 = vst.msk [vmem:[#allocation2 + $0x2e1] sm:$0x1] %vm1317, 0.0
    %1385 = vst.msk [vmem:[#allocation2 + $0x2f9] sm:$0x1] %vm1317, 0.0
    %1386 = vst.msk [vmem:[#allocation2 + $0x311] sm:$0x1] %vm1317, 0.0
    %1387 = vst.msk [vmem:[#allocation2 + $0x329] sm:$0x1] %vm1317, 0.0
    %1388 = vst.msk [vmem:[#allocation2 + $0x341] sm:$0x1] %vm1317, 0.0
    %1389 = vst.msk [vmem:[#allocation2 + $0x359] sm:$0x1] %vm1317, 0.0
    %s1390 = scalar_lea.vmem [#allocation2], 24
    %1391 = vst.msk [vmem:[%s1390 + $0x1] sm:$0xff] %vm861, %v1239
    %1392 = vst.msk [vmem:[%s1390 + $0x9] sm:$0xff] %vm861, %v1240
    %1393 = vst.msk [vmem:[%s1390 + $0x19] sm:$0xff] %vm861, %v1241
    %1394 = vst.msk [vmem:[%s1390 + $0x21] sm:$0xff] %vm861, %v1242
    %1395 = vst.msk [vmem:[%s1390 + $0x31] sm:$0xff] %vm861, %v1243
    %1396 = vst.msk [vmem:[%s1390 + $0x39] sm:$0xff] %vm861, %v1244
    %1397 = vst.msk [vmem:[%s1390 + $0x49] sm:$0xff] %vm861, %v1245
    %1398 = vst.msk [vmem:[%s1390 + $0x51] sm:$0xff] %vm861, %v1246
    %1399 = vst.msk [vmem:[%s1390 + $0x61] sm:$0xff] %vm861, %v1247
    %1400 = vst.msk [vmem:[%s1390 + $0x69] sm:$0xff] %vm861, %v1248
    %1401 = vst.msk [vmem:[%s1390 + $0x79] sm:$0xff] %vm861, %v1249
    %1402 = vst.msk [vmem:[%s1390 + $0x81] sm:$0xff] %vm861, %v1250
    %1403 = vst.msk [vmem:[%s1390 + $0x91] sm:$0xff] %vm861, %v1251
    %1404 = vst.msk [vmem:[%s1390 + $0x99] sm:$0xff] %vm861, %v1252
    %1405 = vst.msk [vmem:[%s1390 + $0xa9] sm:$0xff] %vm861, %v1253
    %1406 = vst.msk [vmem:[%s1390 + $0xb1] sm:$0xff] %vm861, %v1254
    %1407 = vst.msk [vmem:[%s1390 + $0xc1] sm:$0xff] %vm861, %v1255
    %1408 = vst.msk [vmem:[%s1390 + $0xc9] sm:$0xff] %vm861, %v1256
    %1409 = vst.msk [vmem:[%s1390 + $0xd9] sm:$0xff] %vm861, %v1257
    %1410 = vst.msk [vmem:[%s1390 + $0xe1] sm:$0xff] %vm861, %v1258
    %1411 = vst.msk [vmem:[%s1390 + $0xf1] sm:$0xff] %vm861, %v1259
    %1412 = vst.msk [vmem:[%s1390 + $0xf9] sm:$0xff] %vm861, %v1260
    %1413 = vst.msk [vmem:[%s1390 + $0x109] sm:$0xff] %vm861, %v1261
    %1414 = vst.msk [vmem:[%s1390 + $0x111] sm:$0xff] %vm861, %v1262
    %1415 = vst.msk [vmem:[%s1390 + $0x121] sm:$0xff] %vm861, %v1263
    %1416 = vst.msk [vmem:[%s1390 + $0x129] sm:$0xff] %vm861, %v1264
    %1417 = vst.msk [vmem:[%s1390 + $0x139] sm:$0xff] %vm861, %v1265
    %1418 = vst.msk [vmem:[%s1390 + $0x141] sm:$0xff] %vm861, %v1266
    %1419 = vst.msk [vmem:[%s1390 + $0x151] sm:$0xff] %vm861, %v1267
    %1420 = vst.msk [vmem:[%s1390 + $0x159] sm:$0xff] %vm861, %v1268
    %1421 = vst.msk [vmem:[%s1390 + $0x169] sm:$0xff] %vm861, %v1269
    %1422 = vst.msk [vmem:[%s1390 + $0x171] sm:$0xff] %vm861, %v1270
    %1423 = vst.msk [vmem:[%s1390 + $0x1b1] sm:$0xff] %vm861, %v1271
    %1424 = vst.msk [vmem:[%s1390 + $0x1b9] sm:$0xff] %vm861, %v1272
    %1425 = vst.msk [vmem:[%s1390 + $0x1c9] sm:$0xff] %vm861, %v1273
    %1426 = vst.msk [vmem:[%s1390 + $0x1d1] sm:$0xff] %vm861, %v1274
    %1427 = vst.msk [vmem:[%s1390 + $0x1e1] sm:$0xff] %vm861, %v1275
    %1428 = vst.msk [vmem:[%s1390 + $0x1e9] sm:$0xff] %vm861, %v1276
    %1429 = vst.msk [vmem:[%s1390 + $0x1f9] sm:$0xff] %vm861, %v1277
    %1430 = vst.msk [vmem:[%s1390 + $0x201] sm:$0xff] %vm861, %v1278
    %1431 = vst.msk [vmem:[%s1390 + $0x211] sm:$0xff] %vm861, %v1279
    %1432 = vst.msk [vmem:[%s1390 + $0x219] sm:$0xff] %vm861, %v1280
    %1433 = vst.msk [vmem:[%s1390 + $0x229] sm:$0xff] %vm861, %v1281
    %1434 = vst.msk [vmem:[%s1390 + $0x231] sm:$0xff] %vm861, %v1282
    %1435 = vst.msk [vmem:[%s1390 + $0x241] sm:$0xff] %vm861, %v1283
    %1436 = vst.msk [vmem:[%s1390 + $0x249] sm:$0xff] %vm861, %v1284
    %1437 = vst.msk [vmem:[%s1390 + $0x259] sm:$0xff] %vm861, %v1285
    %1438 = vst.msk [vmem:[%s1390 + $0x261] sm:$0xff] %vm861, %v1286
    %1439 = vst.msk [vmem:[%s1390 + $0x271] sm:$0xff] %vm861, %v1287
    %1440 = vst.msk [vmem:[%s1390 + $0x279] sm:$0xff] %vm861, %v1288
    %1441 = vst.msk [vmem:[%s1390 + $0x289] sm:$0xff] %vm861, %v1289
    %1442 = vst.msk [vmem:[%s1390 + $0x291] sm:$0xff] %vm861, %v1290
    %1443 = vst.msk [vmem:[%s1390 + $0x2a1] sm:$0xff] %vm861, %v1291
    %1444 = vst.msk [vmem:[%s1390 + $0x2a9] sm:$0xff] %vm861, %v1292
    %1445 = vst.msk [vmem:[%s1390 + $0x2b9] sm:$0xff] %vm861, %v1293
    %1446 = vst.msk [vmem:[%s1390 + $0x2c1] sm:$0xff] %vm861, %v1294
    %1447 = vst.msk [vmem:[%s1390 + $0x2d1] sm:$0xff] %vm861, %v1295
    %1448 = vst.msk [vmem:[%s1390 + $0x2d9] sm:$0xff] %vm861, %v1296
    %1449 = vst.msk [vmem:[%s1390 + $0x2e9] sm:$0xff] %vm861, %v1297
    %1450 = vst.msk [vmem:[%s1390 + $0x2f1] sm:$0xff] %vm861, %v1298
    %1451 = vst.msk [vmem:[%s1390 + $0x301] sm:$0xff] %vm861, %v1299
    %1452 = vst.msk [vmem:[%s1390 + $0x309] sm:$0xff] %vm861, %v1300
    %1453 = vst.msk [vmem:[%s1390 + $0x319] sm:$0xff] %vm861, %v1301
    %1454 = vst.msk [vmem:[%s1390 + $0x321] sm:$0xff] %vm861, %v1302
    %v1455 = vld [vmem:[#allocation2] sm:$0xff]
    %v1456 = vld [vmem:[#allocation2 + $0x8] sm:$0xff]
    %v1457 = vld [vmem:[#allocation2 + $0x18] sm:$0xff]
    %v1458 = vld [vmem:[#allocation2 + $0x20] sm:$0xff]
    %v1459 = vld [vmem:[#allocation2 + $0x30] sm:$0xff]
    %v1460 = vld [vmem:[#allocation2 + $0x38] sm:$0xff]
    %v1461 = vld [vmem:[#allocation2 + $0x48] sm:$0xff]
    %v1462 = vld [vmem:[#allocation2 + $0x50] sm:$0xff]
    %v1463 = vld [vmem:[#allocation2 + $0x60] sm:$0xff]
    %v1464 = vld [vmem:[#allocation2 + $0x68] sm:$0xff]
    %v1465 = vld [vmem:[#allocation2 + $0x78] sm:$0xff]
    %v1466 = vld [vmem:[#allocation2 + $0x80] sm:$0xff]
    %v1467 = vld [vmem:[#allocation2 + $0x90] sm:$0xff]
    %v1468 = vld [vmem:[#allocation2 + $0x98] sm:$0xff]
    %v1469 = vld [vmem:[#allocation2 + $0xa8] sm:$0xff]
    %v1470 = vld [vmem:[#allocation2 + $0xb0] sm:$0xff]
    %v1471 = vld [vmem:[#allocation2 + $0xc0] sm:$0xff]
    %v1472 = vld [vmem:[#allocation2 + $0xc8] sm:$0xff]
    %v1473 = vld [vmem:[#allocation2 + $0xd8] sm:$0xff]
    %v1474 = vld [vmem:[#allocation2 + $0xe0] sm:$0xff]
    %v1475 = vld [vmem:[#allocation2 + $0xf0] sm:$0xff]
    %v1476 = vld [vmem:[#allocation2 + $0xf8] sm:$0xff]
    %v1477 = vld [vmem:[#allocation2 + $0x108] sm:$0xff]
    %v1478 = vld [vmem:[#allocation2 + $0x110] sm:$0xff]
    %v1479 = vld [vmem:[#allocation2 + $0x120] sm:$0xff]
    %v1480 = vld [vmem:[#allocation2 + $0x128] sm:$0xff]
    %v1481 = vld [vmem:[#allocation2 + $0x138] sm:$0xff]
    %v1482 = vld [vmem:[#allocation2 + $0x140] sm:$0xff]
    %v1483 = vld [vmem:[#allocation2 + $0x150] sm:$0xff]
    %v1484 = vld [vmem:[#allocation2 + $0x158] sm:$0xff]
    %v1485 = vld [vmem:[#allocation2 + $0x168] sm:$0xff]
    %v1486 = vld [vmem:[#allocation2 + $0x170] sm:$0xff]
    %v1487 = vld [vmem:[#allocation2 + $0x1b0] sm:$0xff]
    %v1488 = vld [vmem:[#allocation2 + $0x1b8] sm:$0xff]
    %v1489 = vld [vmem:[#allocation2 + $0x1c8] sm:$0xff]
    %v1490 = vld [vmem:[#allocation2 + $0x1d0] sm:$0xff]
    %v1491 = vld [vmem:[#allocation2 + $0x1e0] sm:$0xff]
    %v1492 = vld [vmem:[#allocation2 + $0x1e8] sm:$0xff]
    %v1493 = vld [vmem:[#allocation2 + $0x1f8] sm:$0xff]
    %v1494 = vld [vmem:[#allocation2 + $0x200] sm:$0xff]
    %v1495 = vld [vmem:[#allocation2 + $0x210] sm:$0xff]
    %v1496 = vld [vmem:[#allocation2 + $0x218] sm:$0xff]
    %v1497 = vld [vmem:[#allocation2 + $0x228] sm:$0xff]
    %v1498 = vld [vmem:[#allocation2 + $0x230] sm:$0xff]
    %v1499 = vld [vmem:[#allocation2 + $0x240] sm:$0xff]
    %v1500 = vld [vmem:[#allocation2 + $0x248] sm:$0xff]
    %v1501 = vld [vmem:[#allocation2 + $0x258] sm:$0xff]
    %v1502 = vld [vmem:[#allocation2 + $0x260] sm:$0xff]
    %v1503 = vld [vmem:[#allocation2 + $0x270] sm:$0xff]
    %v1504 = vld [vmem:[#allocation2 + $0x278] sm:$0xff]
    %v1505 = vld [vmem:[#allocation2 + $0x288] sm:$0xff]
    %v1506 = vld [vmem:[#allocation2 + $0x290] sm:$0xff]
    %v1507 = vld [vmem:[#allocation2 + $0x2a0] sm:$0xff]
    %v1508 = vld [vmem:[#allocation2 + $0x2a8] sm:$0xff]
    %v1509 = vld [vmem:[#allocation2 + $0x2b8] sm:$0xff]
    %v1510 = vld [vmem:[#allocation2 + $0x2c0] sm:$0xff]
    %v1511 = vld [vmem:[#allocation2 + $0x2d0] sm:$0xff]
    %v1512 = vld [vmem:[#allocation2 + $0x2d8] sm:$0xff]
    %v1513 = vld [vmem:[#allocation2 + $0x2e8] sm:$0xff]
    %v1514 = vld [vmem:[#allocation2 + $0x2f0] sm:$0xff]
    %v1515 = vld [vmem:[#allocation2 + $0x300] sm:$0xff]
    %v1516 = vld [vmem:[#allocation2 + $0x308] sm:$0xff]
    %v1517 = vld [vmem:[#allocation2 + $0x318] sm:$0xff]
    %v1518 = vld [vmem:[#allocation2 + $0x320] sm:$0xff]
    %v1519 = vpack.c.bf16 %v1456, %v1455
    %v1520 = vpack.c.bf16 %v1458, %v1457
    %v1521 = vpack.c.bf16 %v1460, %v1459
    %v1522 = vpack.c.bf16 %v1462, %v1461
    %v1523 = vpack.c.bf16 %v1464, %v1463
    %v1524 = vpack.c.bf16 %v1466, %v1465
    %v1525 = vpack.c.bf16 %v1468, %v1467
    %v1526 = vpack.c.bf16 %v1470, %v1469
    %v1527 = vpack.c.bf16 %v1472, %v1471
    %v1528 = vpack.c.bf16 %v1474, %v1473
    %v1529 = vpack.c.bf16 %v1476, %v1475
    %v1530 = vpack.c.bf16 %v1478, %v1477
    %v1531 = vpack.c.bf16 %v1480, %v1479
    %v1532 = vpack.c.bf16 %v1482, %v1481
    %v1533 = vpack.c.bf16 %v1484, %v1483
    %v1534 = vpack.c.bf16 %v1486, %v1485
    %v1535 = vpack.c.bf16 %v1488, %v1487
    %v1536 = vpack.c.bf16 %v1490, %v1489
    %v1537 = vpack.c.bf16 %v1492, %v1491
    %v1538 = vpack.c.bf16 %v1494, %v1493
    %v1539 = vpack.c.bf16 %v1496, %v1495
    %v1540 = vpack.c.bf16 %v1498, %v1497
    %v1541 = vpack.c.bf16 %v1500, %v1499
    %v1542 = vpack.c.bf16 %v1502, %v1501
    %v1543 = vpack.c.bf16 %v1504, %v1503
    %v1544 = vpack.c.bf16 %v1506, %v1505
    %v1545 = vpack.c.bf16 %v1508, %v1507
    %v1546 = vpack.c.bf16 %v1510, %v1509
    %v1547 = vpack.c.bf16 %v1512, %v1511
    %v1548 = vpack.c.bf16 %v1514, %v1513
    %v1549 = vpack.c.bf16 %v1516, %v1515
    %v1550 = vpack.c.bf16 %v1518, %v1517
    %v1551 = vld [vmem:[%s4] sm:$0x3]
    %v1552 = vld [vmem:[#allocation2 + $0x1] sm:$0xff]
    %v1553 = vld [vmem:[#allocation2 + $0x9] sm:$0xff]
    %v1554 = vld [vmem:[#allocation2 + $0x19] sm:$0xff]
    %v1555 = vld [vmem:[#allocation2 + $0x21] sm:$0xff]
    %v1556 = vld [vmem:[#allocation2 + $0x31] sm:$0xff]
    %v1557 = vld [vmem:[#allocation2 + $0x39] sm:$0xff]
    %v1558 = vld [vmem:[#allocation2 + $0x49] sm:$0xff]
    %v1559 = vld [vmem:[#allocation2 + $0x51] sm:$0xff]
    %v1560 = vld [vmem:[#allocation2 + $0x61] sm:$0xff]
    %v1561 = vld [vmem:[#allocation2 + $0x69] sm:$0xff]
    %v1562 = vld [vmem:[#allocation2 + $0x79] sm:$0xff]
    %v1563 = vld [vmem:[#allocation2 + $0x81] sm:$0xff]
    %v1564 = vld [vmem:[#allocation2 + $0x91] sm:$0xff]
    %v1565 = vld [vmem:[#allocation2 + $0x99] sm:$0xff]
    %v1566 = vld [vmem:[#allocation2 + $0xa9] sm:$0xff]
    %v1567 = vld [vmem:[#allocation2 + $0xb1] sm:$0xff]
    %v1568 = vld [vmem:[#allocation2 + $0xc1] sm:$0xff]
    %v1569 = vld [vmem:[#allocation2 + $0xc9] sm:$0xff]
    %v1570 = vld [vmem:[#allocation2 + $0xd9] sm:$0xff]
    %v1571 = vld [vmem:[#allocation2 + $0xe1] sm:$0xff]
    %v1572 = vld [vmem:[#allocation2 + $0xf1] sm:$0xff]
    %v1573 = vld [vmem:[#allocation2 + $0xf9] sm:$0xff]
    %v1574 = vld [vmem:[#allocation2 + $0x109] sm:$0xff]
    %v1575 = vld [vmem:[#allocation2 + $0x111] sm:$0xff]
    %v1576 = vld [vmem:[#allocation2 + $0x121] sm:$0xff]
    %v1577 = vld [vmem:[#allocation2 + $0x129] sm:$0xff]
    %v1578 = vld [vmem:[#allocation2 + $0x139] sm:$0xff]
    %v1579 = vld [vmem:[#allocation2 + $0x141] sm:$0xff]
    %v1580 = vld [vmem:[#allocation2 + $0x151] sm:$0xff]
    %v1581 = vld [vmem:[#allocation2 + $0x159] sm:$0xff]
    %v1582 = vld [vmem:[#allocation2 + $0x169] sm:$0xff]
    %v1583 = vld [vmem:[#allocation2 + $0x171] sm:$0xff]
    %v1584 = vld [vmem:[#allocation2 + $0x1b1] sm:$0xff]
    %v1585 = vld [vmem:[#allocation2 + $0x1b9] sm:$0xff]
    %v1586 = vld [vmem:[#allocation2 + $0x1c9] sm:$0xff]
    %v1587 = vld [vmem:[#allocation2 + $0x1d1] sm:$0xff]
    %v1588 = vld [vmem:[#allocation2 + $0x1e1] sm:$0xff]
    %v1589 = vld [vmem:[#allocation2 + $0x1e9] sm:$0xff]
    %v1590 = vld [vmem:[#allocation2 + $0x1f9] sm:$0xff]
    %v1591 = vld [vmem:[#allocation2 + $0x201] sm:$0xff]
    %v1592 = vld [vmem:[#allocation2 + $0x211] sm:$0xff]
    %v1593 = vld [vmem:[#allocation2 + $0x219] sm:$0xff]
    %v1594 = vld [vmem:[#allocation2 + $0x229] sm:$0xff]
    %v1595 = vld [vmem:[#allocation2 + $0x231] sm:$0xff]
    %v1596 = vld [vmem:[#allocation2 + $0x241] sm:$0xff]
    %v1597 = vld [vmem:[#allocation2 + $0x249] sm:$0xff]
    %v1598 = vld [vmem:[#allocation2 + $0x259] sm:$0xff]
    %v1599 = vld [vmem:[#allocation2 + $0x261] sm:$0xff]
    %v1600 = vld [vmem:[#allocation2 + $0x271] sm:$0xff]
    %v1601 = vld [vmem:[#allocation2 + $0x279] sm:$0xff]
    %v1602 = vld [vmem:[#allocation2 + $0x289] sm:$0xff]
    %v1603 = vld [vmem:[#allocation2 + $0x291] sm:$0xff]
    %v1604 = vld [vmem:[#allocation2 + $0x2a1] sm:$0xff]
    %v1605 = vld [vmem:[#allocation2 + $0x2a9] sm:$0xff]
    %v1606 = vld [vmem:[#allocation2 + $0x2b9] sm:$0xff]
    %v1607 = vld [vmem:[#allocation2 + $0x2c1] sm:$0xff]
    %v1608 = vld [vmem:[#allocation2 + $0x2d1] sm:$0xff]
    %v1609 = vld [vmem:[#allocation2 + $0x2d9] sm:$0xff]
    %v1610 = vld [vmem:[#allocation2 + $0x2e9] sm:$0xff]
    %v1611 = vld [vmem:[#allocation2 + $0x2f1] sm:$0xff]
    %v1612 = vld [vmem:[#allocation2 + $0x301] sm:$0xff]
    %v1613 = vld [vmem:[#allocation2 + $0x309] sm:$0xff]
    %v1614 = vld [vmem:[#allocation2 + $0x319] sm:$0xff]
    %v1615 = vld [vmem:[#allocation2 + $0x321] sm:$0xff]
    %v1616 = vpack.c.bf16 %v1553, %v1552
    %v1617 = vpack.c.bf16 %v1555, %v1554
    %v1618 = vpack.c.bf16 %v1557, %v1556
    %v1619 = vpack.c.bf16 %v1559, %v1558
    %v1620 = vpack.c.bf16 %v1561, %v1560
    %v1621 = vpack.c.bf16 %v1563, %v1562
    %v1622 = vpack.c.bf16 %v1565, %v1564
    %v1623 = vpack.c.bf16 %v1567, %v1566
    %v1624 = vpack.c.bf16 %v1569, %v1568
    %v1625 = vpack.c.bf16 %v1571, %v1570
    %v1626 = vpack.c.bf16 %v1573, %v1572
    %v1627 = vpack.c.bf16 %v1575, %v1574
    %v1628 = vpack.c.bf16 %v1577, %v1576
    %v1629 = vpack.c.bf16 %v1579, %v1578
    %v1630 = vpack.c.bf16 %v1581, %v1580
    %v1631 = vpack.c.bf16 %v1583, %v1582
    %v1632 = vpack.c.bf16 %v1585, %v1584
    %v1633 = vpack.c.bf16 %v1587, %v1586
    %v1634 = vpack.c.bf16 %v1589, %v1588
    %v1635 = vpack.c.bf16 %v1591, %v1590
    %v1636 = vpack.c.bf16 %v1593, %v1592
    %v1637 = vpack.c.bf16 %v1595, %v1594
    %v1638 = vpack.c.bf16 %v1597, %v1596
    %v1639 = vpack.c.bf16 %v1599, %v1598
    %v1640 = vpack.c.bf16 %v1601, %v1600
    %v1641 = vpack.c.bf16 %v1603, %v1602
    %v1642 = vpack.c.bf16 %v1605, %v1604
    %v1643 = vpack.c.bf16 %v1607, %v1606
    %v1644 = vpack.c.bf16 %v1609, %v1608
    %v1645 = vpack.c.bf16 %v1611, %v1610
    %v1646 = vpack.c.bf16 %v1613, %v1612
    %v1647 = vpack.c.bf16 %v1615, %v1614
    %s1648 = scalar_lea.vmem %s4, 2
    %v1649 = vld [vmem:[%s1648] sm:$0x3]
    %v1651 = vsel %vm861, %v1616, 0
    %v1654 = vsel %vm861, %v1617, 0
    %v1657 = vsel %vm861, %v1618, 0
    %v1660 = vsel %vm861, %v1619, 0
    %v1663 = vsel %vm861, %v1620, 0
    %v1666 = vsel %vm861, %v1621, 0
    %v1669 = vsel %vm861, %v1622, 0
    %v1672 = vsel %vm861, %v1623, 0
    %v1675 = vsel %vm861, %v1624, 0
    %v1678 = vsel %vm861, %v1625, 0
    %v1681 = vsel %vm861, %v1626, 0
    %v1684 = vsel %vm861, %v1627, 0
    %v1687 = vsel %vm861, %v1628, 0
    %v1690 = vsel %vm861, %v1629, 0
    %v1693 = vsel %vm861, %v1630, 0
    %v1696 = vsel %vm861, %v1631, 0
    %v1699 = vsel %vm861, %v1632, 0
    %v1702 = vsel %vm861, %v1633, 0
    %v1705 = vsel %vm861, %v1634, 0
    %v1708 = vsel %vm861, %v1635, 0
    %v1711 = vsel %vm861, %v1636, 0
    %v1714 = vsel %vm861, %v1637, 0
    %v1717 = vsel %vm861, %v1638, 0
    %v1720 = vsel %vm861, %v1639, 0
    %v1723 = vsel %vm861, %v1640, 0
    %v1726 = vsel %vm861, %v1641, 0
    %v1729 = vsel %vm861, %v1642, 0
    %v1732 = vsel %vm861, %v1643, 0
    %v1735 = vsel %vm861, %v1644, 0
    %v1738 = vsel %vm861, %v1645, 0
    %v1741 = vsel %vm861, %v1646, 0
    %v1744 = vsel %vm861, %v1647, 0
    %vm1746 = vcmask 1041408
    %v1748 = vsel %vm1746, %v1649, 0
    %1750 = vmatprep.subr.bf16.mxu0 0
    %1751 = vmatpush1.bf16.msra.mxu0 %v1748
    %1752 = vmatprep.subr.bf16.mxu0 0
    %1753 = vmatpush1.bf16.msra.mxu0 0
    %1754 = vmatprep.subr.bf16.mxu0 0
    %1755 = vmatpush1.bf16.msra.mxu0 0
    %1756 = vmatprep.subr.bf16.mxu0 0
    %1757 = vmatpush1.bf16.msra.mxu0 0
    %1758 = vmatprep.subr.bf16.mxu0 0
    %1759 = vmatpush1.bf16.msra.mxu0 0
    %1760 = vmatprep.subr.bf16.mxu0 0
    %1761 = vmatpush1.bf16.msra.mxu0 0
    %1762 = vmatprep.subr.bf16.mxu0 0
    %1763 = vmatpush1.bf16.msra.mxu0 0
    %1764 = vmatprep.subr.bf16.mxu0 0
    %1765 = vmatpush1.bf16.msra.mxu0 0
    %1766 = vmatprep.subr.bf16.mxu0 0
    %1767 = vmatpush1.bf16.msra.mxu0 0
    %1768 = vmatprep.subr.bf16.mxu0 0
    %1769 = vmatpush1.bf16.msra.mxu0 0
    %1770 = vmatprep.subr.bf16.mxu0 0
    %1771 = vmatpush1.bf16.msra.mxu0 0
    %1772 = vmatprep.subr.bf16.mxu0 0
    %1773 = vmatpush1.bf16.msra.mxu0 0
    %1774 = vmatprep.subr.bf16.mxu0 0
    %1775 = vmatpush1.bf16.msra.mxu0 0
    %1776 = vmatprep.subr.bf16.mxu0 0
    %1777 = vmatpush1.bf16.msra.mxu0 0
    %1778 = vmatprep.subr.bf16.mxu0 0
    %1779 = vmatpush1.bf16.msra.mxu0 0
    %1780 = vmatprep.subr.bf16.mxu0 0
    %1781 = vmatpush1.bf16.msra.mxu0 0
    %1782 = vmatprep.mubr.bf16.mxu0 0
    %1783 = vmatmul.mubr.bf16.gmra.mrb[0].mxu0 %v1651
    %v1784 = vpop.f32.mrb[0].mxu0
    %v1785 = vadd.f32 0.0, %v1784
    %v1786 = vpop.f32.mrb[0].mxu0
    %v1787 = vpop.f32.mrb[0].mxu0
    %v1788 = vadd.f32 0.0, %v1787
    %v1789 = vpop.f32.mrb[0].mxu0
    %1790 = vmatprep.mubr.bf16.mxu0 0
    %1791 = vmatmul.mubr.bf16.gmra.mrb[0].mxu0 %v1654
    %v1792 = vpop.f32.mrb[0].mxu0
    %v1793 = vadd.f32 0.0, %v1792
    %v1794 = vpop.f32.mrb[0].mxu0
    %v1795 = vpop.f32.mrb[0].mxu0
    %v1796 = vadd.f32 0.0, %v1795
    %v1797 = vpop.f32.mrb[0].mxu0
    %1798 = vmatprep.mubr.bf16.mxu0 0
    %1799 = vmatmul.mubr.bf16.gmra.mrb[0].mxu0 %v1657
    %v1800 = vpop.f32.mrb[0].mxu0
    %v1801 = vadd.f32 0.0, %v1800
    %v1802 = vpop.f32.mrb[0].mxu0
    %v1803 = vpop.f32.mrb[0].mxu0
    %v1804 = vadd.f32 0.0, %v1803
    %v1805 = vpop.f32.mrb[0].mxu0
    %1806 = vmatprep.mubr.bf16.mxu0 0
    %1807 = vmatmul.mubr.bf16.gmra.mrb[0].mxu0 %v1660
    %v1808 = vpop.f32.mrb[0].mxu0
    %v1809 = vadd.f32 0.0, %v1808
    %v1810 = vpop.f32.mrb[0].mxu0
    %v1811 = vpop.f32.mrb[0].mxu0
    %v1812 = vadd.f32 0.0, %v1811
    %v1813 = vpop.f32.mrb[0].mxu0
    %1814 = vmatprep.mubr.bf16.mxu0 0
    %1815 = vmatmul.mubr.bf16.gmra.mrb[0].mxu0 %v1663
    %v1816 = vpop.f32.mrb[0].mxu0
    %v1817 = vadd.f32 0.0, %v1816
    %v1818 = vpop.f32.mrb[0].mxu0
    %v1819 = vpop.f32.mrb[0].mxu0
    %v1820 = vadd.f32 0.0, %v1819
    %v1821 = vpop.f32.mrb[0].mxu0
    %1822 = vmatprep.mubr.bf16.mxu0 0
    %1823 = vmatmul.mubr.bf16.gmra.mrb[0].mxu0 %v1666
    %v1824 = vpop.f32.mrb[0].mxu0
    %v1825 = vadd.f32 0.0, %v1824
    %v1826 = vpop.f32.mrb[0].mxu0
    %v1827 = vpop.f32.mrb[0].mxu0
    %v1828 = vadd.f32 0.0, %v1827
    %v1829 = vpop.f32.mrb[0].mxu0
    %1830 = vmatprep.mubr.bf16.mxu0 0
    %1831 = vmatmul.mubr.bf16.gmra.mrb[0].mxu0 %v1669
    %v1832 = vpop.f32.mrb[0].mxu0
    %v1833 = vadd.f32 0.0, %v1832
    %v1834 = vpop.f32.mrb[0].mxu0
    %v1835 = vpop.f32.mrb[0].mxu0
    %v1836 = vadd.f32 0.0, %v1835
    %v1837 = vpop.f32.mrb[0].mxu0
    %1838 = vmatprep.mubr.bf16.mxu0 0
    %1839 = vmatmul.mubr.bf16.gmra.mrb[0].mxu0 %v1672
    %v1840 = vpop.f32.mrb[0].mxu0
    %v1841 = vadd.f32 0.0, %v1840
    %v1842 = vpop.f32.mrb[0].mxu0
    %v1843 = vpop.f32.mrb[0].mxu0
    %v1844 = vadd.f32 0.0, %v1843
    %v1845 = vpop.f32.mrb[0].mxu0
    %1846 = vmatprep.mubr.bf16.mxu0 0
    %1847 = vmatmul.mubr.bf16.gmra.mrb[0].mxu0 %v1675
    %v1848 = vpop.f32.mrb[0].mxu0
    %v1849 = vadd.f32 0.0, %v1848
    %v1850 = vpop.f32.mrb[0].mxu0
    %v1851 = vpop.f32.mrb[0].mxu0
    %v1852 = vadd.f32 0.0, %v1851
    %v1853 = vpop.f32.mrb[0].mxu0
    %1854 = vmatprep.mubr.bf16.mxu0 0
    %1855 = vmatmul.mubr.bf16.gmra.mrb[0].mxu0 %v1678
    %v1856 = vpop.f32.mrb[0].mxu0
    %v1857 = vadd.f32 0.0, %v1856
    %v1858 = vpop.f32.mrb[0].mxu0
    %v1859 = vpop.f32.mrb[0].mxu0
    %v1860 = vadd.f32 0.0, %v1859
    %v1861 = vpop.f32.mrb[0].mxu0
    %1862 = vmatprep.mubr.bf16.mxu0 0
    %1863 = vmatmul.mubr.bf16.gmra.mrb[0].mxu0 %v1681
    %v1864 = vpop.f32.mrb[0].mxu0
    %v1865 = vadd.f32 0.0, %v1864
    %v1866 = vpop.f32.mrb[0].mxu0
    %v1867 = vpop.f32.mrb[0].mxu0
    %v1868 = vadd.f32 0.0, %v1867
    %v1869 = vpop.f32.mrb[0].mxu0
    %1870 = vmatprep.mubr.bf16.mxu0 0
    %1871 = vmatmul.mubr.bf16.gmra.mrb[0].mxu0 %v1684
    %v1872 = vpop.f32.mrb[0].mxu0
    %v1873 = vadd.f32 0.0, %v1872
    %v1874 = vpop.f32.mrb[0].mxu0
    %v1875 = vpop.f32.mrb[0].mxu0
    %v1876 = vadd.f32 0.0, %v1875
    %v1877 = vpop.f32.mrb[0].mxu0
    %1878 = vmatprep.mubr.bf16.mxu0 0
    %1879 = vmatmul.mubr.bf16.gmra.mrb[0].mxu0 %v1687
    %v1880 = vpop.f32.mrb[0].mxu0
    %v1881 = vadd.f32 0.0, %v1880
    %v1882 = vpop.f32.mrb[0].mxu0
    %v1883 = vpop.f32.mrb[0].mxu0
    %v1884 = vadd.f32 0.0, %v1883
    %v1885 = vpop.f32.mrb[0].mxu0
    %1886 = vmatprep.mubr.bf16.mxu0 0
    %1887 = vmatmul.mubr.bf16.gmra.mrb[0].mxu0 %v1690
    %v1888 = vpop.f32.mrb[0].mxu0
    %v1889 = vadd.f32 0.0, %v1888
    %v1890 = vpop.f32.mrb[0].mxu0
    %v1891 = vpop.f32.mrb[0].mxu0
    %v1892 = vadd.f32 0.0, %v1891
    %v1893 = vpop.f32.mrb[0].mxu0
    %1894 = vmatprep.mubr.bf16.mxu0 0
    %1895 = vmatmul.mubr.bf16.gmra.mrb[0].mxu0 %v1693
    %v1896 = vpop.f32.mrb[0].mxu0
    %v1897 = vadd.f32 0.0, %v1896
    %v1898 = vpop.f32.mrb[0].mxu0
    %v1899 = vpop.f32.mrb[0].mxu0
    %v1900 = vadd.f32 0.0, %v1899
    %v1901 = vpop.f32.mrb[0].mxu0
    %1902 = vmatprep.mubr.bf16.mxu0 0
    %1903 = vmatmul.mubr.bf16.gmra.mrb[0].mxu0 %v1696
    %v1904 = vpop.f32.mrb[0].mxu0
    %v1905 = vadd.f32 0.0, %v1904
    %v1906 = vpop.f32.mrb[0].mxu0
    %v1907 = vpop.f32.mrb[0].mxu0
    %v1908 = vadd.f32 0.0, %v1907
    %v1909 = vpop.f32.mrb[0].mxu0
    %1910 = vmatprep.mubr.bf16.mxu0 0
    %1911 = vmatmul.mubr.bf16.gmra.mrb[0].mxu0 %v1699
    %v1912 = vpop.f32.mrb[0].mxu0
    %v1913 = vadd.f32 0.0, %v1912
    %v1914 = vpop.f32.mrb[0].mxu0
    %v1915 = vpop.f32.mrb[0].mxu0
    %v1916 = vadd.f32 0.0, %v1915
    %v1917 = vpop.f32.mrb[0].mxu0
    %1918 = vmatprep.mubr.bf16.mxu0 0
    %1919 = vmatmul.mubr.bf16.gmra.mrb[0].mxu0 %v1702
    %v1920 = vpop.f32.mrb[0].mxu0
    %v1921 = vadd.f32 0.0, %v1920
    %v1922 = vpop.f32.mrb[0].mxu0
    %v1923 = vpop.f32.mrb[0].mxu0
    %v1924 = vadd.f32 0.0, %v1923
    %v1925 = vpop.f32.mrb[0].mxu0
    %1926 = vmatprep.mubr.bf16.mxu0 0
    %1927 = vmatmul.mubr.bf16.gmra.mrb[0].mxu0 %v1705
    %v1928 = vpop.f32.mrb[0].mxu0
    %v1929 = vadd.f32 0.0, %v1928
    %v1930 = vpop.f32.mrb[0].mxu0
    %v1931 = vpop.f32.mrb[0].mxu0
    %v1932 = vadd.f32 0.0, %v1931
    %v1933 = vpop.f32.mrb[0].mxu0
    %1934 = vmatprep.mubr.bf16.mxu0 0
    %1935 = vmatmul.mubr.bf16.gmra.mrb[0].mxu0 %v1708
    %v1936 = vpop.f32.mrb[0].mxu0
    %v1937 = vadd.f32 0.0, %v1936
    %v1938 = vpop.f32.mrb[0].mxu0
    %v1939 = vpop.f32.mrb[0].mxu0
    %v1940 = vadd.f32 0.0, %v1939
    %v1941 = vpop.f32.mrb[0].mxu0
    %1942 = vmatprep.mubr.bf16.mxu0 0
    %1943 = vmatmul.mubr.bf16.gmra.mrb[0].mxu0 %v1711
    %v1944 = vpop.f32.mrb[0].mxu0
    %v1945 = vadd.f32 0.0, %v1944
    %v1946 = vpop.f32.mrb[0].mxu0
    %v1947 = vpop.f32.mrb[0].mxu0
    %v1948 = vadd.f32 0.0, %v1947
    %v1949 = vpop.f32.mrb[0].mxu0
    %1950 = vmatprep.mubr.bf16.mxu0 0
    %1951 = vmatmul.mubr.bf16.gmra.mrb[0].mxu0 %v1714
    %v1952 = vpop.f32.mrb[0].mxu0
    %v1953 = vadd.f32 0.0, %v1952
    %v1954 = vpop.f32.mrb[0].mxu0
    %v1955 = vpop.f32.mrb[0].mxu0
    %v1956 = vadd.f32 0.0, %v1955
    %v1957 = vpop.f32.mrb[0].mxu0
    %1958 = vmatprep.mubr.bf16.mxu0 0
    %1959 = vmatmul.mubr.bf16.gmra.mrb[0].mxu0 %v1717
    %v1960 = vpop.f32.mrb[0].mxu0
    %v1961 = vadd.f32 0.0, %v1960
    %v1962 = vpop.f32.mrb[0].mxu0
    %v1963 = vpop.f32.mrb[0].mxu0
    %v1964 = vadd.f32 0.0, %v1963
    %v1965 = vpop.f32.mrb[0].mxu0
    %1966 = vmatprep.mubr.bf16.mxu0 0
    %1967 = vmatmul.mubr.bf16.gmra.mrb[0].mxu0 %v1720
    %v1968 = vpop.f32.mrb[0].mxu0
    %v1969 = vadd.f32 0.0, %v1968
    %v1970 = vpop.f32.mrb[0].mxu0
    %v1971 = vpop.f32.mrb[0].mxu0
    %v1972 = vadd.f32 0.0, %v1971
    %v1973 = vpop.f32.mrb[0].mxu0
    %1974 = vmatprep.mubr.bf16.mxu0 0
    %1975 = vmatmul.mubr.bf16.gmra.mrb[0].mxu0 %v1723
    %v1976 = vpop.f32.mrb[0].mxu0
    %v1977 = vadd.f32 0.0, %v1976
    %v1978 = vpop.f32.mrb[0].mxu0
    %v1979 = vpop.f32.mrb[0].mxu0
    %v1980 = vadd.f32 0.0, %v1979
    %v1981 = vpop.f32.mrb[0].mxu0
    %1982 = vmatprep.mubr.bf16.mxu0 0
    %1983 = vmatmul.mubr.bf16.gmra.mrb[0].mxu0 %v1726
    %v1984 = vpop.f32.mrb[0].mxu0
    %v1985 = vadd.f32 0.0, %v1984
    %v1986 = vpop.f32.mrb[0].mxu0
    %v1987 = vpop.f32.mrb[0].mxu0
    %v1988 = vadd.f32 0.0, %v1987
    %v1989 = vpop.f32.mrb[0].mxu0
    %1990 = vmatprep.mubr.bf16.mxu0 0
    %1991 = vmatmul.mubr.bf16.gmra.mrb[0].mxu0 %v1729
    %v1992 = vpop.f32.mrb[0].mxu0
    %v1993 = vadd.f32 0.0, %v1992
    %v1994 = vpop.f32.mrb[0].mxu0
    %v1995 = vpop.f32.mrb[0].mxu0
    %v1996 = vadd.f32 0.0, %v1995
    %v1997 = vpop.f32.mrb[0].mxu0
    %1998 = vmatprep.mubr.bf16.mxu0 0
    %1999 = vmatmul.mubr.bf16.gmra.mrb[0].mxu0 %v1732
    %v2000 = vpop.f32.mrb[0].mxu0
    %v2001 = vadd.f32 0.0, %v2000
    %v2002 = vpop.f32.mrb[0].mxu0
    %v2003 = vpop.f32.mrb[0].mxu0
    %v2004 = vadd.f32 0.0, %v2003
    %v2005 = vpop.f32.mrb[0].mxu0
    %2006 = vmatprep.mubr.bf16.mxu0 0
    %2007 = vmatmul.mubr.bf16.gmra.mrb[0].mxu0 %v1735
    %v2008 = vpop.f32.mrb[0].mxu0
    %v2009 = vadd.f32 0.0, %v2008
    %v2010 = vpop.f32.mrb[0].mxu0
    %v2011 = vpop.f32.mrb[0].mxu0
    %v2012 = vadd.f32 0.0, %v2011
    %v2013 = vpop.f32.mrb[0].mxu0
    %2014 = vmatprep.mubr.bf16.mxu0 0
    %2015 = vmatmul.mubr.bf16.gmra.mrb[0].mxu0 %v1738
    %v2016 = vpop.f32.mrb[0].mxu0
    %v2017 = vadd.f32 0.0, %v2016
    %v2018 = vpop.f32.mrb[0].mxu0
    %v2019 = vpop.f32.mrb[0].mxu0
    %v2020 = vadd.f32 0.0, %v2019
    %v2021 = vpop.f32.mrb[0].mxu0
    %2022 = vmatprep.mubr.bf16.mxu0 0
    %2023 = vmatmul.mubr.bf16.gmra.mrb[0].mxu0 %v1741
    %v2024 = vpop.f32.mrb[0].mxu0
    %v2025 = vadd.f32 0.0, %v2024
    %v2026 = vpop.f32.mrb[0].mxu0
    %v2027 = vpop.f32.mrb[0].mxu0
    %v2028 = vadd.f32 0.0, %v2027
    %v2029 = vpop.f32.mrb[0].mxu0
    %2030 = vmatprep.mubr.bf16.mxu0 0
    %2031 = vmatmul.mubr.bf16.gmra.mrb[0].mxu0 %v1744
    %v2032 = vpop.f32.mrb[0].mxu0
    %v2033 = vadd.f32 0.0, %v2032
    %v2034 = vpop.f32.mrb[0].mxu0
    %v2035 = vpop.f32.mrb[0].mxu0
    %v2036 = vadd.f32 0.0, %v2035
    %v2037 = vpop.f32.mrb[0].mxu0
    %2038 = vdwg.mxu0
    %v2040 = vsel %vm861, %v1519, 0
    %v2043 = vsel %vm861, %v1520, 0
    %v2046 = vsel %vm861, %v1521, 0
    %v2049 = vsel %vm861, %v1522, 0
    %v2052 = vsel %vm861, %v1523, 0
    %v2055 = vsel %vm861, %v1524, 0
    %v2058 = vsel %vm861, %v1525, 0
    %v2061 = vsel %vm861, %v1526, 0
    %v2064 = vsel %vm861, %v1527, 0
    %v2067 = vsel %vm861, %v1528, 0
    %v2070 = vsel %vm861, %v1529, 0
    %v2073 = vsel %vm861, %v1530, 0
    %v2076 = vsel %vm861, %v1531, 0
    %v2079 = vsel %vm861, %v1532, 0
    %v2082 = vsel %vm861, %v1533, 0
    %v2085 = vsel %vm861, %v1534, 0
    %v2088 = vsel %vm861, %v1535, 0
    %v2091 = vsel %vm861, %v1536, 0
    %v2094 = vsel %vm861, %v1537, 0
    %v2097 = vsel %vm861, %v1538, 0
    %v2100 = vsel %vm861, %v1539, 0
    %v2103 = vsel %vm861, %v1540, 0
    %v2106 = vsel %vm861, %v1541, 0
    %v2109 = vsel %vm861, %v1542, 0
    %v2112 = vsel %vm861, %v1543, 0
    %v2115 = vsel %vm861, %v1544, 0
    %v2118 = vsel %vm861, %v1545, 0
    %v2121 = vsel %vm861, %v1546, 0
    %v2124 = vsel %vm861, %v1547, 0
    %v2127 = vsel %vm861, %v1548, 0
    %v2130 = vsel %vm861, %v1549, 0
    %v2133 = vsel %vm861, %v1550, 0
    %v2136 = vsel %vm1746, %v1551, 0
    %2138 = vmatprep.subr.bf16.mxu0 0
    %2139 = vmatpush1.bf16.msra.mxu0 %v2136
    %2140 = vmatprep.subr.bf16.mxu0 0
    %2141 = vmatpush1.bf16.msra.mxu0 0
    %2142 = vmatprep.subr.bf16.mxu0 0
    %2143 = vmatpush1.bf16.msra.mxu0 0
    %2144 = vmatprep.subr.bf16.mxu0 0
    %2145 = vmatpush1.bf16.msra.mxu0 0
    %2146 = vmatprep.subr.bf16.mxu0 0
    %2147 = vmatpush1.bf16.msra.mxu0 0
    %2148 = vmatprep.subr.bf16.mxu0 0
    %2149 = vmatpush1.bf16.msra.mxu0 0
    %2150 = vmatprep.subr.bf16.mxu0 0
    %2151 = vmatpush1.bf16.msra.mxu0 0
    %2152 = vmatprep.subr.bf16.mxu0 0
    %2153 = vmatpush1.bf16.msra.mxu0 0
    %2154 = vmatprep.subr.bf16.mxu0 0
    %2155 = vmatpush1.bf16.msra.mxu0 0
    %2156 = vmatprep.subr.bf16.mxu0 0
    %2157 = vmatpush1.bf16.msra.mxu0 0
    %2158 = vmatprep.subr.bf16.mxu0 0
    %2159 = vmatpush1.bf16.msra.mxu0 0
    %2160 = vmatprep.subr.bf16.mxu0 0
    %2161 = vmatpush1.bf16.msra.mxu0 0
    %2162 = vmatprep.subr.bf16.mxu0 0
    %2163 = vmatpush1.bf16.msra.mxu0 0
    %2164 = vmatprep.subr.bf16.mxu0 0
    %2165 = vmatpush1.bf16.msra.mxu0 0
    %2166 = vmatprep.subr.bf16.mxu0 0
    %2167 = vmatpush1.bf16.msra.mxu0 0
    %2168 = vmatprep.subr.bf16.mxu0 0
    %2169 = vmatpush1.bf16.msra.mxu0 0
    %2170 = vmatprep.mubr.bf16.mxu0 0
    %2171 = vmatmul.mubr.bf16.gmra.mrb[0].mxu0 %v2040
    %v2172 = vpop.f32.mrb[0].mxu0
    %v2173 = vadd.f32 %v1785, %v2172
    %v2174 = vpop.f32.mrb[0].mxu0
    %v2175 = vpop.f32.mrb[0].mxu0
    %v2176 = vadd.f32 %v1788, %v2175
    %v2177 = vpop.f32.mrb[0].mxu0
    %2178 = vmatprep.mubr.bf16.mxu0 0
    %2179 = vmatmul.mubr.bf16.gmra.mrb[0].mxu0 %v2043
    %v2180 = vpop.f32.mrb[0].mxu0
    %v2181 = vadd.f32 %v1793, %v2180
    %v2182 = vpop.f32.mrb[0].mxu0
    %v2183 = vpop.f32.mrb[0].mxu0
    %v2184 = vadd.f32 %v1796, %v2183
    %v2185 = vpop.f32.mrb[0].mxu0
    %2186 = vmatprep.mubr.bf16.mxu0 0
    %2187 = vmatmul.mubr.bf16.gmra.mrb[0].mxu0 %v2046
    %v2188 = vpop.f32.mrb[0].mxu0
    %v2189 = vadd.f32 %v1801, %v2188
    %v2190 = vpop.f32.mrb[0].mxu0
    %v2191 = vpop.f32.mrb[0].mxu0
    %v2192 = vadd.f32 %v1804, %v2191
    %v2193 = vpop.f32.mrb[0].mxu0
    %2194 = vmatprep.mubr.bf16.mxu0 0
    %2195 = vmatmul.mubr.bf16.gmra.mrb[0].mxu0 %v2049
    %v2196 = vpop.f32.mrb[0].mxu0
    %v2197 = vadd.f32 %v1809, %v2196
    %v2198 = vpop.f32.mrb[0].mxu0
    %v2199 = vpop.f32.mrb[0].mxu0
    %v2200 = vadd.f32 %v1812, %v2199
    %v2201 = vpop.f32.mrb[0].mxu0
    %2202 = vmatprep.mubr.bf16.mxu0 0
    %2203 = vmatmul.mubr.bf16.gmra.mrb[0].mxu0 %v2052
    %v2204 = vpop.f32.mrb[0].mxu0
    %v2205 = vadd.f32 %v1817, %v2204
    %v2206 = vpop.f32.mrb[0].mxu0
    %v2207 = vpop.f32.mrb[0].mxu0
    %v2208 = vadd.f32 %v1820, %v2207
    %v2209 = vpop.f32.mrb[0].mxu0
    %2210 = vmatprep.mubr.bf16.mxu0 0
    %2211 = vmatmul.mubr.bf16.gmra.mrb[0].mxu0 %v2055
    %v2212 = vpop.f32.mrb[0].mxu0
    %v2213 = vadd.f32 %v1825, %v2212
    %v2214 = vpop.f32.mrb[0].mxu0
    %v2215 = vpop.f32.mrb[0].mxu0
    %v2216 = vadd.f32 %v1828, %v2215
    %v2217 = vpop.f32.mrb[0].mxu0
    %2218 = vmatprep.mubr.bf16.mxu0 0
    %2219 = vmatmul.mubr.bf16.gmra.mrb[0].mxu0 %v2058
    %v2220 = vpop.f32.mrb[0].mxu0
    %v2221 = vadd.f32 %v1833, %v2220
    %v2222 = vpop.f32.mrb[0].mxu0
    %v2223 = vpop.f32.mrb[0].mxu0
    %v2224 = vadd.f32 %v1836, %v2223
    %v2225 = vpop.f32.mrb[0].mxu0
    %2226 = vmatprep.mubr.bf16.mxu0 0
    %2227 = vmatmul.mubr.bf16.gmra.mrb[0].mxu0 %v2061
    %v2228 = vpop.f32.mrb[0].mxu0
    %v2229 = vadd.f32 %v1841, %v2228
    %v2230 = vpop.f32.mrb[0].mxu0
    %v2231 = vpop.f32.mrb[0].mxu0
    %v2232 = vadd.f32 %v1844, %v2231
    %v2233 = vpop.f32.mrb[0].mxu0
    %2234 = vmatprep.mubr.bf16.mxu0 0
    %2235 = vmatmul.mubr.bf16.gmra.mrb[0].mxu0 %v2064
    %v2236 = vpop.f32.mrb[0].mxu0
    %v2237 = vadd.f32 %v1849, %v2236
    %v2238 = vpop.f32.mrb[0].mxu0
    %v2239 = vpop.f32.mrb[0].mxu0
    %v2240 = vadd.f32 %v1852, %v2239
    %v2241 = vpop.f32.mrb[0].mxu0
    %2242 = vmatprep.mubr.bf16.mxu0 0
    %2243 = vmatmul.mubr.bf16.gmra.mrb[0].mxu0 %v2067
    %v2244 = vpop.f32.mrb[0].mxu0
    %v2245 = vadd.f32 %v1857, %v2244
    %v2246 = vpop.f32.mrb[0].mxu0
    %v2247 = vpop.f32.mrb[0].mxu0
    %v2248 = vadd.f32 %v1860, %v2247
    %v2249 = vpop.f32.mrb[0].mxu0
    %2250 = vmatprep.mubr.bf16.mxu0 0
    %2251 = vmatmul.mubr.bf16.gmra.mrb[0].mxu0 %v2070
    %v2252 = vpop.f32.mrb[0].mxu0
    %v2253 = vadd.f32 %v1865, %v2252
    %v2254 = vpop.f32.mrb[0].mxu0
    %v2255 = vpop.f32.mrb[0].mxu0
    %v2256 = vadd.f32 %v1868, %v2255
    %v2257 = vpop.f32.mrb[0].mxu0
    %2258 = vmatprep.mubr.bf16.mxu0 0
    %2259 = vmatmul.mubr.bf16.gmra.mrb[0].mxu0 %v2073
    %v2260 = vpop.f32.mrb[0].mxu0
    %v2261 = vadd.f32 %v1873, %v2260
    %v2262 = vpop.f32.mrb[0].mxu0
    %v2263 = vpop.f32.mrb[0].mxu0
    %v2264 = vadd.f32 %v1876, %v2263
    %v2265 = vpop.f32.mrb[0].mxu0
    %2266 = vmatprep.mubr.bf16.mxu0 0
    %2267 = vmatmul.mubr.bf16.gmra.mrb[0].mxu0 %v2076
    %v2268 = vpop.f32.mrb[0].mxu0
    %v2269 = vadd.f32 %v1881, %v2268
    %v2270 = vpop.f32.mrb[0].mxu0
    %v2271 = vpop.f32.mrb[0].mxu0
    %v2272 = vadd.f32 %v1884, %v2271
    %v2273 = vpop.f32.mrb[0].mxu0
    %2274 = vmatprep.mubr.bf16.mxu0 0
    %2275 = vmatmul.mubr.bf16.gmra.mrb[0].mxu0 %v2079
    %v2276 = vpop.f32.mrb[0].mxu0
    %v2277 = vadd.f32 %v1889, %v2276
    %v2278 = vpop.f32.mrb[0].mxu0
    %v2279 = vpop.f32.mrb[0].mxu0
    %v2280 = vadd.f32 %v1892, %v2279
    %v2281 = vpop.f32.mrb[0].mxu0
    %2282 = vmatprep.mubr.bf16.mxu0 0
    %2283 = vmatmul.mubr.bf16.gmra.mrb[0].mxu0 %v2082
    %v2284 = vpop.f32.mrb[0].mxu0
    %v2285 = vadd.f32 %v1897, %v2284
    %v2286 = vpop.f32.mrb[0].mxu0
    %v2287 = vpop.f32.mrb[0].mxu0
    %v2288 = vadd.f32 %v1900, %v2287
    %v2289 = vpop.f32.mrb[0].mxu0
    %2290 = vmatprep.mubr.bf16.mxu0 0
    %2291 = vmatmul.mubr.bf16.gmra.mrb[0].mxu0 %v2085
    %v2292 = vpop.f32.mrb[0].mxu0
    %v2293 = vadd.f32 %v1905, %v2292
    %v2294 = vpop.f32.mrb[0].mxu0
    %v2295 = vpop.f32.mrb[0].mxu0
    %v2296 = vadd.f32 %v1908, %v2295
    %v2297 = vpop.f32.mrb[0].mxu0
    %2298 = vmatprep.mubr.bf16.mxu0 0
    %2299 = vmatmul.mubr.bf16.gmra.mrb[0].mxu0 %v2088
    %v2300 = vpop.f32.mrb[0].mxu0
    %v2301 = vadd.f32 %v1913, %v2300
    %v2302 = vpop.f32.mrb[0].mxu0
    %v2303 = vpop.f32.mrb[0].mxu0
    %v2304 = vadd.f32 %v1916, %v2303
    %v2305 = vpop.f32.mrb[0].mxu0
    %2306 = vmatprep.mubr.bf16.mxu0 0
    %2307 = vmatmul.mubr.bf16.gmra.mrb[0].mxu0 %v2091
    %v2308 = vpop.f32.mrb[0].mxu0
    %v2309 = vadd.f32 %v1921, %v2308
    %v2310 = vpop.f32.mrb[0].mxu0
    %v2311 = vpop.f32.mrb[0].mxu0
    %v2312 = vadd.f32 %v1924, %v2311
    %v2313 = vpop.f32.mrb[0].mxu0
    %2314 = vmatprep.mubr.bf16.mxu0 0
    %2315 = vmatmul.mubr.bf16.gmra.mrb[0].mxu0 %v2094
    %v2316 = vpop.f32.mrb[0].mxu0
    %v2317 = vadd.f32 %v1929, %v2316
    %v2318 = vpop.f32.mrb[0].mxu0
    %v2319 = vpop.f32.mrb[0].mxu0
    %v2320 = vadd.f32 %v1932, %v2319
    %v2321 = vpop.f32.mrb[0].mxu0
    %2322 = vmatprep.mubr.bf16.mxu0 0
    %2323 = vmatmul.mubr.bf16.gmra.mrb[0].mxu0 %v2097
    %v2324 = vpop.f32.mrb[0].mxu0
    %v2325 = vadd.f32 %v1937, %v2324
    %v2326 = vpop.f32.mrb[0].mxu0
    %v2327 = vpop.f32.mrb[0].mxu0
    %v2328 = vadd.f32 %v1940, %v2327
    %v2329 = vpop.f32.mrb[0].mxu0
    %2330 = vmatprep.mubr.bf16.mxu0 0
    %2331 = vmatmul.mubr.bf16.gmra.mrb[0].mxu0 %v2100
    %v2332 = vpop.f32.mrb[0].mxu0
    %v2333 = vadd.f32 %v1945, %v2332
    %v2334 = vpop.f32.mrb[0].mxu0
    %v2335 = vpop.f32.mrb[0].mxu0
    %v2336 = vadd.f32 %v1948, %v2335
    %v2337 = vpop.f32.mrb[0].mxu0
    %2338 = vmatprep.mubr.bf16.mxu0 0
    %2339 = vmatmul.mubr.bf16.gmra.mrb[0].mxu0 %v2103
    %v2340 = vpop.f32.mrb[0].mxu0
    %v2341 = vadd.f32 %v1953, %v2340
    %v2342 = vpop.f32.mrb[0].mxu0
    %v2343 = vpop.f32.mrb[0].mxu0
    %v2344 = vadd.f32 %v1956, %v2343
    %v2345 = vpop.f32.mrb[0].mxu0
    %2346 = vmatprep.mubr.bf16.mxu0 0
    %2347 = vmatmul.mubr.bf16.gmra.mrb[0].mxu0 %v2106
    %v2348 = vpop.f32.mrb[0].mxu0
    %v2349 = vadd.f32 %v1961, %v2348
    %v2350 = vpop.f32.mrb[0].mxu0
    %v2351 = vpop.f32.mrb[0].mxu0
    %v2352 = vadd.f32 %v1964, %v2351
    %v2353 = vpop.f32.mrb[0].mxu0
    %2354 = vmatprep.mubr.bf16.mxu0 0
    %2355 = vmatmul.mubr.bf16.gmra.mrb[0].mxu0 %v2109
    %v2356 = vpop.f32.mrb[0].mxu0
    %v2357 = vadd.f32 %v1969, %v2356
    %v2358 = vpop.f32.mrb[0].mxu0
    %v2359 = vpop.f32.mrb[0].mxu0
    %v2360 = vadd.f32 %v1972, %v2359
    %v2361 = vpop.f32.mrb[0].mxu0
    %2362 = vmatprep.mubr.bf16.mxu0 0
    %2363 = vmatmul.mubr.bf16.gmra.mrb[0].mxu0 %v2112
    %v2364 = vpop.f32.mrb[0].mxu0
    %v2365 = vadd.f32 %v1977, %v2364
    %v2366 = vpop.f32.mrb[0].mxu0
    %v2367 = vpop.f32.mrb[0].mxu0
    %v2368 = vadd.f32 %v1980, %v2367
    %v2369 = vpop.f32.mrb[0].mxu0
    %2370 = vmatprep.mubr.bf16.mxu0 0
    %2371 = vmatmul.mubr.bf16.gmra.mrb[0].mxu0 %v2115
    %v2372 = vpop.f32.mrb[0].mxu0
    %v2373 = vadd.f32 %v1985, %v2372
    %v2374 = vpop.f32.mrb[0].mxu0
    %v2375 = vpop.f32.mrb[0].mxu0
    %v2376 = vadd.f32 %v1988, %v2375
    %v2377 = vpop.f32.mrb[0].mxu0
    %2378 = vmatprep.mubr.bf16.mxu0 0
    %2379 = vmatmul.mubr.bf16.gmra.mrb[0].mxu0 %v2118
    %v2380 = vpop.f32.mrb[0].mxu0
    %v2381 = vadd.f32 %v1993, %v2380
    %v2382 = vpop.f32.mrb[0].mxu0
    %v2383 = vpop.f32.mrb[0].mxu0
    %v2384 = vadd.f32 %v1996, %v2383
    %v2385 = vpop.f32.mrb[0].mxu0
    %2386 = vmatprep.mubr.bf16.mxu0 0
    %2387 = vmatmul.mubr.bf16.gmra.mrb[0].mxu0 %v2121
    %v2388 = vpop.f32.mrb[0].mxu0
    %v2389 = vadd.f32 %v2001, %v2388
    %v2390 = vpop.f32.mrb[0].mxu0
    %v2391 = vpop.f32.mrb[0].mxu0
    %v2392 = vadd.f32 %v2004, %v2391
    %v2393 = vpop.f32.mrb[0].mxu0
    %2394 = vmatprep.mubr.bf16.mxu0 0
    %2395 = vmatmul.mubr.bf16.gmra.mrb[0].mxu0 %v2124
    %v2396 = vpop.f32.mrb[0].mxu0
    %v2397 = vadd.f32 %v2009, %v2396
    %v2398 = vpop.f32.mrb[0].mxu0
    %v2399 = vpop.f32.mrb[0].mxu0
    %v2400 = vadd.f32 %v2012, %v2399
    %v2401 = vpop.f32.mrb[0].mxu0
    %2402 = vmatprep.mubr.bf16.mxu0 0
    %2403 = vmatmul.mubr.bf16.gmra.mrb[0].mxu0 %v2127
    %v2404 = vpop.f32.mrb[0].mxu0
    %v2405 = vadd.f32 %v2017, %v2404
    %v2406 = vpop.f32.mrb[0].mxu0
    %v2407 = vpop.f32.mrb[0].mxu0
    %v2408 = vadd.f32 %v2020, %v2407
    %v2409 = vpop.f32.mrb[0].mxu0
    %2410 = vmatprep.mubr.bf16.mxu0 0
    %2411 = vmatmul.mubr.bf16.gmra.mrb[0].mxu0 %v2130
    %v2412 = vpop.f32.mrb[0].mxu0
    %v2413 = vadd.f32 %v2025, %v2412
    %v2414 = vpop.f32.mrb[0].mxu0
    %v2415 = vpop.f32.mrb[0].mxu0
    %v2416 = vadd.f32 %v2028, %v2415
    %v2417 = vpop.f32.mrb[0].mxu0
    %2418 = vmatprep.mubr.bf16.mxu0 0
    %2419 = vmatmul.mubr.bf16.gmra.mrb[0].mxu0 %v2133
    %v2420 = vpop.f32.mrb[0].mxu0
    %v2421 = vadd.f32 %v2033, %v2420
    %v2422 = vpop.f32.mrb[0].mxu0
    %v2423 = vpop.f32.mrb[0].mxu0
    %v2424 = vadd.f32 %v2036, %v2423
    %v2425 = vpop.f32.mrb[0].mxu0
    %2426 = vdwg.mxu0
    %v2427 = vld [vmem:[#allocation2 + $0x2] sm:$0xff]
    %v2428 = vld [vmem:[#allocation2 + $0xa] sm:$0xff]
    %v2429 = vld [vmem:[#allocation2 + $0x1a] sm:$0xff]
    %v2430 = vld [vmem:[#allocation2 + $0x22] sm:$0xff]
    %v2431 = vld [vmem:[#allocation2 + $0x32] sm:$0xff]
    %v2432 = vld [vmem:[#allocation2 + $0x3a] sm:$0xff]
    %v2433 = vld [vmem:[#allocation2 + $0x4a] sm:$0xff]
    %v2434 = vld [vmem:[#allocation2 + $0x52] sm:$0xff]
    %v2435 = vld [vmem:[#allocation2 + $0x62] sm:$0xff]
    %v2436 = vld [vmem:[#allocation2 + $0x6a] sm:$0xff]
    %v2437 = vld [vmem:[#allocation2 + $0x7a] sm:$0xff]
    %v2438 = vld [vmem:[#allocation2 + $0x82] sm:$0xff]
    %v2439 = vld [vmem:[#allocation2 + $0x92] sm:$0xff]
    %v2440 = vld [vmem:[#allocation2 + $0x9a] sm:$0xff]
    %v2441 = vld [vmem:[#allocation2 + $0xaa] sm:$0xff]
    %v2442 = vld [vmem:[#allocation2 + $0xb2] sm:$0xff]
    %v2443 = vld [vmem:[#allocation2 + $0xc2] sm:$0xff]
    %v2444 = vld [vmem:[#allocation2 + $0xca] sm:$0xff]
    %v2445 = vld [vmem:[#allocation2 + $0xda] sm:$0xff]
    %v2446 = vld [vmem:[#allocation2 + $0xe2] sm:$0xff]
    %v2447 = vld [vmem:[#allocation2 + $0xf2] sm:$0xff]
    %v2448 = vld [vmem:[#allocation2 + $0xfa] sm:$0xff]
    %v2449 = vld [vmem:[#allocation2 + $0x10a] sm:$0xff]
    %v2450 = vld [vmem:[#allocation2 + $0x112] sm:$0xff]
    %v2451 = vld [vmem:[#allocation2 + $0x122] sm:$0xff]
    %v2452 = vld [vmem:[#allocation2 + $0x12a] sm:$0xff]
    %v2453 = vld [vmem:[#allocation2 + $0x13a] sm:$0xff]
    %v2454 = vld [vmem:[#allocation2 + $0x142] sm:$0xff]
    %v2455 = vld [vmem:[#allocation2 + $0x152] sm:$0xff]
    %v2456 = vld [vmem:[#allocation2 + $0x15a] sm:$0xff]
    %v2457 = vld [vmem:[#allocation2 + $0x16a] sm:$0xff]
    %v2458 = vld [vmem:[#allocation2 + $0x172] sm:$0xff]
    %v2459 = vld [vmem:[#allocation2 + $0x1b2] sm:$0xff]
    %v2460 = vld [vmem:[#allocation2 + $0x1ba] sm:$0xff]
    %v2461 = vld [vmem:[#allocation2 + $0x1ca] sm:$0xff]
    %v2462 = vld [vmem:[#allocation2 + $0x1d2] sm:$0xff]
    %v2463 = vld [vmem:[#allocation2 + $0x1e2] sm:$0xff]
    %v2464 = vld [vmem:[#allocation2 + $0x1ea] sm:$0xff]
    %v2465 = vld [vmem:[#allocation2 + $0x1fa] sm:$0xff]
    %v2466 = vld [vmem:[#allocation2 + $0x202] sm:$0xff]
    %v2467 = vld [vmem:[#allocation2 + $0x212] sm:$0xff]
    %v2468 = vld [vmem:[#allocation2 + $0x21a] sm:$0xff]
    %v2469 = vld [vmem:[#allocation2 + $0x22a] sm:$0xff]
    %v2470 = vld [vmem:[#allocation2 + $0x232] sm:$0xff]
    %v2471 = vld [vmem:[#allocation2 + $0x242] sm:$0xff]
    %v2472 = vld [vmem:[#allocation2 + $0x24a] sm:$0xff]
    %v2473 = vld [vmem:[#allocation2 + $0x25a] sm:$0xff]
    %v2474 = vld [vmem:[#allocation2 + $0x262] sm:$0xff]
    %v2475 = vld [vmem:[#allocation2 + $0x272] sm:$0xff]
    %v2476 = vld [vmem:[#allocation2 + $0x27a] sm:$0xff]
    %v2477 = vld [vmem:[#allocation2 + $0x28a] sm:$0xff]
    %v2478 = vld [vmem:[#allocation2 + $0x292] sm:$0xff]
    %v2479 = vld [vmem:[#allocation2 + $0x2a2] sm:$0xff]
    %v2480 = vld [vmem:[#allocation2 + $0x2aa] sm:$0xff]
    %v2481 = vld [vmem:[#allocation2 + $0x2ba] sm:$0xff]
    %v2482 = vld [vmem:[#allocation2 + $0x2c2] sm:$0xff]
    %v2483 = vld [vmem:[#allocation2 + $0x2d2] sm:$0xff]
    %v2484 = vld [vmem:[#allocation2 + $0x2da] sm:$0xff]
    %v2485 = vld [vmem:[#allocation2 + $0x2ea] sm:$0xff]
    %v2486 = vld [vmem:[#allocation2 + $0x2f2] sm:$0xff]
    %v2487 = vld [vmem:[#allocation2 + $0x302] sm:$0xff]
    %v2488 = vld [vmem:[#allocation2 + $0x30a] sm:$0xff]
    %v2489 = vld [vmem:[#allocation2 + $0x31a] sm:$0xff]
    %v2490 = vld [vmem:[#allocation2 + $0x322] sm:$0xff]
    %v2491 = vpack.c.bf16 %v2428, %v2427
    %v2492 = vpack.c.bf16 %v2430, %v2429
    %v2493 = vpack.c.bf16 %v2432, %v2431
    %v2494 = vpack.c.bf16 %v2434, %v2433
    %v2495 = vpack.c.bf16 %v2436, %v2435
    %v2496 = vpack.c.bf16 %v2438, %v2437
    %v2497 = vpack.c.bf16 %v2440, %v2439
    %v2498 = vpack.c.bf16 %v2442, %v2441
    %v2499 = vpack.c.bf16 %v2444, %v2443
    %v2500 = vpack.c.bf16 %v2446, %v2445
    %v2501 = vpack.c.bf16 %v2448, %v2447
    %v2502 = vpack.c.bf16 %v2450, %v2449
    %v2503 = vpack.c.bf16 %v2452, %v2451
    %v2504 = vpack.c.bf16 %v2454, %v2453
    %v2505 = vpack.c.bf16 %v2456, %v2455
    %v2506 = vpack.c.bf16 %v2458, %v2457
    %v2507 = vpack.c.bf16 %v2460, %v2459
    %v2508 = vpack.c.bf16 %v2462, %v2461
    %v2509 = vpack.c.bf16 %v2464, %v2463
    %v2510 = vpack.c.bf16 %v2466, %v2465
    %v2511 = vpack.c.bf16 %v2468, %v2467
    %v2512 = vpack.c.bf16 %v2470, %v2469
    %v2513 = vpack.c.bf16 %v2472, %v2471
    %v2514 = vpack.c.bf16 %v2474, %v2473
    %v2515 = vpack.c.bf16 %v2476, %v2475
    %v2516 = vpack.c.bf16 %v2478, %v2477
    %v2517 = vpack.c.bf16 %v2480, %v2479
    %v2518 = vpack.c.bf16 %v2482, %v2481
    %v2519 = vpack.c.bf16 %v2484, %v2483
    %v2520 = vpack.c.bf16 %v2486, %v2485
    %v2521 = vpack.c.bf16 %v2488, %v2487
    %v2522 = vpack.c.bf16 %v2490, %v2489
    %s2523 = scalar_lea.vmem %s4, 4
    %v2524 = vld [vmem:[%s2523] sm:$0x3]
    %v2526 = vsel %vm861, %v2491, 0
    %v2529 = vsel %vm861, %v2492, 0
    %v2532 = vsel %vm861, %v2493, 0
    %v2535 = vsel %vm861, %v2494, 0
    %v2538 = vsel %vm861, %v2495, 0
    %v2541 = vsel %vm861, %v2496, 0
    %v2544 = vsel %vm861, %v2497, 0
    %v2547 = vsel %vm861, %v2498, 0
    %v2550 = vsel %vm861, %v2499, 0
    %v2553 = vsel %vm861, %v2500, 0
    %v2556 = vsel %vm861, %v2501, 0
    %v2559 = vsel %vm861, %v2502, 0
    %v2562 = vsel %vm861, %v2503, 0
    %v2565 = vsel %vm861, %v2504, 0
    %v2568 = vsel %vm861, %v2505, 0
    %v2571 = vsel %vm861, %v2506, 0
    %v2574 = vsel %vm861, %v2507, 0
    %v2577 = vsel %vm861, %v2508, 0
    %v2580 = vsel %vm861, %v2509, 0
    %v2583 = vsel %vm861, %v2510, 0
    %v2586 = vsel %vm861, %v2511, 0
    %v2589 = vsel %vm861, %v2512, 0
    %v2592 = vsel %vm861, %v2513, 0
    %v2595 = vsel %vm861, %v2514, 0
    %v2598 = vsel %vm861, %v2515, 0
    %v2601 = vsel %vm861, %v2516, 0
    %v2604 = vsel %vm861, %v2517, 0
    %v2607 = vsel %vm861, %v2518, 0
    %v2610 = vsel %vm861, %v2519, 0
    %v2613 = vsel %vm861, %v2520, 0
    %v2616 = vsel %vm861, %v2521, 0
    %v2619 = vsel %vm861, %v2522, 0
    %v2622 = vsel %vm1746, %v2524, 0
    %2624 = vmatprep.subr.bf16.mxu0 0
    %2625 = vmatpush1.bf16.msra.mxu0 %v2622
    %2626 = vmatprep.subr.bf16.mxu0 0
    %2627 = vmatpush1.bf16.msra.mxu0 0
    %2628 = vmatprep.subr.bf16.mxu0 0
    %2629 = vmatpush1.bf16.msra.mxu0 0
    %2630 = vmatprep.subr.bf16.mxu0 0
    %2631 = vmatpush1.bf16.msra.mxu0 0
    %2632 = vmatprep.subr.bf16.mxu0 0
    %2633 = vmatpush1.bf16.msra.mxu0 0
    %2634 = vmatprep.subr.bf16.mxu0 0
    %2635 = vmatpush1.bf16.msra.mxu0 0
    %2636 = vmatprep.subr.bf16.mxu0 0
    %2637 = vmatpush1.bf16.msra.mxu0 0
    %2638 = vmatprep.subr.bf16.mxu0 0
    %2639 = vmatpush1.bf16.msra.mxu0 0
    %2640 = vmatprep.subr.bf16.mxu0 0
    %2641 = vmatpush1.bf16.msra.mxu0 0
    %2642 = vmatprep.subr.bf16.mxu0 0
    %2643 = vmatpush1.bf16.msra.mxu0 0
    %2644 = vmatprep.subr.bf16.mxu0 0
    %2645 = vmatpush1.bf16.msra.mxu0 0
    %2646 = vmatprep.subr.bf16.mxu0 0
    %2647 = vmatpush1.bf16.msra.mxu0 0
    %2648 = vmatprep.subr.bf16.mxu0 0
    %2649 = vmatpush1.bf16.msra.mxu0 0
    %2650 = vmatprep.subr.bf16.mxu0 0
    %2651 = vmatpush1.bf16.msra.mxu0 0
    %2652 = vmatprep.subr.bf16.mxu0 0
    %2653 = vmatpush1.bf16.msra.mxu0 0
    %2654 = vmatprep.subr.bf16.mxu0 0
    %2655 = vmatpush1.bf16.msra.mxu0 0
    %2656 = vmatprep.mubr.bf16.mxu0 0
    %2657 = vmatmul.mubr.bf16.gmra.mrb[0].mxu0 %v2526
    %v2658 = vpop.f32.mrb[0].mxu0
    %v2659 = vadd.f32 0.0, %v2658
    %v2660 = vpop.f32.mrb[0].mxu0
    %v2661 = vpop.f32.mrb[0].mxu0
    %v2662 = vadd.f32 0.0, %v2661
    %v2663 = vpop.f32.mrb[0].mxu0
    %2664 = vmatprep.mubr.bf16.mxu0 0
    %2665 = vmatmul.mubr.bf16.gmra.mrb[0].mxu0 %v2529
    %v2666 = vpop.f32.mrb[0].mxu0
    %v2667 = vadd.f32 0.0, %v2666
    %v2668 = vpop.f32.mrb[0].mxu0
    %v2669 = vpop.f32.mrb[0].mxu0
    %v2670 = vadd.f32 0.0, %v2669
    %v2671 = vpop.f32.mrb[0].mxu0
    %2672 = vmatprep.mubr.bf16.mxu0 0
    %2673 = vmatmul.mubr.bf16.gmra.mrb[0].mxu0 %v2532
    %v2674 = vpop.f32.mrb[0].mxu0
    %v2675 = vadd.f32 0.0, %v2674
    %v2676 = vpop.f32.mrb[0].mxu0
    %v2677 = vpop.f32.mrb[0].mxu0
    %v2678 = vadd.f32 0.0, %v2677
    %v2679 = vpop.f32.mrb[0].mxu0
    %2680 = vmatprep.mubr.bf16.mxu0 0
    %2681 = vmatmul.mubr.bf16.gmra.mrb[0].mxu0 %v2535
    %v2682 = vpop.f32.mrb[0].mxu0
    %v2683 = vadd.f32 0.0, %v2682
    %v2684 = vpop.f32.mrb[0].mxu0
    %v2685 = vpop.f32.mrb[0].mxu0
    %v2686 = vadd.f32 0.0, %v2685
    %v2687 = vpop.f32.mrb[0].mxu0
    %2688 = vmatprep.mubr.bf16.mxu0 0
    %2689 = vmatmul.mubr.bf16.gmra.mrb[0].mxu0 %v2538
    %v2690 = vpop.f32.mrb[0].mxu0
    %v2691 = vadd.f32 0.0, %v2690
    %v2692 = vpop.f32.mrb[0].mxu0
    %v2693 = vpop.f32.mrb[0].mxu0
    %v2694 = vadd.f32 0.0, %v2693
    %v2695 = vpop.f32.mrb[0].mxu0
    %2696 = vmatprep.mubr.bf16.mxu0 0
    %2697 = vmatmul.mubr.bf16.gmra.mrb[0].mxu0 %v2541
    %v2698 = vpop.f32.mrb[0].mxu0
    %v2699 = vadd.f32 0.0, %v2698
    %v2700 = vpop.f32.mrb[0].mxu0
    %v2701 = vpop.f32.mrb[0].mxu0
    %v2702 = vadd.f32 0.0, %v2701
    %v2703 = vpop.f32.mrb[0].mxu0
    %2704 = vmatprep.mubr.bf16.mxu0 0
    %2705 = vmatmul.mubr.bf16.gmra.mrb[0].mxu0 %v2544
    %v2706 = vpop.f32.mrb[0].mxu0
    %v2707 = vadd.f32 0.0, %v2706
    %v2708 = vpop.f32.mrb[0].mxu0
    %v2709 = vpop.f32.mrb[0].mxu0
    %v2710 = vadd.f32 0.0, %v2709
    %v2711 = vpop.f32.mrb[0].mxu0
    %2712 = vmatprep.mubr.bf16.mxu0 0
    %2713 = vmatmul.mubr.bf16.gmra.mrb[0].mxu0 %v2547
    %v2714 = vpop.f32.mrb[0].mxu0
    %v2715 = vadd.f32 0.0, %v2714
    %v2716 = vpop.f32.mrb[0].mxu0
    %v2717 = vpop.f32.mrb[0].mxu0
    %v2718 = vadd.f32 0.0, %v2717
    %v2719 = vpop.f32.mrb[0].mxu0
    %2720 = vmatprep.mubr.bf16.mxu0 0
    %2721 = vmatmul.mubr.bf16.gmra.mrb[0].mxu0 %v2550
    %v2722 = vpop.f32.mrb[0].mxu0
    %v2723 = vadd.f32 0.0, %v2722
    %v2724 = vpop.f32.mrb[0].mxu0
    %v2725 = vpop.f32.mrb[0].mxu0
    %v2726 = vadd.f32 0.0, %v2725
    %v2727 = vpop.f32.mrb[0].mxu0
    %2728 = vmatprep.mubr.bf16.mxu0 0
    %2729 = vmatmul.mubr.bf16.gmra.mrb[0].mxu0 %v2553
    %v2730 = vpop.f32.mrb[0].mxu0
    %v2731 = vadd.f32 0.0, %v2730
    %v2732 = vpop.f32.mrb[0].mxu0
    %v2733 = vpop.f32.mrb[0].mxu0
    %v2734 = vadd.f32 0.0, %v2733
    %v2735 = vpop.f32.mrb[0].mxu0
    %2736 = vmatprep.mubr.bf16.mxu0 0
    %2737 = vmatmul.mubr.bf16.gmra.mrb[0].mxu0 %v2556
    %v2738 = vpop.f32.mrb[0].mxu0
    %v2739 = vadd.f32 0.0, %v2738
    %v2740 = vpop.f32.mrb[0].mxu0
    %v2741 = vpop.f32.mrb[0].mxu0
    %v2742 = vadd.f32 0.0, %v2741
    %v2743 = vpop.f32.mrb[0].mxu0
    %2744 = vmatprep.mubr.bf16.mxu0 0
    %2745 = vmatmul.mubr.bf16.gmra.mrb[0].mxu0 %v2559
    %v2746 = vpop.f32.mrb[0].mxu0
    %v2747 = vadd.f32 0.0, %v2746
    %v2748 = vpop.f32.mrb[0].mxu0
    %v2749 = vpop.f32.mrb[0].mxu0
    %v2750 = vadd.f32 0.0, %v2749
    %v2751 = vpop.f32.mrb[0].mxu0
    %2752 = vmatprep.mubr.bf16.mxu0 0
    %2753 = vmatmul.mubr.bf16.gmra.mrb[0].mxu0 %v2562
    %v2754 = vpop.f32.mrb[0].mxu0
    %v2755 = vadd.f32 0.0, %v2754
    %v2756 = vpop.f32.mrb[0].mxu0
    %v2757 = vpop.f32.mrb[0].mxu0
    %v2758 = vadd.f32 0.0, %v2757
    %v2759 = vpop.f32.mrb[0].mxu0
    %2760 = vmatprep.mubr.bf16.mxu0 0
    %2761 = vmatmul.mubr.bf16.gmra.mrb[0].mxu0 %v2565
    %v2762 = vpop.f32.mrb[0].mxu0
    %v2763 = vadd.f32 0.0, %v2762
    %v2764 = vpop.f32.mrb[0].mxu0
    %v2765 = vpop.f32.mrb[0].mxu0
    %v2766 = vadd.f32 0.0, %v2765
    %v2767 = vpop.f32.mrb[0].mxu0
    %2768 = vmatprep.mubr.bf16.mxu0 0
    %2769 = vmatmul.mubr.bf16.gmra.mrb[0].mxu0 %v2568
    %v2770 = vpop.f32.mrb[0].mxu0
    %v2771 = vadd.f32 0.0, %v2770
    %v2772 = vpop.f32.mrb[0].mxu0
    %v2773 = vpop.f32.mrb[0].mxu0
    %v2774 = vadd.f32 0.0, %v2773
    %v2775 = vpop.f32.mrb[0].mxu0
    %2776 = vmatprep.mubr.bf16.mxu0 0
    %2777 = vmatmul.mubr.bf16.gmra.mrb[0].mxu0 %v2571
    %v2778 = vpop.f32.mrb[0].mxu0
    %v2779 = vadd.f32 0.0, %v2778
    %v2780 = vpop.f32.mrb[0].mxu0
    %v2781 = vpop.f32.mrb[0].mxu0
    %v2782 = vadd.f32 0.0, %v2781
    %v2783 = vpop.f32.mrb[0].mxu0
    %2784 = vmatprep.mubr.bf16.mxu0 0
    %2785 = vmatmul.mubr.bf16.gmra.mrb[0].mxu0 %v2574
    %v2786 = vpop.f32.mrb[0].mxu0
    %v2787 = vadd.f32 0.0, %v2786
    %v2788 = vpop.f32.mrb[0].mxu0
    %v2789 = vpop.f32.mrb[0].mxu0
    %v2790 = vadd.f32 0.0, %v2789
    %v2791 = vpop.f32.mrb[0].mxu0
    %2792 = vmatprep.mubr.bf16.mxu0 0
    %2793 = vmatmul.mubr.bf16.gmra.mrb[0].mxu0 %v2577
    %v2794 = vpop.f32.mrb[0].mxu0
    %v2795 = vadd.f32 0.0, %v2794
    %v2796 = vpop.f32.mrb[0].mxu0
    %v2797 = vpop.f32.mrb[0].mxu0
    %v2798 = vadd.f32 0.0, %v2797
    %v2799 = vpop.f32.mrb[0].mxu0
    %2800 = vmatprep.mubr.bf16.mxu0 0
    %2801 = vmatmul.mubr.bf16.gmra.mrb[0].mxu0 %v2580
    %v2802 = vpop.f32.mrb[0].mxu0
    %v2803 = vadd.f32 0.0, %v2802
    %v2804 = vpop.f32.mrb[0].mxu0
    %v2805 = vpop.f32.mrb[0].mxu0
    %v2806 = vadd.f32 0.0, %v2805
    %v2807 = vpop.f32.mrb[0].mxu0
    %2808 = vmatprep.mubr.bf16.mxu0 0
    %2809 = vmatmul.mubr.bf16.gmra.mrb[0].mxu0 %v2583
    %v2810 = vpop.f32.mrb[0].mxu0
    %v2811 = vadd.f32 0.0, %v2810
    %v2812 = vpop.f32.mrb[0].mxu0
    %v2813 = vpop.f32.mrb[0].mxu0
    %v2814 = vadd.f32 0.0, %v2813
    %v2815 = vpop.f32.mrb[0].mxu0
    %2816 = vmatprep.mubr.bf16.mxu0 0
    %2817 = vmatmul.mubr.bf16.gmra.mrb[0].mxu0 %v2586
    %v2818 = vpop.f32.mrb[0].mxu0
    %v2819 = vadd.f32 0.0, %v2818
    %v2820 = vpop.f32.mrb[0].mxu0
    %v2821 = vpop.f32.mrb[0].mxu0
    %v2822 = vadd.f32 0.0, %v2821
    %v2823 = vpop.f32.mrb[0].mxu0
    %2824 = vmatprep.mubr.bf16.mxu0 0
    %2825 = vmatmul.mubr.bf16.gmra.mrb[0].mxu0 %v2589
    %v2826 = vpop.f32.mrb[0].mxu0
    %v2827 = vadd.f32 0.0, %v2826
    %v2828 = vpop.f32.mrb[0].mxu0
    %v2829 = vpop.f32.mrb[0].mxu0
    %v2830 = vadd.f32 0.0, %v2829
    %v2831 = vpop.f32.mrb[0].mxu0
    %2832 = vmatprep.mubr.bf16.mxu0 0
    %2833 = vmatmul.mubr.bf16.gmra.mrb[0].mxu0 %v2592
    %v2834 = vpop.f32.mrb[0].mxu0
    %v2835 = vadd.f32 0.0, %v2834
    %v2836 = vpop.f32.mrb[0].mxu0
    %v2837 = vpop.f32.mrb[0].mxu0
    %v2838 = vadd.f32 0.0, %v2837
    %v2839 = vpop.f32.mrb[0].mxu0
    %2840 = vmatprep.mubr.bf16.mxu0 0
    %2841 = vmatmul.mubr.bf16.gmra.mrb[0].mxu0 %v2595
    %v2842 = vpop.f32.mrb[0].mxu0
    %v2843 = vadd.f32 0.0, %v2842
    %v2844 = vpop.f32.mrb[0].mxu0
    %v2845 = vpop.f32.mrb[0].mxu0
    %v2846 = vadd.f32 0.0, %v2845
    %v2847 = vpop.f32.mrb[0].mxu0
    %2848 = vmatprep.mubr.bf16.mxu0 0
    %2849 = vmatmul.mubr.bf16.gmra.mrb[0].mxu0 %v2598
    %v2850 = vpop.f32.mrb[0].mxu0
    %v2851 = vadd.f32 0.0, %v2850
    %v2852 = vpop.f32.mrb[0].mxu0
    %v2853 = vpop.f32.mrb[0].mxu0
    %v2854 = vadd.f32 0.0, %v2853
    %v2855 = vpop.f32.mrb[0].mxu0
    %2856 = vmatprep.mubr.bf16.mxu0 0
    %2857 = vmatmul.mubr.bf16.gmra.mrb[0].mxu0 %v2601
    %v2858 = vpop.f32.mrb[0].mxu0
    %v2859 = vadd.f32 0.0, %v2858
    %v2860 = vpop.f32.mrb[0].mxu0
    %v2861 = vpop.f32.mrb[0].mxu0
    %v2862 = vadd.f32 0.0, %v2861
    %v2863 = vpop.f32.mrb[0].mxu0
    %2864 = vmatprep.mubr.bf16.mxu0 0
    %2865 = vmatmul.mubr.bf16.gmra.mrb[0].mxu0 %v2604
    %v2866 = vpop.f32.mrb[0].mxu0
    %v2867 = vadd.f32 0.0, %v2866
    %v2868 = vpop.f32.mrb[0].mxu0
    %v2869 = vpop.f32.mrb[0].mxu0
    %v2870 = vadd.f32 0.0, %v2869
    %v2871 = vpop.f32.mrb[0].mxu0
    %2872 = vmatprep.mubr.bf16.mxu0 0
    %2873 = vmatmul.mubr.bf16.gmra.mrb[0].mxu0 %v2607
    %v2874 = vpop.f32.mrb[0].mxu0
    %v2875 = vadd.f32 0.0, %v2874
    %v2876 = vpop.f32.mrb[0].mxu0
    %v2877 = vpop.f32.mrb[0].mxu0
    %v2878 = vadd.f32 0.0, %v2877
    %v2879 = vpop.f32.mrb[0].mxu0
    %2880 = vmatprep.mubr.bf16.mxu0 0
    %2881 = vmatmul.mubr.bf16.gmra.mrb[0].mxu0 %v2610
    %v2882 = vpop.f32.mrb[0].mxu0
    %v2883 = vadd.f32 0.0, %v2882
    %v2884 = vpop.f32.mrb[0].mxu0
    %v2885 = vpop.f32.mrb[0].mxu0
    %v2886 = vadd.f32 0.0, %v2885
    %v2887 = vpop.f32.mrb[0].mxu0
    %2888 = vmatprep.mubr.bf16.mxu0 0
    %2889 = vmatmul.mubr.bf16.gmra.mrb[0].mxu0 %v2613
    %v2890 = vpop.f32.mrb[0].mxu0
    %v2891 = vadd.f32 0.0, %v2890
    %v2892 = vpop.f32.mrb[0].mxu0
    %v2893 = vpop.f32.mrb[0].mxu0
    %v2894 = vadd.f32 0.0, %v2893
    %v2895 = vpop.f32.mrb[0].mxu0
    %2896 = vmatprep.mubr.bf16.mxu0 0
    %2897 = vmatmul.mubr.bf16.gmra.mrb[0].mxu0 %v2616
    %v2898 = vpop.f32.mrb[0].mxu0
    %v2899 = vadd.f32 0.0, %v2898
    %v2900 = vpop.f32.mrb[0].mxu0
    %v2901 = vpop.f32.mrb[0].mxu0
    %v2902 = vadd.f32 0.0, %v2901
    %v2903 = vpop.f32.mrb[0].mxu0
    %2904 = vmatprep.mubr.bf16.mxu0 0
    %2905 = vmatmul.mubr.bf16.gmra.mrb[0].mxu0 %v2619
    %v2906 = vpop.f32.mrb[0].mxu0
    %v2907 = vadd.f32 0.0, %v2906
    %v2908 = vpop.f32.mrb[0].mxu0
    %v2909 = vpop.f32.mrb[0].mxu0
    %v2910 = vadd.f32 0.0, %v2909
    %v2911 = vpop.f32.mrb[0].mxu0
    %2912 = vdwg.mxu0
    %v2913 = vadd.f32 %v2173, %v2659
    %v2914 = vadd.f32 %v2176, %v2662
    %v2915 = vadd.f32 %v2181, %v2667
    %v2916 = vadd.f32 %v2184, %v2670
    %v2917 = vadd.f32 %v2189, %v2675
    %v2918 = vadd.f32 %v2192, %v2678
    %v2919 = vadd.f32 %v2197, %v2683
    %v2920 = vadd.f32 %v2200, %v2686
    %v2921 = vadd.f32 %v2205, %v2691
    %v2922 = vadd.f32 %v2208, %v2694
    %v2923 = vadd.f32 %v2213, %v2699
    %v2924 = vadd.f32 %v2216, %v2702
    %v2925 = vadd.f32 %v2221, %v2707
    %v2926 = vadd.f32 %v2224, %v2710
    %v2927 = vadd.f32 %v2229, %v2715
    %v2928 = vadd.f32 %v2232, %v2718
    %v2929 = vadd.f32 %v2237, %v2723
    %v2930 = vadd.f32 %v2240, %v2726
    %v2931 = vadd.f32 %v2245, %v2731
    %v2932 = vadd.f32 %v2248, %v2734
    %v2933 = vadd.f32 %v2253, %v2739
    %v2934 = vadd.f32 %v2256, %v2742
    %v2935 = vadd.f32 %v2261, %v2747
    %v2936 = vadd.f32 %v2264, %v2750
    %v2937 = vadd.f32 %v2269, %v2755
    %v2938 = vadd.f32 %v2272, %v2758
    %v2939 = vadd.f32 %v2277, %v2763
    %v2940 = vadd.f32 %v2280, %v2766
    %v2941 = vadd.f32 %v2285, %v2771
    %v2942 = vadd.f32 %v2288, %v2774
    %v2943 = vadd.f32 %v2293, %v2779
    %v2944 = vadd.f32 %v2296, %v2782
    %v2945 = vadd.f32 %v2301, %v2787
    %v2946 = vadd.f32 %v2304, %v2790
    %v2947 = vadd.f32 %v2309, %v2795
    %v2948 = vadd.f32 %v2312, %v2798
    %v2949 = vadd.f32 %v2317, %v2803
    %v2950 = vadd.f32 %v2320, %v2806
    %v2951 = vadd.f32 %v2325, %v2811
    %v2952 = vadd.f32 %v2328, %v2814
    %v2953 = vadd.f32 %v2333, %v2819
    %v2954 = vadd.f32 %v2336, %v2822
    %v2955 = vadd.f32 %v2341, %v2827
    %v2956 = vadd.f32 %v2344, %v2830
    %v2957 = vadd.f32 %v2349, %v2835
    %v2958 = vadd.f32 %v2352, %v2838
    %v2959 = vadd.f32 %v2357, %v2843
    %v2960 = vadd.f32 %v2360, %v2846
    %v2961 = vadd.f32 %v2365, %v2851
    %v2962 = vadd.f32 %v2368, %v2854
    %v2963 = vadd.f32 %v2373, %v2859
    %v2964 = vadd.f32 %v2376, %v2862
    %v2965 = vadd.f32 %v2381, %v2867
    %v2966 = vadd.f32 %v2384, %v2870
    %v2967 = vadd.f32 %v2389, %v2875
    %v2968 = vadd.f32 %v2392, %v2878
    %v2969 = vadd.f32 %v2397, %v2883
    %v2970 = vadd.f32 %v2400, %v2886
    %v2971 = vadd.f32 %v2405, %v2891
    %v2972 = vadd.f32 %v2408, %v2894
    %v2973 = vadd.f32 %v2413, %v2899
    %v2974 = vadd.f32 %v2416, %v2902
    %v2975 = vadd.f32 %v2421, %v2907
    %v2976 = vadd.f32 %v2424, %v2910
    %v2977 = vld [vmem:[%s1390] sm:$0xff]
    %v2978 = vld [vmem:[%s1390 + $0x8] sm:$0xff]
    %v2979 = vld [vmem:[%s1390 + $0x18] sm:$0xff]
    %v2980 = vld [vmem:[%s1390 + $0x20] sm:$0xff]
    %v2981 = vld [vmem:[%s1390 + $0x30] sm:$0xff]
    %v2982 = vld [vmem:[%s1390 + $0x38] sm:$0xff]
    %v2983 = vld [vmem:[%s1390 + $0x48] sm:$0xff]
    %v2984 = vld [vmem:[%s1390 + $0x50] sm:$0xff]
    %v2985 = vld [vmem:[%s1390 + $0x60] sm:$0xff]
    %v2986 = vld [vmem:[%s1390 + $0x68] sm:$0xff]
    %v2987 = vld [vmem:[%s1390 + $0x78] sm:$0xff]
    %v2988 = vld [vmem:[%s1390 + $0x80] sm:$0xff]
    %v2989 = vld [vmem:[%s1390 + $0x90] sm:$0xff]
    %v2990 = vld [vmem:[%s1390 + $0x98] sm:$0xff]
    %v2991 = vld [vmem:[%s1390 + $0xa8] sm:$0xff]
    %v2992 = vld [vmem:[%s1390 + $0xb0] sm:$0xff]
    %v2993 = vld [vmem:[%s1390 + $0xc0] sm:$0xff]
    %v2994 = vld [vmem:[%s1390 + $0xc8] sm:$0xff]
    %v2995 = vld [vmem:[%s1390 + $0xd8] sm:$0xff]
    %v2996 = vld [vmem:[%s1390 + $0xe0] sm:$0xff]
    %v2997 = vld [vmem:[%s1390 + $0xf0] sm:$0xff]
    %v2998 = vld [vmem:[%s1390 + $0xf8] sm:$0xff]
    %v2999 = vld [vmem:[%s1390 + $0x108] sm:$0xff]
    %v3000 = vld [vmem:[%s1390 + $0x110] sm:$0xff]
    %v3001 = vld [vmem:[%s1390 + $0x120] sm:$0xff]
    %v3002 = vld [vmem:[%s1390 + $0x128] sm:$0xff]
    %v3003 = vld [vmem:[%s1390 + $0x138] sm:$0xff]
    %v3004 = vld [vmem:[%s1390 + $0x140] sm:$0xff]
    %v3005 = vld [vmem:[%s1390 + $0x150] sm:$0xff]
    %v3006 = vld [vmem:[%s1390 + $0x158] sm:$0xff]
    %v3007 = vld [vmem:[%s1390 + $0x168] sm:$0xff]
    %v3008 = vld [vmem:[%s1390 + $0x170] sm:$0xff]
    %v3009 = vld [vmem:[%s1390 + $0x1b0] sm:$0xff]
    %v3010 = vld [vmem:[%s1390 + $0x1b8] sm:$0xff]
    %v3011 = vld [vmem:[%s1390 + $0x1c8] sm:$0xff]
    %v3012 = vld [vmem:[%s1390 + $0x1d0] sm:$0xff]
    %v3013 = vld [vmem:[%s1390 + $0x1e0] sm:$0xff]
    %v3014 = vld [vmem:[%s1390 + $0x1e8] sm:$0xff]
    %v3015 = vld [vmem:[%s1390 + $0x1f8] sm:$0xff]
    %v3016 = vld [vmem:[%s1390 + $0x200] sm:$0xff]
    %v3017 = vld [vmem:[%s1390 + $0x210] sm:$0xff]
    %v3018 = vld [vmem:[%s1390 + $0x218] sm:$0xff]
    %v3019 = vld [vmem:[%s1390 + $0x228] sm:$0xff]
    %v3020 = vld [vmem:[%s1390 + $0x230] sm:$0xff]
    %v3021 = vld [vmem:[%s1390 + $0x240] sm:$0xff]
    %v3022 = vld [vmem:[%s1390 + $0x248] sm:$0xff]
    %v3023 = vld [vmem:[%s1390 + $0x258] sm:$0xff]
    %v3024 = vld [vmem:[%s1390 + $0x260] sm:$0xff]
    %v3025 = vld [vmem:[%s1390 + $0x270] sm:$0xff]
    %v3026 = vld [vmem:[%s1390 + $0x278] sm:$0xff]
    %v3027 = vld [vmem:[%s1390 + $0x288] sm:$0xff]
    %v3028 = vld [vmem:[%s1390 + $0x290] sm:$0xff]
    %v3029 = vld [vmem:[%s1390 + $0x2a0] sm:$0xff]
    %v3030 = vld [vmem:[%s1390 + $0x2a8] sm:$0xff]
    %v3031 = vld [vmem:[%s1390 + $0x2b8] sm:$0xff]
    %v3032 = vld [vmem:[%s1390 + $0x2c0] sm:$0xff]
    %v3033 = vld [vmem:[%s1390 + $0x2d0] sm:$0xff]
    %v3034 = vld [vmem:[%s1390 + $0x2d8] sm:$0xff]
    %v3035 = vld [vmem:[%s1390 + $0x2e8] sm:$0xff]
    %v3036 = vld [vmem:[%s1390 + $0x2f0] sm:$0xff]
    %v3037 = vld [vmem:[%s1390 + $0x300] sm:$0xff]
    %v3038 = vld [vmem:[%s1390 + $0x308] sm:$0xff]
    %v3039 = vld [vmem:[%s1390 + $0x318] sm:$0xff]
    %v3040 = vld [vmem:[%s1390 + $0x320] sm:$0xff]
    %v3041 = vpack.c.bf16 %v2978, %v2977
    %v3042 = vpack.c.bf16 %v2980, %v2979
    %v3043 = vpack.c.bf16 %v2982, %v2981
    %v3044 = vpack.c.bf16 %v2984, %v2983
    %v3045 = vpack.c.bf16 %v2986, %v2985
    %v3046 = vpack.c.bf16 %v2988, %v2987
    %v3047 = vpack.c.bf16 %v2990, %v2989
    %v3048 = vpack.c.bf16 %v2992, %v2991
    %v3049 = vpack.c.bf16 %v2994, %v2993
    %v3050 = vpack.c.bf16 %v2996, %v2995
    %v3051 = vpack.c.bf16 %v2998, %v2997
    %v3052 = vpack.c.bf16 %v3000, %v2999
    %v3053 = vpack.c.bf16 %v3002, %v3001
    %v3054 = vpack.c.bf16 %v3004, %v3003
    %v3055 = vpack.c.bf16 %v3006, %v3005
    %v3056 = vpack.c.bf16 %v3008, %v3007
    %v3057 = vpack.c.bf16 %v3010, %v3009
    %v3058 = vpack.c.bf16 %v3012, %v3011
    %v3059 = vpack.c.bf16 %v3014, %v3013
    %v3060 = vpack.c.bf16 %v3016, %v3015
    %v3061 = vpack.c.bf16 %v3018, %v3017
    %v3062 = vpack.c.bf16 %v3020, %v3019
    %v3063 = vpack.c.bf16 %v3022, %v3021
    %v3064 = vpack.c.bf16 %v3024, %v3023
    %v3065 = vpack.c.bf16 %v3026, %v3025
    %v3066 = vpack.c.bf16 %v3028, %v3027
    %v3067 = vpack.c.bf16 %v3030, %v3029
    %v3068 = vpack.c.bf16 %v3032, %v3031
    %v3069 = vpack.c.bf16 %v3034, %v3033
    %v3070 = vpack.c.bf16 %v3036, %v3035
    %v3071 = vpack.c.bf16 %v3038, %v3037
    %v3072 = vpack.c.bf16 %v3040, %v3039
    %s3073 = scalar_lea.vmem %s4, 6
    %v3074 = vld [vmem:[%s3073] sm:$0x3]
    %v3076 = vsel %vm861, %v3041, 0
    %v3079 = vsel %vm861, %v3042, 0
    %v3082 = vsel %vm861, %v3043, 0
    %v3085 = vsel %vm861, %v3044, 0
    %v3088 = vsel %vm861, %v3045, 0
    %v3091 = vsel %vm861, %v3046, 0
    %v3094 = vsel %vm861, %v3047, 0
    %v3097 = vsel %vm861, %v3048, 0
    %v3100 = vsel %vm861, %v3049, 0
    %v3103 = vsel %vm861, %v3050, 0
    %v3106 = vsel %vm861, %v3051, 0
    %v3109 = vsel %vm861, %v3052, 0
    %v3112 = vsel %vm861, %v3053, 0
    %v3115 = vsel %vm861, %v3054, 0
    %v3118 = vsel %vm861, %v3055, 0
    %v3121 = vsel %vm861, %v3056, 0
    %v3124 = vsel %vm861, %v3057, 0
    %v3127 = vsel %vm861, %v3058, 0
    %v3130 = vsel %vm861, %v3059, 0
    %v3133 = vsel %vm861, %v3060, 0
    %v3136 = vsel %vm861, %v3061, 0
    %v3139 = vsel %vm861, %v3062, 0
    %v3142 = vsel %vm861, %v3063, 0
    %v3145 = vsel %vm861, %v3064, 0
    %v3148 = vsel %vm861, %v3065, 0
    %v3151 = vsel %vm861, %v3066, 0
    %v3154 = vsel %vm861, %v3067, 0
    %v3157 = vsel %vm861, %v3068, 0
    %v3160 = vsel %vm861, %v3069, 0
    %v3163 = vsel %vm861, %v3070, 0
    %v3166 = vsel %vm861, %v3071, 0
    %v3169 = vsel %vm861, %v3072, 0
    %v3172 = vsel %vm1746, %v3074, 0
    %3174 = vmatprep.subr.bf16.mxu0 0
    %3175 = vmatpush1.bf16.msra.mxu0 %v3172
    %3176 = vmatprep.subr.bf16.mxu0 0
    %3177 = vmatpush1.bf16.msra.mxu0 0
    %3178 = vmatprep.subr.bf16.mxu0 0
    %3179 = vmatpush1.bf16.msra.mxu0 0
    %3180 = vmatprep.subr.bf16.mxu0 0
    %3181 = vmatpush1.bf16.msra.mxu0 0
    %3182 = vmatprep.subr.bf16.mxu0 0
    %3183 = vmatpush1.bf16.msra.mxu0 0
    %3184 = vmatprep.subr.bf16.mxu0 0
    %3185 = vmatpush1.bf16.msra.mxu0 0
    %3186 = vmatprep.subr.bf16.mxu0 0
    %3187 = vmatpush1.bf16.msra.mxu0 0
    %3188 = vmatprep.subr.bf16.mxu0 0
    %3189 = vmatpush1.bf16.msra.mxu0 0
    %3190 = vmatprep.subr.bf16.mxu0 0
    %3191 = vmatpush1.bf16.msra.mxu0 0
    %3192 = vmatprep.subr.bf16.mxu0 0
    %3193 = vmatpush1.bf16.msra.mxu0 0
    %3194 = vmatprep.subr.bf16.mxu0 0
    %3195 = vmatpush1.bf16.msra.mxu0 0
    %3196 = vmatprep.subr.bf16.mxu0 0
    %3197 = vmatpush1.bf16.msra.mxu0 0
    %3198 = vmatprep.subr.bf16.mxu0 0
    %3199 = vmatpush1.bf16.msra.mxu0 0
    %3200 = vmatprep.subr.bf16.mxu0 0
    %3201 = vmatpush1.bf16.msra.mxu0 0
    %3202 = vmatprep.subr.bf16.mxu0 0
    %3203 = vmatpush1.bf16.msra.mxu0 0
    %3204 = vmatprep.subr.bf16.mxu0 0
    %3205 = vmatpush1.bf16.msra.mxu0 0
    %3206 = vmatprep.mubr.bf16.mxu0 0
    %3207 = vmatmul.mubr.bf16.gmra.mrb[0].mxu0 %v3076
    %v3208 = vpop.f32.mrb[0].mxu0
    %v3209 = vadd.f32 0.0, %v3208
    %v3210 = vpop.f32.mrb[0].mxu0
    %v3211 = vpop.f32.mrb[0].mxu0
    %v3212 = vadd.f32 0.0, %v3211
    %v3213 = vpop.f32.mrb[0].mxu0
    %3214 = vmatprep.mubr.bf16.mxu0 0
    %3215 = vmatmul.mubr.bf16.gmra.mrb[0].mxu0 %v3079
    %v3216 = vpop.f32.mrb[0].mxu0
    %v3217 = vadd.f32 0.0, %v3216
    %v3218 = vpop.f32.mrb[0].mxu0
    %v3219 = vpop.f32.mrb[0].mxu0
    %v3220 = vadd.f32 0.0, %v3219
    %v3221 = vpop.f32.mrb[0].mxu0
    %3222 = vmatprep.mubr.bf16.mxu0 0
    %3223 = vmatmul.mubr.bf16.gmra.mrb[0].mxu0 %v3082
    %v3224 = vpop.f32.mrb[0].mxu0
    %v3225 = vadd.f32 0.0, %v3224
    %v3226 = vpop.f32.mrb[0].mxu0
    %v3227 = vpop.f32.mrb[0].mxu0
    %v3228 = vadd.f32 0.0, %v3227
    %v3229 = vpop.f32.mrb[0].mxu0
    %3230 = vmatprep.mubr.bf16.mxu0 0
    %3231 = vmatmul.mubr.bf16.gmra.mrb[0].mxu0 %v3085
    %v3232 = vpop.f32.mrb[0].mxu0
    %v3233 = vadd.f32 0.0, %v3232
    %v3234 = vpop.f32.mrb[0].mxu0
    %v3235 = vpop.f32.mrb[0].mxu0
    %v3236 = vadd.f32 0.0, %v3235
    %v3237 = vpop.f32.mrb[0].mxu0
    %3238 = vmatprep.mubr.bf16.mxu0 0
    %3239 = vmatmul.mubr.bf16.gmra.mrb[0].mxu0 %v3088
    %v3240 = vpop.f32.mrb[0].mxu0
    %v3241 = vadd.f32 0.0, %v3240
    %v3242 = vpop.f32.mrb[0].mxu0
    %v3243 = vpop.f32.mrb[0].mxu0
    %v3244 = vadd.f32 0.0, %v3243
    %v3245 = vpop.f32.mrb[0].mxu0
    %3246 = vmatprep.mubr.bf16.mxu0 0
    %3247 = vmatmul.mubr.bf16.gmra.mrb[0].mxu0 %v3091
    %v3248 = vpop.f32.mrb[0].mxu0
    %v3249 = vadd.f32 0.0, %v3248
    %v3250 = vpop.f32.mrb[0].mxu0
    %v3251 = vpop.f32.mrb[0].mxu0
    %v3252 = vadd.f32 0.0, %v3251
    %v3253 = vpop.f32.mrb[0].mxu0
    %3254 = vmatprep.mubr.bf16.mxu0 0
    %3255 = vmatmul.mubr.bf16.gmra.mrb[0].mxu0 %v3094
    %v3256 = vpop.f32.mrb[0].mxu0
    %v3257 = vadd.f32 0.0, %v3256
    %v3258 = vpop.f32.mrb[0].mxu0
    %v3259 = vpop.f32.mrb[0].mxu0
    %v3260 = vadd.f32 0.0, %v3259
    %v3261 = vpop.f32.mrb[0].mxu0
    %3262 = vmatprep.mubr.bf16.mxu0 0
    %3263 = vmatmul.mubr.bf16.gmra.mrb[0].mxu0 %v3097
    %v3264 = vpop.f32.mrb[0].mxu0
    %v3265 = vadd.f32 0.0, %v3264
    %v3266 = vpop.f32.mrb[0].mxu0
    %v3267 = vpop.f32.mrb[0].mxu0
    %v3268 = vadd.f32 0.0, %v3267
    %v3269 = vpop.f32.mrb[0].mxu0
    %3270 = vmatprep.mubr.bf16.mxu0 0
    %3271 = vmatmul.mubr.bf16.gmra.mrb[0].mxu0 %v3100
    %v3272 = vpop.f32.mrb[0].mxu0
    %v3273 = vadd.f32 0.0, %v3272
    %v3274 = vpop.f32.mrb[0].mxu0
    %v3275 = vpop.f32.mrb[0].mxu0
    %v3276 = vadd.f32 0.0, %v3275
    %v3277 = vpop.f32.mrb[0].mxu0
    %3278 = vmatprep.mubr.bf16.mxu0 0
    %3279 = vmatmul.mubr.bf16.gmra.mrb[0].mxu0 %v3103
    %v3280 = vpop.f32.mrb[0].mxu0
    %v3281 = vadd.f32 0.0, %v3280
    %v3282 = vpop.f32.mrb[0].mxu0
    %v3283 = vpop.f32.mrb[0].mxu0
    %v3284 = vadd.f32 0.0, %v3283
    %v3285 = vpop.f32.mrb[0].mxu0
    %3286 = vmatprep.mubr.bf16.mxu0 0
    %3287 = vmatmul.mubr.bf16.gmra.mrb[0].mxu0 %v3106
    %v3288 = vpop.f32.mrb[0].mxu0
    %v3289 = vadd.f32 0.0, %v3288
    %v3290 = vpop.f32.mrb[0].mxu0
    %v3291 = vpop.f32.mrb[0].mxu0
    %v3292 = vadd.f32 0.0, %v3291
    %v3293 = vpop.f32.mrb[0].mxu0
    %3294 = vmatprep.mubr.bf16.mxu0 0
    %3295 = vmatmul.mubr.bf16.gmra.mrb[0].mxu0 %v3109
    %v3296 = vpop.f32.mrb[0].mxu0
    %v3297 = vadd.f32 0.0, %v3296
    %v3298 = vpop.f32.mrb[0].mxu0
    %v3299 = vpop.f32.mrb[0].mxu0
    %v3300 = vadd.f32 0.0, %v3299
    %v3301 = vpop.f32.mrb[0].mxu0
    %3302 = vmatprep.mubr.bf16.mxu0 0
    %3303 = vmatmul.mubr.bf16.gmra.mrb[0].mxu0 %v3112
    %v3304 = vpop.f32.mrb[0].mxu0
    %v3305 = vadd.f32 0.0, %v3304
    %v3306 = vpop.f32.mrb[0].mxu0
    %v3307 = vpop.f32.mrb[0].mxu0
    %v3308 = vadd.f32 0.0, %v3307
    %v3309 = vpop.f32.mrb[0].mxu0
    %3310 = vmatprep.mubr.bf16.mxu0 0
    %3311 = vmatmul.mubr.bf16.gmra.mrb[0].mxu0 %v3115
    %v3312 = vpop.f32.mrb[0].mxu0
    %v3313 = vadd.f32 0.0, %v3312
    %v3314 = vpop.f32.mrb[0].mxu0
    %v3315 = vpop.f32.mrb[0].mxu0
    %v3316 = vadd.f32 0.0, %v3315
    %v3317 = vpop.f32.mrb[0].mxu0
    %3318 = vmatprep.mubr.bf16.mxu0 0
    %3319 = vmatmul.mubr.bf16.gmra.mrb[0].mxu0 %v3118
    %v3320 = vpop.f32.mrb[0].mxu0
    %v3321 = vadd.f32 0.0, %v3320
    %v3322 = vpop.f32.mrb[0].mxu0
    %v3323 = vpop.f32.mrb[0].mxu0
    %v3324 = vadd.f32 0.0, %v3323
    %v3325 = vpop.f32.mrb[0].mxu0
    %3326 = vmatprep.mubr.bf16.mxu0 0
    %3327 = vmatmul.mubr.bf16.gmra.mrb[0].mxu0 %v3121
    %v3328 = vpop.f32.mrb[0].mxu0
    %v3329 = vadd.f32 0.0, %v3328
    %v3330 = vpop.f32.mrb[0].mxu0
    %v3331 = vpop.f32.mrb[0].mxu0
    %v3332 = vadd.f32 0.0, %v3331
    %v3333 = vpop.f32.mrb[0].mxu0
    %3334 = vmatprep.mubr.bf16.mxu0 0
    %3335 = vmatmul.mubr.bf16.gmra.mrb[0].mxu0 %v3124
    %v3336 = vpop.f32.mrb[0].mxu0
    %v3337 = vadd.f32 0.0, %v3336
    %v3338 = vpop.f32.mrb[0].mxu0
    %v3339 = vpop.f32.mrb[0].mxu0
    %v3340 = vadd.f32 0.0, %v3339
    %v3341 = vpop.f32.mrb[0].mxu0
    %3342 = vmatprep.mubr.bf16.mxu0 0
    %3343 = vmatmul.mubr.bf16.gmra.mrb[0].mxu0 %v3127
    %v3344 = vpop.f32.mrb[0].mxu0
    %v3345 = vadd.f32 0.0, %v3344
    %v3346 = vpop.f32.mrb[0].mxu0
    %v3347 = vpop.f32.mrb[0].mxu0
    %v3348 = vadd.f32 0.0, %v3347
    %v3349 = vpop.f32.mrb[0].mxu0
    %3350 = vmatprep.mubr.bf16.mxu0 0
    %3351 = vmatmul.mubr.bf16.gmra.mrb[0].mxu0 %v3130
    %v3352 = vpop.f32.mrb[0].mxu0
    %v3353 = vadd.f32 0.0, %v3352
    %v3354 = vpop.f32.mrb[0].mxu0
    %v3355 = vpop.f32.mrb[0].mxu0
    %v3356 = vadd.f32 0.0, %v3355
    %v3357 = vpop.f32.mrb[0].mxu0
    %3358 = vmatprep.mubr.bf16.mxu0 0
    %3359 = vmatmul.mubr.bf16.gmra.mrb[0].mxu0 %v3133
    %v3360 = vpop.f32.mrb[0].mxu0
    %v3361 = vadd.f32 0.0, %v3360
    %v3362 = vpop.f32.mrb[0].mxu0
    %v3363 = vpop.f32.mrb[0].mxu0
    %v3364 = vadd.f32 0.0, %v3363
    %v3365 = vpop.f32.mrb[0].mxu0
    %3366 = vmatprep.mubr.bf16.mxu0 0
    %3367 = vmatmul.mubr.bf16.gmra.mrb[0].mxu0 %v3136
    %v3368 = vpop.f32.mrb[0].mxu0
    %v3369 = vadd.f32 0.0, %v3368
    %v3370 = vpop.f32.mrb[0].mxu0
    %v3371 = vpop.f32.mrb[0].mxu0
    %v3372 = vadd.f32 0.0, %v3371
    %v3373 = vpop.f32.mrb[0].mxu0
    %3374 = vmatprep.mubr.bf16.mxu0 0
    %3375 = vmatmul.mubr.bf16.gmra.mrb[0].mxu0 %v3139
    %v3376 = vpop.f32.mrb[0].mxu0
    %v3377 = vadd.f32 0.0, %v3376
    %v3378 = vpop.f32.mrb[0].mxu0
    %v3379 = vpop.f32.mrb[0].mxu0
    %v3380 = vadd.f32 0.0, %v3379
    %v3381 = vpop.f32.mrb[0].mxu0
    %3382 = vmatprep.mubr.bf16.mxu0 0
    %3383 = vmatmul.mubr.bf16.gmra.mrb[0].mxu0 %v3142
    %v3384 = vpop.f32.mrb[0].mxu0
    %v3385 = vadd.f32 0.0, %v3384
    %v3386 = vpop.f32.mrb[0].mxu0
    %v3387 = vpop.f32.mrb[0].mxu0
    %v3388 = vadd.f32 0.0, %v3387
    %v3389 = vpop.f32.mrb[0].mxu0
    %3390 = vmatprep.mubr.bf16.mxu0 0
    %3391 = vmatmul.mubr.bf16.gmra.mrb[0].mxu0 %v3145
    %v3392 = vpop.f32.mrb[0].mxu0
    %v3393 = vadd.f32 0.0, %v3392
    %v3394 = vpop.f32.mrb[0].mxu0
    %v3395 = vpop.f32.mrb[0].mxu0
    %v3396 = vadd.f32 0.0, %v3395
    %v3397 = vpop.f32.mrb[0].mxu0
    %3398 = vmatprep.mubr.bf16.mxu0 0
    %3399 = vmatmul.mubr.bf16.gmra.mrb[0].mxu0 %v3148
    %v3400 = vpop.f32.mrb[0].mxu0
    %v3401 = vadd.f32 0.0, %v3400
    %v3402 = vpop.f32.mrb[0].mxu0
    %v3403 = vpop.f32.mrb[0].mxu0
    %v3404 = vadd.f32 0.0, %v3403
    %v3405 = vpop.f32.mrb[0].mxu0
    %3406 = vmatprep.mubr.bf16.mxu0 0
    %3407 = vmatmul.mubr.bf16.gmra.mrb[0].mxu0 %v3151
    %v3408 = vpop.f32.mrb[0].mxu0
    %v3409 = vadd.f32 0.0, %v3408
    %v3410 = vpop.f32.mrb[0].mxu0
    %v3411 = vpop.f32.mrb[0].mxu0
    %v3412 = vadd.f32 0.0, %v3411
    %v3413 = vpop.f32.mrb[0].mxu0
    %3414 = vmatprep.mubr.bf16.mxu0 0
    %3415 = vmatmul.mubr.bf16.gmra.mrb[0].mxu0 %v3154
    %v3416 = vpop.f32.mrb[0].mxu0
    %v3417 = vadd.f32 0.0, %v3416
    %v3418 = vpop.f32.mrb[0].mxu0
    %v3419 = vpop.f32.mrb[0].mxu0
    %v3420 = vadd.f32 0.0, %v3419
    %v3421 = vpop.f32.mrb[0].mxu0
    %3422 = vmatprep.mubr.bf16.mxu0 0
    %3423 = vmatmul.mubr.bf16.gmra.mrb[0].mxu0 %v3157
    %v3424 = vpop.f32.mrb[0].mxu0
    %v3425 = vadd.f32 0.0, %v3424
    %v3426 = vpop.f32.mrb[0].mxu0
    %v3427 = vpop.f32.mrb[0].mxu0
    %v3428 = vadd.f32 0.0, %v3427
    %v3429 = vpop.f32.mrb[0].mxu0
    %3430 = vmatprep.mubr.bf16.mxu0 0
    %3431 = vmatmul.mubr.bf16.gmra.mrb[0].mxu0 %v3160
    %v3432 = vpop.f32.mrb[0].mxu0
    %v3433 = vadd.f32 0.0, %v3432
    %v3434 = vpop.f32.mrb[0].mxu0
    %v3435 = vpop.f32.mrb[0].mxu0
    %v3436 = vadd.f32 0.0, %v3435
    %v3437 = vpop.f32.mrb[0].mxu0
    %3438 = vmatprep.mubr.bf16.mxu0 0
    %3439 = vmatmul.mubr.bf16.gmra.mrb[0].mxu0 %v3163
    %v3440 = vpop.f32.mrb[0].mxu0
    %v3441 = vadd.f32 0.0, %v3440
    %v3442 = vpop.f32.mrb[0].mxu0
    %v3443 = vpop.f32.mrb[0].mxu0
    %v3444 = vadd.f32 0.0, %v3443
    %v3445 = vpop.f32.mrb[0].mxu0
    %3446 = vmatprep.mubr.bf16.mxu0 0
    %3447 = vmatmul.mubr.bf16.gmra.mrb[0].mxu0 %v3166
    %v3448 = vpop.f32.mrb[0].mxu0
    %v3449 = vadd.f32 0.0, %v3448
    %v3450 = vpop.f32.mrb[0].mxu0
    %v3451 = vpop.f32.mrb[0].mxu0
    %v3452 = vadd.f32 0.0, %v3451
    %v3453 = vpop.f32.mrb[0].mxu0
    %3454 = vmatprep.mubr.bf16.mxu0 0
    %3455 = vmatmul.mubr.bf16.gmra.mrb[0].mxu0 %v3169
    %v3456 = vpop.f32.mrb[0].mxu0
    %v3457 = vadd.f32 0.0, %v3456
    %v3458 = vpop.f32.mrb[0].mxu0
    %v3459 = vpop.f32.mrb[0].mxu0
    %v3460 = vadd.f32 0.0, %v3459
    %v3461 = vpop.f32.mrb[0].mxu0
    %3462 = vdwg.mxu0
    %v3463 = vadd.f32 %v2913, %v3209
    %v3464 = vadd.f32 %v2914, %v3212
    %v3465 = vadd.f32 %v2915, %v3217
    %v3466 = vadd.f32 %v2916, %v3220
    %v3467 = vadd.f32 %v2917, %v3225
    %v3468 = vadd.f32 %v2918, %v3228
    %v3469 = vadd.f32 %v2919, %v3233
    %v3470 = vadd.f32 %v2920, %v3236
    %v3471 = vadd.f32 %v2921, %v3241
    %v3472 = vadd.f32 %v2922, %v3244
    %v3473 = vadd.f32 %v2923, %v3249
    %v3474 = vadd.f32 %v2924, %v3252
    %v3475 = vadd.f32 %v2925, %v3257
    %v3476 = vadd.f32 %v2926, %v3260
    %v3477 = vadd.f32 %v2927, %v3265
    %v3478 = vadd.f32 %v2928, %v3268
    %v3479 = vadd.f32 %v2929, %v3273
    %v3480 = vadd.f32 %v2930, %v3276
    %v3481 = vadd.f32 %v2931, %v3281
    %v3482 = vadd.f32 %v2932, %v3284
    %v3483 = vadd.f32 %v2933, %v3289
    %v3484 = vadd.f32 %v2934, %v3292
    %v3485 = vadd.f32 %v2935, %v3297
    %v3486 = vadd.f32 %v2936, %v3300
    %v3487 = vadd.f32 %v2937, %v3305
    %v3488 = vadd.f32 %v2938, %v3308
    %v3489 = vadd.f32 %v2939, %v3313
    %v3490 = vadd.f32 %v2940, %v3316
    %v3491 = vadd.f32 %v2941, %v3321
    %v3492 = vadd.f32 %v2942, %v3324
    %v3493 = vadd.f32 %v2943, %v3329
    %v3494 = vadd.f32 %v2944, %v3332
    %v3495 = vadd.f32 %v2945, %v3337
    %v3496 = vadd.f32 %v2946, %v3340
    %v3497 = vadd.f32 %v2947, %v3345
    %v3498 = vadd.f32 %v2948, %v3348
    %v3499 = vadd.f32 %v2949, %v3353
    %v3500 = vadd.f32 %v2950, %v3356
    %v3501 = vadd.f32 %v2951, %v3361
    %v3502 = vadd.f32 %v2952, %v3364
    %v3503 = vadd.f32 %v2953, %v3369
    %v3504 = vadd.f32 %v2954, %v3372
    %v3505 = vadd.f32 %v2955, %v3377
    %v3506 = vadd.f32 %v2956, %v3380
    %v3507 = vadd.f32 %v2957, %v3385
    %v3508 = vadd.f32 %v2958, %v3388
    %v3509 = vadd.f32 %v2959, %v3393
    %v3510 = vadd.f32 %v2960, %v3396
    %v3511 = vadd.f32 %v2961, %v3401
    %v3512 = vadd.f32 %v2962, %v3404
    %v3513 = vadd.f32 %v2963, %v3409
    %v3514 = vadd.f32 %v2964, %v3412
    %v3515 = vadd.f32 %v2965, %v3417
    %v3516 = vadd.f32 %v2966, %v3420
    %v3517 = vadd.f32 %v2967, %v3425
    %v3518 = vadd.f32 %v2968, %v3428
    %v3519 = vadd.f32 %v2969, %v3433
    %v3520 = vadd.f32 %v2970, %v3436
    %v3521 = vadd.f32 %v2971, %v3441
    %v3522 = vadd.f32 %v2972, %v3444
    %v3523 = vadd.f32 %v2973, %v3449
    %v3524 = vadd.f32 %v2974, %v3452
    %v3525 = vadd.f32 %v2975, %v3457
    %v3526 = vadd.f32 %v2976, %v3460
    %v3527 = vld [vmem:[%s1390 + $0x1] sm:$0xff]
    %v3528 = vld [vmem:[%s1390 + $0x9] sm:$0xff]
    %v3529 = vld [vmem:[%s1390 + $0x19] sm:$0xff]
    %v3530 = vld [vmem:[%s1390 + $0x21] sm:$0xff]
    %v3531 = vld [vmem:[%s1390 + $0x31] sm:$0xff]
    %v3532 = vld [vmem:[%s1390 + $0x39] sm:$0xff]
    %v3533 = vld [vmem:[%s1390 + $0x49] sm:$0xff]
    %v3534 = vld [vmem:[%s1390 + $0x51] sm:$0xff]
    %v3535 = vld [vmem:[%s1390 + $0x61] sm:$0xff]
    %v3536 = vld [vmem:[%s1390 + $0x69] sm:$0xff]
    %v3537 = vld [vmem:[%s1390 + $0x79] sm:$0xff]
    %v3538 = vld [vmem:[%s1390 + $0x81] sm:$0xff]
    %v3539 = vld [vmem:[%s1390 + $0x91] sm:$0xff]
    %v3540 = vld [vmem:[%s1390 + $0x99] sm:$0xff]
    %v3541 = vld [vmem:[%s1390 + $0xa9] sm:$0xff]
    %v3542 = vld [vmem:[%s1390 + $0xb1] sm:$0xff]
    %v3543 = vld [vmem:[%s1390 + $0xc1] sm:$0xff]
    %v3544 = vld [vmem:[%s1390 + $0xc9] sm:$0xff]
    %v3545 = vld [vmem:[%s1390 + $0xd9] sm:$0xff]
    %v3546 = vld [vmem:[%s1390 + $0xe1] sm:$0xff]
    %v3547 = vld [vmem:[%s1390 + $0xf1] sm:$0xff]
    %v3548 = vld [vmem:[%s1390 + $0xf9] sm:$0xff]
    %v3549 = vld [vmem:[%s1390 + $0x109] sm:$0xff]
    %v3550 = vld [vmem:[%s1390 + $0x111] sm:$0xff]
    %v3551 = vld [vmem:[%s1390 + $0x121] sm:$0xff]
    %v3552 = vld [vmem:[%s1390 + $0x129] sm:$0xff]
    %v3553 = vld [vmem:[%s1390 + $0x139] sm:$0xff]
    %v3554 = vld [vmem:[%s1390 + $0x141] sm:$0xff]
    %v3555 = vld [vmem:[%s1390 + $0x151] sm:$0xff]
    %v3556 = vld [vmem:[%s1390 + $0x159] sm:$0xff]
    %v3557 = vld [vmem:[%s1390 + $0x169] sm:$0xff]
    %v3558 = vld [vmem:[%s1390 + $0x171] sm:$0xff]
    %v3559 = vld [vmem:[%s1390 + $0x1b1] sm:$0xff]
    %v3560 = vld [vmem:[%s1390 + $0x1b9] sm:$0xff]
    %v3561 = vld [vmem:[%s1390 + $0x1c9] sm:$0xff]
    %v3562 = vld [vmem:[%s1390 + $0x1d1] sm:$0xff]
    %v3563 = vld [vmem:[%s1390 + $0x1e1] sm:$0xff]
    %v3564 = vld [vmem:[%s1390 + $0x1e9] sm:$0xff]
    %v3565 = vld [vmem:[%s1390 + $0x1f9] sm:$0xff]
    %v3566 = vld [vmem:[%s1390 + $0x201] sm:$0xff]
    %v3567 = vld [vmem:[%s1390 + $0x211] sm:$0xff]
    %v3568 = vld [vmem:[%s1390 + $0x219] sm:$0xff]
    %v3569 = vld [vmem:[%s1390 + $0x229] sm:$0xff]
    %v3570 = vld [vmem:[%s1390 + $0x231] sm:$0xff]
    %v3571 = vld [vmem:[%s1390 + $0x241] sm:$0xff]
    %v3572 = vld [vmem:[%s1390 + $0x249] sm:$0xff]
    %v3573 = vld [vmem:[%s1390 + $0x259] sm:$0xff]
    %v3574 = vld [vmem:[%s1390 + $0x261] sm:$0xff]
    %v3575 = vld [vmem:[%s1390 + $0x271] sm:$0xff]
    %v3576 = vld [vmem:[%s1390 + $0x279] sm:$0xff]
    %v3577 = vld [vmem:[%s1390 + $0x289] sm:$0xff]
    %v3578 = vld [vmem:[%s1390 + $0x291] sm:$0xff]
    %v3579 = vld [vmem:[%s1390 + $0x2a1] sm:$0xff]
    %v3580 = vld [vmem:[%s1390 + $0x2a9] sm:$0xff]
    %v3581 = vld [vmem:[%s1390 + $0x2b9] sm:$0xff]
    %v3582 = vld [vmem:[%s1390 + $0x2c1] sm:$0xff]
    %v3583 = vld [vmem:[%s1390 + $0x2d1] sm:$0xff]
    %v3584 = vld [vmem:[%s1390 + $0x2d9] sm:$0xff]
    %v3585 = vld [vmem:[%s1390 + $0x2e9] sm:$0xff]
    %v3586 = vld [vmem:[%s1390 + $0x2f1] sm:$0xff]
    %v3587 = vld [vmem:[%s1390 + $0x301] sm:$0xff]
    %v3588 = vld [vmem:[%s1390 + $0x309] sm:$0xff]
    %v3589 = vld [vmem:[%s1390 + $0x319] sm:$0xff]
    %v3590 = vld [vmem:[%s1390 + $0x321] sm:$0xff]
    %v3591 = vpack.c.bf16 %v3528, %v3527
    %v3592 = vpack.c.bf16 %v3530, %v3529
    %v3593 = vpack.c.bf16 %v3532, %v3531
    %v3594 = vpack.c.bf16 %v3534, %v3533
    %v3595 = vpack.c.bf16 %v3536, %v3535
    %v3596 = vpack.c.bf16 %v3538, %v3537
    %v3597 = vpack.c.bf16 %v3540, %v3539
    %v3598 = vpack.c.bf16 %v3542, %v3541
    %v3599 = vpack.c.bf16 %v3544, %v3543
    %v3600 = vpack.c.bf16 %v3546, %v3545
    %v3601 = vpack.c.bf16 %v3548, %v3547
    %v3602 = vpack.c.bf16 %v3550, %v3549
    %v3603 = vpack.c.bf16 %v3552, %v3551
    %v3604 = vpack.c.bf16 %v3554, %v3553
    %v3605 = vpack.c.bf16 %v3556, %v3555
    %v3606 = vpack.c.bf16 %v3558, %v3557
    %v3607 = vpack.c.bf16 %v3560, %v3559
    %v3608 = vpack.c.bf16 %v3562, %v3561
    %v3609 = vpack.c.bf16 %v3564, %v3563
    %v3610 = vpack.c.bf16 %v3566, %v3565
    %v3611 = vpack.c.bf16 %v3568, %v3567
    %v3612 = vpack.c.bf16 %v3570, %v3569
    %v3613 = vpack.c.bf16 %v3572, %v3571
    %v3614 = vpack.c.bf16 %v3574, %v3573
    %v3615 = vpack.c.bf16 %v3576, %v3575
    %v3616 = vpack.c.bf16 %v3578, %v3577
    %v3617 = vpack.c.bf16 %v3580, %v3579
    %v3618 = vpack.c.bf16 %v3582, %v3581
    %v3619 = vpack.c.bf16 %v3584, %v3583
    %v3620 = vpack.c.bf16 %v3586, %v3585
    %v3621 = vpack.c.bf16 %v3588, %v3587
    %v3622 = vpack.c.bf16 %v3590, %v3589
    %s3623 = scalar_lea.vmem %s4, 8
    %v3624 = vld [vmem:[%s3623] sm:$0x3]
    %v3626 = vsel %vm861, %v3591, 0
    %v3629 = vsel %vm861, %v3592, 0
    %v3632 = vsel %vm861, %v3593, 0
    %v3635 = vsel %vm861, %v3594, 0
    %v3638 = vsel %vm861, %v3595, 0
    %v3641 = vsel %vm861, %v3596, 0
    %v3644 = vsel %vm861, %v3597, 0
    %v3647 = vsel %vm861, %v3598, 0
    %v3650 = vsel %vm861, %v3599, 0
    %v3653 = vsel %vm861, %v3600, 0
    %v3656 = vsel %vm861, %v3601, 0
    %v3659 = vsel %vm861, %v3602, 0
    %v3662 = vsel %vm861, %v3603, 0
    %v3665 = vsel %vm861, %v3604, 0
    %v3668 = vsel %vm861, %v3605, 0
    %v3671 = vsel %vm861, %v3606, 0
    %v3674 = vsel %vm861, %v3607, 0
    %v3677 = vsel %vm861, %v3608, 0
    %v3680 = vsel %vm861, %v3609, 0
    %v3683 = vsel %vm861, %v3610, 0
    %v3686 = vsel %vm861, %v3611, 0
    %v3689 = vsel %vm861, %v3612, 0
    %v3692 = vsel %vm861, %v3613, 0
    %v3695 = vsel %vm861, %v3614, 0
    %v3698 = vsel %vm861, %v3615, 0
    %v3701 = vsel %vm861, %v3616, 0
    %v3704 = vsel %vm861, %v3617, 0
    %v3707 = vsel %vm861, %v3618, 0
    %v3710 = vsel %vm861, %v3619, 0
    %v3713 = vsel %vm861, %v3620, 0
    %v3716 = vsel %vm861, %v3621, 0
    %v3719 = vsel %vm861, %v3622, 0
    %v3722 = vsel %vm1746, %v3624, 0
    %3724 = vmatprep.subr.bf16.mxu0 0
    %3725 = vmatpush1.bf16.msra.mxu0 %v3722
    %3726 = vmatprep.subr.bf16.mxu0 0
    %3727 = vmatpush1.bf16.msra.mxu0 0
    %3728 = vmatprep.subr.bf16.mxu0 0
    %3729 = vmatpush1.bf16.msra.mxu0 0
    %3730 = vmatprep.subr.bf16.mxu0 0
    %3731 = vmatpush1.bf16.msra.mxu0 0
    %3732 = vmatprep.subr.bf16.mxu0 0
    %3733 = vmatpush1.bf16.msra.mxu0 0
    %3734 = vmatprep.subr.bf16.mxu0 0
    %3735 = vmatpush1.bf16.msra.mxu0 0
    %3736 = vmatprep.subr.bf16.mxu0 0
    %3737 = vmatpush1.bf16.msra.mxu0 0
    %3738 = vmatprep.subr.bf16.mxu0 0
    %3739 = vmatpush1.bf16.msra.mxu0 0
    %3740 = vmatprep.subr.bf16.mxu0 0
    %3741 = vmatpush1.bf16.msra.mxu0 0
    %3742 = vmatprep.subr.bf16.mxu0 0
    %3743 = vmatpush1.bf16.msra.mxu0 0
    %3744 = vmatprep.subr.bf16.mxu0 0
    %3745 = vmatpush1.bf16.msra.mxu0 0
    %3746 = vmatprep.subr.bf16.mxu0 0
    %3747 = vmatpush1.bf16.msra.mxu0 0
    %3748 = vmatprep.subr.bf16.mxu0 0
    %3749 = vmatpush1.bf16.msra.mxu0 0
    %3750 = vmatprep.subr.bf16.mxu0 0
    %3751 = vmatpush1.bf16.msra.mxu0 0
    %3752 = vmatprep.subr.bf16.mxu0 0
    %3753 = vmatpush1.bf16.msra.mxu0 0
    %3754 = vmatprep.subr.bf16.mxu0 0
    %3755 = vmatpush1.bf16.msra.mxu0 0
    %3756 = vmatprep.mubr.bf16.mxu0 0
    %3757 = vmatmul.mubr.bf16.gmra.mrb[0].mxu0 %v3626
    %v3758 = vpop.f32.mrb[0].mxu0
    %v3759 = vadd.f32 0.0, %v3758
    %v3760 = vpop.f32.mrb[0].mxu0
    %v3761 = vpop.f32.mrb[0].mxu0
    %v3762 = vadd.f32 0.0, %v3761
    %v3763 = vpop.f32.mrb[0].mxu0
    %3764 = vmatprep.mubr.bf16.mxu0 0
    %3765 = vmatmul.mubr.bf16.gmra.mrb[0].mxu0 %v3629
    %v3766 = vpop.f32.mrb[0].mxu0
    %v3767 = vadd.f32 0.0, %v3766
    %v3768 = vpop.f32.mrb[0].mxu0
    %v3769 = vpop.f32.mrb[0].mxu0
    %v3770 = vadd.f32 0.0, %v3769
    %v3771 = vpop.f32.mrb[0].mxu0
    %3772 = vmatprep.mubr.bf16.mxu0 0
    %3773 = vmatmul.mubr.bf16.gmra.mrb[0].mxu0 %v3632
    %v3774 = vpop.f32.mrb[0].mxu0
    %v3775 = vadd.f32 0.0, %v3774
    %v3776 = vpop.f32.mrb[0].mxu0
    %v3777 = vpop.f32.mrb[0].mxu0
    %v3778 = vadd.f32 0.0, %v3777
    %v3779 = vpop.f32.mrb[0].mxu0
    %3780 = vmatprep.mubr.bf16.mxu0 0
    %3781 = vmatmul.mubr.bf16.gmra.mrb[0].mxu0 %v3635
    %v3782 = vpop.f32.mrb[0].mxu0
    %v3783 = vadd.f32 0.0, %v3782
    %v3784 = vpop.f32.mrb[0].mxu0
    %v3785 = vpop.f32.mrb[0].mxu0
    %v3786 = vadd.f32 0.0, %v3785
    %v3787 = vpop.f32.mrb[0].mxu0
    %3788 = vmatprep.mubr.bf16.mxu0 0
    %3789 = vmatmul.mubr.bf16.gmra.mrb[0].mxu0 %v3638
    %v3790 = vpop.f32.mrb[0].mxu0
    %v3791 = vadd.f32 0.0, %v3790
    %v3792 = vpop.f32.mrb[0].mxu0
    %v3793 = vpop.f32.mrb[0].mxu0
    %v3794 = vadd.f32 0.0, %v3793
    %v3795 = vpop.f32.mrb[0].mxu0
    %3796 = vmatprep.mubr.bf16.mxu0 0
    %3797 = vmatmul.mubr.bf16.gmra.mrb[0].mxu0 %v3641
    %v3798 = vpop.f32.mrb[0].mxu0
    %v3799 = vadd.f32 0.0, %v3798
    %v3800 = vpop.f32.mrb[0].mxu0
    %v3801 = vpop.f32.mrb[0].mxu0
    %v3802 = vadd.f32 0.0, %v3801
    %v3803 = vpop.f32.mrb[0].mxu0
    %3804 = vmatprep.mubr.bf16.mxu0 0
    %3805 = vmatmul.mubr.bf16.gmra.mrb[0].mxu0 %v3644
    %v3806 = vpop.f32.mrb[0].mxu0
    %v3807 = vadd.f32 0.0, %v3806
    %v3808 = vpop.f32.mrb[0].mxu0
    %v3809 = vpop.f32.mrb[0].mxu0
    %v3810 = vadd.f32 0.0, %v3809
    %v3811 = vpop.f32.mrb[0].mxu0
    %3812 = vmatprep.mubr.bf16.mxu0 0
    %3813 = vmatmul.mubr.bf16.gmra.mrb[0].mxu0 %v3647
    %v3814 = vpop.f32.mrb[0].mxu0
    %v3815 = vadd.f32 0.0, %v3814
    %v3816 = vpop.f32.mrb[0].mxu0
    %v3817 = vpop.f32.mrb[0].mxu0
    %v3818 = vadd.f32 0.0, %v3817
    %v3819 = vpop.f32.mrb[0].mxu0
    %3820 = vmatprep.mubr.bf16.mxu0 0
    %3821 = vmatmul.mubr.bf16.gmra.mrb[0].mxu0 %v3650
    %v3822 = vpop.f32.mrb[0].mxu0
    %v3823 = vadd.f32 0.0, %v3822
    %v3824 = vpop.f32.mrb[0].mxu0
    %v3825 = vpop.f32.mrb[0].mxu0
    %v3826 = vadd.f32 0.0, %v3825
    %v3827 = vpop.f32.mrb[0].mxu0
    %3828 = vmatprep.mubr.bf16.mxu0 0
    %3829 = vmatmul.mubr.bf16.gmra.mrb[0].mxu0 %v3653
    %v3830 = vpop.f32.mrb[0].mxu0
    %v3831 = vadd.f32 0.0, %v3830
    %v3832 = vpop.f32.mrb[0].mxu0
    %v3833 = vpop.f32.mrb[0].mxu0
    %v3834 = vadd.f32 0.0, %v3833
    %v3835 = vpop.f32.mrb[0].mxu0
    %3836 = vmatprep.mubr.bf16.mxu0 0
    %3837 = vmatmul.mubr.bf16.gmra.mrb[0].mxu0 %v3656
    %v3838 = vpop.f32.mrb[0].mxu0
    %v3839 = vadd.f32 0.0, %v3838
    %v3840 = vpop.f32.mrb[0].mxu0
    %v3841 = vpop.f32.mrb[0].mxu0
    %v3842 = vadd.f32 0.0, %v3841
    %v3843 = vpop.f32.mrb[0].mxu0
    %3844 = vmatprep.mubr.bf16.mxu0 0
    %3845 = vmatmul.mubr.bf16.gmra.mrb[0].mxu0 %v3659
    %v3846 = vpop.f32.mrb[0].mxu0
    %v3847 = vadd.f32 0.0, %v3846
    %v3848 = vpop.f32.mrb[0].mxu0
    %v3849 = vpop.f32.mrb[0].mxu0
    %v3850 = vadd.f32 0.0, %v3849
    %v3851 = vpop.f32.mrb[0].mxu0
    %3852 = vmatprep.mubr.bf16.mxu0 0
    %3853 = vmatmul.mubr.bf16.gmra.mrb[0].mxu0 %v3662
    %v3854 = vpop.f32.mrb[0].mxu0
    %v3855 = vadd.f32 0.0, %v3854
    %v3856 = vpop.f32.mrb[0].mxu0
    %v3857 = vpop.f32.mrb[0].mxu0
    %v3858 = vadd.f32 0.0, %v3857
    %v3859 = vpop.f32.mrb[0].mxu0
    %3860 = vmatprep.mubr.bf16.mxu0 0
    %3861 = vmatmul.mubr.bf16.gmra.mrb[0].mxu0 %v3665
    %v3862 = vpop.f32.mrb[0].mxu0
    %v3863 = vadd.f32 0.0, %v3862
    %v3864 = vpop.f32.mrb[0].mxu0
    %v3865 = vpop.f32.mrb[0].mxu0
    %v3866 = vadd.f32 0.0, %v3865
    %v3867 = vpop.f32.mrb[0].mxu0
    %3868 = vmatprep.mubr.bf16.mxu0 0
    %3869 = vmatmul.mubr.bf16.gmra.mrb[0].mxu0 %v3668
    %v3870 = vpop.f32.mrb[0].mxu0
    %v3871 = vadd.f32 0.0, %v3870
    %v3872 = vpop.f32.mrb[0].mxu0
    %v3873 = vpop.f32.mrb[0].mxu0
    %v3874 = vadd.f32 0.0, %v3873
    %v3875 = vpop.f32.mrb[0].mxu0
    %3876 = vmatprep.mubr.bf16.mxu0 0
    %3877 = vmatmul.mubr.bf16.gmra.mrb[0].mxu0 %v3671
    %v3878 = vpop.f32.mrb[0].mxu0
    %v3879 = vadd.f32 0.0, %v3878
    %v3880 = vpop.f32.mrb[0].mxu0
    %v3881 = vpop.f32.mrb[0].mxu0
    %v3882 = vadd.f32 0.0, %v3881
    %v3883 = vpop.f32.mrb[0].mxu0
    %3884 = vmatprep.mubr.bf16.mxu0 0
    %3885 = vmatmul.mubr.bf16.gmra.mrb[0].mxu0 %v3674
    %v3886 = vpop.f32.mrb[0].mxu0
    %v3887 = vadd.f32 0.0, %v3886
    %v3888 = vpop.f32.mrb[0].mxu0
    %v3889 = vpop.f32.mrb[0].mxu0
    %v3890 = vadd.f32 0.0, %v3889
    %v3891 = vpop.f32.mrb[0].mxu0
    %3892 = vmatprep.mubr.bf16.mxu0 0
    %3893 = vmatmul.mubr.bf16.gmra.mrb[0].mxu0 %v3677
    %v3894 = vpop.f32.mrb[0].mxu0
    %v3895 = vadd.f32 0.0, %v3894
    %v3896 = vpop.f32.mrb[0].mxu0
    %v3897 = vpop.f32.mrb[0].mxu0
    %v3898 = vadd.f32 0.0, %v3897
    %v3899 = vpop.f32.mrb[0].mxu0
    %3900 = vmatprep.mubr.bf16.mxu0 0
    %3901 = vmatmul.mubr.bf16.gmra.mrb[0].mxu0 %v3680
    %v3902 = vpop.f32.mrb[0].mxu0
    %v3903 = vadd.f32 0.0, %v3902
    %v3904 = vpop.f32.mrb[0].mxu0
    %v3905 = vpop.f32.mrb[0].mxu0
    %v3906 = vadd.f32 0.0, %v3905
    %v3907 = vpop.f32.mrb[0].mxu0
    %3908 = vmatprep.mubr.bf16.mxu0 0
    %3909 = vmatmul.mubr.bf16.gmra.mrb[0].mxu0 %v3683
    %v3910 = vpop.f32.mrb[0].mxu0
    %v3911 = vadd.f32 0.0, %v3910
    %v3912 = vpop.f32.mrb[0].mxu0
    %v3913 = vpop.f32.mrb[0].mxu0
    %v3914 = vadd.f32 0.0, %v3913
    %v3915 = vpop.f32.mrb[0].mxu0
    %3916 = vmatprep.mubr.bf16.mxu0 0
    %3917 = vmatmul.mubr.bf16.gmra.mrb[0].mxu0 %v3686
    %v3918 = vpop.f32.mrb[0].mxu0
    %v3919 = vadd.f32 0.0, %v3918
    %v3920 = vpop.f32.mrb[0].mxu0
    %v3921 = vpop.f32.mrb[0].mxu0
    %v3922 = vadd.f32 0.0, %v3921
    %v3923 = vpop.f32.mrb[0].mxu0
    %3924 = vmatprep.mubr.bf16.mxu0 0
    %3925 = vmatmul.mubr.bf16.gmra.mrb[0].mxu0 %v3689
    %v3926 = vpop.f32.mrb[0].mxu0
    %v3927 = vadd.f32 0.0, %v3926
    %v3928 = vpop.f32.mrb[0].mxu0
    %v3929 = vpop.f32.mrb[0].mxu0
    %v3930 = vadd.f32 0.0, %v3929
    %v3931 = vpop.f32.mrb[0].mxu0
    %3932 = vmatprep.mubr.bf16.mxu0 0
    %3933 = vmatmul.mubr.bf16.gmra.mrb[0].mxu0 %v3692
    %v3934 = vpop.f32.mrb[0].mxu0
    %v3935 = vadd.f32 0.0, %v3934
    %v3936 = vpop.f32.mrb[0].mxu0
    %v3937 = vpop.f32.mrb[0].mxu0
    %v3938 = vadd.f32 0.0, %v3937
    %v3939 = vpop.f32.mrb[0].mxu0
    %3940 = vmatprep.mubr.bf16.mxu0 0
    %3941 = vmatmul.mubr.bf16.gmra.mrb[0].mxu0 %v3695
    %v3942 = vpop.f32.mrb[0].mxu0
    %v3943 = vadd.f32 0.0, %v3942
    %v3944 = vpop.f32.mrb[0].mxu0
    %v3945 = vpop.f32.mrb[0].mxu0
    %v3946 = vadd.f32 0.0, %v3945
    %v3947 = vpop.f32.mrb[0].mxu0
    %3948 = vmatprep.mubr.bf16.mxu0 0
    %3949 = vmatmul.mubr.bf16.gmra.mrb[0].mxu0 %v3698
    %v3950 = vpop.f32.mrb[0].mxu0
    %v3951 = vadd.f32 0.0, %v3950
    %v3952 = vpop.f32.mrb[0].mxu0
    %v3953 = vpop.f32.mrb[0].mxu0
    %v3954 = vadd.f32 0.0, %v3953
    %v3955 = vpop.f32.mrb[0].mxu0
    %3956 = vmatprep.mubr.bf16.mxu0 0
    %3957 = vmatmul.mubr.bf16.gmra.mrb[0].mxu0 %v3701
    %v3958 = vpop.f32.mrb[0].mxu0
    %v3959 = vadd.f32 0.0, %v3958
    %v3960 = vpop.f32.mrb[0].mxu0
    %v3961 = vpop.f32.mrb[0].mxu0
    %v3962 = vadd.f32 0.0, %v3961
    %v3963 = vpop.f32.mrb[0].mxu0
    %3964 = vmatprep.mubr.bf16.mxu0 0
    %3965 = vmatmul.mubr.bf16.gmra.mrb[0].mxu0 %v3704
    %v3966 = vpop.f32.mrb[0].mxu0
    %v3967 = vadd.f32 0.0, %v3966
    %v3968 = vpop.f32.mrb[0].mxu0
    %v3969 = vpop.f32.mrb[0].mxu0
    %v3970 = vadd.f32 0.0, %v3969
    %v3971 = vpop.f32.mrb[0].mxu0
    %3972 = vmatprep.mubr.bf16.mxu0 0
    %3973 = vmatmul.mubr.bf16.gmra.mrb[0].mxu0 %v3707
    %v3974 = vpop.f32.mrb[0].mxu0
    %v3975 = vadd.f32 0.0, %v3974
    %v3976 = vpop.f32.mrb[0].mxu0
    %v3977 = vpop.f32.mrb[0].mxu0
    %v3978 = vadd.f32 0.0, %v3977
    %v3979 = vpop.f32.mrb[0].mxu0
    %3980 = vmatprep.mubr.bf16.mxu0 0
    %3981 = vmatmul.mubr.bf16.gmra.mrb[0].mxu0 %v3710
    %v3982 = vpop.f32.mrb[0].mxu0
    %v3983 = vadd.f32 0.0, %v3982
    %v3984 = vpop.f32.mrb[0].mxu0
    %v3985 = vpop.f32.mrb[0].mxu0
    %v3986 = vadd.f32 0.0, %v3985
    %v3987 = vpop.f32.mrb[0].mxu0
    %3988 = vmatprep.mubr.bf16.mxu0 0
    %3989 = vmatmul.mubr.bf16.gmra.mrb[0].mxu0 %v3713
    %v3990 = vpop.f32.mrb[0].mxu0
    %v3991 = vadd.f32 0.0, %v3990
    %v3992 = vpop.f32.mrb[0].mxu0
    %v3993 = vpop.f32.mrb[0].mxu0
    %v3994 = vadd.f32 0.0, %v3993
    %v3995 = vpop.f32.mrb[0].mxu0
    %3996 = vmatprep.mubr.bf16.mxu0 0
    %3997 = vmatmul.mubr.bf16.gmra.mrb[0].mxu0 %v3716
    %v3998 = vpop.f32.mrb[0].mxu0
    %v3999 = vadd.f32 0.0, %v3998
    %v4000 = vpop.f32.mrb[0].mxu0
    %v4001 = vpop.f32.mrb[0].mxu0
    %v4002 = vadd.f32 0.0, %v4001
    %v4003 = vpop.f32.mrb[0].mxu0
    %4004 = vmatprep.mubr.bf16.mxu0 0
    %4005 = vmatmul.mubr.bf16.gmra.mrb[0].mxu0 %v3719
    %v4006 = vpop.f32.mrb[0].mxu0
    %v4007 = vadd.f32 0.0, %v4006
    %v4008 = vpop.f32.mrb[0].mxu0
    %v4009 = vpop.f32.mrb[0].mxu0
    %v4010 = vadd.f32 0.0, %v4009
    %v4011 = vpop.f32.mrb[0].mxu0
    %4012 = vdwg.mxu0
    %v4013 = vadd.f32 %v3463, %v3759
    %v4014 = vadd.f32 %v3464, %v3762
    %v4015 = vadd.f32 %v3465, %v3767
    %v4016 = vadd.f32 %v3466, %v3770
    %v4017 = vadd.f32 %v3467, %v3775
    %v4018 = vadd.f32 %v3468, %v3778
    %v4019 = vadd.f32 %v3469, %v3783
    %v4020 = vadd.f32 %v3470, %v3786
    %v4021 = vadd.f32 %v3471, %v3791
    %v4022 = vadd.f32 %v3472, %v3794
    %v4023 = vadd.f32 %v3473, %v3799
    %v4024 = vadd.f32 %v3474, %v3802
    %v4025 = vadd.f32 %v3475, %v3807
    %v4026 = vadd.f32 %v3476, %v3810
    %v4027 = vadd.f32 %v3477, %v3815
    %v4028 = vadd.f32 %v3478, %v3818
    %v4029 = vadd.f32 %v3479, %v3823
    %v4030 = vadd.f32 %v3480, %v3826
    %v4031 = vadd.f32 %v3481, %v3831
    %v4032 = vadd.f32 %v3482, %v3834
    %v4033 = vadd.f32 %v3483, %v3839
    %v4034 = vadd.f32 %v3484, %v3842
    %v4035 = vadd.f32 %v3485, %v3847
    %v4036 = vadd.f32 %v3486, %v3850
    %v4037 = vadd.f32 %v3487, %v3855
    %v4038 = vadd.f32 %v3488, %v3858
    %v4039 = vadd.f32 %v3489, %v3863
    %v4040 = vadd.f32 %v3490, %v3866
    %v4041 = vadd.f32 %v3491, %v3871
    %v4042 = vadd.f32 %v3492, %v3874
    %v4043 = vadd.f32 %v3493, %v3879
    %v4044 = vadd.f32 %v3494, %v3882
    %v4045 = vadd.f32 %v3495, %v3887
    %v4046 = vadd.f32 %v3496, %v3890
    %v4047 = vadd.f32 %v3497, %v3895
    %v4048 = vadd.f32 %v3498, %v3898
    %v4049 = vadd.f32 %v3499, %v3903
    %v4050 = vadd.f32 %v3500, %v3906
    %v4051 = vadd.f32 %v3501, %v3911
    %v4052 = vadd.f32 %v3502, %v3914
    %v4053 = vadd.f32 %v3503, %v3919
    %v4054 = vadd.f32 %v3504, %v3922
    %v4055 = vadd.f32 %v3505, %v3927
    %v4056 = vadd.f32 %v3506, %v3930
    %v4057 = vadd.f32 %v3507, %v3935
    %v4058 = vadd.f32 %v3508, %v3938
    %v4059 = vadd.f32 %v3509, %v3943
    %v4060 = vadd.f32 %v3510, %v3946
    %v4061 = vadd.f32 %v3511, %v3951
    %v4062 = vadd.f32 %v3512, %v3954
    %v4063 = vadd.f32 %v3513, %v3959
    %v4064 = vadd.f32 %v3514, %v3962
    %v4065 = vadd.f32 %v3515, %v3967
    %v4066 = vadd.f32 %v3516, %v3970
    %v4067 = vadd.f32 %v3517, %v3975
    %v4068 = vadd.f32 %v3518, %v3978
    %v4069 = vadd.f32 %v3519, %v3983
    %v4070 = vadd.f32 %v3520, %v3986
    %v4071 = vadd.f32 %v3521, %v3991
    %v4072 = vadd.f32 %v3522, %v3994
    %v4073 = vadd.f32 %v3523, %v3999
    %v4074 = vadd.f32 %v3524, %v4002
    %v4075 = vadd.f32 %v3525, %v4007
    %v4076 = vadd.f32 %v3526, %v4010
    %v4077 = vld [vmem:[%s1390 + $0x2] sm:$0xff]
    %v4078 = vld [vmem:[%s1390 + $0xa] sm:$0xff]
    %v4079 = vld [vmem:[%s1390 + $0x1a] sm:$0xff]
    %v4080 = vld [vmem:[%s1390 + $0x22] sm:$0xff]
    %v4081 = vld [vmem:[%s1390 + $0x32] sm:$0xff]
    %v4082 = vld [vmem:[%s1390 + $0x3a] sm:$0xff]
    %v4083 = vld [vmem:[%s1390 + $0x4a] sm:$0xff]
    %v4084 = vld [vmem:[%s1390 + $0x52] sm:$0xff]
    %v4085 = vld [vmem:[%s1390 + $0x62] sm:$0xff]
    %v4086 = vld [vmem:[%s1390 + $0x6a] sm:$0xff]
    %v4087 = vld [vmem:[%s1390 + $0x7a] sm:$0xff]
    %v4088 = vld [vmem:[%s1390 + $0x82] sm:$0xff]
    %v4089 = vld [vmem:[%s1390 + $0x92] sm:$0xff]
    %v4090 = vld [vmem:[%s1390 + $0x9a] sm:$0xff]
    %v4091 = vld [vmem:[%s1390 + $0xaa] sm:$0xff]
    %v4092 = vld [vmem:[%s1390 + $0xb2] sm:$0xff]
    %v4093 = vld [vmem:[%s1390 + $0xc2] sm:$0xff]
    %v4094 = vld [vmem:[%s1390 + $0xca] sm:$0xff]
    %v4095 = vld [vmem:[%s1390 + $0xda] sm:$0xff]
    %v4096 = vld [vmem:[%s1390 + $0xe2] sm:$0xff]
    %v4097 = vld [vmem:[%s1390 + $0xf2] sm:$0xff]
    %v4098 = vld [vmem:[%s1390 + $0xfa] sm:$0xff]
    %v4099 = vld [vmem:[%s1390 + $0x10a] sm:$0xff]
    %v4100 = vld [vmem:[%s1390 + $0x112] sm:$0xff]
    %v4101 = vld [vmem:[%s1390 + $0x122] sm:$0xff]
    %v4102 = vld [vmem:[%s1390 + $0x12a] sm:$0xff]
    %v4103 = vld [vmem:[%s1390 + $0x13a] sm:$0xff]
    %v4104 = vld [vmem:[%s1390 + $0x142] sm:$0xff]
    %v4105 = vld [vmem:[%s1390 + $0x152] sm:$0xff]
    %v4106 = vld [vmem:[%s1390 + $0x15a] sm:$0xff]
    %v4107 = vld [vmem:[%s1390 + $0x16a] sm:$0xff]
    %v4108 = vld [vmem:[%s1390 + $0x172] sm:$0xff]
    %v4109 = vld [vmem:[%s1390 + $0x1b2] sm:$0xff]
    %v4110 = vld [vmem:[%s1390 + $0x1ba] sm:$0xff]
    %v4111 = vld [vmem:[%s1390 + $0x1ca] sm:$0xff]
    %v4112 = vld [vmem:[%s1390 + $0x1d2] sm:$0xff]
    %v4113 = vld [vmem:[%s1390 + $0x1e2] sm:$0xff]
    %v4114 = vld [vmem:[%s1390 + $0x1ea] sm:$0xff]
    %v4115 = vld [vmem:[%s1390 + $0x1fa] sm:$0xff]
    %v4116 = vld [vmem:[%s1390 + $0x202] sm:$0xff]
    %v4117 = vld [vmem:[%s1390 + $0x212] sm:$0xff]
    %v4118 = vld [vmem:[%s1390 + $0x21a] sm:$0xff]
    %v4119 = vld [vmem:[%s1390 + $0x22a] sm:$0xff]
    %v4120 = vld [vmem:[%s1390 + $0x232] sm:$0xff]
    %v4121 = vld [vmem:[%s1390 + $0x242] sm:$0xff]
    %v4122 = vld [vmem:[%s1390 + $0x24a] sm:$0xff]
    %v4123 = vld [vmem:[%s1390 + $0x25a] sm:$0xff]
    %v4124 = vld [vmem:[%s1390 + $0x262] sm:$0xff]
    %v4125 = vld [vmem:[%s1390 + $0x272] sm:$0xff]
    %v4126 = vld [vmem:[%s1390 + $0x27a] sm:$0xff]
    %v4127 = vld [vmem:[%s1390 + $0x28a] sm:$0xff]
    %v4128 = vld [vmem:[%s1390 + $0x292] sm:$0xff]
    %v4129 = vld [vmem:[%s1390 + $0x2a2] sm:$0xff]
    %v4130 = vld [vmem:[%s1390 + $0x2aa] sm:$0xff]
    %v4131 = vld [vmem:[%s1390 + $0x2ba] sm:$0xff]
    %v4132 = vld [vmem:[%s1390 + $0x2c2] sm:$0xff]
    %v4133 = vld [vmem:[%s1390 + $0x2d2] sm:$0xff]
    %v4134 = vld [vmem:[%s1390 + $0x2da] sm:$0xff]
    %v4135 = vld [vmem:[%s1390 + $0x2ea] sm:$0xff]
    %v4136 = vld [vmem:[%s1390 + $0x2f2] sm:$0xff]
    %v4137 = vld [vmem:[%s1390 + $0x302] sm:$0xff]
    %v4138 = vld [vmem:[%s1390 + $0x30a] sm:$0xff]
    %v4139 = vld [vmem:[%s1390 + $0x31a] sm:$0xff]
    %v4140 = vld [vmem:[%s1390 + $0x322] sm:$0xff]
    %v4141 = vpack.c.bf16 %v4078, %v4077
    %v4142 = vpack.c.bf16 %v4080, %v4079
    %v4143 = vpack.c.bf16 %v4082, %v4081
    %v4144 = vpack.c.bf16 %v4084, %v4083
    %v4145 = vpack.c.bf16 %v4086, %v4085
    %v4146 = vpack.c.bf16 %v4088, %v4087
    %v4147 = vpack.c.bf16 %v4090, %v4089
    %v4148 = vpack.c.bf16 %v4092, %v4091
    %v4149 = vpack.c.bf16 %v4094, %v4093
    %v4150 = vpack.c.bf16 %v4096, %v4095
    %v4151 = vpack.c.bf16 %v4098, %v4097
    %v4152 = vpack.c.bf16 %v4100, %v4099
    %v4153 = vpack.c.bf16 %v4102, %v4101
    %v4154 = vpack.c.bf16 %v4104, %v4103
    %v4155 = vpack.c.bf16 %v4106, %v4105
    %v4156 = vpack.c.bf16 %v4108, %v4107
    %v4157 = vpack.c.bf16 %v4110, %v4109
    %v4158 = vpack.c.bf16 %v4112, %v4111
    %v4159 = vpack.c.bf16 %v4114, %v4113
    %v4160 = vpack.c.bf16 %v4116, %v4115
    %v4161 = vpack.c.bf16 %v4118, %v4117
    %v4162 = vpack.c.bf16 %v4120, %v4119
    %v4163 = vpack.c.bf16 %v4122, %v4121
    %v4164 = vpack.c.bf16 %v4124, %v4123
    %v4165 = vpack.c.bf16 %v4126, %v4125
    %v4166 = vpack.c.bf16 %v4128, %v4127
    %v4167 = vpack.c.bf16 %v4130, %v4129
    %v4168 = vpack.c.bf16 %v4132, %v4131
    %v4169 = vpack.c.bf16 %v4134, %v4133
    %v4170 = vpack.c.bf16 %v4136, %v4135
    %v4171 = vpack.c.bf16 %v4138, %v4137
    %v4172 = vpack.c.bf16 %v4140, %v4139
    %s4173 = scalar_lea.vmem %s4, 10
    %v4174 = vld [vmem:[%s4173] sm:$0x3]
    %v4176 = vsel %vm861, %v4141, 0
    %v4179 = vsel %vm861, %v4142, 0
    %v4182 = vsel %vm861, %v4143, 0
    %v4185 = vsel %vm861, %v4144, 0
    %v4188 = vsel %vm861, %v4145, 0
    %v4191 = vsel %vm861, %v4146, 0
    %v4194 = vsel %vm861, %v4147, 0
    %v4197 = vsel %vm861, %v4148, 0
    %v4200 = vsel %vm861, %v4149, 0
    %v4203 = vsel %vm861, %v4150, 0
    %v4206 = vsel %vm861, %v4151, 0
    %v4209 = vsel %vm861, %v4152, 0
    %v4212 = vsel %vm861, %v4153, 0
    %v4215 = vsel %vm861, %v4154, 0
    %v4218 = vsel %vm861, %v4155, 0
    %v4221 = vsel %vm861, %v4156, 0
    %v4224 = vsel %vm861, %v4157, 0
    %v4227 = vsel %vm861, %v4158, 0
    %v4230 = vsel %vm861, %v4159, 0
    %v4233 = vsel %vm861, %v4160, 0
    %v4236 = vsel %vm861, %v4161, 0
    %v4239 = vsel %vm861, %v4162, 0
    %v4242 = vsel %vm861, %v4163, 0
    %v4245 = vsel %vm861, %v4164, 0
    %v4248 = vsel %vm861, %v4165, 0
    %v4251 = vsel %vm861, %v4166, 0
    %v4254 = vsel %vm861, %v4167, 0
    %v4257 = vsel %vm861, %v4168, 0
    %v4260 = vsel %vm861, %v4169, 0
    %v4263 = vsel %vm861, %v4170, 0
    %v4266 = vsel %vm861, %v4171, 0
    %v4269 = vsel %vm861, %v4172, 0
    %v4272 = vsel %vm1746, %v4174, 0
    %4274 = vmatprep.subr.bf16.mxu0 0
    %4275 = vmatpush1.bf16.msra.mxu0 %v4272
    %4276 = vmatprep.subr.bf16.mxu0 0
    %4277 = vmatpush1.bf16.msra.mxu0 0
    %4278 = vmatprep.subr.bf16.mxu0 0
    %4279 = vmatpush1.bf16.msra.mxu0 0
    %4280 = vmatprep.subr.bf16.mxu0 0
    %4281 = vmatpush1.bf16.msra.mxu0 0
    %4282 = vmatprep.subr.bf16.mxu0 0
    %4283 = vmatpush1.bf16.msra.mxu0 0
    %4284 = vmatprep.subr.bf16.mxu0 0
    %4285 = vmatpush1.bf16.msra.mxu0 0
    %4286 = vmatprep.subr.bf16.mxu0 0
    %4287 = vmatpush1.bf16.msra.mxu0 0
    %4288 = vmatprep.subr.bf16.mxu0 0
    %4289 = vmatpush1.bf16.msra.mxu0 0
    %4290 = vmatprep.subr.bf16.mxu0 0
    %4291 = vmatpush1.bf16.msra.mxu0 0
    %4292 = vmatprep.subr.bf16.mxu0 0
    %4293 = vmatpush1.bf16.msra.mxu0 0
    %4294 = vmatprep.subr.bf16.mxu0 0
    %4295 = vmatpush1.bf16.msra.mxu0 0
    %4296 = vmatprep.subr.bf16.mxu0 0
    %4297 = vmatpush1.bf16.msra.mxu0 0
    %4298 = vmatprep.subr.bf16.mxu0 0
    %4299 = vmatpush1.bf16.msra.mxu0 0
    %4300 = vmatprep.subr.bf16.mxu0 0
    %4301 = vmatpush1.bf16.msra.mxu0 0
    %4302 = vmatprep.subr.bf16.mxu0 0
    %4303 = vmatpush1.bf16.msra.mxu0 0
    %4304 = vmatprep.subr.bf16.mxu0 0
    %4305 = vmatpush1.bf16.msra.mxu0 0
    %4306 = vmatprep.mubr.bf16.mxu0 0
    %4307 = vmatmul.mubr.bf16.gmra.mrb[0].mxu0 %v4176
    %v4308 = vpop.f32.mrb[0].mxu0
    %v4309 = vadd.f32 0.0, %v4308
    %v4310 = vpop.f32.mrb[0].mxu0
    %v4311 = vpop.f32.mrb[0].mxu0
    %v4312 = vadd.f32 0.0, %v4311
    %v4313 = vpop.f32.mrb[0].mxu0
    %4314 = vmatprep.mubr.bf16.mxu0 0
    %4315 = vmatmul.mubr.bf16.gmra.mrb[0].mxu0 %v4179
    %v4316 = vpop.f32.mrb[0].mxu0
    %v4317 = vadd.f32 0.0, %v4316
    %v4318 = vpop.f32.mrb[0].mxu0
    %v4319 = vpop.f32.mrb[0].mxu0
    %v4320 = vadd.f32 0.0, %v4319
    %v4321 = vpop.f32.mrb[0].mxu0
    %4322 = vmatprep.mubr.bf16.mxu0 0
    %4323 = vmatmul.mubr.bf16.gmra.mrb[0].mxu0 %v4182
    %v4324 = vpop.f32.mrb[0].mxu0
    %v4325 = vadd.f32 0.0, %v4324
    %v4326 = vpop.f32.mrb[0].mxu0
    %v4327 = vpop.f32.mrb[0].mxu0
    %v4328 = vadd.f32 0.0, %v4327
    %v4329 = vpop.f32.mrb[0].mxu0
    %4330 = vmatprep.mubr.bf16.mxu0 0
    %4331 = vmatmul.mubr.bf16.gmra.mrb[0].mxu0 %v4185
    %v4332 = vpop.f32.mrb[0].mxu0
    %v4333 = vadd.f32 0.0, %v4332
    %v4334 = vpop.f32.mrb[0].mxu0
    %v4335 = vpop.f32.mrb[0].mxu0
    %v4336 = vadd.f32 0.0, %v4335
    %v4337 = vpop.f32.mrb[0].mxu0
    %4338 = vmatprep.mubr.bf16.mxu0 0
    %4339 = vmatmul.mubr.bf16.gmra.mrb[0].mxu0 %v4188
    %v4340 = vpop.f32.mrb[0].mxu0
    %v4341 = vadd.f32 0.0, %v4340
    %v4342 = vpop.f32.mrb[0].mxu0
    %v4343 = vpop.f32.mrb[0].mxu0
    %v4344 = vadd.f32 0.0, %v4343
    %v4345 = vpop.f32.mrb[0].mxu0
    %4346 = vmatprep.mubr.bf16.mxu0 0
    %4347 = vmatmul.mubr.bf16.gmra.mrb[0].mxu0 %v4191
    %v4348 = vpop.f32.mrb[0].mxu0
    %v4349 = vadd.f32 0.0, %v4348
    %v4350 = vpop.f32.mrb[0].mxu0
    %v4351 = vpop.f32.mrb[0].mxu0
    %v4352 = vadd.f32 0.0, %v4351
    %v4353 = vpop.f32.mrb[0].mxu0
    %4354 = vmatprep.mubr.bf16.mxu0 0
    %4355 = vmatmul.mubr.bf16.gmra.mrb[0].mxu0 %v4194
    %v4356 = vpop.f32.mrb[0].mxu0
    %v4357 = vadd.f32 0.0, %v4356
    %v4358 = vpop.f32.mrb[0].mxu0
    %v4359 = vpop.f32.mrb[0].mxu0
    %v4360 = vadd.f32 0.0, %v4359
    %v4361 = vpop.f32.mrb[0].mxu0
    %4362 = vmatprep.mubr.bf16.mxu0 0
    %4363 = vmatmul.mubr.bf16.gmra.mrb[0].mxu0 %v4197
    %v4364 = vpop.f32.mrb[0].mxu0
    %v4365 = vadd.f32 0.0, %v4364
    %v4366 = vpop.f32.mrb[0].mxu0
    %v4367 = vpop.f32.mrb[0].mxu0
    %v4368 = vadd.f32 0.0, %v4367
    %v4369 = vpop.f32.mrb[0].mxu0
    %4370 = vmatprep.mubr.bf16.mxu0 0
    %4371 = vmatmul.mubr.bf16.gmra.mrb[0].mxu0 %v4200
    %v4372 = vpop.f32.mrb[0].mxu0
    %v4373 = vadd.f32 0.0, %v4372
    %v4374 = vpop.f32.mrb[0].mxu0
    %v4375 = vpop.f32.mrb[0].mxu0
    %v4376 = vadd.f32 0.0, %v4375
    %v4377 = vpop.f32.mrb[0].mxu0
    %4378 = vmatprep.mubr.bf16.mxu0 0
    %4379 = vmatmul.mubr.bf16.gmra.mrb[0].mxu0 %v4203
    %v4380 = vpop.f32.mrb[0].mxu0
    %v4381 = vadd.f32 0.0, %v4380
    %v4382 = vpop.f32.mrb[0].mxu0
    %v4383 = vpop.f32.mrb[0].mxu0
    %v4384 = vadd.f32 0.0, %v4383
    %v4385 = vpop.f32.mrb[0].mxu0
    %4386 = vmatprep.mubr.bf16.mxu0 0
    %4387 = vmatmul.mubr.bf16.gmra.mrb[0].mxu0 %v4206
    %v4388 = vpop.f32.mrb[0].mxu0
    %v4389 = vadd.f32 0.0, %v4388
    %v4390 = vpop.f32.mrb[0].mxu0
    %v4391 = vpop.f32.mrb[0].mxu0
    %v4392 = vadd.f32 0.0, %v4391
    %v4393 = vpop.f32.mrb[0].mxu0
    %4394 = vmatprep.mubr.bf16.mxu0 0
    %4395 = vmatmul.mubr.bf16.gmra.mrb[0].mxu0 %v4209
    %v4396 = vpop.f32.mrb[0].mxu0
    %v4397 = vadd.f32 0.0, %v4396
    %v4398 = vpop.f32.mrb[0].mxu0
    %v4399 = vpop.f32.mrb[0].mxu0
    %v4400 = vadd.f32 0.0, %v4399
    %v4401 = vpop.f32.mrb[0].mxu0
    %4402 = vmatprep.mubr.bf16.mxu0 0
    %4403 = vmatmul.mubr.bf16.gmra.mrb[0].mxu0 %v4212
    %v4404 = vpop.f32.mrb[0].mxu0
    %v4405 = vadd.f32 0.0, %v4404
    %v4406 = vpop.f32.mrb[0].mxu0
    %v4407 = vpop.f32.mrb[0].mxu0
    %v4408 = vadd.f32 0.0, %v4407
    %v4409 = vpop.f32.mrb[0].mxu0
    %4410 = vmatprep.mubr.bf16.mxu0 0
    %4411 = vmatmul.mubr.bf16.gmra.mrb[0].mxu0 %v4215
    %v4412 = vpop.f32.mrb[0].mxu0
    %v4413 = vadd.f32 0.0, %v4412
    %v4414 = vpop.f32.mrb[0].mxu0
    %v4415 = vpop.f32.mrb[0].mxu0
    %v4416 = vadd.f32 0.0, %v4415
    %v4417 = vpop.f32.mrb[0].mxu0
    %4418 = vmatprep.mubr.bf16.mxu0 0
    %4419 = vmatmul.mubr.bf16.gmra.mrb[0].mxu0 %v4218
    %v4420 = vpop.f32.mrb[0].mxu0
    %v4421 = vadd.f32 0.0, %v4420
    %v4422 = vpop.f32.mrb[0].mxu0
    %v4423 = vpop.f32.mrb[0].mxu0
    %v4424 = vadd.f32 0.0, %v4423
    %v4425 = vpop.f32.mrb[0].mxu0
    %4426 = vmatprep.mubr.bf16.mxu0 0
    %4427 = vmatmul.mubr.bf16.gmra.mrb[0].mxu0 %v4221
    %v4428 = vpop.f32.mrb[0].mxu0
    %v4429 = vadd.f32 0.0, %v4428
    %v4430 = vpop.f32.mrb[0].mxu0
    %v4431 = vpop.f32.mrb[0].mxu0
    %v4432 = vadd.f32 0.0, %v4431
    %v4433 = vpop.f32.mrb[0].mxu0
    %4434 = vmatprep.mubr.bf16.mxu0 0
    %4435 = vmatmul.mubr.bf16.gmra.mrb[0].mxu0 %v4224
    %v4436 = vpop.f32.mrb[0].mxu0
    %v4437 = vadd.f32 0.0, %v4436
    %v4438 = vpop.f32.mrb[0].mxu0
    %v4439 = vpop.f32.mrb[0].mxu0
    %v4440 = vadd.f32 0.0, %v4439
    %v4441 = vpop.f32.mrb[0].mxu0
    %4442 = vmatprep.mubr.bf16.mxu0 0
    %4443 = vmatmul.mubr.bf16.gmra.mrb[0].mxu0 %v4227
    %v4444 = vpop.f32.mrb[0].mxu0
    %v4445 = vadd.f32 0.0, %v4444
    %v4446 = vpop.f32.mrb[0].mxu0
    %v4447 = vpop.f32.mrb[0].mxu0
    %v4448 = vadd.f32 0.0, %v4447
    %v4449 = vpop.f32.mrb[0].mxu0
    %4450 = vmatprep.mubr.bf16.mxu0 0
    %4451 = vmatmul.mubr.bf16.gmra.mrb[0].mxu0 %v4230
    %v4452 = vpop.f32.mrb[0].mxu0
    %v4453 = vadd.f32 0.0, %v4452
    %v4454 = vpop.f32.mrb[0].mxu0
    %v4455 = vpop.f32.mrb[0].mxu0
    %v4456 = vadd.f32 0.0, %v4455
    %v4457 = vpop.f32.mrb[0].mxu0
    %4458 = vmatprep.mubr.bf16.mxu0 0
    %4459 = vmatmul.mubr.bf16.gmra.mrb[0].mxu0 %v4233
    %v4460 = vpop.f32.mrb[0].mxu0
    %v4461 = vadd.f32 0.0, %v4460
    %v4462 = vpop.f32.mrb[0].mxu0
    %v4463 = vpop.f32.mrb[0].mxu0
    %v4464 = vadd.f32 0.0, %v4463
    %v4465 = vpop.f32.mrb[0].mxu0
    %4466 = vmatprep.mubr.bf16.mxu0 0
    %4467 = vmatmul.mubr.bf16.gmra.mrb[0].mxu0 %v4236
    %v4468 = vpop.f32.mrb[0].mxu0
    %v4469 = vadd.f32 0.0, %v4468
    %v4470 = vpop.f32.mrb[0].mxu0
    %v4471 = vpop.f32.mrb[0].mxu0
    %v4472 = vadd.f32 0.0, %v4471
    %v4473 = vpop.f32.mrb[0].mxu0
    %4474 = vmatprep.mubr.bf16.mxu0 0
    %4475 = vmatmul.mubr.bf16.gmra.mrb[0].mxu0 %v4239
    %v4476 = vpop.f32.mrb[0].mxu0
    %v4477 = vadd.f32 0.0, %v4476
    %v4478 = vpop.f32.mrb[0].mxu0
    %v4479 = vpop.f32.mrb[0].mxu0
    %v4480 = vadd.f32 0.0, %v4479
    %v4481 = vpop.f32.mrb[0].mxu0
    %4482 = vmatprep.mubr.bf16.mxu0 0
    %4483 = vmatmul.mubr.bf16.gmra.mrb[0].mxu0 %v4242
    %v4484 = vpop.f32.mrb[0].mxu0
    %v4485 = vadd.f32 0.0, %v4484
    %v4486 = vpop.f32.mrb[0].mxu0
    %v4487 = vpop.f32.mrb[0].mxu0
    %v4488 = vadd.f32 0.0, %v4487
    %v4489 = vpop.f32.mrb[0].mxu0
    %4490 = vmatprep.mubr.bf16.mxu0 0
    %4491 = vmatmul.mubr.bf16.gmra.mrb[0].mxu0 %v4245
    %v4492 = vpop.f32.mrb[0].mxu0
    %v4493 = vadd.f32 0.0, %v4492
    %v4494 = vpop.f32.mrb[0].mxu0
    %v4495 = vpop.f32.mrb[0].mxu0
    %v4496 = vadd.f32 0.0, %v4495
    %v4497 = vpop.f32.mrb[0].mxu0
    %4498 = vmatprep.mubr.bf16.mxu0 0
    %4499 = vmatmul.mubr.bf16.gmra.mrb[0].mxu0 %v4248
    %v4500 = vpop.f32.mrb[0].mxu0
    %v4501 = vadd.f32 0.0, %v4500
    %v4502 = vpop.f32.mrb[0].mxu0
    %v4503 = vpop.f32.mrb[0].mxu0
    %v4504 = vadd.f32 0.0, %v4503
    %v4505 = vpop.f32.mrb[0].mxu0
    %4506 = vmatprep.mubr.bf16.mxu0 0
    %4507 = vmatmul.mubr.bf16.gmra.mrb[0].mxu0 %v4251
    %v4508 = vpop.f32.mrb[0].mxu0
    %v4509 = vadd.f32 0.0, %v4508
    %v4510 = vpop.f32.mrb[0].mxu0
    %v4511 = vpop.f32.mrb[0].mxu0
    %v4512 = vadd.f32 0.0, %v4511
    %v4513 = vpop.f32.mrb[0].mxu0
    %4514 = vmatprep.mubr.bf16.mxu0 0
    %4515 = vmatmul.mubr.bf16.gmra.mrb[0].mxu0 %v4254
    %v4516 = vpop.f32.mrb[0].mxu0
    %v4517 = vadd.f32 0.0, %v4516
    %v4518 = vpop.f32.mrb[0].mxu0
    %v4519 = vpop.f32.mrb[0].mxu0
    %v4520 = vadd.f32 0.0, %v4519
    %v4521 = vpop.f32.mrb[0].mxu0
    %4522 = vmatprep.mubr.bf16.mxu0 0
    %4523 = vmatmul.mubr.bf16.gmra.mrb[0].mxu0 %v4257
    %v4524 = vpop.f32.mrb[0].mxu0
    %v4525 = vadd.f32 0.0, %v4524
    %v4526 = vpop.f32.mrb[0].mxu0
    %v4527 = vpop.f32.mrb[0].mxu0
    %v4528 = vadd.f32 0.0, %v4527
    %v4529 = vpop.f32.mrb[0].mxu0
    %4530 = vmatprep.mubr.bf16.mxu0 0
    %4531 = vmatmul.mubr.bf16.gmra.mrb[0].mxu0 %v4260
    %v4532 = vpop.f32.mrb[0].mxu0
    %v4533 = vadd.f32 0.0, %v4532
    %v4534 = vpop.f32.mrb[0].mxu0
    %v4535 = vpop.f32.mrb[0].mxu0
    %v4536 = vadd.f32 0.0, %v4535
    %v4537 = vpop.f32.mrb[0].mxu0
    %4538 = vmatprep.mubr.bf16.mxu0 0
    %4539 = vmatmul.mubr.bf16.gmra.mrb[0].mxu0 %v4263
    %v4540 = vpop.f32.mrb[0].mxu0
    %v4541 = vadd.f32 0.0, %v4540
    %v4542 = vpop.f32.mrb[0].mxu0
    %v4543 = vpop.f32.mrb[0].mxu0
    %v4544 = vadd.f32 0.0, %v4543
    %v4545 = vpop.f32.mrb[0].mxu0
    %4546 = vmatprep.mubr.bf16.mxu0 0
    %4547 = vmatmul.mubr.bf16.gmra.mrb[0].mxu0 %v4266
    %v4548 = vpop.f32.mrb[0].mxu0
    %v4549 = vadd.f32 0.0, %v4548
    %v4550 = vpop.f32.mrb[0].mxu0
    %v4551 = vpop.f32.mrb[0].mxu0
    %v4552 = vadd.f32 0.0, %v4551
    %v4553 = vpop.f32.mrb[0].mxu0
    %4554 = vmatprep.mubr.bf16.mxu0 0
    %4555 = vmatmul.mubr.bf16.gmra.mrb[0].mxu0 %v4269
    %v4556 = vpop.f32.mrb[0].mxu0
    %v4557 = vadd.f32 0.0, %v4556
    %v4558 = vpop.f32.mrb[0].mxu0
    %v4559 = vpop.f32.mrb[0].mxu0
    %v4560 = vadd.f32 0.0, %v4559
    %v4561 = vpop.f32.mrb[0].mxu0
    %4562 = vdwg.mxu0
    %v4563 = vadd.f32 %v4013, %v4309
    %v4564 = vadd.f32 %v4014, %v4312
    %v4565 = vadd.f32 %v4015, %v4317
    %v4566 = vadd.f32 %v4016, %v4320
    %v4567 = vadd.f32 %v4017, %v4325
    %v4568 = vadd.f32 %v4018, %v4328
    %v4569 = vadd.f32 %v4019, %v4333
    %v4570 = vadd.f32 %v4020, %v4336
    %v4571 = vadd.f32 %v4021, %v4341
    %v4572 = vadd.f32 %v4022, %v4344
    %v4573 = vadd.f32 %v4023, %v4349
    %v4574 = vadd.f32 %v4024, %v4352
    %v4575 = vadd.f32 %v4025, %v4357
    %v4576 = vadd.f32 %v4026, %v4360
    %v4577 = vadd.f32 %v4027, %v4365
    %v4578 = vadd.f32 %v4028, %v4368
    %v4579 = vadd.f32 %v4029, %v4373
    %v4580 = vadd.f32 %v4030, %v4376
    %v4581 = vadd.f32 %v4031, %v4381
    %v4582 = vadd.f32 %v4032, %v4384
    %v4583 = vadd.f32 %v4033, %v4389
    %v4584 = vadd.f32 %v4034, %v4392
    %v4585 = vadd.f32 %v4035, %v4397
    %v4586 = vadd.f32 %v4036, %v4400
    %v4587 = vadd.f32 %v4037, %v4405
    %v4588 = vadd.f32 %v4038, %v4408
    %v4589 = vadd.f32 %v4039, %v4413
    %v4590 = vadd.f32 %v4040, %v4416
    %v4591 = vadd.f32 %v4041, %v4421
    %v4592 = vadd.f32 %v4042, %v4424
    %v4593 = vadd.f32 %v4043, %v4429
    %v4594 = vadd.f32 %v4044, %v4432
    %v4595 = vadd.f32 %v4045, %v4437
    %v4596 = vadd.f32 %v4046, %v4440
    %v4597 = vadd.f32 %v4047, %v4445
    %v4598 = vadd.f32 %v4048, %v4448
    %v4599 = vadd.f32 %v4049, %v4453
    %v4600 = vadd.f32 %v4050, %v4456
    %v4601 = vadd.f32 %v4051, %v4461
    %v4602 = vadd.f32 %v4052, %v4464
    %v4603 = vadd.f32 %v4053, %v4469
    %v4604 = vadd.f32 %v4054, %v4472
    %v4605 = vadd.f32 %v4055, %v4477
    %v4606 = vadd.f32 %v4056, %v4480
    %v4607 = vadd.f32 %v4057, %v4485
    %v4608 = vadd.f32 %v4058, %v4488
    %v4609 = vadd.f32 %v4059, %v4493
    %v4610 = vadd.f32 %v4060, %v4496
    %v4611 = vadd.f32 %v4061, %v4501
    %v4612 = vadd.f32 %v4062, %v4504
    %v4613 = vadd.f32 %v4063, %v4509
    %v4614 = vadd.f32 %v4064, %v4512
    %v4615 = vadd.f32 %v4065, %v4517
    %v4616 = vadd.f32 %v4066, %v4520
    %v4617 = vadd.f32 %v4067, %v4525
    %v4618 = vadd.f32 %v4068, %v4528
    %v4619 = vadd.f32 %v4069, %v4533
    %v4620 = vadd.f32 %v4070, %v4536
    %v4621 = vadd.f32 %v4071, %v4541
    %v4622 = vadd.f32 %v4072, %v4544
    %v4623 = vadd.f32 %v4073, %v4549
    %v4624 = vadd.f32 %v4074, %v4552
    %v4625 = vadd.f32 %v4075, %v4557
    %v4626 = vadd.f32 %v4076, %v4560
    %s4627 = scalar_lea.vmem [#allocation2], 48
    %v4628 = vld [vmem:[%s4627] sm:$0xff]
    %v4629 = vld [vmem:[%s4627 + $0x8] sm:$0xff]
    %v4630 = vld [vmem:[%s4627 + $0x18] sm:$0xff]
    %v4631 = vld [vmem:[%s4627 + $0x20] sm:$0xff]
    %v4632 = vld [vmem:[%s4627 + $0x30] sm:$0xff]
    %v4633 = vld [vmem:[%s4627 + $0x38] sm:$0xff]
    %v4634 = vld [vmem:[%s4627 + $0x48] sm:$0xff]
    %v4635 = vld [vmem:[%s4627 + $0x50] sm:$0xff]
    %v4636 = vld [vmem:[%s4627 + $0x60] sm:$0xff]
    %v4637 = vld [vmem:[%s4627 + $0x68] sm:$0xff]
    %v4638 = vld [vmem:[%s4627 + $0x78] sm:$0xff]
    %v4639 = vld [vmem:[%s4627 + $0x80] sm:$0xff]
    %v4640 = vld [vmem:[%s4627 + $0x90] sm:$0xff]
    %v4641 = vld [vmem:[%s4627 + $0x98] sm:$0xff]
    %v4642 = vld [vmem:[%s4627 + $0xa8] sm:$0xff]
    %v4643 = vld [vmem:[%s4627 + $0xb0] sm:$0xff]
    %v4644 = vld [vmem:[%s4627 + $0xc0] sm:$0xff]
    %v4645 = vld [vmem:[%s4627 + $0xc8] sm:$0xff]
    %v4646 = vld [vmem:[%s4627 + $0xd8] sm:$0xff]
    %v4647 = vld [vmem:[%s4627 + $0xe0] sm:$0xff]
    %v4648 = vld [vmem:[%s4627 + $0xf0] sm:$0xff]
    %v4649 = vld [vmem:[%s4627 + $0xf8] sm:$0xff]
    %v4650 = vld [vmem:[%s4627 + $0x108] sm:$0xff]
    %v4651 = vld [vmem:[%s4627 + $0x110] sm:$0xff]
    %v4652 = vld [vmem:[%s4627 + $0x120] sm:$0xff]
    %v4653 = vld [vmem:[%s4627 + $0x128] sm:$0xff]
    %v4654 = vld [vmem:[%s4627 + $0x138] sm:$0xff]
    %v4655 = vld [vmem:[%s4627 + $0x140] sm:$0xff]
    %v4656 = vld [vmem:[%s4627 + $0x150] sm:$0xff]
    %v4657 = vld [vmem:[%s4627 + $0x158] sm:$0xff]
    %v4658 = vld [vmem:[%s4627 + $0x168] sm:$0xff]
    %v4659 = vld [vmem:[%s4627 + $0x170] sm:$0xff]
    %v4660 = vld [vmem:[%s4627 + $0x1b0] sm:$0xff]
    %v4661 = vld [vmem:[%s4627 + $0x1b8] sm:$0xff]
    %v4662 = vld [vmem:[%s4627 + $0x1c8] sm:$0xff]
    %v4663 = vld [vmem:[%s4627 + $0x1d0] sm:$0xff]
    %v4664 = vld [vmem:[%s4627 + $0x1e0] sm:$0xff]
    %v4665 = vld [vmem:[%s4627 + $0x1e8] sm:$0xff]
    %v4666 = vld [vmem:[%s4627 + $0x1f8] sm:$0xff]
    %v4667 = vld [vmem:[%s4627 + $0x200] sm:$0xff]
    %v4668 = vld [vmem:[%s4627 + $0x210] sm:$0xff]
    %v4669 = vld [vmem:[%s4627 + $0x218] sm:$0xff]
    %v4670 = vld [vmem:[%s4627 + $0x228] sm:$0xff]
    %v4671 = vld [vmem:[%s4627 + $0x230] sm:$0xff]
    %v4672 = vld [vmem:[%s4627 + $0x240] sm:$0xff]
    %v4673 = vld [vmem:[%s4627 + $0x248] sm:$0xff]
    %v4674 = vld [vmem:[%s4627 + $0x258] sm:$0xff]
    %v4675 = vld [vmem:[%s4627 + $0x260] sm:$0xff]
    %v4676 = vld [vmem:[%s4627 + $0x270] sm:$0xff]
    %v4677 = vld [vmem:[%s4627 + $0x278] sm:$0xff]
    %v4678 = vld [vmem:[%s4627 + $0x288] sm:$0xff]
    %v4679 = vld [vmem:[%s4627 + $0x290] sm:$0xff]
    %v4680 = vld [vmem:[%s4627 + $0x2a0] sm:$0xff]
    %v4681 = vld [vmem:[%s4627 + $0x2a8] sm:$0xff]
    %v4682 = vld [vmem:[%s4627 + $0x2b8] sm:$0xff]
    %v4683 = vld [vmem:[%s4627 + $0x2c0] sm:$0xff]
    %v4684 = vld [vmem:[%s4627 + $0x2d0] sm:$0xff]
    %v4685 = vld [vmem:[%s4627 + $0x2d8] sm:$0xff]
    %v4686 = vld [vmem:[%s4627 + $0x2e8] sm:$0xff]
    %v4687 = vld [vmem:[%s4627 + $0x2f0] sm:$0xff]
    %v4688 = vld [vmem:[%s4627 + $0x300] sm:$0xff]
    %v4689 = vld [vmem:[%s4627 + $0x308] sm:$0xff]
    %v4690 = vld [vmem:[%s4627 + $0x318] sm:$0xff]
    %v4691 = vld [vmem:[%s4627 + $0x320] sm:$0xff]
    %v4692 = vpack.c.bf16 %v4629, %v4628
    %v4693 = vpack.c.bf16 %v4631, %v4630
    %v4694 = vpack.c.bf16 %v4633, %v4632
    %v4695 = vpack.c.bf16 %v4635, %v4634
    %v4696 = vpack.c.bf16 %v4637, %v4636
    %v4697 = vpack.c.bf16 %v4639, %v4638
    %v4698 = vpack.c.bf16 %v4641, %v4640
    %v4699 = vpack.c.bf16 %v4643, %v4642
    %v4700 = vpack.c.bf16 %v4645, %v4644
    %v4701 = vpack.c.bf16 %v4647, %v4646
    %v4702 = vpack.c.bf16 %v4649, %v4648
    %v4703 = vpack.c.bf16 %v4651, %v4650
    %v4704 = vpack.c.bf16 %v4653, %v4652
    %v4705 = vpack.c.bf16 %v4655, %v4654
    %v4706 = vpack.c.bf16 %v4657, %v4656
    %v4707 = vpack.c.bf16 %v4659, %v4658
    %v4708 = vpack.c.bf16 %v4661, %v4660
    %v4709 = vpack.c.bf16 %v4663, %v4662
    %v4710 = vpack.c.bf16 %v4665, %v4664
    %v4711 = vpack.c.bf16 %v4667, %v4666
    %v4712 = vpack.c.bf16 %v4669, %v4668
    %v4713 = vpack.c.bf16 %v4671, %v4670
    %v4714 = vpack.c.bf16 %v4673, %v4672
    %v4715 = vpack.c.bf16 %v4675, %v4674
    %v4716 = vpack.c.bf16 %v4677, %v4676
    %v4717 = vpack.c.bf16 %v4679, %v4678
    %v4718 = vpack.c.bf16 %v4681, %v4680
    %v4719 = vpack.c.bf16 %v4683, %v4682
    %v4720 = vpack.c.bf16 %v4685, %v4684
    %v4721 = vpack.c.bf16 %v4687, %v4686
    %v4722 = vpack.c.bf16 %v4689, %v4688
    %v4723 = vpack.c.bf16 %v4691, %v4690
    %s4724 = scalar_lea.vmem %s4, 12
    %v4725 = vld [vmem:[%s4724] sm:$0x3]
    %v4727 = vsel %vm861, %v4692, 0
    %v4730 = vsel %vm861, %v4693, 0
    %v4733 = vsel %vm861, %v4694, 0
    %v4736 = vsel %vm861, %v4695, 0
    %v4739 = vsel %vm861, %v4696, 0
    %v4742 = vsel %vm861, %v4697, 0
    %v4745 = vsel %vm861, %v4698, 0
    %v4748 = vsel %vm861, %v4699, 0
    %v4751 = vsel %vm861, %v4700, 0
    %v4754 = vsel %vm861, %v4701, 0
    %v4757 = vsel %vm861, %v4702, 0
    %v4760 = vsel %vm861, %v4703, 0
    %v4763 = vsel %vm861, %v4704, 0
    %v4766 = vsel %vm861, %v4705, 0
    %v4769 = vsel %vm861, %v4706, 0
    %v4772 = vsel %vm861, %v4707, 0
    %v4775 = vsel %vm861, %v4708, 0
    %v4778 = vsel %vm861, %v4709, 0
    %v4781 = vsel %vm861, %v4710, 0
    %v4784 = vsel %vm861, %v4711, 0
    %v4787 = vsel %vm861, %v4712, 0
    %v4790 = vsel %vm861, %v4713, 0
    %v4793 = vsel %vm861, %v4714, 0
    %v4796 = vsel %vm861, %v4715, 0
    %v4799 = vsel %vm861, %v4716, 0
    %v4802 = vsel %vm861, %v4717, 0
    %v4805 = vsel %vm861, %v4718, 0
    %v4808 = vsel %vm861, %v4719, 0
    %v4811 = vsel %vm861, %v4720, 0
    %v4814 = vsel %vm861, %v4721, 0
    %v4817 = vsel %vm861, %v4722, 0
    %v4820 = vsel %vm861, %v4723, 0
    %v4823 = vsel %vm1746, %v4725, 0
    %4825 = vmatprep.subr.bf16.mxu0 0
    %4826 = vmatpush1.bf16.msra.mxu0 %v4823
    %4827 = vmatprep.subr.bf16.mxu0 0
    %4828 = vmatpush1.bf16.msra.mxu0 0
    %4829 = vmatprep.subr.bf16.mxu0 0
    %4830 = vmatpush1.bf16.msra.mxu0 0
    %4831 = vmatprep.subr.bf16.mxu0 0
    %4832 = vmatpush1.bf16.msra.mxu0 0
    %4833 = vmatprep.subr.bf16.mxu0 0
    %4834 = vmatpush1.bf16.msra.mxu0 0
    %4835 = vmatprep.subr.bf16.mxu0 0
    %4836 = vmatpush1.bf16.msra.mxu0 0
    %4837 = vmatprep.subr.bf16.mxu0 0
    %4838 = vmatpush1.bf16.msra.mxu0 0
    %4839 = vmatprep.subr.bf16.mxu0 0
    %4840 = vmatpush1.bf16.msra.mxu0 0
    %4841 = vmatprep.subr.bf16.mxu0 0
    %4842 = vmatpush1.bf16.msra.mxu0 0
    %4843 = vmatprep.subr.bf16.mxu0 0
    %4844 = vmatpush1.bf16.msra.mxu0 0
    %4845 = vmatprep.subr.bf16.mxu0 0
    %4846 = vmatpush1.bf16.msra.mxu0 0
    %4847 = vmatprep.subr.bf16.mxu0 0
    %4848 = vmatpush1.bf16.msra.mxu0 0
    %4849 = vmatprep.subr.bf16.mxu0 0
    %4850 = vmatpush1.bf16.msra.mxu0 0
    %4851 = vmatprep.subr.bf16.mxu0 0
    %4852 = vmatpush1.bf16.msra.mxu0 0
    %4853 = vmatprep.subr.bf16.mxu0 0
    %4854 = vmatpush1.bf16.msra.mxu0 0
    %4855 = vmatprep.subr.bf16.mxu0 0
    %4856 = vmatpush1.bf16.msra.mxu0 0
    %4857 = vmatprep.mubr.bf16.mxu0 0
    %4858 = vmatmul.mubr.bf16.gmra.mrb[0].mxu0 %v4727
    %v4859 = vpop.f32.mrb[0].mxu0
    %v4860 = vadd.f32 0.0, %v4859
    %v4861 = vpop.f32.mrb[0].mxu0
    %v4862 = vpop.f32.mrb[0].mxu0
    %v4863 = vadd.f32 0.0, %v4862
    %v4864 = vpop.f32.mrb[0].mxu0
    %4865 = vmatprep.mubr.bf16.mxu0 0
    %4866 = vmatmul.mubr.bf16.gmra.mrb[0].mxu0 %v4730
    %v4867 = vpop.f32.mrb[0].mxu0
    %v4868 = vadd.f32 0.0, %v4867
    %v4869 = vpop.f32.mrb[0].mxu0
    %v4870 = vpop.f32.mrb[0].mxu0
    %v4871 = vadd.f32 0.0, %v4870
    %v4872 = vpop.f32.mrb[0].mxu0
    %4873 = vmatprep.mubr.bf16.mxu0 0
    %4874 = vmatmul.mubr.bf16.gmra.mrb[0].mxu0 %v4733
    %v4875 = vpop.f32.mrb[0].mxu0
    %v4876 = vadd.f32 0.0, %v4875
    %v4877 = vpop.f32.mrb[0].mxu0
    %v4878 = vpop.f32.mrb[0].mxu0
    %v4879 = vadd.f32 0.0, %v4878
    %v4880 = vpop.f32.mrb[0].mxu0
    %4881 = vmatprep.mubr.bf16.mxu0 0
    %4882 = vmatmul.mubr.bf16.gmra.mrb[0].mxu0 %v4736
    %v4883 = vpop.f32.mrb[0].mxu0
    %v4884 = vadd.f32 0.0, %v4883
    %v4885 = vpop.f32.mrb[0].mxu0
    %v4886 = vpop.f32.mrb[0].mxu0
    %v4887 = vadd.f32 0.0, %v4886
    %v4888 = vpop.f32.mrb[0].mxu0
    %4889 = vmatprep.mubr.bf16.mxu0 0
    %4890 = vmatmul.mubr.bf16.gmra.mrb[0].mxu0 %v4739
    %v4891 = vpop.f32.mrb[0].mxu0
    %v4892 = vadd.f32 0.0, %v4891
    %v4893 = vpop.f32.mrb[0].mxu0
    %v4894 = vpop.f32.mrb[0].mxu0
    %v4895 = vadd.f32 0.0, %v4894
    %v4896 = vpop.f32.mrb[0].mxu0
    %4897 = vmatprep.mubr.bf16.mxu0 0
    %4898 = vmatmul.mubr.bf16.gmra.mrb[0].mxu0 %v4742
    %v4899 = vpop.f32.mrb[0].mxu0
    %v4900 = vadd.f32 0.0, %v4899
    %v4901 = vpop.f32.mrb[0].mxu0
    %v4902 = vpop.f32.mrb[0].mxu0
    %v4903 = vadd.f32 0.0, %v4902
    %v4904 = vpop.f32.mrb[0].mxu0
    %4905 = vmatprep.mubr.bf16.mxu0 0
    %4906 = vmatmul.mubr.bf16.gmra.mrb[0].mxu0 %v4745
    %v4907 = vpop.f32.mrb[0].mxu0
    %v4908 = vadd.f32 0.0, %v4907
    %v4909 = vpop.f32.mrb[0].mxu0
    %v4910 = vpop.f32.mrb[0].mxu0
    %v4911 = vadd.f32 0.0, %v4910
    %v4912 = vpop.f32.mrb[0].mxu0
    %4913 = vmatprep.mubr.bf16.mxu0 0
    %4914 = vmatmul.mubr.bf16.gmra.mrb[0].mxu0 %v4748
    %v4915 = vpop.f32.mrb[0].mxu0
    %v4916 = vadd.f32 0.0, %v4915
    %v4917 = vpop.f32.mrb[0].mxu0
    %v4918 = vpop.f32.mrb[0].mxu0
    %v4919 = vadd.f32 0.0, %v4918
    %v4920 = vpop.f32.mrb[0].mxu0
    %4921 = vmatprep.mubr.bf16.mxu0 0
    %4922 = vmatmul.mubr.bf16.gmra.mrb[0].mxu0 %v4751
    %v4923 = vpop.f32.mrb[0].mxu0
    %v4924 = vadd.f32 0.0, %v4923
    %v4925 = vpop.f32.mrb[0].mxu0
    %v4926 = vpop.f32.mrb[0].mxu0
    %v4927 = vadd.f32 0.0, %v4926
    %v4928 = vpop.f32.mrb[0].mxu0
    %4929 = vmatprep.mubr.bf16.mxu0 0
    %4930 = vmatmul.mubr.bf16.gmra.mrb[0].mxu0 %v4754
    %v4931 = vpop.f32.mrb[0].mxu0
    %v4932 = vadd.f32 0.0, %v4931
    %v4933 = vpop.f32.mrb[0].mxu0
    %v4934 = vpop.f32.mrb[0].mxu0
    %v4935 = vadd.f32 0.0, %v4934
    %v4936 = vpop.f32.mrb[0].mxu0
    %4937 = vmatprep.mubr.bf16.mxu0 0
    %4938 = vmatmul.mubr.bf16.gmra.mrb[0].mxu0 %v4757
    %v4939 = vpop.f32.mrb[0].mxu0
    %v4940 = vadd.f32 0.0, %v4939
    %v4941 = vpop.f32.mrb[0].mxu0
    %v4942 = vpop.f32.mrb[0].mxu0
    %v4943 = vadd.f32 0.0, %v4942
    %v4944 = vpop.f32.mrb[0].mxu0
    %4945 = vmatprep.mubr.bf16.mxu0 0
    %4946 = vmatmul.mubr.bf16.gmra.mrb[0].mxu0 %v4760
    %v4947 = vpop.f32.mrb[0].mxu0
    %v4948 = vadd.f32 0.0, %v4947
    %v4949 = vpop.f32.mrb[0].mxu0
    %v4950 = vpop.f32.mrb[0].mxu0
    %v4951 = vadd.f32 0.0, %v4950
    %v4952 = vpop.f32.mrb[0].mxu0
    %4953 = vmatprep.mubr.bf16.mxu0 0
    %4954 = vmatmul.mubr.bf16.gmra.mrb[0].mxu0 %v4763
    %v4955 = vpop.f32.mrb[0].mxu0
    %v4956 = vadd.f32 0.0, %v4955
    %v4957 = vpop.f32.mrb[0].mxu0
    %v4958 = vpop.f32.mrb[0].mxu0
    %v4959 = vadd.f32 0.0, %v4958
    %v4960 = vpop.f32.mrb[0].mxu0
    %4961 = vmatprep.mubr.bf16.mxu0 0
    %4962 = vmatmul.mubr.bf16.gmra.mrb[0].mxu0 %v4766
    %v4963 = vpop.f32.mrb[0].mxu0
    %v4964 = vadd.f32 0.0, %v4963
    %v4965 = vpop.f32.mrb[0].mxu0
    %v4966 = vpop.f32.mrb[0].mxu0
    %v4967 = vadd.f32 0.0, %v4966
    %v4968 = vpop.f32.mrb[0].mxu0
    %4969 = vmatprep.mubr.bf16.mxu0 0
    %4970 = vmatmul.mubr.bf16.gmra.mrb[0].mxu0 %v4769
    %v4971 = vpop.f32.mrb[0].mxu0
    %v4972 = vadd.f32 0.0, %v4971
    %v4973 = vpop.f32.mrb[0].mxu0
    %v4974 = vpop.f32.mrb[0].mxu0
    %v4975 = vadd.f32 0.0, %v4974
    %v4976 = vpop.f32.mrb[0].mxu0
    %4977 = vmatprep.mubr.bf16.mxu0 0
    %4978 = vmatmul.mubr.bf16.gmra.mrb[0].mxu0 %v4772
    %v4979 = vpop.f32.mrb[0].mxu0
    %v4980 = vadd.f32 0.0, %v4979
    %v4981 = vpop.f32.mrb[0].mxu0
    %v4982 = vpop.f32.mrb[0].mxu0
    %v4983 = vadd.f32 0.0, %v4982
    %v4984 = vpop.f32.mrb[0].mxu0
    %4985 = vmatprep.mubr.bf16.mxu0 0
    %4986 = vmatmul.mubr.bf16.gmra.mrb[0].mxu0 %v4775
    %v4987 = vpop.f32.mrb[0].mxu0
    %v4988 = vadd.f32 0.0, %v4987
    %v4989 = vpop.f32.mrb[0].mxu0
    %v4990 = vpop.f32.mrb[0].mxu0
    %v4991 = vadd.f32 0.0, %v4990
    %v4992 = vpop.f32.mrb[0].mxu0
    %4993 = vmatprep.mubr.bf16.mxu0 0
    %4994 = vmatmul.mubr.bf16.gmra.mrb[0].mxu0 %v4778
    %v4995 = vpop.f32.mrb[0].mxu0
    %v4996 = vadd.f32 0.0, %v4995
    %v4997 = vpop.f32.mrb[0].mxu0
    %v4998 = vpop.f32.mrb[0].mxu0
    %v4999 = vadd.f32 0.0, %v4998
    %v5000 = vpop.f32.mrb[0].mxu0
    %5001 = vmatprep.mubr.bf16.mxu0 0
    %5002 = vmatmul.mubr.bf16.gmra.mrb[0].mxu0 %v4781
    %v5003 = vpop.f32.mrb[0].mxu0
    %v5004 = vadd.f32 0.0, %v5003
    %v5005 = vpop.f32.mrb[0].mxu0
    %v5006 = vpop.f32.mrb[0].mxu0
    %v5007 = vadd.f32 0.0, %v5006
    %v5008 = vpop.f32.mrb[0].mxu0
    %5009 = vmatprep.mubr.bf16.mxu0 0
    %5010 = vmatmul.mubr.bf16.gmra.mrb[0].mxu0 %v4784
    %v5011 = vpop.f32.mrb[0].mxu0
    %v5012 = vadd.f32 0.0, %v5011
    %v5013 = vpop.f32.mrb[0].mxu0
    %v5014 = vpop.f32.mrb[0].mxu0
    %v5015 = vadd.f32 0.0, %v5014
    %v5016 = vpop.f32.mrb[0].mxu0
    %5017 = vmatprep.mubr.bf16.mxu0 0
    %5018 = vmatmul.mubr.bf16.gmra.mrb[0].mxu0 %v4787
    %v5019 = vpop.f32.mrb[0].mxu0
    %v5020 = vadd.f32 0.0, %v5019
    %v5021 = vpop.f32.mrb[0].mxu0
    %v5022 = vpop.f32.mrb[0].mxu0
    %v5023 = vadd.f32 0.0, %v5022
    %v5024 = vpop.f32.mrb[0].mxu0
    %5025 = vmatprep.mubr.bf16.mxu0 0
    %5026 = vmatmul.mubr.bf16.gmra.mrb[0].mxu0 %v4790
    %v5027 = vpop.f32.mrb[0].mxu0
    %v5028 = vadd.f32 0.0, %v5027
    %v5029 = vpop.f32.mrb[0].mxu0
    %v5030 = vpop.f32.mrb[0].mxu0
    %v5031 = vadd.f32 0.0, %v5030
    %v5032 = vpop.f32.mrb[0].mxu0
    %5033 = vmatprep.mubr.bf16.mxu0 0
    %5034 = vmatmul.mubr.bf16.gmra.mrb[0].mxu0 %v4793
    %v5035 = vpop.f32.mrb[0].mxu0
    %v5036 = vadd.f32 0.0, %v5035
    %v5037 = vpop.f32.mrb[0].mxu0
    %v5038 = vpop.f32.mrb[0].mxu0
    %v5039 = vadd.f32 0.0, %v5038
    %v5040 = vpop.f32.mrb[0].mxu0
    %5041 = vmatprep.mubr.bf16.mxu0 0
    %5042 = vmatmul.mubr.bf16.gmra.mrb[0].mxu0 %v4796
    %v5043 = vpop.f32.mrb[0].mxu0
    %v5044 = vadd.f32 0.0, %v5043
    %v5045 = vpop.f32.mrb[0].mxu0
    %v5046 = vpop.f32.mrb[0].mxu0
    %v5047 = vadd.f32 0.0, %v5046
    %v5048 = vpop.f32.mrb[0].mxu0
    %5049 = vmatprep.mubr.bf16.mxu0 0
    %5050 = vmatmul.mubr.bf16.gmra.mrb[0].mxu0 %v4799
    %v5051 = vpop.f32.mrb[0].mxu0
    %v5052 = vadd.f32 0.0, %v5051
    %v5053 = vpop.f32.mrb[0].mxu0
    %v5054 = vpop.f32.mrb[0].mxu0
    %v5055 = vadd.f32 0.0, %v5054
    %v5056 = vpop.f32.mrb[0].mxu0
    %5057 = vmatprep.mubr.bf16.mxu0 0
    %5058 = vmatmul.mubr.bf16.gmra.mrb[0].mxu0 %v4802
    %v5059 = vpop.f32.mrb[0].mxu0
    %v5060 = vadd.f32 0.0, %v5059
    %v5061 = vpop.f32.mrb[0].mxu0
    %v5062 = vpop.f32.mrb[0].mxu0
    %v5063 = vadd.f32 0.0, %v5062
    %v5064 = vpop.f32.mrb[0].mxu0
    %5065 = vmatprep.mubr.bf16.mxu0 0
    %5066 = vmatmul.mubr.bf16.gmra.mrb[0].mxu0 %v4805
    %v5067 = vpop.f32.mrb[0].mxu0
    %v5068 = vadd.f32 0.0, %v5067
    %v5069 = vpop.f32.mrb[0].mxu0
    %v5070 = vpop.f32.mrb[0].mxu0
    %v5071 = vadd.f32 0.0, %v5070
    %v5072 = vpop.f32.mrb[0].mxu0
    %5073 = vmatprep.mubr.bf16.mxu0 0
    %5074 = vmatmul.mubr.bf16.gmra.mrb[0].mxu0 %v4808
    %v5075 = vpop.f32.mrb[0].mxu0
    %v5076 = vadd.f32 0.0, %v5075
    %v5077 = vpop.f32.mrb[0].mxu0
    %v5078 = vpop.f32.mrb[0].mxu0
    %v5079 = vadd.f32 0.0, %v5078
    %v5080 = vpop.f32.mrb[0].mxu0
    %5081 = vmatprep.mubr.bf16.mxu0 0
    %5082 = vmatmul.mubr.bf16.gmra.mrb[0].mxu0 %v4811
    %v5083 = vpop.f32.mrb[0].mxu0
    %v5084 = vadd.f32 0.0, %v5083
    %v5085 = vpop.f32.mrb[0].mxu0
    %v5086 = vpop.f32.mrb[0].mxu0
    %v5087 = vadd.f32 0.0, %v5086
    %v5088 = vpop.f32.mrb[0].mxu0
    %5089 = vmatprep.mubr.bf16.mxu0 0
    %5090 = vmatmul.mubr.bf16.gmra.mrb[0].mxu0 %v4814
    %v5091 = vpop.f32.mrb[0].mxu0
    %v5092 = vadd.f32 0.0, %v5091
    %v5093 = vpop.f32.mrb[0].mxu0
    %v5094 = vpop.f32.mrb[0].mxu0
    %v5095 = vadd.f32 0.0, %v5094
    %v5096 = vpop.f32.mrb[0].mxu0
    %5097 = vmatprep.mubr.bf16.mxu0 0
    %5098 = vmatmul.mubr.bf16.gmra.mrb[0].mxu0 %v4817
    %v5099 = vpop.f32.mrb[0].mxu0
    %v5100 = vadd.f32 0.0, %v5099
    %v5101 = vpop.f32.mrb[0].mxu0
    %v5102 = vpop.f32.mrb[0].mxu0
    %v5103 = vadd.f32 0.0, %v5102
    %v5104 = vpop.f32.mrb[0].mxu0
    %5105 = vmatprep.mubr.bf16.mxu0 0
    %5106 = vmatmul.mubr.bf16.gmra.mrb[0].mxu0 %v4820
    %v5107 = vpop.f32.mrb[0].mxu0
    %v5108 = vadd.f32 0.0, %v5107
    %v5109 = vpop.f32.mrb[0].mxu0
    %v5110 = vpop.f32.mrb[0].mxu0
    %v5111 = vadd.f32 0.0, %v5110
    %v5112 = vpop.f32.mrb[0].mxu0
    %5113 = vdwg.mxu0
    %v5114 = vadd.f32 %v4563, %v4860
    %v5115 = vadd.f32 %v4564, %v4863
    %v5116 = vadd.f32 %v4565, %v4868
    %v5117 = vadd.f32 %v4566, %v4871
    %v5118 = vadd.f32 %v4567, %v4876
    %v5119 = vadd.f32 %v4568, %v4879
    %v5120 = vadd.f32 %v4569, %v4884
    %v5121 = vadd.f32 %v4570, %v4887
    %v5122 = vadd.f32 %v4571, %v4892
    %v5123 = vadd.f32 %v4572, %v4895
    %v5124 = vadd.f32 %v4573, %v4900
    %v5125 = vadd.f32 %v4574, %v4903
    %v5126 = vadd.f32 %v4575, %v4908
    %v5127 = vadd.f32 %v4576, %v4911
    %v5128 = vadd.f32 %v4577, %v4916
    %v5129 = vadd.f32 %v4578, %v4919
    %v5130 = vadd.f32 %v4579, %v4924
    %v5131 = vadd.f32 %v4580, %v4927
    %v5132 = vadd.f32 %v4581, %v4932
    %v5133 = vadd.f32 %v4582, %v4935
    %v5134 = vadd.f32 %v4583, %v4940
    %v5135 = vadd.f32 %v4584, %v4943
    %v5136 = vadd.f32 %v4585, %v4948
    %v5137 = vadd.f32 %v4586, %v4951
    %v5138 = vadd.f32 %v4587, %v4956
    %v5139 = vadd.f32 %v4588, %v4959
    %v5140 = vadd.f32 %v4589, %v4964
    %v5141 = vadd.f32 %v4590, %v4967
    %v5142 = vadd.f32 %v4591, %v4972
    %v5143 = vadd.f32 %v4592, %v4975
    %v5144 = vadd.f32 %v4593, %v4980
    %v5145 = vadd.f32 %v4594, %v4983
    %v5146 = vadd.f32 %v4595, %v4988
    %v5147 = vadd.f32 %v4596, %v4991
    %v5148 = vadd.f32 %v4597, %v4996
    %v5149 = vadd.f32 %v4598, %v4999
    %v5150 = vadd.f32 %v4599, %v5004
    %v5151 = vadd.f32 %v4600, %v5007
    %v5152 = vadd.f32 %v4601, %v5012
    %v5153 = vadd.f32 %v4602, %v5015
    %v5154 = vadd.f32 %v4603, %v5020
    %v5155 = vadd.f32 %v4604, %v5023
    %v5156 = vadd.f32 %v4605, %v5028
    %v5157 = vadd.f32 %v4606, %v5031
    %v5158 = vadd.f32 %v4607, %v5036
    %v5159 = vadd.f32 %v4608, %v5039
    %v5160 = vadd.f32 %v4609, %v5044
    %v5161 = vadd.f32 %v4610, %v5047
    %v5162 = vadd.f32 %v4611, %v5052
    %v5163 = vadd.f32 %v4612, %v5055
    %v5164 = vadd.f32 %v4613, %v5060
    %v5165 = vadd.f32 %v4614, %v5063
    %v5166 = vadd.f32 %v4615, %v5068
    %v5167 = vadd.f32 %v4616, %v5071
    %v5168 = vadd.f32 %v4617, %v5076
    %v5169 = vadd.f32 %v4618, %v5079
    %v5170 = vadd.f32 %v4619, %v5084
    %v5171 = vadd.f32 %v4620, %v5087
    %v5172 = vadd.f32 %v4621, %v5092
    %v5173 = vadd.f32 %v4622, %v5095
    %v5174 = vadd.f32 %v4623, %v5100
    %v5175 = vadd.f32 %v4624, %v5103
    %v5176 = vadd.f32 %v4625, %v5108
    %v5177 = vadd.f32 %v4626, %v5111
    %v5178 = vld [vmem:[%s4627 + $0x1] sm:$0xff]
    %v5179 = vld [vmem:[%s4627 + $0x9] sm:$0xff]
    %v5180 = vld [vmem:[%s4627 + $0x19] sm:$0xff]
    %v5181 = vld [vmem:[%s4627 + $0x21] sm:$0xff]
    %v5182 = vld [vmem:[%s4627 + $0x31] sm:$0xff]
    %v5183 = vld [vmem:[%s4627 + $0x39] sm:$0xff]
    %v5184 = vld [vmem:[%s4627 + $0x49] sm:$0xff]
    %v5185 = vld [vmem:[%s4627 + $0x51] sm:$0xff]
    %v5186 = vld [vmem:[%s4627 + $0x61] sm:$0xff]
    %v5187 = vld [vmem:[%s4627 + $0x69] sm:$0xff]
    %v5188 = vld [vmem:[%s4627 + $0x79] sm:$0xff]
    %v5189 = vld [vmem:[%s4627 + $0x81] sm:$0xff]
    %v5190 = vld [vmem:[%s4627 + $0x91] sm:$0xff]
    %v5191 = vld [vmem:[%s4627 + $0x99] sm:$0xff]
    %v5192 = vld [vmem:[%s4627 + $0xa9] sm:$0xff]
    %v5193 = vld [vmem:[%s4627 + $0xb1] sm:$0xff]
    %v5194 = vld [vmem:[%s4627 + $0xc1] sm:$0xff]
    %v5195 = vld [vmem:[%s4627 + $0xc9] sm:$0xff]
    %v5196 = vld [vmem:[%s4627 + $0xd9] sm:$0xff]
    %v5197 = vld [vmem:[%s4627 + $0xe1] sm:$0xff]
    %v5198 = vld [vmem:[%s4627 + $0xf1] sm:$0xff]
    %v5199 = vld [vmem:[%s4627 + $0xf9] sm:$0xff]
    %v5200 = vld [vmem:[%s4627 + $0x109] sm:$0xff]
    %v5201 = vld [vmem:[%s4627 + $0x111] sm:$0xff]
    %v5202 = vld [vmem:[%s4627 + $0x121] sm:$0xff]
    %v5203 = vld [vmem:[%s4627 + $0x129] sm:$0xff]
    %v5204 = vld [vmem:[%s4627 + $0x139] sm:$0xff]
    %v5205 = vld [vmem:[%s4627 + $0x141] sm:$0xff]
    %v5206 = vld [vmem:[%s4627 + $0x151] sm:$0xff]
    %v5207 = vld [vmem:[%s4627 + $0x159] sm:$0xff]
    %v5208 = vld [vmem:[%s4627 + $0x169] sm:$0xff]
    %v5209 = vld [vmem:[%s4627 + $0x171] sm:$0xff]
    %v5210 = vld [vmem:[%s4627 + $0x1b1] sm:$0xff]
    %v5211 = vld [vmem:[%s4627 + $0x1b9] sm:$0xff]
    %v5212 = vld [vmem:[%s4627 + $0x1c9] sm:$0xff]
    %v5213 = vld [vmem:[%s4627 + $0x1d1] sm:$0xff]
    %v5214 = vld [vmem:[%s4627 + $0x1e1] sm:$0xff]
    %v5215 = vld [vmem:[%s4627 + $0x1e9] sm:$0xff]
    %v5216 = vld [vmem:[%s4627 + $0x1f9] sm:$0xff]
    %v5217 = vld [vmem:[%s4627 + $0x201] sm:$0xff]
    %v5218 = vld [vmem:[%s4627 + $0x211] sm:$0xff]
    %v5219 = vld [vmem:[%s4627 + $0x219] sm:$0xff]
    %v5220 = vld [vmem:[%s4627 + $0x229] sm:$0xff]
    %v5221 = vld [vmem:[%s4627 + $0x231] sm:$0xff]
    %v5222 = vld [vmem:[%s4627 + $0x241] sm:$0xff]
    %v5223 = vld [vmem:[%s4627 + $0x249] sm:$0xff]
    %v5224 = vld [vmem:[%s4627 + $0x259] sm:$0xff]
    %v5225 = vld [vmem:[%s4627 + $0x261] sm:$0xff]
    %v5226 = vld [vmem:[%s4627 + $0x271] sm:$0xff]
    %v5227 = vld [vmem:[%s4627 + $0x279] sm:$0xff]
    %v5228 = vld [vmem:[%s4627 + $0x289] sm:$0xff]
    %v5229 = vld [vmem:[%s4627 + $0x291] sm:$0xff]
    %v5230 = vld [vmem:[%s4627 + $0x2a1] sm:$0xff]
    %v5231 = vld [vmem:[%s4627 + $0x2a9] sm:$0xff]
    %v5232 = vld [vmem:[%s4627 + $0x2b9] sm:$0xff]
    %v5233 = vld [vmem:[%s4627 + $0x2c1] sm:$0xff]
    %v5234 = vld [vmem:[%s4627 + $0x2d1] sm:$0xff]
    %v5235 = vld [vmem:[%s4627 + $0x2d9] sm:$0xff]
    %v5236 = vld [vmem:[%s4627 + $0x2e9] sm:$0xff]
    %v5237 = vld [vmem:[%s4627 + $0x2f1] sm:$0xff]
    %v5238 = vld [vmem:[%s4627 + $0x301] sm:$0xff]
    %v5239 = vld [vmem:[%s4627 + $0x309] sm:$0xff]
    %v5240 = vld [vmem:[%s4627 + $0x319] sm:$0xff]
    %v5241 = vld [vmem:[%s4627 + $0x321] sm:$0xff]
    %v5242 = vpack.c.bf16 %v5179, %v5178
    %v5243 = vpack.c.bf16 %v5181, %v5180
    %v5244 = vpack.c.bf16 %v5183, %v5182
    %v5245 = vpack.c.bf16 %v5185, %v5184
    %v5246 = vpack.c.bf16 %v5187, %v5186
    %v5247 = vpack.c.bf16 %v5189, %v5188
    %v5248 = vpack.c.bf16 %v5191, %v5190
    %v5249 = vpack.c.bf16 %v5193, %v5192
    %v5250 = vpack.c.bf16 %v5195, %v5194
    %v5251 = vpack.c.bf16 %v5197, %v5196
    %v5252 = vpack.c.bf16 %v5199, %v5198
    %v5253 = vpack.c.bf16 %v5201, %v5200
    %v5254 = vpack.c.bf16 %v5203, %v5202
    %v5255 = vpack.c.bf16 %v5205, %v5204
    %v5256 = vpack.c.bf16 %v5207, %v5206
    %v5257 = vpack.c.bf16 %v5209, %v5208
    %v5258 = vpack.c.bf16 %v5211, %v5210
    %v5259 = vpack.c.bf16 %v5213, %v5212
    %v5260 = vpack.c.bf16 %v5215, %v5214
    %v5261 = vpack.c.bf16 %v5217, %v5216
    %v5262 = vpack.c.bf16 %v5219, %v5218
    %v5263 = vpack.c.bf16 %v5221, %v5220
    %v5264 = vpack.c.bf16 %v5223, %v5222
    %v5265 = vpack.c.bf16 %v5225, %v5224
    %v5266 = vpack.c.bf16 %v5227, %v5226
    %v5267 = vpack.c.bf16 %v5229, %v5228
    %v5268 = vpack.c.bf16 %v5231, %v5230
    %v5269 = vpack.c.bf16 %v5233, %v5232
    %v5270 = vpack.c.bf16 %v5235, %v5234
    %v5271 = vpack.c.bf16 %v5237, %v5236
    %v5272 = vpack.c.bf16 %v5239, %v5238
    %v5273 = vpack.c.bf16 %v5241, %v5240
    %s5274 = scalar_lea.vmem %s4, 14
    %v5275 = vld [vmem:[%s5274] sm:$0x3]
    %v5277 = vsel %vm861, %v5242, 0
    %v5280 = vsel %vm861, %v5243, 0
    %v5283 = vsel %vm861, %v5244, 0
    %v5286 = vsel %vm861, %v5245, 0
    %v5289 = vsel %vm861, %v5246, 0
    %v5292 = vsel %vm861, %v5247, 0
    %v5295 = vsel %vm861, %v5248, 0
    %v5298 = vsel %vm861, %v5249, 0
    %v5301 = vsel %vm861, %v5250, 0
    %v5304 = vsel %vm861, %v5251, 0
    %v5307 = vsel %vm861, %v5252, 0
    %v5310 = vsel %vm861, %v5253, 0
    %v5313 = vsel %vm861, %v5254, 0
    %v5316 = vsel %vm861, %v5255, 0
    %v5319 = vsel %vm861, %v5256, 0
    %v5322 = vsel %vm861, %v5257, 0
    %v5325 = vsel %vm861, %v5258, 0
    %v5328 = vsel %vm861, %v5259, 0
    %v5331 = vsel %vm861, %v5260, 0
    %v5334 = vsel %vm861, %v5261, 0
    %v5337 = vsel %vm861, %v5262, 0
    %v5340 = vsel %vm861, %v5263, 0
    %v5343 = vsel %vm861, %v5264, 0
    %v5346 = vsel %vm861, %v5265, 0
    %v5349 = vsel %vm861, %v5266, 0
    %v5352 = vsel %vm861, %v5267, 0
    %v5355 = vsel %vm861, %v5268, 0
    %v5358 = vsel %vm861, %v5269, 0
    %v5361 = vsel %vm861, %v5270, 0
    %v5364 = vsel %vm861, %v5271, 0
    %v5367 = vsel %vm861, %v5272, 0
    %v5370 = vsel %vm861, %v5273, 0
    %v5373 = vsel %vm1746, %v5275, 0
    %5375 = vmatprep.subr.bf16.mxu0 0
    %5376 = vmatpush1.bf16.msra.mxu0 %v5373
    %5377 = vmatprep.subr.bf16.mxu0 0
    %5378 = vmatpush1.bf16.msra.mxu0 0
    %5379 = vmatprep.subr.bf16.mxu0 0
    %5380 = vmatpush1.bf16.msra.mxu0 0
    %5381 = vmatprep.subr.bf16.mxu0 0
    %5382 = vmatpush1.bf16.msra.mxu0 0
    %5383 = vmatprep.subr.bf16.mxu0 0
    %5384 = vmatpush1.bf16.msra.mxu0 0
    %5385 = vmatprep.subr.bf16.mxu0 0
    %5386 = vmatpush1.bf16.msra.mxu0 0
    %5387 = vmatprep.subr.bf16.mxu0 0
    %5388 = vmatpush1.bf16.msra.mxu0 0
    %5389 = vmatprep.subr.bf16.mxu0 0
    %5390 = vmatpush1.bf16.msra.mxu0 0
    %5391 = vmatprep.subr.bf16.mxu0 0
    %5392 = vmatpush1.bf16.msra.mxu0 0
    %5393 = vmatprep.subr.bf16.mxu0 0
    %5394 = vmatpush1.bf16.msra.mxu0 0
    %5395 = vmatprep.subr.bf16.mxu0 0
    %5396 = vmatpush1.bf16.msra.mxu0 0
    %5397 = vmatprep.subr.bf16.mxu0 0
    %5398 = vmatpush1.bf16.msra.mxu0 0
    %5399 = vmatprep.subr.bf16.mxu0 0
    %5400 = vmatpush1.bf16.msra.mxu0 0
    %5401 = vmatprep.subr.bf16.mxu0 0
    %5402 = vmatpush1.bf16.msra.mxu0 0
    %5403 = vmatprep.subr.bf16.mxu0 0
    %5404 = vmatpush1.bf16.msra.mxu0 0
    %5405 = vmatprep.subr.bf16.mxu0 0
    %5406 = vmatpush1.bf16.msra.mxu0 0
    %5407 = vmatprep.mubr.bf16.mxu0 0
    %5408 = vmatmul.mubr.bf16.gmra.mrb[0].mxu0 %v5277
    %v5409 = vpop.f32.mrb[0].mxu0
    %v5410 = vadd.f32 0.0, %v5409
    %v5411 = vpop.f32.mrb[0].mxu0
    %v5412 = vpop.f32.mrb[0].mxu0
    %v5413 = vadd.f32 0.0, %v5412
    %v5414 = vpop.f32.mrb[0].mxu0
    %5415 = vmatprep.mubr.bf16.mxu0 0
    %5416 = vmatmul.mubr.bf16.gmra.mrb[0].mxu0 %v5280
    %v5417 = vpop.f32.mrb[0].mxu0
    %v5418 = vadd.f32 0.0, %v5417
    %v5419 = vpop.f32.mrb[0].mxu0
    %v5420 = vpop.f32.mrb[0].mxu0
    %v5421 = vadd.f32 0.0, %v5420
    %v5422 = vpop.f32.mrb[0].mxu0
    %5423 = vmatprep.mubr.bf16.mxu0 0
    %5424 = vmatmul.mubr.bf16.gmra.mrb[0].mxu0 %v5283
    %v5425 = vpop.f32.mrb[0].mxu0
    %v5426 = vadd.f32 0.0, %v5425
    %v5427 = vpop.f32.mrb[0].mxu0
    %v5428 = vpop.f32.mrb[0].mxu0
    %v5429 = vadd.f32 0.0, %v5428
    %v5430 = vpop.f32.mrb[0].mxu0
    %5431 = vmatprep.mubr.bf16.mxu0 0
    %5432 = vmatmul.mubr.bf16.gmra.mrb[0].mxu0 %v5286
    %v5433 = vpop.f32.mrb[0].mxu0
    %v5434 = vadd.f32 0.0, %v5433
    %v5435 = vpop.f32.mrb[0].mxu0
    %v5436 = vpop.f32.mrb[0].mxu0
    %v5437 = vadd.f32 0.0, %v5436
    %v5438 = vpop.f32.mrb[0].mxu0
    %5439 = vmatprep.mubr.bf16.mxu0 0
    %5440 = vmatmul.mubr.bf16.gmra.mrb[0].mxu0 %v5289
    %v5441 = vpop.f32.mrb[0].mxu0
    %v5442 = vadd.f32 0.0, %v5441
    %v5443 = vpop.f32.mrb[0].mxu0
    %v5444 = vpop.f32.mrb[0].mxu0
    %v5445 = vadd.f32 0.0, %v5444
    %v5446 = vpop.f32.mrb[0].mxu0
    %5447 = vmatprep.mubr.bf16.mxu0 0
    %5448 = vmatmul.mubr.bf16.gmra.mrb[0].mxu0 %v5292
    %v5449 = vpop.f32.mrb[0].mxu0
    %v5450 = vadd.f32 0.0, %v5449
    %v5451 = vpop.f32.mrb[0].mxu0
    %v5452 = vpop.f32.mrb[0].mxu0
    %v5453 = vadd.f32 0.0, %v5452
    %v5454 = vpop.f32.mrb[0].mxu0
    %5455 = vmatprep.mubr.bf16.mxu0 0
    %5456 = vmatmul.mubr.bf16.gmra.mrb[0].mxu0 %v5295
    %v5457 = vpop.f32.mrb[0].mxu0
    %v5458 = vadd.f32 0.0, %v5457
    %v5459 = vpop.f32.mrb[0].mxu0
    %v5460 = vpop.f32.mrb[0].mxu0
    %v5461 = vadd.f32 0.0, %v5460
    %v5462 = vpop.f32.mrb[0].mxu0
    %5463 = vmatprep.mubr.bf16.mxu0 0
    %5464 = vmatmul.mubr.bf16.gmra.mrb[0].mxu0 %v5298
    %v5465 = vpop.f32.mrb[0].mxu0
    %v5466 = vadd.f32 0.0, %v5465
    %v5467 = vpop.f32.mrb[0].mxu0
    %v5468 = vpop.f32.mrb[0].mxu0
    %v5469 = vadd.f32 0.0, %v5468
    %v5470 = vpop.f32.mrb[0].mxu0
    %5471 = vmatprep.mubr.bf16.mxu0 0
    %5472 = vmatmul.mubr.bf16.gmra.mrb[0].mxu0 %v5301
    %v5473 = vpop.f32.mrb[0].mxu0
    %v5474 = vadd.f32 0.0, %v5473
    %v5475 = vpop.f32.mrb[0].mxu0
    %v5476 = vpop.f32.mrb[0].mxu0
    %v5477 = vadd.f32 0.0, %v5476
    %v5478 = vpop.f32.mrb[0].mxu0
    %5479 = vmatprep.mubr.bf16.mxu0 0
    %5480 = vmatmul.mubr.bf16.gmra.mrb[0].mxu0 %v5304
    %v5481 = vpop.f32.mrb[0].mxu0
    %v5482 = vadd.f32 0.0, %v5481
    %v5483 = vpop.f32.mrb[0].mxu0
    %v5484 = vpop.f32.mrb[0].mxu0
    %v5485 = vadd.f32 0.0, %v5484
    %v5486 = vpop.f32.mrb[0].mxu0
    %5487 = vmatprep.mubr.bf16.mxu0 0
    %5488 = vmatmul.mubr.bf16.gmra.mrb[0].mxu0 %v5307
    %v5489 = vpop.f32.mrb[0].mxu0
    %v5490 = vadd.f32 0.0, %v5489
    %v5491 = vpop.f32.mrb[0].mxu0
    %v5492 = vpop.f32.mrb[0].mxu0
    %v5493 = vadd.f32 0.0, %v5492
    %v5494 = vpop.f32.mrb[0].mxu0
    %5495 = vmatprep.mubr.bf16.mxu0 0
    %5496 = vmatmul.mubr.bf16.gmra.mrb[0].mxu0 %v5310
    %v5497 = vpop.f32.mrb[0].mxu0
    %v5498 = vadd.f32 0.0, %v5497
    %v5499 = vpop.f32.mrb[0].mxu0
    %v5500 = vpop.f32.mrb[0].mxu0
    %v5501 = vadd.f32 0.0, %v5500
    %v5502 = vpop.f32.mrb[0].mxu0
    %5503 = vmatprep.mubr.bf16.mxu0 0
    %5504 = vmatmul.mubr.bf16.gmra.mrb[0].mxu0 %v5313
    %v5505 = vpop.f32.mrb[0].mxu0
    %v5506 = vadd.f32 0.0, %v5505
    %v5507 = vpop.f32.mrb[0].mxu0
    %v5508 = vpop.f32.mrb[0].mxu0
    %v5509 = vadd.f32 0.0, %v5508
    %v5510 = vpop.f32.mrb[0].mxu0
    %5511 = vmatprep.mubr.bf16.mxu0 0
    %5512 = vmatmul.mubr.bf16.gmra.mrb[0].mxu0 %v5316
    %v5513 = vpop.f32.mrb[0].mxu0
    %v5514 = vadd.f32 0.0, %v5513
    %v5515 = vpop.f32.mrb[0].mxu0
    %v5516 = vpop.f32.mrb[0].mxu0
    %v5517 = vadd.f32 0.0, %v5516
    %v5518 = vpop.f32.mrb[0].mxu0
    %5519 = vmatprep.mubr.bf16.mxu0 0
    %5520 = vmatmul.mubr.bf16.gmra.mrb[0].mxu0 %v5319
    %v5521 = vpop.f32.mrb[0].mxu0
    %v5522 = vadd.f32 0.0, %v5521
    %v5523 = vpop.f32.mrb[0].mxu0
    %v5524 = vpop.f32.mrb[0].mxu0
    %v5525 = vadd.f32 0.0, %v5524
    %v5526 = vpop.f32.mrb[0].mxu0
    %5527 = vmatprep.mubr.bf16.mxu0 0
    %5528 = vmatmul.mubr.bf16.gmra.mrb[0].mxu0 %v5322
    %v5529 = vpop.f32.mrb[0].mxu0
    %v5530 = vadd.f32 0.0, %v5529
    %v5531 = vpop.f32.mrb[0].mxu0
    %v5532 = vpop.f32.mrb[0].mxu0
    %v5533 = vadd.f32 0.0, %v5532
    %v5534 = vpop.f32.mrb[0].mxu0
    %5535 = vmatprep.mubr.bf16.mxu0 0
    %5536 = vmatmul.mubr.bf16.gmra.mrb[0].mxu0 %v5325
    %v5537 = vpop.f32.mrb[0].mxu0
    %v5538 = vadd.f32 0.0, %v5537
    %v5539 = vpop.f32.mrb[0].mxu0
    %v5540 = vpop.f32.mrb[0].mxu0
    %v5541 = vadd.f32 0.0, %v5540
    %v5542 = vpop.f32.mrb[0].mxu0
    %5543 = vmatprep.mubr.bf16.mxu0 0
    %5544 = vmatmul.mubr.bf16.gmra.mrb[0].mxu0 %v5328
    %v5545 = vpop.f32.mrb[0].mxu0
    %v5546 = vadd.f32 0.0, %v5545
    %v5547 = vpop.f32.mrb[0].mxu0
    %v5548 = vpop.f32.mrb[0].mxu0
    %v5549 = vadd.f32 0.0, %v5548
    %v5550 = vpop.f32.mrb[0].mxu0
    %5551 = vmatprep.mubr.bf16.mxu0 0
    %5552 = vmatmul.mubr.bf16.gmra.mrb[0].mxu0 %v5331
    %v5553 = vpop.f32.mrb[0].mxu0
    %v5554 = vadd.f32 0.0, %v5553
    %v5555 = vpop.f32.mrb[0].mxu0
    %v5556 = vpop.f32.mrb[0].mxu0
    %v5557 = vadd.f32 0.0, %v5556
    %v5558 = vpop.f32.mrb[0].mxu0
    %5559 = vmatprep.mubr.bf16.mxu0 0
    %5560 = vmatmul.mubr.bf16.gmra.mrb[0].mxu0 %v5334
    %v5561 = vpop.f32.mrb[0].mxu0
    %v5562 = vadd.f32 0.0, %v5561
    %v5563 = vpop.f32.mrb[0].mxu0
    %v5564 = vpop.f32.mrb[0].mxu0
    %v5565 = vadd.f32 0.0, %v5564
    %v5566 = vpop.f32.mrb[0].mxu0
    %5567 = vmatprep.mubr.bf16.mxu0 0
    %5568 = vmatmul.mubr.bf16.gmra.mrb[0].mxu0 %v5337
    %v5569 = vpop.f32.mrb[0].mxu0
    %v5570 = vadd.f32 0.0, %v5569
    %v5571 = vpop.f32.mrb[0].mxu0
    %v5572 = vpop.f32.mrb[0].mxu0
    %v5573 = vadd.f32 0.0, %v5572
    %v5574 = vpop.f32.mrb[0].mxu0
    %5575 = vmatprep.mubr.bf16.mxu0 0
    %5576 = vmatmul.mubr.bf16.gmra.mrb[0].mxu0 %v5340
    %v5577 = vpop.f32.mrb[0].mxu0
    %v5578 = vadd.f32 0.0, %v5577
    %v5579 = vpop.f32.mrb[0].mxu0
    %v5580 = vpop.f32.mrb[0].mxu0
    %v5581 = vadd.f32 0.0, %v5580
    %v5582 = vpop.f32.mrb[0].mxu0
    %5583 = vmatprep.mubr.bf16.mxu0 0
    %5584 = vmatmul.mubr.bf16.gmra.mrb[0].mxu0 %v5343
    %v5585 = vpop.f32.mrb[0].mxu0
    %v5586 = vadd.f32 0.0, %v5585
    %v5587 = vpop.f32.mrb[0].mxu0
    %v5588 = vpop.f32.mrb[0].mxu0
    %v5589 = vadd.f32 0.0, %v5588
    %v5590 = vpop.f32.mrb[0].mxu0
    %5591 = vmatprep.mubr.bf16.mxu0 0
    %5592 = vmatmul.mubr.bf16.gmra.mrb[0].mxu0 %v5346
    %v5593 = vpop.f32.mrb[0].mxu0
    %v5594 = vadd.f32 0.0, %v5593
    %v5595 = vpop.f32.mrb[0].mxu0
    %v5596 = vpop.f32.mrb[0].mxu0
    %v5597 = vadd.f32 0.0, %v5596
    %v5598 = vpop.f32.mrb[0].mxu0
    %5599 = vmatprep.mubr.bf16.mxu0 0
    %5600 = vmatmul.mubr.bf16.gmra.mrb[0].mxu0 %v5349
    %v5601 = vpop.f32.mrb[0].mxu0
    %v5602 = vadd.f32 0.0, %v5601
    %v5603 = vpop.f32.mrb[0].mxu0
    %v5604 = vpop.f32.mrb[0].mxu0
    %v5605 = vadd.f32 0.0, %v5604
    %v5606 = vpop.f32.mrb[0].mxu0
    %5607 = vmatprep.mubr.bf16.mxu0 0
    %5608 = vmatmul.mubr.bf16.gmra.mrb[0].mxu0 %v5352
    %v5609 = vpop.f32.mrb[0].mxu0
    %v5610 = vadd.f32 0.0, %v5609
    %v5611 = vpop.f32.mrb[0].mxu0
    %v5612 = vpop.f32.mrb[0].mxu0
    %v5613 = vadd.f32 0.0, %v5612
    %v5614 = vpop.f32.mrb[0].mxu0
    %5615 = vmatprep.mubr.bf16.mxu0 0
    %5616 = vmatmul.mubr.bf16.gmra.mrb[0].mxu0 %v5355
    %v5617 = vpop.f32.mrb[0].mxu0
    %v5618 = vadd.f32 0.0, %v5617
    %v5619 = vpop.f32.mrb[0].mxu0
    %v5620 = vpop.f32.mrb[0].mxu0
    %v5621 = vadd.f32 0.0, %v5620
    %v5622 = vpop.f32.mrb[0].mxu0
    %5623 = vmatprep.mubr.bf16.mxu0 0
    %5624 = vmatmul.mubr.bf16.gmra.mrb[0].mxu0 %v5358
    %v5625 = vpop.f32.mrb[0].mxu0
    %v5626 = vadd.f32 0.0, %v5625
    %v5627 = vpop.f32.mrb[0].mxu0
    %v5628 = vpop.f32.mrb[0].mxu0
    %v5629 = vadd.f32 0.0, %v5628
    %v5630 = vpop.f32.mrb[0].mxu0
    %5631 = vmatprep.mubr.bf16.mxu0 0
    %5632 = vmatmul.mubr.bf16.gmra.mrb[0].mxu0 %v5361
    %v5633 = vpop.f32.mrb[0].mxu0
    %v5634 = vadd.f32 0.0, %v5633
    %v5635 = vpop.f32.mrb[0].mxu0
    %v5636 = vpop.f32.mrb[0].mxu0
    %v5637 = vadd.f32 0.0, %v5636
    %v5638 = vpop.f32.mrb[0].mxu0
    %5639 = vmatprep.mubr.bf16.mxu0 0
    %5640 = vmatmul.mubr.bf16.gmra.mrb[0].mxu0 %v5364
    %v5641 = vpop.f32.mrb[0].mxu0
    %v5642 = vadd.f32 0.0, %v5641
    %v5643 = vpop.f32.mrb[0].mxu0
    %v5644 = vpop.f32.mrb[0].mxu0
    %v5645 = vadd.f32 0.0, %v5644
    %v5646 = vpop.f32.mrb[0].mxu0
    %5647 = vmatprep.mubr.bf16.mxu0 0
    %5648 = vmatmul.mubr.bf16.gmra.mrb[0].mxu0 %v5367
    %v5649 = vpop.f32.mrb[0].mxu0
    %v5650 = vadd.f32 0.0, %v5649
    %v5651 = vpop.f32.mrb[0].mxu0
    %v5652 = vpop.f32.mrb[0].mxu0
    %v5653 = vadd.f32 0.0, %v5652
    %v5654 = vpop.f32.mrb[0].mxu0
    %5655 = vmatprep.mubr.bf16.mxu0 0
    %5656 = vmatmul.mubr.bf16.gmra.mrb[0].mxu0 %v5370
    %v5657 = vpop.f32.mrb[0].mxu0
    %v5658 = vadd.f32 0.0, %v5657
    %v5659 = vpop.f32.mrb[0].mxu0
    %v5660 = vpop.f32.mrb[0].mxu0
    %v5661 = vadd.f32 0.0, %v5660
    %v5662 = vpop.f32.mrb[0].mxu0
    %5663 = vdwg.mxu0
    %v5664 = vadd.f32 %v5114, %v5410
    %v5665 = vadd.f32 %v5115, %v5413
    %v5666 = vadd.f32 %v5116, %v5418
    %v5667 = vadd.f32 %v5117, %v5421
    %v5668 = vadd.f32 %v5118, %v5426
    %v5669 = vadd.f32 %v5119, %v5429
    %v5670 = vadd.f32 %v5120, %v5434
    %v5671 = vadd.f32 %v5121, %v5437
    %v5672 = vadd.f32 %v5122, %v5442
    %v5673 = vadd.f32 %v5123, %v5445
    %v5674 = vadd.f32 %v5124, %v5450
    %v5675 = vadd.f32 %v5125, %v5453
    %v5676 = vadd.f32 %v5126, %v5458
    %v5677 = vadd.f32 %v5127, %v5461
    %v5678 = vadd.f32 %v5128, %v5466
    %v5679 = vadd.f32 %v5129, %v5469
    %v5680 = vadd.f32 %v5130, %v5474
    %v5681 = vadd.f32 %v5131, %v5477
    %v5682 = vadd.f32 %v5132, %v5482
    %v5683 = vadd.f32 %v5133, %v5485
    %v5684 = vadd.f32 %v5134, %v5490
    %v5685 = vadd.f32 %v5135, %v5493
    %v5686 = vadd.f32 %v5136, %v5498
    %v5687 = vadd.f32 %v5137, %v5501
    %v5688 = vadd.f32 %v5138, %v5506
    %v5689 = vadd.f32 %v5139, %v5509
    %v5690 = vadd.f32 %v5140, %v5514
    %v5691 = vadd.f32 %v5141, %v5517
    %v5692 = vadd.f32 %v5142, %v5522
    %v5693 = vadd.f32 %v5143, %v5525
    %v5694 = vadd.f32 %v5144, %v5530
    %v5695 = vadd.f32 %v5145, %v5533
    %v5696 = vadd.f32 %v5146, %v5538
    %v5697 = vadd.f32 %v5147, %v5541
    %v5698 = vadd.f32 %v5148, %v5546
    %v5699 = vadd.f32 %v5149, %v5549
    %v5700 = vadd.f32 %v5150, %v5554
    %v5701 = vadd.f32 %v5151, %v5557
    %v5702 = vadd.f32 %v5152, %v5562
    %v5703 = vadd.f32 %v5153, %v5565
    %v5704 = vadd.f32 %v5154, %v5570
    %v5705 = vadd.f32 %v5155, %v5573
    %v5706 = vadd.f32 %v5156, %v5578
    %v5707 = vadd.f32 %v5157, %v5581
    %v5708 = vadd.f32 %v5158, %v5586
    %v5709 = vadd.f32 %v5159, %v5589
    %v5710 = vadd.f32 %v5160, %v5594
    %v5711 = vadd.f32 %v5161, %v5597
    %v5712 = vadd.f32 %v5162, %v5602
    %v5713 = vadd.f32 %v5163, %v5605
    %v5714 = vadd.f32 %v5164, %v5610
    %v5715 = vadd.f32 %v5165, %v5613
    %v5716 = vadd.f32 %v5166, %v5618
    %v5717 = vadd.f32 %v5167, %v5621
    %v5718 = vadd.f32 %v5168, %v5626
    %v5719 = vadd.f32 %v5169, %v5629
    %v5720 = vadd.f32 %v5170, %v5634
    %v5721 = vadd.f32 %v5171, %v5637
    %v5722 = vadd.f32 %v5172, %v5642
    %v5723 = vadd.f32 %v5173, %v5645
    %v5724 = vadd.f32 %v5174, %v5650
    %v5725 = vadd.f32 %v5175, %v5653
    %v5726 = vadd.f32 %v5176, %v5658
    %v5727 = vadd.f32 %v5177, %v5661
    %v5728 = vld [vmem:[%s4627 + $0x2] sm:$0xff]
    %v5729 = vld [vmem:[%s4627 + $0xa] sm:$0xff]
    %v5730 = vld [vmem:[%s4627 + $0x1a] sm:$0xff]
    %v5731 = vld [vmem:[%s4627 + $0x22] sm:$0xff]
    %v5732 = vld [vmem:[%s4627 + $0x32] sm:$0xff]
    %v5733 = vld [vmem:[%s4627 + $0x3a] sm:$0xff]
    %v5734 = vld [vmem:[%s4627 + $0x4a] sm:$0xff]
    %v5735 = vld [vmem:[%s4627 + $0x52] sm:$0xff]
    %v5736 = vld [vmem:[%s4627 + $0x62] sm:$0xff]
    %v5737 = vld [vmem:[%s4627 + $0x6a] sm:$0xff]
    %v5738 = vld [vmem:[%s4627 + $0x7a] sm:$0xff]
    %v5739 = vld [vmem:[%s4627 + $0x82] sm:$0xff]
    %v5740 = vld [vmem:[%s4627 + $0x92] sm:$0xff]
    %v5741 = vld [vmem:[%s4627 + $0x9a] sm:$0xff]
    %v5742 = vld [vmem:[%s4627 + $0xaa] sm:$0xff]
    %v5743 = vld [vmem:[%s4627 + $0xb2] sm:$0xff]
    %v5744 = vld [vmem:[%s4627 + $0xc2] sm:$0xff]
    %v5745 = vld [vmem:[%s4627 + $0xca] sm:$0xff]
    %v5746 = vld [vmem:[%s4627 + $0xda] sm:$0xff]
    %v5747 = vld [vmem:[%s4627 + $0xe2] sm:$0xff]
    %v5748 = vld [vmem:[%s4627 + $0xf2] sm:$0xff]
    %v5749 = vld [vmem:[%s4627 + $0xfa] sm:$0xff]
    %v5750 = vld [vmem:[%s4627 + $0x10a] sm:$0xff]
    %v5751 = vld [vmem:[%s4627 + $0x112] sm:$0xff]
    %v5752 = vld [vmem:[%s4627 + $0x122] sm:$0xff]
    %v5753 = vld [vmem:[%s4627 + $0x12a] sm:$0xff]
    %v5754 = vld [vmem:[%s4627 + $0x13a] sm:$0xff]
    %v5755 = vld [vmem:[%s4627 + $0x142] sm:$0xff]
    %v5756 = vld [vmem:[%s4627 + $0x152] sm:$0xff]
    %v5757 = vld [vmem:[%s4627 + $0x15a] sm:$0xff]
    %v5758 = vld [vmem:[%s4627 + $0x16a] sm:$0xff]
    %v5759 = vld [vmem:[%s4627 + $0x172] sm:$0xff]
    %v5760 = vld [vmem:[%s4627 + $0x1b2] sm:$0xff]
    %v5761 = vld [vmem:[%s4627 + $0x1ba] sm:$0xff]
    %v5762 = vld [vmem:[%s4627 + $0x1ca] sm:$0xff]
    %v5763 = vld [vmem:[%s4627 + $0x1d2] sm:$0xff]
    %v5764 = vld [vmem:[%s4627 + $0x1e2] sm:$0xff]
    %v5765 = vld [vmem:[%s4627 + $0x1ea] sm:$0xff]
    %v5766 = vld [vmem:[%s4627 + $0x1fa] sm:$0xff]
    %v5767 = vld [vmem:[%s4627 + $0x202] sm:$0xff]
    %v5768 = vld [vmem:[%s4627 + $0x212] sm:$0xff]
    %v5769 = vld [vmem:[%s4627 + $0x21a] sm:$0xff]
    %v5770 = vld [vmem:[%s4627 + $0x22a] sm:$0xff]
    %v5771 = vld [vmem:[%s4627 + $0x232] sm:$0xff]
    %v5772 = vld [vmem:[%s4627 + $0x242] sm:$0xff]
    %v5773 = vld [vmem:[%s4627 + $0x24a] sm:$0xff]
    %v5774 = vld [vmem:[%s4627 + $0x25a] sm:$0xff]
    %v5775 = vld [vmem:[%s4627 + $0x262] sm:$0xff]
    %v5776 = vld [vmem:[%s4627 + $0x272] sm:$0xff]
    %v5777 = vld [vmem:[%s4627 + $0x27a] sm:$0xff]
    %v5778 = vld [vmem:[%s4627 + $0x28a] sm:$0xff]
    %v5779 = vld [vmem:[%s4627 + $0x292] sm:$0xff]
    %v5780 = vld [vmem:[%s4627 + $0x2a2] sm:$0xff]
    %v5781 = vld [vmem:[%s4627 + $0x2aa] sm:$0xff]
    %v5782 = vld [vmem:[%s4627 + $0x2ba] sm:$0xff]
    %v5783 = vld [vmem:[%s4627 + $0x2c2] sm:$0xff]
    %v5784 = vld [vmem:[%s4627 + $0x2d2] sm:$0xff]
    %v5785 = vld [vmem:[%s4627 + $0x2da] sm:$0xff]
    %v5786 = vld [vmem:[%s4627 + $0x2ea] sm:$0xff]
    %v5787 = vld [vmem:[%s4627 + $0x2f2] sm:$0xff]
    %v5788 = vld [vmem:[%s4627 + $0x302] sm:$0xff]
    %v5789 = vld [vmem:[%s4627 + $0x30a] sm:$0xff]
    %v5790 = vld [vmem:[%s4627 + $0x31a] sm:$0xff]
    %v5791 = vld [vmem:[%s4627 + $0x322] sm:$0xff]
    %v5792 = vpack.c.bf16 %v5729, %v5728
    %v5793 = vpack.c.bf16 %v5731, %v5730
    %v5794 = vpack.c.bf16 %v5733, %v5732
    %v5795 = vpack.c.bf16 %v5735, %v5734
    %v5796 = vpack.c.bf16 %v5737, %v5736
    %v5797 = vpack.c.bf16 %v5739, %v5738
    %v5798 = vpack.c.bf16 %v5741, %v5740
    %v5799 = vpack.c.bf16 %v5743, %v5742
    %v5800 = vpack.c.bf16 %v5745, %v5744
    %v5801 = vpack.c.bf16 %v5747, %v5746
    %v5802 = vpack.c.bf16 %v5749, %v5748
    %v5803 = vpack.c.bf16 %v5751, %v5750
    %v5804 = vpack.c.bf16 %v5753, %v5752
    %v5805 = vpack.c.bf16 %v5755, %v5754
    %v5806 = vpack.c.bf16 %v5757, %v5756
    %v5807 = vpack.c.bf16 %v5759, %v5758
    %v5808 = vpack.c.bf16 %v5761, %v5760
    %v5809 = vpack.c.bf16 %v5763, %v5762
    %v5810 = vpack.c.bf16 %v5765, %v5764
    %v5811 = vpack.c.bf16 %v5767, %v5766
    %v5812 = vpack.c.bf16 %v5769, %v5768
    %v5813 = vpack.c.bf16 %v5771, %v5770
    %v5814 = vpack.c.bf16 %v5773, %v5772
    %v5815 = vpack.c.bf16 %v5775, %v5774
    %v5816 = vpack.c.bf16 %v5777, %v5776
    %v5817 = vpack.c.bf16 %v5779, %v5778
    %v5818 = vpack.c.bf16 %v5781, %v5780
    %v5819 = vpack.c.bf16 %v5783, %v5782
    %v5820 = vpack.c.bf16 %v5785, %v5784
    %v5821 = vpack.c.bf16 %v5787, %v5786
    %v5822 = vpack.c.bf16 %v5789, %v5788
    %v5823 = vpack.c.bf16 %v5791, %v5790
    %s5824 = scalar_lea.vmem %s4, 16
    %v5825 = vld [vmem:[%s5824] sm:$0x3]
    %v5827 = vsel %vm861, %v5792, 0
    %v5830 = vsel %vm861, %v5793, 0
    %v5833 = vsel %vm861, %v5794, 0
    %v5836 = vsel %vm861, %v5795, 0
    %v5839 = vsel %vm861, %v5796, 0
    %v5842 = vsel %vm861, %v5797, 0
    %v5845 = vsel %vm861, %v5798, 0
    %v5848 = vsel %vm861, %v5799, 0
    %v5851 = vsel %vm861, %v5800, 0
    %v5854 = vsel %vm861, %v5801, 0
    %v5857 = vsel %vm861, %v5802, 0
    %v5860 = vsel %vm861, %v5803, 0
    %v5863 = vsel %vm861, %v5804, 0
    %v5866 = vsel %vm861, %v5805, 0
    %v5869 = vsel %vm861, %v5806, 0
    %v5872 = vsel %vm861, %v5807, 0
    %v5875 = vsel %vm861, %v5808, 0
    %v5878 = vsel %vm861, %v5809, 0
    %v5881 = vsel %vm861, %v5810, 0
    %v5884 = vsel %vm861, %v5811, 0
    %v5887 = vsel %vm861, %v5812, 0
    %v5890 = vsel %vm861, %v5813, 0
    %v5893 = vsel %vm861, %v5814, 0
    %v5896 = vsel %vm861, %v5815, 0
    %v5899 = vsel %vm861, %v5816, 0
    %v5902 = vsel %vm861, %v5817, 0
    %v5905 = vsel %vm861, %v5818, 0
    %v5908 = vsel %vm861, %v5819, 0
    %v5911 = vsel %vm861, %v5820, 0
    %v5914 = vsel %vm861, %v5821, 0
    %v5917 = vsel %vm861, %v5822, 0
    %v5920 = vsel %vm861, %v5823, 0
    %v5923 = vsel %vm1746, %v5825, 0
    %5925 = vmatprep.subr.bf16.mxu0 0
    %5926 = vmatpush1.bf16.msra.mxu0 %v5923
    %5927 = vmatprep.subr.bf16.mxu0 0
    %5928 = vmatpush1.bf16.msra.mxu0 0
    %5929 = vmatprep.subr.bf16.mxu0 0
    %5930 = vmatpush1.bf16.msra.mxu0 0
    %5931 = vmatprep.subr.bf16.mxu0 0
    %5932 = vmatpush1.bf16.msra.mxu0 0
    %5933 = vmatprep.subr.bf16.mxu0 0
    %5934 = vmatpush1.bf16.msra.mxu0 0
    %5935 = vmatprep.subr.bf16.mxu0 0
    %5936 = vmatpush1.bf16.msra.mxu0 0
    %5937 = vmatprep.subr.bf16.mxu0 0
    %5938 = vmatpush1.bf16.msra.mxu0 0
    %5939 = vmatprep.subr.bf16.mxu0 0
    %5940 = vmatpush1.bf16.msra.mxu0 0
    %5941 = vmatprep.subr.bf16.mxu0 0
    %5942 = vmatpush1.bf16.msra.mxu0 0
    %5943 = vmatprep.subr.bf16.mxu0 0
    %5944 = vmatpush1.bf16.msra.mxu0 0
    %5945 = vmatprep.subr.bf16.mxu0 0
    %5946 = vmatpush1.bf16.msra.mxu0 0
    %5947 = vmatprep.subr.bf16.mxu0 0
    %5948 = vmatpush1.bf16.msra.mxu0 0
    %5949 = vmatprep.subr.bf16.mxu0 0
    %5950 = vmatpush1.bf16.msra.mxu0 0
    %5951 = vmatprep.subr.bf16.mxu0 0
    %5952 = vmatpush1.bf16.msra.mxu0 0
    %5953 = vmatprep.subr.bf16.mxu0 0
    %5954 = vmatpush1.bf16.msra.mxu0 0
    %5955 = vmatprep.subr.bf16.mxu0 0
    %5956 = vmatpush1.bf16.msra.mxu0 0
    %5957 = vmatprep.mubr.bf16.mxu0 0
    %5958 = vmatmul.mubr.bf16.gmra.mrb[0].mxu0 %v5827
    %v5959 = vpop.f32.mrb[0].mxu0
    %v5960 = vadd.f32 0.0, %v5959
    %v5961 = vpop.f32.mrb[0].mxu0
    %v5962 = vpop.f32.mrb[0].mxu0
    %v5963 = vadd.f32 0.0, %v5962
    %v5964 = vpop.f32.mrb[0].mxu0
    %5965 = vmatprep.mubr.bf16.mxu0 0
    %5966 = vmatmul.mubr.bf16.gmra.mrb[0].mxu0 %v5830
    %v5967 = vpop.f32.mrb[0].mxu0
    %v5968 = vadd.f32 0.0, %v5967
    %v5969 = vpop.f32.mrb[0].mxu0
    %v5970 = vpop.f32.mrb[0].mxu0
    %v5971 = vadd.f32 0.0, %v5970
    %v5972 = vpop.f32.mrb[0].mxu0
    %5973 = vmatprep.mubr.bf16.mxu0 0
    %5974 = vmatmul.mubr.bf16.gmra.mrb[0].mxu0 %v5833
    %v5975 = vpop.f32.mrb[0].mxu0
    %v5976 = vadd.f32 0.0, %v5975
    %v5977 = vpop.f32.mrb[0].mxu0
    %v5978 = vpop.f32.mrb[0].mxu0
    %v5979 = vadd.f32 0.0, %v5978
    %v5980 = vpop.f32.mrb[0].mxu0
    %5981 = vmatprep.mubr.bf16.mxu0 0
    %5982 = vmatmul.mubr.bf16.gmra.mrb[0].mxu0 %v5836
    %v5983 = vpop.f32.mrb[0].mxu0
    %v5984 = vadd.f32 0.0, %v5983
    %v5985 = vpop.f32.mrb[0].mxu0
    %v5986 = vpop.f32.mrb[0].mxu0
    %v5987 = vadd.f32 0.0, %v5986
    %v5988 = vpop.f32.mrb[0].mxu0
    %5989 = vmatprep.mubr.bf16.mxu0 0
    %5990 = vmatmul.mubr.bf16.gmra.mrb[0].mxu0 %v5839
    %v5991 = vpop.f32.mrb[0].mxu0
    %v5992 = vadd.f32 0.0, %v5991
    %v5993 = vpop.f32.mrb[0].mxu0
    %v5994 = vpop.f32.mrb[0].mxu0
    %v5995 = vadd.f32 0.0, %v5994
    %v5996 = vpop.f32.mrb[0].mxu0
    %5997 = vmatprep.mubr.bf16.mxu0 0
    %5998 = vmatmul.mubr.bf16.gmra.mrb[0].mxu0 %v5842
    %v5999 = vpop.f32.mrb[0].mxu0
    %v6000 = vadd.f32 0.0, %v5999
    %v6001 = vpop.f32.mrb[0].mxu0
    %v6002 = vpop.f32.mrb[0].mxu0
    %v6003 = vadd.f32 0.0, %v6002
    %v6004 = vpop.f32.mrb[0].mxu0
    %6005 = vmatprep.mubr.bf16.mxu0 0
    %6006 = vmatmul.mubr.bf16.gmra.mrb[0].mxu0 %v5845
    %v6007 = vpop.f32.mrb[0].mxu0
    %v6008 = vadd.f32 0.0, %v6007
    %v6009 = vpop.f32.mrb[0].mxu0
    %v6010 = vpop.f32.mrb[0].mxu0
    %v6011 = vadd.f32 0.0, %v6010
    %v6012 = vpop.f32.mrb[0].mxu0
    %6013 = vmatprep.mubr.bf16.mxu0 0
    %6014 = vmatmul.mubr.bf16.gmra.mrb[0].mxu0 %v5848
    %v6015 = vpop.f32.mrb[0].mxu0
    %v6016 = vadd.f32 0.0, %v6015
    %v6017 = vpop.f32.mrb[0].mxu0
    %v6018 = vpop.f32.mrb[0].mxu0
    %v6019 = vadd.f32 0.0, %v6018
    %v6020 = vpop.f32.mrb[0].mxu0
    %6021 = vmatprep.mubr.bf16.mxu0 0
    %6022 = vmatmul.mubr.bf16.gmra.mrb[0].mxu0 %v5851
    %v6023 = vpop.f32.mrb[0].mxu0
    %v6024 = vadd.f32 0.0, %v6023
    %v6025 = vpop.f32.mrb[0].mxu0
    %v6026 = vpop.f32.mrb[0].mxu0
    %v6027 = vadd.f32 0.0, %v6026
    %v6028 = vpop.f32.mrb[0].mxu0
    %6029 = vmatprep.mubr.bf16.mxu0 0
    %6030 = vmatmul.mubr.bf16.gmra.mrb[0].mxu0 %v5854
    %v6031 = vpop.f32.mrb[0].mxu0
    %v6032 = vadd.f32 0.0, %v6031
    %v6033 = vpop.f32.mrb[0].mxu0
    %v6034 = vpop.f32.mrb[0].mxu0
    %v6035 = vadd.f32 0.0, %v6034
    %v6036 = vpop.f32.mrb[0].mxu0
    %6037 = vmatprep.mubr.bf16.mxu0 0
    %6038 = vmatmul.mubr.bf16.gmra.mrb[0].mxu0 %v5857
    %v6039 = vpop.f32.mrb[0].mxu0
    %v6040 = vadd.f32 0.0, %v6039
    %v6041 = vpop.f32.mrb[0].mxu0
    %v6042 = vpop.f32.mrb[0].mxu0
    %v6043 = vadd.f32 0.0, %v6042
    %v6044 = vpop.f32.mrb[0].mxu0
    %6045 = vmatprep.mubr.bf16.mxu0 0
    %6046 = vmatmul.mubr.bf16.gmra.mrb[0].mxu0 %v5860
    %v6047 = vpop.f32.mrb[0].mxu0
    %v6048 = vadd.f32 0.0, %v6047
    %v6049 = vpop.f32.mrb[0].mxu0
    %v6050 = vpop.f32.mrb[0].mxu0
    %v6051 = vadd.f32 0.0, %v6050
    %v6052 = vpop.f32.mrb[0].mxu0
    %6053 = vmatprep.mubr.bf16.mxu0 0
    %6054 = vmatmul.mubr.bf16.gmra.mrb[0].mxu0 %v5863
    %v6055 = vpop.f32.mrb[0].mxu0
    %v6056 = vadd.f32 0.0, %v6055
    %v6057 = vpop.f32.mrb[0].mxu0
    %v6058 = vpop.f32.mrb[0].mxu0
    %v6059 = vadd.f32 0.0, %v6058
    %v6060 = vpop.f32.mrb[0].mxu0
    %6061 = vmatprep.mubr.bf16.mxu0 0
    %6062 = vmatmul.mubr.bf16.gmra.mrb[0].mxu0 %v5866
    %v6063 = vpop.f32.mrb[0].mxu0
    %v6064 = vadd.f32 0.0, %v6063
    %v6065 = vpop.f32.mrb[0].mxu0
    %v6066 = vpop.f32.mrb[0].mxu0
    %v6067 = vadd.f32 0.0, %v6066
    %v6068 = vpop.f32.mrb[0].mxu0
    %6069 = vmatprep.mubr.bf16.mxu0 0
    %6070 = vmatmul.mubr.bf16.gmra.mrb[0].mxu0 %v5869
    %v6071 = vpop.f32.mrb[0].mxu0
    %v6072 = vadd.f32 0.0, %v6071
    %v6073 = vpop.f32.mrb[0].mxu0
    %v6074 = vpop.f32.mrb[0].mxu0
    %v6075 = vadd.f32 0.0, %v6074
    %v6076 = vpop.f32.mrb[0].mxu0
    %6077 = vmatprep.mubr.bf16.mxu0 0
    %6078 = vmatmul.mubr.bf16.gmra.mrb[0].mxu0 %v5872
    %v6079 = vpop.f32.mrb[0].mxu0
    %v6080 = vadd.f32 0.0, %v6079
    %v6081 = vpop.f32.mrb[0].mxu0
    %v6082 = vpop.f32.mrb[0].mxu0
    %v6083 = vadd.f32 0.0, %v6082
    %v6084 = vpop.f32.mrb[0].mxu0
    %6085 = vmatprep.mubr.bf16.mxu0 0
    %6086 = vmatmul.mubr.bf16.gmra.mrb[0].mxu0 %v5875
    %v6087 = vpop.f32.mrb[0].mxu0
    %v6088 = vadd.f32 0.0, %v6087
    %v6089 = vpop.f32.mrb[0].mxu0
    %v6090 = vpop.f32.mrb[0].mxu0
    %v6091 = vadd.f32 0.0, %v6090
    %v6092 = vpop.f32.mrb[0].mxu0
    %6093 = vmatprep.mubr.bf16.mxu0 0
    %6094 = vmatmul.mubr.bf16.gmra.mrb[0].mxu0 %v5878
    %v6095 = vpop.f32.mrb[0].mxu0
    %v6096 = vadd.f32 0.0, %v6095
    %v6097 = vpop.f32.mrb[0].mxu0
    %v6098 = vpop.f32.mrb[0].mxu0
    %v6099 = vadd.f32 0.0, %v6098
    %v6100 = vpop.f32.mrb[0].mxu0
    %6101 = vmatprep.mubr.bf16.mxu0 0
    %6102 = vmatmul.mubr.bf16.gmra.mrb[0].mxu0 %v5881
    %v6103 = vpop.f32.mrb[0].mxu0
    %v6104 = vadd.f32 0.0, %v6103
    %v6105 = vpop.f32.mrb[0].mxu0
    %v6106 = vpop.f32.mrb[0].mxu0
    %v6107 = vadd.f32 0.0, %v6106
    %v6108 = vpop.f32.mrb[0].mxu0
    %6109 = vmatprep.mubr.bf16.mxu0 0
    %6110 = vmatmul.mubr.bf16.gmra.mrb[0].mxu0 %v5884
    %v6111 = vpop.f32.mrb[0].mxu0
    %v6112 = vadd.f32 0.0, %v6111
    %v6113 = vpop.f32.mrb[0].mxu0
    %v6114 = vpop.f32.mrb[0].mxu0
    %v6115 = vadd.f32 0.0, %v6114
    %v6116 = vpop.f32.mrb[0].mxu0
    %6117 = vmatprep.mubr.bf16.mxu0 0
    %6118 = vmatmul.mubr.bf16.gmra.mrb[0].mxu0 %v5887
    %v6119 = vpop.f32.mrb[0].mxu0
    %v6120 = vadd.f32 0.0, %v6119
    %v6121 = vpop.f32.mrb[0].mxu0
    %v6122 = vpop.f32.mrb[0].mxu0
    %v6123 = vadd.f32 0.0, %v6122
    %v6124 = vpop.f32.mrb[0].mxu0
    %6125 = vmatprep.mubr.bf16.mxu0 0
    %6126 = vmatmul.mubr.bf16.gmra.mrb[0].mxu0 %v5890
    %v6127 = vpop.f32.mrb[0].mxu0
    %v6128 = vadd.f32 0.0, %v6127
    %v6129 = vpop.f32.mrb[0].mxu0
    %v6130 = vpop.f32.mrb[0].mxu0
    %v6131 = vadd.f32 0.0, %v6130
    %v6132 = vpop.f32.mrb[0].mxu0
    %6133 = vmatprep.mubr.bf16.mxu0 0
    %6134 = vmatmul.mubr.bf16.gmra.mrb[0].mxu0 %v5893
    %v6135 = vpop.f32.mrb[0].mxu0
    %v6136 = vadd.f32 0.0, %v6135
    %v6137 = vpop.f32.mrb[0].mxu0
    %v6138 = vpop.f32.mrb[0].mxu0
    %v6139 = vadd.f32 0.0, %v6138
    %v6140 = vpop.f32.mrb[0].mxu0
    %6141 = vmatprep.mubr.bf16.mxu0 0
    %6142 = vmatmul.mubr.bf16.gmra.mrb[0].mxu0 %v5896
    %v6143 = vpop.f32.mrb[0].mxu0
    %v6144 = vadd.f32 0.0, %v6143
    %v6145 = vpop.f32.mrb[0].mxu0
    %v6146 = vpop.f32.mrb[0].mxu0
    %v6147 = vadd.f32 0.0, %v6146
    %v6148 = vpop.f32.mrb[0].mxu0
    %6149 = vmatprep.mubr.bf16.mxu0 0
    %6150 = vmatmul.mubr.bf16.gmra.mrb[0].mxu0 %v5899
    %v6151 = vpop.f32.mrb[0].mxu0
    %v6152 = vadd.f32 0.0, %v6151
    %v6153 = vpop.f32.mrb[0].mxu0
    %v6154 = vpop.f32.mrb[0].mxu0
    %v6155 = vadd.f32 0.0, %v6154
    %v6156 = vpop.f32.mrb[0].mxu0
    %6157 = vmatprep.mubr.bf16.mxu0 0
    %6158 = vmatmul.mubr.bf16.gmra.mrb[0].mxu0 %v5902
    %v6159 = vpop.f32.mrb[0].mxu0
    %v6160 = vadd.f32 0.0, %v6159
    %v6161 = vpop.f32.mrb[0].mxu0
    %v6162 = vpop.f32.mrb[0].mxu0
    %v6163 = vadd.f32 0.0, %v6162
    %v6164 = vpop.f32.mrb[0].mxu0
    %6165 = vmatprep.mubr.bf16.mxu0 0
    %6166 = vmatmul.mubr.bf16.gmra.mrb[0].mxu0 %v5905
    %v6167 = vpop.f32.mrb[0].mxu0
    %v6168 = vadd.f32 0.0, %v6167
    %v6169 = vpop.f32.mrb[0].mxu0
    %v6170 = vpop.f32.mrb[0].mxu0
    %v6171 = vadd.f32 0.0, %v6170
    %v6172 = vpop.f32.mrb[0].mxu0
    %6173 = vmatprep.mubr.bf16.mxu0 0
    %6174 = vmatmul.mubr.bf16.gmra.mrb[0].mxu0 %v5908
    %v6175 = vpop.f32.mrb[0].mxu0
    %v6176 = vadd.f32 0.0, %v6175
    %v6177 = vpop.f32.mrb[0].mxu0
    %v6178 = vpop.f32.mrb[0].mxu0
    %v6179 = vadd.f32 0.0, %v6178
    %v6180 = vpop.f32.mrb[0].mxu0
    %6181 = vmatprep.mubr.bf16.mxu0 0
    %6182 = vmatmul.mubr.bf16.gmra.mrb[0].mxu0 %v5911
    %v6183 = vpop.f32.mrb[0].mxu0
    %v6184 = vadd.f32 0.0, %v6183
    %v6185 = vpop.f32.mrb[0].mxu0
    %v6186 = vpop.f32.mrb[0].mxu0
    %v6187 = vadd.f32 0.0, %v6186
    %v6188 = vpop.f32.mrb[0].mxu0
    %6189 = vmatprep.mubr.bf16.mxu0 0
    %6190 = vmatmul.mubr.bf16.gmra.mrb[0].mxu0 %v5914
    %v6191 = vpop.f32.mrb[0].mxu0
    %v6192 = vadd.f32 0.0, %v6191
    %v6193 = vpop.f32.mrb[0].mxu0
    %v6194 = vpop.f32.mrb[0].mxu0
    %v6195 = vadd.f32 0.0, %v6194
    %v6196 = vpop.f32.mrb[0].mxu0
    %6197 = vmatprep.mubr.bf16.mxu0 0
    %6198 = vmatmul.mubr.bf16.gmra.mrb[0].mxu0 %v5917
    %v6199 = vpop.f32.mrb[0].mxu0
    %v6200 = vadd.f32 0.0, %v6199
    %v6201 = vpop.f32.mrb[0].mxu0
    %v6202 = vpop.f32.mrb[0].mxu0
    %v6203 = vadd.f32 0.0, %v6202
    %v6204 = vpop.f32.mrb[0].mxu0
    %6205 = vmatprep.mubr.bf16.mxu0 0
    %6206 = vmatmul.mubr.bf16.gmra.mrb[0].mxu0 %v5920
    %v6207 = vpop.f32.mrb[0].mxu0
    %v6208 = vadd.f32 0.0, %v6207
    %v6209 = vpop.f32.mrb[0].mxu0
    %v6210 = vpop.f32.mrb[0].mxu0
    %v6211 = vadd.f32 0.0, %v6210
    %v6212 = vpop.f32.mrb[0].mxu0
    %6213 = vdwg.mxu0
    %v6214 = vadd.f32 %v5664, %v5960
    %v6215 = vadd.f32 %v5665, %v5963
    %v6216 = vadd.f32 %v5666, %v5968
    %v6217 = vadd.f32 %v5667, %v5971
    %v6218 = vadd.f32 %v5668, %v5976
    %v6219 = vadd.f32 %v5669, %v5979
    %v6220 = vadd.f32 %v5670, %v5984
    %v6221 = vadd.f32 %v5671, %v5987
    %v6222 = vadd.f32 %v5672, %v5992
    %v6223 = vadd.f32 %v5673, %v5995
    %v6224 = vadd.f32 %v5674, %v6000
    %v6225 = vadd.f32 %v5675, %v6003
    %v6226 = vadd.f32 %v5676, %v6008
    %v6227 = vadd.f32 %v5677, %v6011
    %v6228 = vadd.f32 %v5678, %v6016
    %v6229 = vadd.f32 %v5679, %v6019
    %v6230 = vadd.f32 %v5680, %v6024
    %v6231 = vadd.f32 %v5681, %v6027
    %v6232 = vadd.f32 %v5682, %v6032
    %v6233 = vadd.f32 %v5683, %v6035
    %v6234 = vadd.f32 %v5684, %v6040
    %v6235 = vadd.f32 %v5685, %v6043
    %v6236 = vadd.f32 %v5686, %v6048
    %v6237 = vadd.f32 %v5687, %v6051
    %v6238 = vadd.f32 %v5688, %v6056
    %v6239 = vadd.f32 %v5689, %v6059
    %v6240 = vadd.f32 %v5690, %v6064
    %v6241 = vadd.f32 %v5691, %v6067
    %v6242 = vadd.f32 %v5692, %v6072
    %v6243 = vadd.f32 %v5693, %v6075
    %v6244 = vadd.f32 %v5694, %v6080
    %v6245 = vadd.f32 %v5695, %v6083
    %v6246 = vadd.f32 %v5696, %v6088
    %v6247 = vadd.f32 %v5697, %v6091
    %v6248 = vadd.f32 %v5698, %v6096
    %v6249 = vadd.f32 %v5699, %v6099
    %v6250 = vadd.f32 %v5700, %v6104
    %v6251 = vadd.f32 %v5701, %v6107
    %v6252 = vadd.f32 %v5702, %v6112
    %v6253 = vadd.f32 %v5703, %v6115
    %v6254 = vadd.f32 %v5704, %v6120
    %v6255 = vadd.f32 %v5705, %v6123
    %v6256 = vadd.f32 %v5706, %v6128
    %v6257 = vadd.f32 %v5707, %v6131
    %v6258 = vadd.f32 %v5708, %v6136
    %v6259 = vadd.f32 %v5709, %v6139
    %v6260 = vadd.f32 %v5710, %v6144
    %v6261 = vadd.f32 %v5711, %v6147
    %v6262 = vadd.f32 %v5712, %v6152
    %v6263 = vadd.f32 %v5713, %v6155
    %v6264 = vadd.f32 %v5714, %v6160
    %v6265 = vadd.f32 %v5715, %v6163
    %v6266 = vadd.f32 %v5716, %v6168
    %v6267 = vadd.f32 %v5717, %v6171
    %v6268 = vadd.f32 %v5718, %v6176
    %v6269 = vadd.f32 %v5719, %v6179
    %v6270 = vadd.f32 %v5720, %v6184
    %v6271 = vadd.f32 %v5721, %v6187
    %v6272 = vadd.f32 %v5722, %v6192
    %v6273 = vadd.f32 %v5723, %v6195
    %v6274 = vadd.f32 %v5724, %v6200
    %v6275 = vadd.f32 %v5725, %v6203
    %v6276 = vadd.f32 %v5726, %v6208
    %v6277 = vadd.f32 %v5727, %v6211
    %v6278 = vmul.f32 %v6214, %v6214
    %v6279 = vmul.f32 %v6215, %v6215
    %v6280 = vmul.f32 %v6216, %v6216
    %v6281 = vmul.f32 %v6217, %v6217
    %v6282 = vmul.f32 %v6218, %v6218
    %v6283 = vmul.f32 %v6219, %v6219
    %v6284 = vmul.f32 %v6220, %v6220
    %v6285 = vmul.f32 %v6221, %v6221
    %v6286 = vmul.f32 %v6222, %v6222
    %v6287 = vmul.f32 %v6223, %v6223
    %v6288 = vmul.f32 %v6224, %v6224
    %v6289 = vmul.f32 %v6225, %v6225
    %v6290 = vmul.f32 %v6226, %v6226
    %v6291 = vmul.f32 %v6227, %v6227
    %v6292 = vmul.f32 %v6228, %v6228
    %v6293 = vmul.f32 %v6229, %v6229
    %v6294 = vmul.f32 %v6230, %v6230
    %v6295 = vmul.f32 %v6231, %v6231
    %v6296 = vmul.f32 %v6232, %v6232
    %v6297 = vmul.f32 %v6233, %v6233
    %v6298 = vmul.f32 %v6234, %v6234
    %v6299 = vmul.f32 %v6235, %v6235
    %v6300 = vmul.f32 %v6236, %v6236
    %v6301 = vmul.f32 %v6237, %v6237
    %v6302 = vmul.f32 %v6238, %v6238
    %v6303 = vmul.f32 %v6239, %v6239
    %v6304 = vmul.f32 %v6240, %v6240
    %v6305 = vmul.f32 %v6241, %v6241
    %v6306 = vmul.f32 %v6242, %v6242
    %v6307 = vmul.f32 %v6243, %v6243
    %v6308 = vmul.f32 %v6244, %v6244
    %v6309 = vmul.f32 %v6245, %v6245
    %v6310 = vmul.f32 %v6246, %v6246
    %v6311 = vmul.f32 %v6247, %v6247
    %v6312 = vmul.f32 %v6248, %v6248
    %v6313 = vmul.f32 %v6249, %v6249
    %v6314 = vmul.f32 %v6250, %v6250
    %v6315 = vmul.f32 %v6251, %v6251
    %v6316 = vmul.f32 %v6252, %v6252
    %v6317 = vmul.f32 %v6253, %v6253
    %v6318 = vmul.f32 %v6254, %v6254
    %v6319 = vmul.f32 %v6255, %v6255
    %v6320 = vmul.f32 %v6256, %v6256
    %v6321 = vmul.f32 %v6257, %v6257
    %v6322 = vmul.f32 %v6258, %v6258
    %v6323 = vmul.f32 %v6259, %v6259
    %v6324 = vmul.f32 %v6260, %v6260
    %v6325 = vmul.f32 %v6261, %v6261
    %v6326 = vmul.f32 %v6262, %v6262
    %v6327 = vmul.f32 %v6263, %v6263
    %v6328 = vmul.f32 %v6264, %v6264
    %v6329 = vmul.f32 %v6265, %v6265
    %v6330 = vmul.f32 %v6266, %v6266
    %v6331 = vmul.f32 %v6267, %v6267
    %v6332 = vmul.f32 %v6268, %v6268
    %v6333 = vmul.f32 %v6269, %v6269
    %v6334 = vmul.f32 %v6270, %v6270
    %v6335 = vmul.f32 %v6271, %v6271
    %v6336 = vmul.f32 %v6272, %v6272
    %v6337 = vmul.f32 %v6273, %v6273
    %v6338 = vmul.f32 %v6274, %v6274
    %v6339 = vmul.f32 %v6275, %v6275
    %v6340 = vmul.f32 %v6276, %v6276
    %v6341 = vmul.f32 %v6277, %v6277
    %6406 = vrot.lane.b32.xlu0 %v6278, 4
    %v6407 = vpop.permute.xlu0 %6406
    %6408 = vrot.lane.b32.xlu0 %v6279, 4
    %v6409 = vpop.permute.xlu0 %6408
    %6410 = vrot.lane.b32.xlu0 %v6280, 4
    %v6411 = vpop.permute.xlu0 %6410
    %6412 = vrot.lane.b32.xlu0 %v6281, 4
    %v6413 = vpop.permute.xlu0 %6412
    %6414 = vrot.lane.b32.xlu0 %v6282, 4
    %v6415 = vpop.permute.xlu0 %6414
    %6416 = vrot.lane.b32.xlu0 %v6283, 4
    %v6417 = vpop.permute.xlu0 %6416
    %6418 = vrot.lane.b32.xlu0 %v6284, 4
    %v6419 = vpop.permute.xlu0 %6418
    %6420 = vrot.lane.b32.xlu0 %v6285, 4
    %v6421 = vpop.permute.xlu0 %6420
    %6422 = vrot.lane.b32.xlu0 %v6286, 4
    %v6423 = vpop.permute.xlu0 %6422
    %6424 = vrot.lane.b32.xlu0 %v6287, 4
    %v6425 = vpop.permute.xlu0 %6424
    %6426 = vrot.lane.b32.xlu0 %v6288, 4
    %v6427 = vpop.permute.xlu0 %6426
    %6428 = vrot.lane.b32.xlu0 %v6289, 4
    %v6429 = vpop.permute.xlu0 %6428
    %6430 = vrot.lane.b32.xlu0 %v6290, 4
    %v6431 = vpop.permute.xlu0 %6430
    %6432 = vrot.lane.b32.xlu0 %v6291, 4
    %v6433 = vpop.permute.xlu0 %6432
    %6434 = vrot.lane.b32.xlu0 %v6292, 4
    %v6435 = vpop.permute.xlu0 %6434
    %6436 = vrot.lane.b32.xlu0 %v6293, 4
    %v6437 = vpop.permute.xlu0 %6436
    %6438 = vrot.lane.b32.xlu0 %v6294, 4
    %v6439 = vpop.permute.xlu0 %6438
    %6440 = vrot.lane.b32.xlu0 %v6295, 4
    %v6441 = vpop.permute.xlu0 %6440
    %6442 = vrot.lane.b32.xlu0 %v6296, 4
    %v6443 = vpop.permute.xlu0 %6442
    %6444 = vrot.lane.b32.xlu0 %v6297, 4
    %v6445 = vpop.permute.xlu0 %6444
    %6446 = vrot.lane.b32.xlu0 %v6298, 4
    %v6447 = vpop.permute.xlu0 %6446
    %6448 = vrot.lane.b32.xlu0 %v6299, 4
    %v6449 = vpop.permute.xlu0 %6448
    %6450 = vrot.lane.b32.xlu0 %v6300, 4
    %v6451 = vpop.permute.xlu0 %6450
    %6452 = vrot.lane.b32.xlu0 %v6301, 4
    %v6453 = vpop.permute.xlu0 %6452
    %6454 = vrot.lane.b32.xlu0 %v6302, 4
    %v6455 = vpop.permute.xlu0 %6454
    %6456 = vrot.lane.b32.xlu0 %v6303, 4
    %v6457 = vpop.permute.xlu0 %6456
    %6458 = vrot.lane.b32.xlu0 %v6304, 4
    %v6459 = vpop.permute.xlu0 %6458
    %6460 = vrot.lane.b32.xlu0 %v6305, 4
    %v6461 = vpop.permute.xlu0 %6460
    %6462 = vrot.lane.b32.xlu0 %v6306, 4
    %v6463 = vpop.permute.xlu0 %6462
    %6464 = vrot.lane.b32.xlu0 %v6307, 4
    %v6465 = vpop.permute.xlu0 %6464
    %6466 = vrot.lane.b32.xlu0 %v6308, 4
    %v6467 = vpop.permute.xlu0 %6466
    %6468 = vrot.lane.b32.xlu0 %v6309, 4
    %v6469 = vpop.permute.xlu0 %6468
    %6470 = vrot.lane.b32.xlu0 %v6310, 4
    %v6471 = vpop.permute.xlu0 %6470
    %6472 = vrot.lane.b32.xlu0 %v6311, 4
    %v6473 = vpop.permute.xlu0 %6472
    %6474 = vrot.lane.b32.xlu0 %v6312, 4
    %v6475 = vpop.permute.xlu0 %6474
    %6476 = vrot.lane.b32.xlu0 %v6313, 4
    %v6477 = vpop.permute.xlu0 %6476
    %6478 = vrot.lane.b32.xlu0 %v6314, 4
    %v6479 = vpop.permute.xlu0 %6478
    %6480 = vrot.lane.b32.xlu0 %v6315, 4
    %v6481 = vpop.permute.xlu0 %6480
    %6482 = vrot.lane.b32.xlu0 %v6316, 4
    %v6483 = vpop.permute.xlu0 %6482
    %6484 = vrot.lane.b32.xlu0 %v6317, 4
    %v6485 = vpop.permute.xlu0 %6484
    %6486 = vrot.lane.b32.xlu0 %v6318, 4
    %v6487 = vpop.permute.xlu0 %6486
    %6488 = vrot.lane.b32.xlu0 %v6319, 4
    %v6489 = vpop.permute.xlu0 %6488
    %6490 = vrot.lane.b32.xlu0 %v6320, 4
    %v6491 = vpop.permute.xlu0 %6490
    %6492 = vrot.lane.b32.xlu0 %v6321, 4
    %v6493 = vpop.permute.xlu0 %6492
    %6494 = vrot.lane.b32.xlu0 %v6322, 4
    %v6495 = vpop.permute.xlu0 %6494
    %6496 = vrot.lane.b32.xlu0 %v6323, 4
    %v6497 = vpop.permute.xlu0 %6496
    %6498 = vrot.lane.b32.xlu0 %v6324, 4
    %v6499 = vpop.permute.xlu0 %6498
    %6500 = vrot.lane.b32.xlu0 %v6325, 4
    %v6501 = vpop.permute.xlu0 %6500
    %6502 = vrot.lane.b32.xlu0 %v6326, 4
    %v6503 = vpop.permute.xlu0 %6502
    %6504 = vrot.lane.b32.xlu0 %v6327, 4
    %v6505 = vpop.permute.xlu0 %6504
    %6506 = vrot.lane.b32.xlu0 %v6328, 4
    %v6507 = vpop.permute.xlu0 %6506
    %6508 = vrot.lane.b32.xlu0 %v6329, 4
    %v6509 = vpop.permute.xlu0 %6508
    %6510 = vrot.lane.b32.xlu0 %v6330, 4
    %v6511 = vpop.permute.xlu0 %6510
    %6512 = vrot.lane.b32.xlu0 %v6331, 4
    %v6513 = vpop.permute.xlu0 %6512
    %6514 = vrot.lane.b32.xlu0 %v6332, 4
    %v6515 = vpop.permute.xlu0 %6514
    %6516 = vrot.lane.b32.xlu0 %v6333, 4
    %v6517 = vpop.permute.xlu0 %6516
    %6518 = vrot.lane.b32.xlu0 %v6334, 4
    %v6519 = vpop.permute.xlu0 %6518
    %6520 = vrot.lane.b32.xlu0 %v6335, 4
    %v6521 = vpop.permute.xlu0 %6520
    %6522 = vrot.lane.b32.xlu0 %v6336, 4
    %v6523 = vpop.permute.xlu0 %6522
    %6524 = vrot.lane.b32.xlu0 %v6337, 4
    %v6525 = vpop.permute.xlu0 %6524
    %6526 = vrot.lane.b32.xlu0 %v6338, 4
    %v6527 = vpop.permute.xlu0 %6526
    %6528 = vrot.lane.b32.xlu0 %v6339, 4
    %v6529 = vpop.permute.xlu0 %6528
    %6530 = vrot.lane.b32.xlu0 %v6340, 4
    %v6531 = vpop.permute.xlu0 %6530
    %6532 = vrot.lane.b32.xlu0 %v6341, 4
    %v6533 = vpop.permute.xlu0 %6532
    %v6598 = vsel %vm861, %v6214, %v6407
    %v6599 = vsel %vm861, %v6215, %v6409
    %v6600 = vsel %vm861, %v6216, %v6411
    %v6601 = vsel %vm861, %v6217, %v6413
    %v6602 = vsel %vm861, %v6218, %v6415
    %v6603 = vsel %vm861, %v6219, %v6417
    %v6604 = vsel %vm861, %v6220, %v6419
    %v6605 = vsel %vm861, %v6221, %v6421
    %v6606 = vsel %vm861, %v6222, %v6423
    %v6607 = vsel %vm861, %v6223, %v6425
    %v6608 = vsel %vm861, %v6224, %v6427
    %v6609 = vsel %vm861, %v6225, %v6429
    %v6610 = vsel %vm861, %v6226, %v6431
    %v6611 = vsel %vm861, %v6227, %v6433
    %v6612 = vsel %vm861, %v6228, %v6435
    %v6613 = vsel %vm861, %v6229, %v6437
    %v6614 = vsel %vm861, %v6230, %v6439
    %v6615 = vsel %vm861, %v6231, %v6441
    %v6616 = vsel %vm861, %v6232, %v6443
    %v6617 = vsel %vm861, %v6233, %v6445
    %v6618 = vsel %vm861, %v6234, %v6447
    %v6619 = vsel %vm861, %v6235, %v6449
    %v6620 = vsel %vm861, %v6236, %v6451
    %v6621 = vsel %vm861, %v6237, %v6453
    %v6622 = vsel %vm861, %v6238, %v6455
    %v6623 = vsel %vm861, %v6239, %v6457
    %v6624 = vsel %vm861, %v6240, %v6459
    %v6625 = vsel %vm861, %v6241, %v6461
    %v6626 = vsel %vm861, %v6242, %v6463
    %v6627 = vsel %vm861, %v6243, %v6465
    %v6628 = vsel %vm861, %v6244, %v6467
    %v6629 = vsel %vm861, %v6245, %v6469
    %v6630 = vsel %vm861, %v6246, %v6471
    %v6631 = vsel %vm861, %v6247, %v6473
    %v6632 = vsel %vm861, %v6248, %v6475
    %v6633 = vsel %vm861, %v6249, %v6477
    %v6634 = vsel %vm861, %v6250, %v6479
    %v6635 = vsel %vm861, %v6251, %v6481
    %v6636 = vsel %vm861, %v6252, %v6483
    %v6637 = vsel %vm861, %v6253, %v6485
    %v6638 = vsel %vm861, %v6254, %v6487
    %v6639 = vsel %vm861, %v6255, %v6489
    %v6640 = vsel %vm861, %v6256, %v6491
    %v6641 = vsel %vm861, %v6257, %v6493
    %v6642 = vsel %vm861, %v6258, %v6495
    %v6643 = vsel %vm861, %v6259, %v6497
    %v6644 = vsel %vm861, %v6260, %v6499
    %v6645 = vsel %vm861, %v6261, %v6501
    %v6646 = vsel %vm861, %v6262, %v6503
    %v6647 = vsel %vm861, %v6263, %v6505
    %v6648 = vsel %vm861, %v6264, %v6507
    %v6649 = vsel %vm861, %v6265, %v6509
    %v6650 = vsel %vm861, %v6266, %v6511
    %v6651 = vsel %vm861, %v6267, %v6513
    %v6652 = vsel %vm861, %v6268, %v6515
    %v6653 = vsel %vm861, %v6269, %v6517
    %v6654 = vsel %vm861, %v6270, %v6519
    %v6655 = vsel %vm861, %v6271, %v6521
    %v6656 = vsel %vm861, %v6272, %v6523
    %v6657 = vsel %vm861, %v6273, %v6525
    %v6658 = vsel %vm861, %v6274, %v6527
    %v6659 = vsel %vm861, %v6275, %v6529
    %v6660 = vsel %vm861, %v6276, %v6531
    %v6661 = vsel %vm861, %v6277, %v6533
    %6662 = vmatprep.subr.mxu0 0.0
    %6663 = vmatpush1.msra.mxu0 %v6598
    %6664 = vmatprep.subr.mxu0 0.0
    %6665 = vmatpush1.msra.mxu0 %v6599
    %6666 = vmatprep.subr.mxu0 0.0
    %6667 = vmatpush1.msra.mxu0 %v6600
    %6668 = vmatprep.subr.mxu0 0.0
    %6669 = vmatpush1.msra.mxu0 %v6601
    %6670 = vmatprep.subr.mxu0 0.0
    %6671 = vmatpush1.msra.mxu0 %v6602
    %6672 = vmatprep.subr.mxu0 0.0
    %6673 = vmatpush1.msra.mxu0 %v6603
    %6674 = vmatprep.subr.mxu0 0.0
    %6675 = vmatpush1.msra.mxu0 %v6604
    %6676 = vmatprep.subr.mxu0 0.0
    %6677 = vmatpush1.msra.mxu0 %v6605
    %6678 = vmatprep.subr.mxu0 0.0
    %6679 = vmatpush1.msra.mxu0 %v6606
    %6680 = vmatprep.subr.mxu0 0.0
    %6681 = vmatpush1.msra.mxu0 %v6607
    %6682 = vmatprep.subr.mxu0 0.0
    %6683 = vmatpush1.msra.mxu0 %v6608
    %6684 = vmatprep.subr.mxu0 0.0
    %6685 = vmatpush1.msra.mxu0 %v6609
    %6686 = vmatprep.subr.mxu0 0.0
    %6687 = vmatpush1.msra.mxu0 %v6610
    %6688 = vmatprep.subr.mxu0 0.0
    %6689 = vmatpush1.msra.mxu0 %v6611
    %6690 = vmatprep.subr.mxu0 0.0
    %6691 = vmatpush1.msra.mxu0 %v6612
    %6692 = vmatprep.subr.mxu0 0.0
    %6693 = vmatpush1.msra.mxu0 %v6613
    %6694 = vmatprep.subr.mxu0 0.0
    %6695 = vmatpush1.msra.mxu0 %v6614
    %6696 = vmatprep.subr.mxu0 0.0
    %6697 = vmatpush1.msra.mxu0 %v6615
    %6698 = vmatprep.subr.mxu0 0.0
    %6699 = vmatpush1.msra.mxu0 %v6616
    %6700 = vmatprep.subr.mxu0 0.0
    %6701 = vmatpush1.msra.mxu0 %v6617
    %6702 = vmatprep.subr.mxu0 0.0
    %6703 = vmatpush1.msra.mxu0 %v6618
    %6704 = vmatprep.subr.mxu0 0.0
    %6705 = vmatpush1.msra.mxu0 %v6619
    %6706 = vmatprep.subr.mxu0 0.0
    %6707 = vmatpush1.msra.mxu0 %v6620
    %6708 = vmatprep.subr.mxu0 0.0
    %6709 = vmatpush1.msra.mxu0 %v6621
    %6710 = vmatprep.subr.mxu0 0.0
    %6711 = vmatpush1.msra.mxu0 %v6622
    %6712 = vmatprep.subr.mxu0 0.0
    %6713 = vmatpush1.msra.mxu0 %v6623
    %6714 = vmatprep.subr.mxu0 0.0
    %6715 = vmatpush1.msra.mxu0 %v6624
    %6716 = vmatprep.subr.mxu0 0.0
    %6717 = vmatpush1.msra.mxu0 %v6625
    %6718 = vmatprep.subr.mxu0 0.0
    %6719 = vmatpush1.msra.mxu0 %v6626
    %6720 = vmatprep.subr.mxu0 0.0
    %6721 = vmatpush1.msra.mxu0 %v6627
    %6722 = vmatprep.subr.mxu0 0.0
    %6723 = vmatpush1.msra.mxu0 %v6628
    %6724 = vmatprep.subr.mxu0 0.0
    %6725 = vmatpush1.msra.mxu0 %v6629
    %6726 = vmatprep.mubr.f32.mxu0 1.0
    %6727 = vmatmul.mubr.f32.gmra.mrb[0].mxu0 1.0
    %v6728 = vpop.f32.mrb[0].mxu0
    %v6729 = vadd.f32 0.0, %v6728
    %v6730 = vpop.f32.mrb[0].mxu0
    %6731 = vdwg.mxu0
    %6732 = vmatprep.subr.mxu0 0.0
    %6733 = vmatpush1.msra.mxu0 %v6630
    %6734 = vmatprep.subr.mxu0 0.0
    %6735 = vmatpush1.msra.mxu0 %v6631
    %6736 = vmatprep.subr.mxu0 0.0
    %6737 = vmatpush1.msra.mxu0 %v6632
    %6738 = vmatprep.subr.mxu0 0.0
    %6739 = vmatpush1.msra.mxu0 %v6633
    %6740 = vmatprep.subr.mxu0 0.0
    %6741 = vmatpush1.msra.mxu0 %v6634
    %6742 = vmatprep.subr.mxu0 0.0
    %6743 = vmatpush1.msra.mxu0 %v6635
    %6744 = vmatprep.subr.mxu0 0.0
    %6745 = vmatpush1.msra.mxu0 %v6636
    %6746 = vmatprep.subr.mxu0 0.0
    %6747 = vmatpush1.msra.mxu0 %v6637
    %6748 = vmatprep.subr.mxu0 0.0
    %6749 = vmatpush1.msra.mxu0 %v6638
    %6750 = vmatprep.subr.mxu0 0.0
    %6751 = vmatpush1.msra.mxu0 %v6639
    %6752 = vmatprep.subr.mxu0 0.0
    %6753 = vmatpush1.msra.mxu0 %v6640
    %6754 = vmatprep.subr.mxu0 0.0
    %6755 = vmatpush1.msra.mxu0 %v6641
    %6756 = vmatprep.subr.mxu0 0.0
    %6757 = vmatpush1.msra.mxu0 %v6642
    %6758 = vmatprep.subr.mxu0 0.0
    %6759 = vmatpush1.msra.mxu0 %v6643
    %6760 = vmatprep.subr.mxu0 0.0
    %6761 = vmatpush1.msra.mxu0 %v6644
    %6762 = vmatprep.subr.mxu0 0.0
    %6763 = vmatpush1.msra.mxu0 %v6645
    %6764 = vmatprep.subr.mxu0 0.0
    %6765 = vmatpush1.msra.mxu0 %v6646
    %6766 = vmatprep.subr.mxu0 0.0
    %6767 = vmatpush1.msra.mxu0 %v6647
    %6768 = vmatprep.subr.mxu0 0.0
    %6769 = vmatpush1.msra.mxu0 %v6648
    %6770 = vmatprep.subr.mxu0 0.0
    %6771 = vmatpush1.msra.mxu0 %v6649
    %6772 = vmatprep.subr.mxu0 0.0
    %6773 = vmatpush1.msra.mxu0 %v6650
    %6774 = vmatprep.subr.mxu0 0.0
    %6775 = vmatpush1.msra.mxu0 %v6651
    %6776 = vmatprep.subr.mxu0 0.0
    %6777 = vmatpush1.msra.mxu0 %v6652
    %6778 = vmatprep.subr.mxu0 0.0
    %6779 = vmatpush1.msra.mxu0 %v6653
    %6780 = vmatprep.subr.mxu0 0.0
    %6781 = vmatpush1.msra.mxu0 %v6654
    %6782 = vmatprep.subr.mxu0 0.0
    %6783 = vmatpush1.msra.mxu0 %v6655
    %6784 = vmatprep.subr.mxu0 0.0
    %6785 = vmatpush1.msra.mxu0 %v6656
    %6786 = vmatprep.subr.mxu0 0.0
    %6787 = vmatpush1.msra.mxu0 %v6657
    %6788 = vmatprep.subr.mxu0 0.0
    %6789 = vmatpush1.msra.mxu0 %v6658
    %6790 = vmatprep.subr.mxu0 0.0
    %6791 = vmatpush1.msra.mxu0 %v6659
    %6792 = vmatprep.subr.mxu0 0.0
    %6793 = vmatpush1.msra.mxu0 %v6660
    %6794 = vmatprep.subr.mxu0 0.0
    %6795 = vmatpush1.msra.mxu0 %v6661
    %6796 = vmatprep.mubr.f32.mxu0 1.0
    %6797 = vmatmul.mubr.f32.gmra.mrb[0].mxu0 1.0
    %v6798 = vpop.f32.mrb[0].mxu0
    %v6799 = vadd.f32 %v6729, %v6798
    %v6800 = vpop.f32.mrb[0].mxu0
    %6801 = vdwg.mxu0
    %v6802 = vmul.f32 %v6799, 0.001953125
    %v6803 = vmul.f32 %v6802, %v6802
    %6805 = vrot.lane.b32.xlu0 %v6803, 4
    %v6806 = vpop.permute.xlu0 %6805
    %v6808 = vsub.f32 %v6802, %v6806
    %v6809 = vmax.f32 %v6808, 0.0
    %v6810 = vld [vmem:[%s5] sm:$0x1]
    %v6811 = vadd.f32 %v6809, 1e-05
    %v6812 = vrsqrt.pop %v6811
    %v6815 = vunpack.c.l.s4 1966171168
    %v6816 = vunpack.c.0.s8 %v6815
    %v6817 = vlaneseq
    %v6818 = vshrl.u32 %v6817, 7
    %v6819 = vsub.s32 %v6816, %v6818
    %v6820 = vrot.slane %v6812, %v6819
    %v6822 = vunpack.c.l.s4 1966171168
    %v6823 = vunpack.c.0.s8 %v6822
    %v6824 = vlaneseq
    %v6825 = vshrl.u32 %v6824, 7
    %v6826 = vsub.s32 %v6823, %v6825
    %v6827 = vrot.slane %v6820, %v6826
    %6828 = vrot.lane.b32.xlu0 %v6827, 124
    %v6829 = vpop.permute.xlu0 %6828
    %v6831 = vmul.f32 %v6810, %v6829
    %v6832 = vld [vmem:[%s6] sm:$0x1]
    %v6833 = vmul.f32 %v6802, %v6831
    %v6834 = vsub.f32 %v6832, %v6833
    %v6836 = vlaneseq
    %v6837 = vshrl.u32 %v6836, 7
    %v6838 = vsub.s32 0, %v6837
    %v6839 = vrot.slane %v6831, %v6838
    %v6841 = vmul.f32 %v6214, %v6839
    %v6842 = vmul.f32 %v6215, %v6839
    %v6843 = vmul.f32 %v6216, %v6839
    %v6844 = vmul.f32 %v6217, %v6839
    %v6845 = vmul.f32 %v6218, %v6839
    %v6846 = vmul.f32 %v6219, %v6839
    %v6847 = vmul.f32 %v6220, %v6839
    %v6848 = vmul.f32 %v6221, %v6839
    %v6849 = vmul.f32 %v6222, %v6839
    %v6850 = vmul.f32 %v6223, %v6839
    %v6851 = vmul.f32 %v6224, %v6839
    %v6852 = vmul.f32 %v6225, %v6839
    %v6853 = vmul.f32 %v6226, %v6839
    %v6854 = vmul.f32 %v6227, %v6839
    %v6855 = vmul.f32 %v6228, %v6839
    %v6856 = vmul.f32 %v6229, %v6839
    %v6857 = vmul.f32 %v6230, %v6839
    %v6858 = vmul.f32 %v6231, %v6839
    %v6859 = vmul.f32 %v6232, %v6839
    %v6860 = vmul.f32 %v6233, %v6839
    %v6861 = vmul.f32 %v6234, %v6839
    %v6862 = vmul.f32 %v6235, %v6839
    %v6863 = vmul.f32 %v6236, %v6839
    %v6864 = vmul.f32 %v6237, %v6839
    %v6865 = vmul.f32 %v6238, %v6839
    %v6866 = vmul.f32 %v6239, %v6839
    %v6867 = vmul.f32 %v6240, %v6839
    %v6868 = vmul.f32 %v6241, %v6839
    %v6869 = vmul.f32 %v6242, %v6839
    %v6870 = vmul.f32 %v6243, %v6839
    %v6871 = vmul.f32 %v6244, %v6839
    %v6872 = vmul.f32 %v6245, %v6839
    %v6873 = vmul.f32 %v6246, %v6839
    %v6874 = vmul.f32 %v6247, %v6839
    %v6875 = vmul.f32 %v6248, %v6839
    %v6876 = vmul.f32 %v6249, %v6839
    %v6877 = vmul.f32 %v6250, %v6839
    %v6878 = vmul.f32 %v6251, %v6839
    %v6879 = vmul.f32 %v6252, %v6839
    %v6880 = vmul.f32 %v6253, %v6839
    %v6881 = vmul.f32 %v6254, %v6839
    %v6882 = vmul.f32 %v6255, %v6839
    %v6883 = vmul.f32 %v6256, %v6839
    %v6884 = vmul.f32 %v6257, %v6839
    %v6885 = vmul.f32 %v6258, %v6839
    %v6886 = vmul.f32 %v6259, %v6839
    %v6887 = vmul.f32 %v6260, %v6839
    %v6888 = vmul.f32 %v6261, %v6839
    %v6889 = vmul.f32 %v6262, %v6839
    %v6890 = vmul.f32 %v6263, %v6839
    %v6891 = vmul.f32 %v6264, %v6839
    %v6892 = vmul.f32 %v6265, %v6839
    %v6893 = vmul.f32 %v6266, %v6839
    %v6894 = vmul.f32 %v6267, %v6839
    %v6895 = vmul.f32 %v6268, %v6839
    %v6896 = vmul.f32 %v6269, %v6839
    %v6897 = vmul.f32 %v6270, %v6839
    %v6898 = vmul.f32 %v6271, %v6839
    %v6899 = vmul.f32 %v6272, %v6839
    %v6900 = vmul.f32 %v6273, %v6839
    %v6901 = vmul.f32 %v6274, %v6839
    %v6902 = vmul.f32 %v6275, %v6839
    %v6903 = vmul.f32 %v6276, %v6839
    %v6904 = vmul.f32 %v6277, %v6839
    %v6906 = vlaneseq
    %v6907 = vshrl.u32 %v6906, 7
    %v6908 = vsub.s32 0, %v6907
    %v6909 = vrot.slane %v6834, %v6908
    %v6911 = vadd.f32 %v6841, %v6909
    %v6912 = vadd.f32 %v6842, %v6909
    %v6913 = vadd.f32 %v6843, %v6909
    %v6914 = vadd.f32 %v6844, %v6909
    %v6915 = vadd.f32 %v6845, %v6909
    %v6916 = vadd.f32 %v6846, %v6909
    %v6917 = vadd.f32 %v6847, %v6909
    %v6918 = vadd.f32 %v6848, %v6909
    %v6919 = vadd.f32 %v6849, %v6909
    %v6920 = vadd.f32 %v6850, %v6909
    %v6921 = vadd.f32 %v6851, %v6909
    %v6922 = vadd.f32 %v6852, %v6909
    %v6923 = vadd.f32 %v6853, %v6909
    %v6924 = vadd.f32 %v6854, %v6909
    %v6925 = vadd.f32 %v6855, %v6909
    %v6926 = vadd.f32 %v6856, %v6909
    %v6927 = vadd.f32 %v6857, %v6909
    %v6928 = vadd.f32 %v6858, %v6909
    %v6929 = vadd.f32 %v6859, %v6909
    %v6930 = vadd.f32 %v6860, %v6909
    %v6931 = vadd.f32 %v6861, %v6909
    %v6932 = vadd.f32 %v6862, %v6909
    %v6933 = vadd.f32 %v6863, %v6909
    %v6934 = vadd.f32 %v6864, %v6909
    %v6935 = vadd.f32 %v6865, %v6909
    %v6936 = vadd.f32 %v6866, %v6909
    %v6937 = vadd.f32 %v6867, %v6909
    %v6938 = vadd.f32 %v6868, %v6909
    %v6939 = vadd.f32 %v6869, %v6909
    %v6940 = vadd.f32 %v6870, %v6909
    %v6941 = vadd.f32 %v6871, %v6909
    %v6942 = vadd.f32 %v6872, %v6909
    %v6943 = vadd.f32 %v6873, %v6909
    %v6944 = vadd.f32 %v6874, %v6909
    %v6945 = vadd.f32 %v6875, %v6909
    %v6946 = vadd.f32 %v6876, %v6909
    %v6947 = vadd.f32 %v6877, %v6909
    %v6948 = vadd.f32 %v6878, %v6909
    %v6949 = vadd.f32 %v6879, %v6909
    %v6950 = vadd.f32 %v6880, %v6909
    %v6951 = vadd.f32 %v6881, %v6909
    %v6952 = vadd.f32 %v6882, %v6909
    %v6953 = vadd.f32 %v6883, %v6909
    %v6954 = vadd.f32 %v6884, %v6909
    %v6955 = vadd.f32 %v6885, %v6909
    %v6956 = vadd.f32 %v6886, %v6909
    %v6957 = vadd.f32 %v6887, %v6909
    %v6958 = vadd.f32 %v6888, %v6909
    %v6959 = vadd.f32 %v6889, %v6909
    %v6960 = vadd.f32 %v6890, %v6909
    %v6961 = vadd.f32 %v6891, %v6909
    %v6962 = vadd.f32 %v6892, %v6909
    %v6963 = vadd.f32 %v6893, %v6909
    %v6964 = vadd.f32 %v6894, %v6909
    %v6965 = vadd.f32 %v6895, %v6909
    %v6966 = vadd.f32 %v6896, %v6909
    %v6967 = vadd.f32 %v6897, %v6909
    %v6968 = vadd.f32 %v6898, %v6909
    %v6969 = vadd.f32 %v6899, %v6909
    %v6970 = vadd.f32 %v6900, %v6909
    %v6971 = vadd.f32 %v6901, %v6909
    %v6972 = vadd.f32 %v6902, %v6909
    %v6973 = vadd.f32 %v6903, %v6909
    %v6974 = vadd.f32 %v6904, %v6909
    %v6975 = vmax.f32 %v6911, 0.0
    %v6976 = vmax.f32 %v6912, 0.0
    %v6977 = vmax.f32 %v6913, 0.0
    %v6978 = vmax.f32 %v6914, 0.0
    %v6979 = vmax.f32 %v6915, 0.0
    %v6980 = vmax.f32 %v6916, 0.0
    %v6981 = vmax.f32 %v6917, 0.0
    %v6982 = vmax.f32 %v6918, 0.0
    %v6983 = vmax.f32 %v6919, 0.0
    %v6984 = vmax.f32 %v6920, 0.0
    %v6985 = vmax.f32 %v6921, 0.0
    %v6986 = vmax.f32 %v6922, 0.0
    %v6987 = vmax.f32 %v6923, 0.0
    %v6988 = vmax.f32 %v6924, 0.0
    %v6989 = vmax.f32 %v6925, 0.0
    %v6990 = vmax.f32 %v6926, 0.0
    %v6991 = vmax.f32 %v6927, 0.0
    %v6992 = vmax.f32 %v6928, 0.0
    %v6993 = vmax.f32 %v6929, 0.0
    %v6994 = vmax.f32 %v6930, 0.0
    %v6995 = vmax.f32 %v6931, 0.0
    %v6996 = vmax.f32 %v6932, 0.0
    %v6997 = vmax.f32 %v6933, 0.0
    %v6998 = vmax.f32 %v6934, 0.0
    %v6999 = vmax.f32 %v6935, 0.0
    %v7000 = vmax.f32 %v6936, 0.0
    %v7001 = vmax.f32 %v6937, 0.0
    %v7002 = vmax.f32 %v6938, 0.0
    %v7003 = vmax.f32 %v6939, 0.0
    %v7004 = vmax.f32 %v6940, 0.0
    %v7005 = vmax.f32 %v6941, 0.0
    %v7006 = vmax.f32 %v6942, 0.0
    %v7007 = vmax.f32 %v6943, 0.0
    %v7008 = vmax.f32 %v6944, 0.0
    %v7009 = vmax.f32 %v6945, 0.0
    %v7010 = vmax.f32 %v6946, 0.0
    %v7011 = vmax.f32 %v6947, 0.0
    %v7012 = vmax.f32 %v6948, 0.0
    %v7013 = vmax.f32 %v6949, 0.0
    %v7014 = vmax.f32 %v6950, 0.0
    %v7015 = vmax.f32 %v6951, 0.0
    %v7016 = vmax.f32 %v6952, 0.0
    %v7017 = vmax.f32 %v6953, 0.0
    %v7018 = vmax.f32 %v6954, 0.0
    %v7019 = vmax.f32 %v6955, 0.0
    %v7020 = vmax.f32 %v6956, 0.0
    %v7021 = vmax.f32 %v6957, 0.0
    %v7022 = vmax.f32 %v6958, 0.0
    %v7023 = vmax.f32 %v6959, 0.0
    %v7024 = vmax.f32 %v6960, 0.0
    %v7025 = vmax.f32 %v6961, 0.0
    %v7026 = vmax.f32 %v6962, 0.0
    %v7027 = vmax.f32 %v6963, 0.0
    %v7028 = vmax.f32 %v6964, 0.0
    %v7029 = vmax.f32 %v6965, 0.0
    %v7030 = vmax.f32 %v6966, 0.0
    %v7031 = vmax.f32 %v6967, 0.0
    %v7032 = vmax.f32 %v6968, 0.0
    %v7033 = vmax.f32 %v6969, 0.0
    %v7034 = vmax.f32 %v6970, 0.0
    %v7035 = vmax.f32 %v6971, 0.0
    %v7036 = vmax.f32 %v6972, 0.0
    %v7037 = vmax.f32 %v6973, 0.0
    %v7038 = vmax.f32 %v6974, 0.0
    %v7039 = vpack.c.bf16 %v6976, %v6975
    %v7040 = vpack.c.bf16 %v6978, %v6977
    %v7041 = vpack.c.bf16 %v6980, %v6979
    %v7042 = vpack.c.bf16 %v6982, %v6981
    %v7043 = vpack.c.bf16 %v6984, %v6983
    %v7044 = vpack.c.bf16 %v6986, %v6985
    %v7045 = vpack.c.bf16 %v6988, %v6987
    %v7046 = vpack.c.bf16 %v6990, %v6989
    %v7047 = vpack.c.bf16 %v6992, %v6991
    %v7048 = vpack.c.bf16 %v6994, %v6993
    %v7049 = vpack.c.bf16 %v6996, %v6995
    %v7050 = vpack.c.bf16 %v6998, %v6997
    %v7051 = vpack.c.bf16 %v7000, %v6999
    %v7052 = vpack.c.bf16 %v7002, %v7001
    %v7053 = vpack.c.bf16 %v7004, %v7003
    %v7054 = vpack.c.bf16 %v7006, %v7005
    %v7055 = vpack.c.bf16 %v7008, %v7007
    %v7056 = vpack.c.bf16 %v7010, %v7009
    %v7057 = vpack.c.bf16 %v7012, %v7011
    %v7058 = vpack.c.bf16 %v7014, %v7013
    %v7059 = vpack.c.bf16 %v7016, %v7015
    %v7060 = vpack.c.bf16 %v7018, %v7017
    %v7061 = vpack.c.bf16 %v7020, %v7019
    %v7062 = vpack.c.bf16 %v7022, %v7021
    %v7063 = vpack.c.bf16 %v7024, %v7023
    %v7064 = vpack.c.bf16 %v7026, %v7025
    %v7065 = vpack.c.bf16 %v7028, %v7027
    %v7066 = vpack.c.bf16 %v7030, %v7029
    %v7067 = vpack.c.bf16 %v7032, %v7031
    %v7068 = vpack.c.bf16 %v7034, %v7033
    %v7069 = vpack.c.bf16 %v7036, %v7035
    %v7070 = vpack.c.bf16 %v7038, %v7037
    %v7071 = vld [vmem:[%s7] sm:$0x3]
    %v7073 = vsel %vm861, %v7039, 0
    %v7076 = vsel %vm861, %v7040, 0
    %v7079 = vsel %vm861, %v7041, 0
    %v7082 = vsel %vm861, %v7042, 0
    %v7085 = vsel %vm861, %v7043, 0
    %v7088 = vsel %vm861, %v7044, 0
    %v7091 = vsel %vm861, %v7045, 0
    %v7094 = vsel %vm861, %v7046, 0
    %v7097 = vsel %vm861, %v7047, 0
    %v7100 = vsel %vm861, %v7048, 0
    %v7103 = vsel %vm861, %v7049, 0
    %v7106 = vsel %vm861, %v7050, 0
    %v7109 = vsel %vm861, %v7051, 0
    %v7112 = vsel %vm861, %v7052, 0
    %v7115 = vsel %vm861, %v7053, 0
    %v7118 = vsel %vm861, %v7054, 0
    %v7121 = vsel %vm861, %v7055, 0
    %v7124 = vsel %vm861, %v7056, 0
    %v7127 = vsel %vm861, %v7057, 0
    %v7130 = vsel %vm861, %v7058, 0
    %v7133 = vsel %vm861, %v7059, 0
    %v7136 = vsel %vm861, %v7060, 0
    %v7139 = vsel %vm861, %v7061, 0
    %v7142 = vsel %vm861, %v7062, 0
    %v7145 = vsel %vm861, %v7063, 0
    %v7148 = vsel %vm861, %v7064, 0
    %v7151 = vsel %vm861, %v7065, 0
    %v7154 = vsel %vm861, %v7066, 0
    %v7157 = vsel %vm861, %v7067, 0
    %v7160 = vsel %vm861, %v7068, 0
    %v7163 = vsel %vm861, %v7069, 0
    %v7166 = vsel %vm861, %v7070, 0
    %v7169 = vsel %vm1746, %v7071, 0
    %7171 = vmatprep.subr.bf16.mxu0 0
    %7172 = vmatpush1.bf16.msra.mxu0 %v7169
    %7173 = vmatprep.subr.bf16.mxu0 0
    %7174 = vmatpush1.bf16.msra.mxu0 0
    %7175 = vmatprep.subr.bf16.mxu0 0
    %7176 = vmatpush1.bf16.msra.mxu0 0
    %7177 = vmatprep.subr.bf16.mxu0 0
    %7178 = vmatpush1.bf16.msra.mxu0 0
    %7179 = vmatprep.subr.bf16.mxu0 0
    %7180 = vmatpush1.bf16.msra.mxu0 0
    %7181 = vmatprep.subr.bf16.mxu0 0
    %7182 = vmatpush1.bf16.msra.mxu0 0
    %7183 = vmatprep.subr.bf16.mxu0 0
    %7184 = vmatpush1.bf16.msra.mxu0 0
    %7185 = vmatprep.subr.bf16.mxu0 0
    %7186 = vmatpush1.bf16.msra.mxu0 0
    %7187 = vmatprep.subr.bf16.mxu0 0
    %7188 = vmatpush1.bf16.msra.mxu0 0
    %7189 = vmatprep.subr.bf16.mxu0 0
    %7190 = vmatpush1.bf16.msra.mxu0 0
    %7191 = vmatprep.subr.bf16.mxu0 0
    %7192 = vmatpush1.bf16.msra.mxu0 0
    %7193 = vmatprep.subr.bf16.mxu0 0
    %7194 = vmatpush1.bf16.msra.mxu0 0
    %7195 = vmatprep.subr.bf16.mxu0 0
    %7196 = vmatpush1.bf16.msra.mxu0 0
    %7197 = vmatprep.subr.bf16.mxu0 0
    %7198 = vmatpush1.bf16.msra.mxu0 0
    %7199 = vmatprep.subr.bf16.mxu0 0
    %7200 = vmatpush1.bf16.msra.mxu0 0
    %7201 = vmatprep.subr.bf16.mxu0 0
    %7202 = vmatpush1.bf16.msra.mxu0 0
    %7203 = vmatprep.mubr.bf16.mxu0 0
    %7204 = vmatmul.mubr.bf16.gmra.mrb[0].mxu0 %v7073
    %v7205 = vpop.f32.mrb[0].mxu0
    %v7206 = vadd.f32 0.0, %v7205
    %v7207 = vpop.f32.mrb[0].mxu0
    %v7208 = vpop.f32.mrb[0].mxu0
    %v7209 = vadd.f32 0.0, %v7208
    %v7210 = vpop.f32.mrb[0].mxu0
    %7211 = vmatprep.mubr.bf16.mxu0 0
    %7212 = vmatmul.mubr.bf16.gmra.mrb[0].mxu0 %v7076
    %v7213 = vpop.f32.mrb[0].mxu0
    %v7214 = vadd.f32 0.0, %v7213
    %v7215 = vpop.f32.mrb[0].mxu0
    %v7216 = vpop.f32.mrb[0].mxu0
    %v7217 = vadd.f32 0.0, %v7216
    %v7218 = vpop.f32.mrb[0].mxu0
    %7219 = vmatprep.mubr.bf16.mxu0 0
    %7220 = vmatmul.mubr.bf16.gmra.mrb[0].mxu0 %v7079
    %v7221 = vpop.f32.mrb[0].mxu0
    %v7222 = vadd.f32 0.0, %v7221
    %v7223 = vpop.f32.mrb[0].mxu0
    %v7224 = vpop.f32.mrb[0].mxu0
    %v7225 = vadd.f32 0.0, %v7224
    %v7226 = vpop.f32.mrb[0].mxu0
    %7227 = vmatprep.mubr.bf16.mxu0 0
    %7228 = vmatmul.mubr.bf16.gmra.mrb[0].mxu0 %v7082
    %v7229 = vpop.f32.mrb[0].mxu0
    %v7230 = vadd.f32 0.0, %v7229
    %v7231 = vpop.f32.mrb[0].mxu0
    %v7232 = vpop.f32.mrb[0].mxu0
    %v7233 = vadd.f32 0.0, %v7232
    %v7234 = vpop.f32.mrb[0].mxu0
    %7235 = vmatprep.mubr.bf16.mxu0 0
    %7236 = vmatmul.mubr.bf16.gmra.mrb[0].mxu0 %v7085
    %v7237 = vpop.f32.mrb[0].mxu0
    %v7238 = vadd.f32 0.0, %v7237
    %v7239 = vpop.f32.mrb[0].mxu0
    %v7240 = vpop.f32.mrb[0].mxu0
    %v7241 = vadd.f32 0.0, %v7240
    %v7242 = vpop.f32.mrb[0].mxu0
    %7243 = vmatprep.mubr.bf16.mxu0 0
    %7244 = vmatmul.mubr.bf16.gmra.mrb[0].mxu0 %v7088
    %v7245 = vpop.f32.mrb[0].mxu0
    %v7246 = vadd.f32 0.0, %v7245
    %v7247 = vpop.f32.mrb[0].mxu0
    %v7248 = vpop.f32.mrb[0].mxu0
    %v7249 = vadd.f32 0.0, %v7248
    %v7250 = vpop.f32.mrb[0].mxu0
    %7251 = vmatprep.mubr.bf16.mxu0 0
    %7252 = vmatmul.mubr.bf16.gmra.mrb[0].mxu0 %v7091
    %v7253 = vpop.f32.mrb[0].mxu0
    %v7254 = vadd.f32 0.0, %v7253
    %v7255 = vpop.f32.mrb[0].mxu0
    %v7256 = vpop.f32.mrb[0].mxu0
    %v7257 = vadd.f32 0.0, %v7256
    %v7258 = vpop.f32.mrb[0].mxu0
    %7259 = vmatprep.mubr.bf16.mxu0 0
    %7260 = vmatmul.mubr.bf16.gmra.mrb[0].mxu0 %v7094
    %v7261 = vpop.f32.mrb[0].mxu0
    %v7262 = vadd.f32 0.0, %v7261
    %v7263 = vpop.f32.mrb[0].mxu0
    %v7264 = vpop.f32.mrb[0].mxu0
    %v7265 = vadd.f32 0.0, %v7264
    %v7266 = vpop.f32.mrb[0].mxu0
    %7267 = vmatprep.mubr.bf16.mxu0 0
    %7268 = vmatmul.mubr.bf16.gmra.mrb[0].mxu0 %v7097
    %v7269 = vpop.f32.mrb[0].mxu0
    %v7270 = vadd.f32 0.0, %v7269
    %v7271 = vpop.f32.mrb[0].mxu0
    %v7272 = vpop.f32.mrb[0].mxu0
    %v7273 = vadd.f32 0.0, %v7272
    %v7274 = vpop.f32.mrb[0].mxu0
    %7275 = vmatprep.mubr.bf16.mxu0 0
    %7276 = vmatmul.mubr.bf16.gmra.mrb[0].mxu0 %v7100
    %v7277 = vpop.f32.mrb[0].mxu0
    %v7278 = vadd.f32 0.0, %v7277
    %v7279 = vpop.f32.mrb[0].mxu0
    %v7280 = vpop.f32.mrb[0].mxu0
    %v7281 = vadd.f32 0.0, %v7280
    %v7282 = vpop.f32.mrb[0].mxu0
    %7283 = vmatprep.mubr.bf16.mxu0 0
    %7284 = vmatmul.mubr.bf16.gmra.mrb[0].mxu0 %v7103
    %v7285 = vpop.f32.mrb[0].mxu0
    %v7286 = vadd.f32 0.0, %v7285
    %v7287 = vpop.f32.mrb[0].mxu0
    %v7288 = vpop.f32.mrb[0].mxu0
    %v7289 = vadd.f32 0.0, %v7288
    %v7290 = vpop.f32.mrb[0].mxu0
    %7291 = vmatprep.mubr.bf16.mxu0 0
    %7292 = vmatmul.mubr.bf16.gmra.mrb[0].mxu0 %v7106
    %v7293 = vpop.f32.mrb[0].mxu0
    %v7294 = vadd.f32 0.0, %v7293
    %v7295 = vpop.f32.mrb[0].mxu0
    %v7296 = vpop.f32.mrb[0].mxu0
    %v7297 = vadd.f32 0.0, %v7296
    %v7298 = vpop.f32.mrb[0].mxu0
    %7299 = vmatprep.mubr.bf16.mxu0 0
    %7300 = vmatmul.mubr.bf16.gmra.mrb[0].mxu0 %v7109
    %v7301 = vpop.f32.mrb[0].mxu0
    %v7302 = vadd.f32 0.0, %v7301
    %v7303 = vpop.f32.mrb[0].mxu0
    %v7304 = vpop.f32.mrb[0].mxu0
    %v7305 = vadd.f32 0.0, %v7304
    %v7306 = vpop.f32.mrb[0].mxu0
    %7307 = vmatprep.mubr.bf16.mxu0 0
    %7308 = vmatmul.mubr.bf16.gmra.mrb[0].mxu0 %v7112
    %v7309 = vpop.f32.mrb[0].mxu0
    %v7310 = vadd.f32 0.0, %v7309
    %v7311 = vpop.f32.mrb[0].mxu0
    %v7312 = vpop.f32.mrb[0].mxu0
    %v7313 = vadd.f32 0.0, %v7312
    %v7314 = vpop.f32.mrb[0].mxu0
    %7315 = vmatprep.mubr.bf16.mxu0 0
    %7316 = vmatmul.mubr.bf16.gmra.mrb[0].mxu0 %v7115
    %v7317 = vpop.f32.mrb[0].mxu0
    %v7318 = vadd.f32 0.0, %v7317
    %v7319 = vpop.f32.mrb[0].mxu0
    %v7320 = vpop.f32.mrb[0].mxu0
    %v7321 = vadd.f32 0.0, %v7320
    %v7322 = vpop.f32.mrb[0].mxu0
    %7323 = vmatprep.mubr.bf16.mxu0 0
    %7324 = vmatmul.mubr.bf16.gmra.mrb[0].mxu0 %v7118
    %v7325 = vpop.f32.mrb[0].mxu0
    %v7326 = vadd.f32 0.0, %v7325
    %v7327 = vpop.f32.mrb[0].mxu0
    %v7328 = vpop.f32.mrb[0].mxu0
    %v7329 = vadd.f32 0.0, %v7328
    %v7330 = vpop.f32.mrb[0].mxu0
    %7331 = vmatprep.mubr.bf16.mxu0 0
    %7332 = vmatmul.mubr.bf16.gmra.mrb[0].mxu0 %v7121
    %v7333 = vpop.f32.mrb[0].mxu0
    %v7334 = vadd.f32 0.0, %v7333
    %v7335 = vpop.f32.mrb[0].mxu0
    %v7336 = vpop.f32.mrb[0].mxu0
    %v7337 = vadd.f32 0.0, %v7336
    %v7338 = vpop.f32.mrb[0].mxu0
    %7339 = vmatprep.mubr.bf16.mxu0 0
    %7340 = vmatmul.mubr.bf16.gmra.mrb[0].mxu0 %v7124
    %v7341 = vpop.f32.mrb[0].mxu0
    %v7342 = vadd.f32 0.0, %v7341
    %v7343 = vpop.f32.mrb[0].mxu0
    %v7344 = vpop.f32.mrb[0].mxu0
    %v7345 = vadd.f32 0.0, %v7344
    %v7346 = vpop.f32.mrb[0].mxu0
    %7347 = vmatprep.mubr.bf16.mxu0 0
    %7348 = vmatmul.mubr.bf16.gmra.mrb[0].mxu0 %v7127
    %v7349 = vpop.f32.mrb[0].mxu0
    %v7350 = vadd.f32 0.0, %v7349
    %v7351 = vpop.f32.mrb[0].mxu0
    %v7352 = vpop.f32.mrb[0].mxu0
    %v7353 = vadd.f32 0.0, %v7352
    %v7354 = vpop.f32.mrb[0].mxu0
    %7355 = vmatprep.mubr.bf16.mxu0 0
    %7356 = vmatmul.mubr.bf16.gmra.mrb[0].mxu0 %v7130
    %v7357 = vpop.f32.mrb[0].mxu0
    %v7358 = vadd.f32 0.0, %v7357
    %v7359 = vpop.f32.mrb[0].mxu0
    %v7360 = vpop.f32.mrb[0].mxu0
    %v7361 = vadd.f32 0.0, %v7360
    %v7362 = vpop.f32.mrb[0].mxu0
    %7363 = vmatprep.mubr.bf16.mxu0 0
    %7364 = vmatmul.mubr.bf16.gmra.mrb[0].mxu0 %v7133
    %v7365 = vpop.f32.mrb[0].mxu0
    %v7366 = vadd.f32 0.0, %v7365
    %v7367 = vpop.f32.mrb[0].mxu0
    %v7368 = vpop.f32.mrb[0].mxu0
    %v7369 = vadd.f32 0.0, %v7368
    %v7370 = vpop.f32.mrb[0].mxu0
    %7371 = vmatprep.mubr.bf16.mxu0 0
    %7372 = vmatmul.mubr.bf16.gmra.mrb[0].mxu0 %v7136
    %v7373 = vpop.f32.mrb[0].mxu0
    %v7374 = vadd.f32 0.0, %v7373
    %v7375 = vpop.f32.mrb[0].mxu0
    %v7376 = vpop.f32.mrb[0].mxu0
    %v7377 = vadd.f32 0.0, %v7376
    %v7378 = vpop.f32.mrb[0].mxu0
    %7379 = vmatprep.mubr.bf16.mxu0 0
    %7380 = vmatmul.mubr.bf16.gmra.mrb[0].mxu0 %v7139
    %v7381 = vpop.f32.mrb[0].mxu0
    %v7382 = vadd.f32 0.0, %v7381
    %v7383 = vpop.f32.mrb[0].mxu0
    %v7384 = vpop.f32.mrb[0].mxu0
    %v7385 = vadd.f32 0.0, %v7384
    %v7386 = vpop.f32.mrb[0].mxu0
    %7387 = vmatprep.mubr.bf16.mxu0 0
    %7388 = vmatmul.mubr.bf16.gmra.mrb[0].mxu0 %v7142
    %v7389 = vpop.f32.mrb[0].mxu0
    %v7390 = vadd.f32 0.0, %v7389
    %v7391 = vpop.f32.mrb[0].mxu0
    %v7392 = vpop.f32.mrb[0].mxu0
    %v7393 = vadd.f32 0.0, %v7392
    %v7394 = vpop.f32.mrb[0].mxu0
    %7395 = vmatprep.mubr.bf16.mxu0 0
    %7396 = vmatmul.mubr.bf16.gmra.mrb[0].mxu0 %v7145
    %v7397 = vpop.f32.mrb[0].mxu0
    %v7398 = vadd.f32 0.0, %v7397
    %v7399 = vpop.f32.mrb[0].mxu0
    %v7400 = vpop.f32.mrb[0].mxu0
    %v7401 = vadd.f32 0.0, %v7400
    %v7402 = vpop.f32.mrb[0].mxu0
    %7403 = vmatprep.mubr.bf16.mxu0 0
    %7404 = vmatmul.mubr.bf16.gmra.mrb[0].mxu0 %v7148
    %v7405 = vpop.f32.mrb[0].mxu0
    %v7406 = vadd.f32 0.0, %v7405
    %v7407 = vpop.f32.mrb[0].mxu0
    %v7408 = vpop.f32.mrb[0].mxu0
    %v7409 = vadd.f32 0.0, %v7408
    %v7410 = vpop.f32.mrb[0].mxu0
    %7411 = vmatprep.mubr.bf16.mxu0 0
    %7412 = vmatmul.mubr.bf16.gmra.mrb[0].mxu0 %v7151
    %v7413 = vpop.f32.mrb[0].mxu0
    %v7414 = vadd.f32 0.0, %v7413
    %v7415 = vpop.f32.mrb[0].mxu0
    %v7416 = vpop.f32.mrb[0].mxu0
    %v7417 = vadd.f32 0.0, %v7416
    %v7418 = vpop.f32.mrb[0].mxu0
    %7419 = vmatprep.mubr.bf16.mxu0 0
    %7420 = vmatmul.mubr.bf16.gmra.mrb[0].mxu0 %v7154
    %v7421 = vpop.f32.mrb[0].mxu0
    %v7422 = vadd.f32 0.0, %v7421
    %v7423 = vpop.f32.mrb[0].mxu0
    %v7424 = vpop.f32.mrb[0].mxu0
    %v7425 = vadd.f32 0.0, %v7424
    %v7426 = vpop.f32.mrb[0].mxu0
    %7427 = vmatprep.mubr.bf16.mxu0 0
    %7428 = vmatmul.mubr.bf16.gmra.mrb[0].mxu0 %v7157
    %v7429 = vpop.f32.mrb[0].mxu0
    %v7430 = vadd.f32 0.0, %v7429
    %v7431 = vpop.f32.mrb[0].mxu0
    %v7432 = vpop.f32.mrb[0].mxu0
    %v7433 = vadd.f32 0.0, %v7432
    %v7434 = vpop.f32.mrb[0].mxu0
    %7435 = vmatprep.mubr.bf16.mxu0 0
    %7436 = vmatmul.mubr.bf16.gmra.mrb[0].mxu0 %v7160
    %v7437 = vpop.f32.mrb[0].mxu0
    %v7438 = vadd.f32 0.0, %v7437
    %v7439 = vpop.f32.mrb[0].mxu0
    %v7440 = vpop.f32.mrb[0].mxu0
    %v7441 = vadd.f32 0.0, %v7440
    %v7442 = vpop.f32.mrb[0].mxu0
    %7443 = vmatprep.mubr.bf16.mxu0 0
    %7444 = vmatmul.mubr.bf16.gmra.mrb[0].mxu0 %v7163
    %v7445 = vpop.f32.mrb[0].mxu0
    %v7446 = vadd.f32 0.0, %v7445
    %v7447 = vpop.f32.mrb[0].mxu0
    %v7448 = vpop.f32.mrb[0].mxu0
    %v7449 = vadd.f32 0.0, %v7448
    %v7450 = vpop.f32.mrb[0].mxu0
    %7451 = vmatprep.mubr.bf16.mxu0 0
    %7452 = vmatmul.mubr.bf16.gmra.mrb[0].mxu0 %v7166
    %v7453 = vpop.f32.mrb[0].mxu0
    %v7454 = vadd.f32 0.0, %v7453
    %v7455 = vpop.f32.mrb[0].mxu0
    %v7456 = vpop.f32.mrb[0].mxu0
    %v7457 = vadd.f32 0.0, %v7456
    %v7458 = vpop.f32.mrb[0].mxu0
    %7459 = vdwg.mxu0
    %v7460 = vmul.f32 %v7206, %v7206
    %v7461 = vmul.f32 %v7209, %v7209
    %v7462 = vmul.f32 %v7214, %v7214
    %v7463 = vmul.f32 %v7217, %v7217
    %v7464 = vmul.f32 %v7222, %v7222
    %v7465 = vmul.f32 %v7225, %v7225
    %v7466 = vmul.f32 %v7230, %v7230
    %v7467 = vmul.f32 %v7233, %v7233
    %v7468 = vmul.f32 %v7238, %v7238
    %v7469 = vmul.f32 %v7241, %v7241
    %v7470 = vmul.f32 %v7246, %v7246
    %v7471 = vmul.f32 %v7249, %v7249
    %v7472 = vmul.f32 %v7254, %v7254
    %v7473 = vmul.f32 %v7257, %v7257
    %v7474 = vmul.f32 %v7262, %v7262
    %v7475 = vmul.f32 %v7265, %v7265
    %v7476 = vmul.f32 %v7270, %v7270
    %v7477 = vmul.f32 %v7273, %v7273
    %v7478 = vmul.f32 %v7278, %v7278
    %v7479 = vmul.f32 %v7281, %v7281
    %v7480 = vmul.f32 %v7286, %v7286
    %v7481 = vmul.f32 %v7289, %v7289
    %v7482 = vmul.f32 %v7294, %v7294
    %v7483 = vmul.f32 %v7297, %v7297
    %v7484 = vmul.f32 %v7302, %v7302
    %v7485 = vmul.f32 %v7305, %v7305
    %v7486 = vmul.f32 %v7310, %v7310
    %v7487 = vmul.f32 %v7313, %v7313
    %v7488 = vmul.f32 %v7318, %v7318
    %v7489 = vmul.f32 %v7321, %v7321
    %v7490 = vmul.f32 %v7326, %v7326
    %v7491 = vmul.f32 %v7329, %v7329
    %v7492 = vmul.f32 %v7334, %v7334
    %v7493 = vmul.f32 %v7337, %v7337
    %v7494 = vmul.f32 %v7342, %v7342
    %v7495 = vmul.f32 %v7345, %v7345
    %v7496 = vmul.f32 %v7350, %v7350
    %v7497 = vmul.f32 %v7353, %v7353
    %v7498 = vmul.f32 %v7358, %v7358
    %v7499 = vmul.f32 %v7361, %v7361
    %v7500 = vmul.f32 %v7366, %v7366
    %v7501 = vmul.f32 %v7369, %v7369
    %v7502 = vmul.f32 %v7374, %v7374
    %v7503 = vmul.f32 %v7377, %v7377
    %v7504 = vmul.f32 %v7382, %v7382
    %v7505 = vmul.f32 %v7385, %v7385
    %v7506 = vmul.f32 %v7390, %v7390
    %v7507 = vmul.f32 %v7393, %v7393
    %v7508 = vmul.f32 %v7398, %v7398
    %v7509 = vmul.f32 %v7401, %v7401
    %v7510 = vmul.f32 %v7406, %v7406
    %v7511 = vmul.f32 %v7409, %v7409
    %v7512 = vmul.f32 %v7414, %v7414
    %v7513 = vmul.f32 %v7417, %v7417
    %v7514 = vmul.f32 %v7422, %v7422
    %v7515 = vmul.f32 %v7425, %v7425
    %v7516 = vmul.f32 %v7430, %v7430
    %v7517 = vmul.f32 %v7433, %v7433
    %v7518 = vmul.f32 %v7438, %v7438
    %v7519 = vmul.f32 %v7441, %v7441
    %v7520 = vmul.f32 %v7446, %v7446
    %v7521 = vmul.f32 %v7449, %v7449
    %v7522 = vmul.f32 %v7454, %v7454
    %v7523 = vmul.f32 %v7457, %v7457
    %7588 = vrot.lane.b32.xlu0 %v7460, 16
    %v7589 = vpop.permute.xlu0 %7588
    %7590 = vrot.lane.b32.xlu0 %v7461, 16
    %v7591 = vpop.permute.xlu0 %7590
    %7592 = vrot.lane.b32.xlu0 %v7462, 16
    %v7593 = vpop.permute.xlu0 %7592
    %7594 = vrot.lane.b32.xlu0 %v7463, 16
    %v7595 = vpop.permute.xlu0 %7594
    %7596 = vrot.lane.b32.xlu0 %v7464, 16
    %v7597 = vpop.permute.xlu0 %7596
    %7598 = vrot.lane.b32.xlu0 %v7465, 16
    %v7599 = vpop.permute.xlu0 %7598
    %7600 = vrot.lane.b32.xlu0 %v7466, 16
    %v7601 = vpop.permute.xlu0 %7600
    %7602 = vrot.lane.b32.xlu0 %v7467, 16
    %v7603 = vpop.permute.xlu0 %7602
    %7604 = vrot.lane.b32.xlu0 %v7468, 16
    %v7605 = vpop.permute.xlu0 %7604
    %7606 = vrot.lane.b32.xlu0 %v7469, 16
    %v7607 = vpop.permute.xlu0 %7606
    %7608 = vrot.lane.b32.xlu0 %v7470, 16
    %v7609 = vpop.permute.xlu0 %7608
    %7610 = vrot.lane.b32.xlu0 %v7471, 16
    %v7611 = vpop.permute.xlu0 %7610
    %7612 = vrot.lane.b32.xlu0 %v7472, 16
    %v7613 = vpop.permute.xlu0 %7612
    %7614 = vrot.lane.b32.xlu0 %v7473, 16
    %v7615 = vpop.permute.xlu0 %7614
    %7616 = vrot.lane.b32.xlu0 %v7474, 16
    %v7617 = vpop.permute.xlu0 %7616
    %7618 = vrot.lane.b32.xlu0 %v7475, 16
    %v7619 = vpop.permute.xlu0 %7618
    %7620 = vrot.lane.b32.xlu0 %v7476, 16
    %v7621 = vpop.permute.xlu0 %7620
    %7622 = vrot.lane.b32.xlu0 %v7477, 16
    %v7623 = vpop.permute.xlu0 %7622
    %7624 = vrot.lane.b32.xlu0 %v7478, 16
    %v7625 = vpop.permute.xlu0 %7624
    %7626 = vrot.lane.b32.xlu0 %v7479, 16
    %v7627 = vpop.permute.xlu0 %7626
    %7628 = vrot.lane.b32.xlu0 %v7480, 16
    %v7629 = vpop.permute.xlu0 %7628
    %7630 = vrot.lane.b32.xlu0 %v7481, 16
    %v7631 = vpop.permute.xlu0 %7630
    %7632 = vrot.lane.b32.xlu0 %v7482, 16
    %v7633 = vpop.permute.xlu0 %7632
    %7634 = vrot.lane.b32.xlu0 %v7483, 16
    %v7635 = vpop.permute.xlu0 %7634
    %7636 = vrot.lane.b32.xlu0 %v7484, 16
    %v7637 = vpop.permute.xlu0 %7636
    %7638 = vrot.lane.b32.xlu0 %v7485, 16
    %v7639 = vpop.permute.xlu0 %7638
    %7640 = vrot.lane.b32.xlu0 %v7486, 16
    %v7641 = vpop.permute.xlu0 %7640
    %7642 = vrot.lane.b32.xlu0 %v7487, 16
    %v7643 = vpop.permute.xlu0 %7642
    %7644 = vrot.lane.b32.xlu0 %v7488, 16
    %v7645 = vpop.permute.xlu0 %7644
    %7646 = vrot.lane.b32.xlu0 %v7489, 16
    %v7647 = vpop.permute.xlu0 %7646
    %7648 = vrot.lane.b32.xlu0 %v7490, 16
    %v7649 = vpop.permute.xlu0 %7648
    %7650 = vrot.lane.b32.xlu0 %v7491, 16
    %v7651 = vpop.permute.xlu0 %7650
    %7652 = vrot.lane.b32.xlu0 %v7492, 16
    %v7653 = vpop.permute.xlu0 %7652
    %7654 = vrot.lane.b32.xlu0 %v7493, 16
    %v7655 = vpop.permute.xlu0 %7654
    %7656 = vrot.lane.b32.xlu0 %v7494, 16
    %v7657 = vpop.permute.xlu0 %7656
    %7658 = vrot.lane.b32.xlu0 %v7495, 16
    %v7659 = vpop.permute.xlu0 %7658
    %7660 = vrot.lane.b32.xlu0 %v7496, 16
    %v7661 = vpop.permute.xlu0 %7660
    %7662 = vrot.lane.b32.xlu0 %v7497, 16
    %v7663 = vpop.permute.xlu0 %7662
    %7664 = vrot.lane.b32.xlu0 %v7498, 16
    %v7665 = vpop.permute.xlu0 %7664
    %7666 = vrot.lane.b32.xlu0 %v7499, 16
    %v7667 = vpop.permute.xlu0 %7666
    %7668 = vrot.lane.b32.xlu0 %v7500, 16
    %v7669 = vpop.permute.xlu0 %7668
    %7670 = vrot.lane.b32.xlu0 %v7501, 16
    %v7671 = vpop.permute.xlu0 %7670
    %7672 = vrot.lane.b32.xlu0 %v7502, 16
    %v7673 = vpop.permute.xlu0 %7672
    %7674 = vrot.lane.b32.xlu0 %v7503, 16
    %v7675 = vpop.permute.xlu0 %7674
    %7676 = vrot.lane.b32.xlu0 %v7504, 16
    %v7677 = vpop.permute.xlu0 %7676
    %7678 = vrot.lane.b32.xlu0 %v7505, 16
    %v7679 = vpop.permute.xlu0 %7678
    %7680 = vrot.lane.b32.xlu0 %v7506, 16
    %v7681 = vpop.permute.xlu0 %7680
    %7682 = vrot.lane.b32.xlu0 %v7507, 16
    %v7683 = vpop.permute.xlu0 %7682
    %7684 = vrot.lane.b32.xlu0 %v7508, 16
    %v7685 = vpop.permute.xlu0 %7684
    %7686 = vrot.lane.b32.xlu0 %v7509, 16
    %v7687 = vpop.permute.xlu0 %7686
    %7688 = vrot.lane.b32.xlu0 %v7510, 16
    %v7689 = vpop.permute.xlu0 %7688
    %7690 = vrot.lane.b32.xlu0 %v7511, 16
    %v7691 = vpop.permute.xlu0 %7690
    %7692 = vrot.lane.b32.xlu0 %v7512, 16
    %v7693 = vpop.permute.xlu0 %7692
    %7694 = vrot.lane.b32.xlu0 %v7513, 16
    %v7695 = vpop.permute.xlu0 %7694
    %7696 = vrot.lane.b32.xlu0 %v7514, 16
    %v7697 = vpop.permute.xlu0 %7696
    %7698 = vrot.lane.b32.xlu0 %v7515, 16
    %v7699 = vpop.permute.xlu0 %7698
    %7700 = vrot.lane.b32.xlu0 %v7516, 16
    %v7701 = vpop.permute.xlu0 %7700
    %7702 = vrot.lane.b32.xlu0 %v7517, 16
    %v7703 = vpop.permute.xlu0 %7702
    %7704 = vrot.lane.b32.xlu0 %v7518, 16
    %v7705 = vpop.permute.xlu0 %7704
    %7706 = vrot.lane.b32.xlu0 %v7519, 16
    %v7707 = vpop.permute.xlu0 %7706
    %7708 = vrot.lane.b32.xlu0 %v7520, 16
    %v7709 = vpop.permute.xlu0 %7708
    %7710 = vrot.lane.b32.xlu0 %v7521, 16
    %v7711 = vpop.permute.xlu0 %7710
    %7712 = vrot.lane.b32.xlu0 %v7522, 16
    %v7713 = vpop.permute.xlu0 %7712
    %7714 = vrot.lane.b32.xlu0 %v7523, 16
    %v7715 = vpop.permute.xlu0 %7714
    %v7780 = vsel %vm155, %v7206, %v7589
    %v7781 = vsel %vm155, %v7209, %v7591
    %v7782 = vsel %vm155, %v7214, %v7593
    %v7783 = vsel %vm155, %v7217, %v7595
    %v7784 = vsel %vm155, %v7222, %v7597
    %v7785 = vsel %vm155, %v7225, %v7599
    %v7786 = vsel %vm155, %v7230, %v7601
    %v7787 = vsel %vm155, %v7233, %v7603
    %v7788 = vsel %vm155, %v7238, %v7605
    %v7789 = vsel %vm155, %v7241, %v7607
    %v7790 = vsel %vm155, %v7246, %v7609
    %v7791 = vsel %vm155, %v7249, %v7611
    %v7792 = vsel %vm155, %v7254, %v7613
    %v7793 = vsel %vm155, %v7257, %v7615
    %v7794 = vsel %vm155, %v7262, %v7617
    %v7795 = vsel %vm155, %v7265, %v7619
    %v7796 = vsel %vm155, %v7270, %v7621
    %v7797 = vsel %vm155, %v7273, %v7623
    %v7798 = vsel %vm155, %v7278, %v7625
    %v7799 = vsel %vm155, %v7281, %v7627
    %v7800 = vsel %vm155, %v7286, %v7629
    %v7801 = vsel %vm155, %v7289, %v7631
    %v7802 = vsel %vm155, %v7294, %v7633
    %v7803 = vsel %vm155, %v7297, %v7635
    %v7804 = vsel %vm155, %v7302, %v7637
    %v7805 = vsel %vm155, %v7305, %v7639
    %v7806 = vsel %vm155, %v7310, %v7641
    %v7807 = vsel %vm155, %v7313, %v7643
    %v7808 = vsel %vm155, %v7318, %v7645
    %v7809 = vsel %vm155, %v7321, %v7647
    %v7810 = vsel %vm155, %v7326, %v7649
    %v7811 = vsel %vm155, %v7329, %v7651
    %v7812 = vsel %vm155, %v7334, %v7653
    %v7813 = vsel %vm155, %v7337, %v7655
    %v7814 = vsel %vm155, %v7342, %v7657
    %v7815 = vsel %vm155, %v7345, %v7659
    %v7816 = vsel %vm155, %v7350, %v7661
    %v7817 = vsel %vm155, %v7353, %v7663
    %v7818 = vsel %vm155, %v7358, %v7665
    %v7819 = vsel %vm155, %v7361, %v7667
    %v7820 = vsel %vm155, %v7366, %v7669
    %v7821 = vsel %vm155, %v7369, %v7671
    %v7822 = vsel %vm155, %v7374, %v7673
    %v7823 = vsel %vm155, %v7377, %v7675
    %v7824 = vsel %vm155, %v7382, %v7677
    %v7825 = vsel %vm155, %v7385, %v7679
    %v7826 = vsel %vm155, %v7390, %v7681
    %v7827 = vsel %vm155, %v7393, %v7683
    %v7828 = vsel %vm155, %v7398, %v7685
    %v7829 = vsel %vm155, %v7401, %v7687
    %v7830 = vsel %vm155, %v7406, %v7689
    %v7831 = vsel %vm155, %v7409, %v7691
    %v7832 = vsel %vm155, %v7414, %v7693
    %v7833 = vsel %vm155, %v7417, %v7695
    %v7834 = vsel %vm155, %v7422, %v7697
    %v7835 = vsel %vm155, %v7425, %v7699
    %v7836 = vsel %vm155, %v7430, %v7701
    %v7837 = vsel %vm155, %v7433, %v7703
    %v7838 = vsel %vm155, %v7438, %v7705
    %v7839 = vsel %vm155, %v7441, %v7707
    %v7840 = vsel %vm155, %v7446, %v7709
    %v7841 = vsel %vm155, %v7449, %v7711
    %v7842 = vsel %vm155, %v7454, %v7713
    %v7843 = vsel %vm155, %v7457, %v7715
    %7844 = vmatprep.subr.mxu0 0.0
    %7845 = vmatpush1.msra.mxu0 %v7780
    %7846 = vmatprep.subr.mxu0 0.0
    %7847 = vmatpush1.msra.mxu0 %v7781
    %7848 = vmatprep.subr.mxu0 0.0
    %7849 = vmatpush1.msra.mxu0 %v7782
    %7850 = vmatprep.subr.mxu0 0.0
    %7851 = vmatpush1.msra.mxu0 %v7783
    %7852 = vmatprep.subr.mxu0 0.0
    %7853 = vmatpush1.msra.mxu0 %v7784
    %7854 = vmatprep.subr.mxu0 0.0
    %7855 = vmatpush1.msra.mxu0 %v7785
    %7856 = vmatprep.subr.mxu0 0.0
    %7857 = vmatpush1.msra.mxu0 %v7786
    %7858 = vmatprep.subr.mxu0 0.0
    %7859 = vmatpush1.msra.mxu0 %v7787
    %7860 = vmatprep.subr.mxu0 0.0
    %7861 = vmatpush1.msra.mxu0 %v7788
    %7862 = vmatprep.subr.mxu0 0.0
    %7863 = vmatpush1.msra.mxu0 %v7789
    %7864 = vmatprep.subr.mxu0 0.0
    %7865 = vmatpush1.msra.mxu0 %v7790
    %7866 = vmatprep.subr.mxu0 0.0
    %7867 = vmatpush1.msra.mxu0 %v7791
    %7868 = vmatprep.subr.mxu0 0.0
    %7869 = vmatpush1.msra.mxu0 %v7792
    %7870 = vmatprep.subr.mxu0 0.0
    %7871 = vmatpush1.msra.mxu0 %v7793
    %7872 = vmatprep.subr.mxu0 0.0
    %7873 = vmatpush1.msra.mxu0 %v7794
    %7874 = vmatprep.subr.mxu0 0.0
    %7875 = vmatpush1.msra.mxu0 %v7795
    %7876 = vmatprep.subr.mxu0 0.0
    %7877 = vmatpush1.msra.mxu0 %v7796
    %7878 = vmatprep.subr.mxu0 0.0
    %7879 = vmatpush1.msra.mxu0 %v7797
    %7880 = vmatprep.subr.mxu0 0.0
    %7881 = vmatpush1.msra.mxu0 %v7798
    %7882 = vmatprep.subr.mxu0 0.0
    %7883 = vmatpush1.msra.mxu0 %v7799
    %7884 = vmatprep.subr.mxu0 0.0
    %7885 = vmatpush1.msra.mxu0 %v7800
    %7886 = vmatprep.subr.mxu0 0.0
    %7887 = vmatpush1.msra.mxu0 %v7801
    %7888 = vmatprep.subr.mxu0 0.0
    %7889 = vmatpush1.msra.mxu0 %v7802
    %7890 = vmatprep.subr.mxu0 0.0
    %7891 = vmatpush1.msra.mxu0 %v7803
    %7892 = vmatprep.subr.mxu0 0.0
    %7893 = vmatpush1.msra.mxu0 %v7804
    %7894 = vmatprep.subr.mxu0 0.0
    %7895 = vmatpush1.msra.mxu0 %v7805
    %7896 = vmatprep.subr.mxu0 0.0
    %7897 = vmatpush1.msra.mxu0 %v7806
    %7898 = vmatprep.subr.mxu0 0.0
    %7899 = vmatpush1.msra.mxu0 %v7807
    %7900 = vmatprep.subr.mxu0 0.0
    %7901 = vmatpush1.msra.mxu0 %v7808
    %7902 = vmatprep.subr.mxu0 0.0
    %7903 = vmatpush1.msra.mxu0 %v7809
    %7904 = vmatprep.subr.mxu0 0.0
    %7905 = vmatpush1.msra.mxu0 %v7810
    %7906 = vmatprep.subr.mxu0 0.0
    %7907 = vmatpush1.msra.mxu0 %v7811
    %7908 = vmatprep.mubr.f32.mxu0 1.0
    %7909 = vmatmul.mubr.f32.gmra.mrb[0].mxu0 1.0
    %v7910 = vpop.f32.mrb[0].mxu0
    %v7911 = vadd.f32 0.0, %v7910
    %v7912 = vpop.f32.mrb[0].mxu0
    %7913 = vdwg.mxu0
    %7914 = vmatprep.subr.mxu0 0.0
    %7915 = vmatpush1.msra.mxu0 %v7812
    %7916 = vmatprep.subr.mxu0 0.0
    %7917 = vmatpush1.msra.mxu0 %v7813
    %7918 = vmatprep.subr.mxu0 0.0
    %7919 = vmatpush1.msra.mxu0 %v7814
    %7920 = vmatprep.subr.mxu0 0.0
    %7921 = vmatpush1.msra.mxu0 %v7815
    %7922 = vmatprep.subr.mxu0 0.0
    %7923 = vmatpush1.msra.mxu0 %v7816
    %7924 = vmatprep.subr.mxu0 0.0
    %7925 = vmatpush1.msra.mxu0 %v7817
    %7926 = vmatprep.subr.mxu0 0.0
    %7927 = vmatpush1.msra.mxu0 %v7818
    %7928 = vmatprep.subr.mxu0 0.0
    %7929 = vmatpush1.msra.mxu0 %v7819
    %7930 = vmatprep.subr.mxu0 0.0
    %7931 = vmatpush1.msra.mxu0 %v7820
    %7932 = vmatprep.subr.mxu0 0.0
    %7933 = vmatpush1.msra.mxu0 %v7821
    %7934 = vmatprep.subr.mxu0 0.0
    %7935 = vmatpush1.msra.mxu0 %v7822
    %7936 = vmatprep.subr.mxu0 0.0
    %7937 = vmatpush1.msra.mxu0 %v7823
    %7938 = vmatprep.subr.mxu0 0.0
    %7939 = vmatpush1.msra.mxu0 %v7824
    %7940 = vmatprep.subr.mxu0 0.0
    %7941 = vmatpush1.msra.mxu0 %v7825
    %7942 = vmatprep.subr.mxu0 0.0
    %7943 = vmatpush1.msra.mxu0 %v7826
    %7944 = vmatprep.subr.mxu0 0.0
    %7945 = vmatpush1.msra.mxu0 %v7827
    %7946 = vmatprep.subr.mxu0 0.0
    %7947 = vmatpush1.msra.mxu0 %v7828
    %7948 = vmatprep.subr.mxu0 0.0
    %7949 = vmatpush1.msra.mxu0 %v7829
    %7950 = vmatprep.subr.mxu0 0.0
    %7951 = vmatpush1.msra.mxu0 %v7830
    %7952 = vmatprep.subr.mxu0 0.0
    %7953 = vmatpush1.msra.mxu0 %v7831
    %7954 = vmatprep.subr.mxu0 0.0
    %7955 = vmatpush1.msra.mxu0 %v7832
    %7956 = vmatprep.subr.mxu0 0.0
    %7957 = vmatpush1.msra.mxu0 %v7833
    %7958 = vmatprep.subr.mxu0 0.0
    %7959 = vmatpush1.msra.mxu0 %v7834
    %7960 = vmatprep.subr.mxu0 0.0
    %7961 = vmatpush1.msra.mxu0 %v7835
    %7962 = vmatprep.subr.mxu0 0.0
    %7963 = vmatpush1.msra.mxu0 %v7836
    %7964 = vmatprep.subr.mxu0 0.0
    %7965 = vmatpush1.msra.mxu0 %v7837
    %7966 = vmatprep.subr.mxu0 0.0
    %7967 = vmatpush1.msra.mxu0 %v7838
    %7968 = vmatprep.subr.mxu0 0.0
    %7969 = vmatpush1.msra.mxu0 %v7839
    %7970 = vmatprep.subr.mxu0 0.0
    %7971 = vmatpush1.msra.mxu0 %v7840
    %7972 = vmatprep.subr.mxu0 0.0
    %7973 = vmatpush1.msra.mxu0 %v7841
    %7974 = vmatprep.subr.mxu0 0.0
    %7975 = vmatpush1.msra.mxu0 %v7842
    %7976 = vmatprep.subr.mxu0 0.0
    %7977 = vmatpush1.msra.mxu0 %v7843
    %7978 = vmatprep.mubr.f32.mxu0 1.0
    %7979 = vmatmul.mubr.f32.gmra.mrb[0].mxu0 1.0
    %v7980 = vpop.f32.mrb[0].mxu0
    %v7981 = vadd.f32 %v7911, %v7980
    %v7982 = vpop.f32.mrb[0].mxu0
    %7983 = vdwg.mxu0
    %v7984 = vmul.f32 %v7981, 0.001953125
    %v7985 = vmul.f32 %v7984, %v7984
    %7987 = vrot.lane.b32.xlu0 %v7985, 16
    %v7988 = vpop.permute.xlu0 %7987
    %v7990 = vsub.f32 %v7984, %v7988
    %v7991 = vmax.f32 %v7990, 0.0
    %v7992 = vld [vmem:[%s8] sm:$0x1]
    %v7993 = vadd.f32 %v7991, 1e-05
    %v7994 = vrsqrt.pop %v7993
    %v7997 = vunpack.c.l.s4 1966171168
    %v7998 = vunpack.c.0.s8 %v7997
    %v7999 = vlaneseq
    %v8000 = vshrl.u32 %v7999, 7
    %v8001 = vsub.s32 %v7998, %v8000
    %v8002 = vrot.slane %v7994, %v8001
    %v8004 = vunpack.c.l.s4 1966171168
    %v8005 = vunpack.c.0.s8 %v8004
    %v8006 = vlaneseq
    %v8007 = vshrl.u32 %v8006, 7
    %v8008 = vsub.s32 %v8005, %v8007
    %v8009 = vrot.slane %v8002, %v8008
    %8010 = vrot.lane.b32.xlu0 %v8009, 112
    %v8011 = vpop.permute.xlu0 %8010
    %v8013 = vmul.f32 %v7992, %v8011
    %v8014 = vld [vmem:[%s9] sm:$0x1]
    %v8015 = vmul.f32 %v7984, %v8013
    %v8016 = vsub.f32 %v8014, %v8015
    %v8018 = vlaneseq
    %v8019 = vshrl.u32 %v8018, 7
    %v8020 = vsub.s32 0, %v8019
    %v8021 = vrot.slane %v8013, %v8020
    %v8023 = vmul.f32 %v7206, %v8021
    %v8024 = vmul.f32 %v7209, %v8021
    %v8025 = vmul.f32 %v7214, %v8021
    %v8026 = vmul.f32 %v7217, %v8021
    %v8027 = vmul.f32 %v7222, %v8021
    %v8028 = vmul.f32 %v7225, %v8021
    %v8029 = vmul.f32 %v7230, %v8021
    %v8030 = vmul.f32 %v7233, %v8021
    %v8031 = vmul.f32 %v7238, %v8021
    %v8032 = vmul.f32 %v7241, %v8021
    %v8033 = vmul.f32 %v7246, %v8021
    %v8034 = vmul.f32 %v7249, %v8021
    %v8035 = vmul.f32 %v7254, %v8021
    %v8036 = vmul.f32 %v7257, %v8021
    %v8037 = vmul.f32 %v7262, %v8021
    %v8038 = vmul.f32 %v7265, %v8021
    %v8039 = vmul.f32 %v7270, %v8021
    %v8040 = vmul.f32 %v7273, %v8021
    %v8041 = vmul.f32 %v7278, %v8021
    %v8042 = vmul.f32 %v7281, %v8021
    %v8043 = vmul.f32 %v7286, %v8021
    %v8044 = vmul.f32 %v7289, %v8021
    %v8045 = vmul.f32 %v7294, %v8021
    %v8046 = vmul.f32 %v7297, %v8021
    %v8047 = vmul.f32 %v7302, %v8021
    %v8048 = vmul.f32 %v7305, %v8021
    %v8049 = vmul.f32 %v7310, %v8021
    %v8050 = vmul.f32 %v7313, %v8021
    %v8051 = vmul.f32 %v7318, %v8021
    %v8052 = vmul.f32 %v7321, %v8021
    %v8053 = vmul.f32 %v7326, %v8021
    %v8054 = vmul.f32 %v7329, %v8021
    %v8055 = vmul.f32 %v7334, %v8021
    %v8056 = vmul.f32 %v7337, %v8021
    %v8057 = vmul.f32 %v7342, %v8021
    %v8058 = vmul.f32 %v7345, %v8021
    %v8059 = vmul.f32 %v7350, %v8021
    %v8060 = vmul.f32 %v7353, %v8021
    %v8061 = vmul.f32 %v7358, %v8021
    %v8062 = vmul.f32 %v7361, %v8021
    %v8063 = vmul.f32 %v7366, %v8021
    %v8064 = vmul.f32 %v7369, %v8021
    %v8065 = vmul.f32 %v7374, %v8021
    %v8066 = vmul.f32 %v7377, %v8021
    %v8067 = vmul.f32 %v7382, %v8021
    %v8068 = vmul.f32 %v7385, %v8021
    %v8069 = vmul.f32 %v7390, %v8021
    %v8070 = vmul.f32 %v7393, %v8021
    %v8071 = vmul.f32 %v7398, %v8021
    %v8072 = vmul.f32 %v7401, %v8021
    %v8073 = vmul.f32 %v7406, %v8021
    %v8074 = vmul.f32 %v7409, %v8021
    %v8075 = vmul.f32 %v7414, %v8021
    %v8076 = vmul.f32 %v7417, %v8021
    %v8077 = vmul.f32 %v7422, %v8021
    %v8078 = vmul.f32 %v7425, %v8021
    %v8079 = vmul.f32 %v7430, %v8021
    %v8080 = vmul.f32 %v7433, %v8021
    %v8081 = vmul.f32 %v7438, %v8021
    %v8082 = vmul.f32 %v7441, %v8021
    %v8083 = vmul.f32 %v7446, %v8021
    %v8084 = vmul.f32 %v7449, %v8021
    %v8085 = vmul.f32 %v7454, %v8021
    %v8086 = vmul.f32 %v7457, %v8021
    %v8088 = vlaneseq
    %v8089 = vshrl.u32 %v8088, 7
    %v8090 = vsub.s32 0, %v8089
    %v8091 = vrot.slane %v8016, %v8090
    %v8093 = vadd.f32 %v8023, %v8091
    %v8094 = vadd.f32 %v8024, %v8091
    %v8095 = vadd.f32 %v8025, %v8091
    %v8096 = vadd.f32 %v8026, %v8091
    %v8097 = vadd.f32 %v8027, %v8091
    %v8098 = vadd.f32 %v8028, %v8091
    %v8099 = vadd.f32 %v8029, %v8091
    %v8100 = vadd.f32 %v8030, %v8091
    %v8101 = vadd.f32 %v8031, %v8091
    %v8102 = vadd.f32 %v8032, %v8091
    %v8103 = vadd.f32 %v8033, %v8091
    %v8104 = vadd.f32 %v8034, %v8091
    %v8105 = vadd.f32 %v8035, %v8091
    %v8106 = vadd.f32 %v8036, %v8091
    %v8107 = vadd.f32 %v8037, %v8091
    %v8108 = vadd.f32 %v8038, %v8091
    %v8109 = vadd.f32 %v8039, %v8091
    %v8110 = vadd.f32 %v8040, %v8091
    %v8111 = vadd.f32 %v8041, %v8091
    %v8112 = vadd.f32 %v8042, %v8091
    %v8113 = vadd.f32 %v8043, %v8091
    %v8114 = vadd.f32 %v8044, %v8091
    %v8115 = vadd.f32 %v8045, %v8091
    %v8116 = vadd.f32 %v8046, %v8091
    %v8117 = vadd.f32 %v8047, %v8091
    %v8118 = vadd.f32 %v8048, %v8091
    %v8119 = vadd.f32 %v8049, %v8091
    %v8120 = vadd.f32 %v8050, %v8091
    %v8121 = vadd.f32 %v8051, %v8091
    %v8122 = vadd.f32 %v8052, %v8091
    %v8123 = vadd.f32 %v8053, %v8091
    %v8124 = vadd.f32 %v8054, %v8091
    %v8125 = vadd.f32 %v8055, %v8091
    %v8126 = vadd.f32 %v8056, %v8091
    %v8127 = vadd.f32 %v8057, %v8091
    %v8128 = vadd.f32 %v8058, %v8091
    %v8129 = vadd.f32 %v8059, %v8091
    %v8130 = vadd.f32 %v8060, %v8091
    %v8131 = vadd.f32 %v8061, %v8091
    %v8132 = vadd.f32 %v8062, %v8091
    %v8133 = vadd.f32 %v8063, %v8091
    %v8134 = vadd.f32 %v8064, %v8091
    %v8135 = vadd.f32 %v8065, %v8091
    %v8136 = vadd.f32 %v8066, %v8091
    %v8137 = vadd.f32 %v8067, %v8091
    %v8138 = vadd.f32 %v8068, %v8091
    %v8139 = vadd.f32 %v8069, %v8091
    %v8140 = vadd.f32 %v8070, %v8091
    %v8141 = vadd.f32 %v8071, %v8091
    %v8142 = vadd.f32 %v8072, %v8091
    %v8143 = vadd.f32 %v8073, %v8091
    %v8144 = vadd.f32 %v8074, %v8091
    %v8145 = vadd.f32 %v8075, %v8091
    %v8146 = vadd.f32 %v8076, %v8091
    %v8147 = vadd.f32 %v8077, %v8091
    %v8148 = vadd.f32 %v8078, %v8091
    %v8149 = vadd.f32 %v8079, %v8091
    %v8150 = vadd.f32 %v8080, %v8091
    %v8151 = vadd.f32 %v8081, %v8091
    %v8152 = vadd.f32 %v8082, %v8091
    %v8153 = vadd.f32 %v8083, %v8091
    %v8154 = vadd.f32 %v8084, %v8091
    %v8155 = vadd.f32 %v8085, %v8091
    %v8156 = vadd.f32 %v8086, %v8091
    %v8157 = vld [vmem:[#allocation3] sm:$0xff]
    %v8158 = vld [vmem:[#allocation3 + $0x8] sm:$0xff]
    %v8159 = vld [vmem:[#allocation3 + $0x10] sm:$0xff]
    %v8160 = vld [vmem:[#allocation3 + $0x18] sm:$0xff]
    %v8161 = vld [vmem:[#allocation3 + $0x20] sm:$0xff]
    %v8162 = vld [vmem:[#allocation3 + $0x28] sm:$0xff]
    %v8163 = vld [vmem:[#allocation3 + $0x30] sm:$0xff]
    %v8164 = vld [vmem:[#allocation3 + $0x38] sm:$0xff]
    %v8165 = vld [vmem:[#allocation3 + $0x40] sm:$0xff]
    %v8166 = vld [vmem:[#allocation3 + $0x48] sm:$0xff]
    %v8167 = vld [vmem:[#allocation3 + $0x50] sm:$0xff]
    %v8168 = vld [vmem:[#allocation3 + $0x58] sm:$0xff]
    %v8169 = vld [vmem:[#allocation3 + $0x60] sm:$0xff]
    %v8170 = vld [vmem:[#allocation3 + $0x68] sm:$0xff]
    %v8171 = vld [vmem:[#allocation3 + $0x70] sm:$0xff]
    %v8172 = vld [vmem:[#allocation3 + $0x78] sm:$0xff]
    %v8173 = vld [vmem:[#allocation3 + $0x80] sm:$0xff]
    %v8174 = vld [vmem:[#allocation3 + $0x88] sm:$0xff]
    %v8175 = vld [vmem:[#allocation3 + $0x90] sm:$0xff]
    %v8176 = vld [vmem:[#allocation3 + $0x98] sm:$0xff]
    %v8177 = vld [vmem:[#allocation3 + $0xa0] sm:$0xff]
    %v8178 = vld [vmem:[#allocation3 + $0xa8] sm:$0xff]
    %v8179 = vld [vmem:[#allocation3 + $0xb0] sm:$0xff]
    %v8180 = vld [vmem:[#allocation3 + $0xb8] sm:$0xff]
    %v8181 = vld [vmem:[#allocation3 + $0xc0] sm:$0xff]
    %v8182 = vld [vmem:[#allocation3 + $0xc8] sm:$0xff]
    %v8183 = vld [vmem:[#allocation3 + $0xd0] sm:$0xff]
    %v8184 = vld [vmem:[#allocation3 + $0xd8] sm:$0xff]
    %v8185 = vld [vmem:[#allocation3 + $0xe0] sm:$0xff]
    %v8186 = vld [vmem:[#allocation3 + $0xe8] sm:$0xff]
    %v8187 = vld [vmem:[#allocation3 + $0xf0] sm:$0xff]
    %v8188 = vld [vmem:[#allocation3 + $0xf8] sm:$0xff]
    %v8189 = vld [vmem:[#allocation3 + $0x100] sm:$0xff]
    %v8190 = vld [vmem:[#allocation3 + $0x108] sm:$0xff]
    %v8191 = vld [vmem:[#allocation3 + $0x110] sm:$0xff]
    %v8192 = vld [vmem:[#allocation3 + $0x118] sm:$0xff]
    %v8193 = vld [vmem:[#allocation3 + $0x120] sm:$0xff]
    %v8194 = vld [vmem:[#allocation3 + $0x128] sm:$0xff]
    %v8195 = vld [vmem:[#allocation3 + $0x130] sm:$0xff]
    %v8196 = vld [vmem:[#allocation3 + $0x138] sm:$0xff]
    %v8197 = vld [vmem:[#allocation3 + $0x140] sm:$0xff]
    %v8198 = vld [vmem:[#allocation3 + $0x148] sm:$0xff]
    %v8199 = vld [vmem:[#allocation3 + $0x150] sm:$0xff]
    %v8200 = vld [vmem:[#allocation3 + $0x158] sm:$0xff]
    %v8201 = vld [vmem:[#allocation3 + $0x160] sm:$0xff]
    %v8202 = vld [vmem:[#allocation3 + $0x168] sm:$0xff]
    %v8203 = vld [vmem:[#allocation3 + $0x170] sm:$0xff]
    %v8204 = vld [vmem:[#allocation3 + $0x178] sm:$0xff]
    %v8205 = vld [vmem:[#allocation3 + $0x180] sm:$0xff]
    %v8206 = vld [vmem:[#allocation3 + $0x188] sm:$0xff]
    %v8207 = vld [vmem:[#allocation3 + $0x190] sm:$0xff]
    %v8208 = vld [vmem:[#allocation3 + $0x198] sm:$0xff]
    %v8209 = vld [vmem:[#allocation3 + $0x1a0] sm:$0xff]
    %v8210 = vld [vmem:[#allocation3 + $0x1a8] sm:$0xff]
    %v8211 = vld [vmem:[#allocation3 + $0x1b0] sm:$0xff]
    %v8212 = vld [vmem:[#allocation3 + $0x1b8] sm:$0xff]
    %v8213 = vld [vmem:[#allocation3 + $0x1c0] sm:$0xff]
    %v8214 = vld [vmem:[#allocation3 + $0x1c8] sm:$0xff]
    %v8215 = vld [vmem:[#allocation3 + $0x1d0] sm:$0xff]
    %v8216 = vld [vmem:[#allocation3 + $0x1d8] sm:$0xff]
    %v8217 = vld [vmem:[#allocation3 + $0x1e0] sm:$0xff]
    %v8218 = vld [vmem:[#allocation3 + $0x1e8] sm:$0xff]
    %v8219 = vld [vmem:[#allocation3 + $0x1f0] sm:$0xff]
    %v8220 = vld [vmem:[#allocation3 + $0x1f8] sm:$0xff]
    %v8221 = vadd.f32 %v8093, %v8157
    %v8222 = vadd.f32 %v8094, %v8158
    %v8223 = vadd.f32 %v8095, %v8159
    %v8224 = vadd.f32 %v8096, %v8160
    %v8225 = vadd.f32 %v8097, %v8161
    %v8226 = vadd.f32 %v8098, %v8162
    %v8227 = vadd.f32 %v8099, %v8163
    %v8228 = vadd.f32 %v8100, %v8164
    %v8229 = vadd.f32 %v8101, %v8165
    %v8230 = vadd.f32 %v8102, %v8166
    %v8231 = vadd.f32 %v8103, %v8167
    %v8232 = vadd.f32 %v8104, %v8168
    %v8233 = vadd.f32 %v8105, %v8169
    %v8234 = vadd.f32 %v8106, %v8170
    %v8235 = vadd.f32 %v8107, %v8171
    %v8236 = vadd.f32 %v8108, %v8172
    %v8237 = vadd.f32 %v8109, %v8173
    %v8238 = vadd.f32 %v8110, %v8174
    %v8239 = vadd.f32 %v8111, %v8175
    %v8240 = vadd.f32 %v8112, %v8176
    %v8241 = vadd.f32 %v8113, %v8177
    %v8242 = vadd.f32 %v8114, %v8178
    %v8243 = vadd.f32 %v8115, %v8179
    %v8244 = vadd.f32 %v8116, %v8180
    %v8245 = vadd.f32 %v8117, %v8181
    %v8246 = vadd.f32 %v8118, %v8182
    %v8247 = vadd.f32 %v8119, %v8183
    %v8248 = vadd.f32 %v8120, %v8184
    %v8249 = vadd.f32 %v8121, %v8185
    %v8250 = vadd.f32 %v8122, %v8186
    %v8251 = vadd.f32 %v8123, %v8187
    %v8252 = vadd.f32 %v8124, %v8188
    %v8253 = vadd.f32 %v8125, %v8189
    %v8254 = vadd.f32 %v8126, %v8190
    %v8255 = vadd.f32 %v8127, %v8191
    %v8256 = vadd.f32 %v8128, %v8192
    %v8257 = vadd.f32 %v8129, %v8193
    %v8258 = vadd.f32 %v8130, %v8194
    %v8259 = vadd.f32 %v8131, %v8195
    %v8260 = vadd.f32 %v8132, %v8196
    %v8261 = vadd.f32 %v8133, %v8197
    %v8262 = vadd.f32 %v8134, %v8198
    %v8263 = vadd.f32 %v8135, %v8199
    %v8264 = vadd.f32 %v8136, %v8200
    %v8265 = vadd.f32 %v8137, %v8201
    %v8266 = vadd.f32 %v8138, %v8202
    %v8267 = vadd.f32 %v8139, %v8203
    %v8268 = vadd.f32 %v8140, %v8204
    %v8269 = vadd.f32 %v8141, %v8205
    %v8270 = vadd.f32 %v8142, %v8206
    %v8271 = vadd.f32 %v8143, %v8207
    %v8272 = vadd.f32 %v8144, %v8208
    %v8273 = vadd.f32 %v8145, %v8209
    %v8274 = vadd.f32 %v8146, %v8210
    %v8275 = vadd.f32 %v8147, %v8211
    %v8276 = vadd.f32 %v8148, %v8212
    %v8277 = vadd.f32 %v8149, %v8213
    %v8278 = vadd.f32 %v8150, %v8214
    %v8279 = vadd.f32 %v8151, %v8215
    %v8280 = vadd.f32 %v8152, %v8216
    %v8281 = vadd.f32 %v8153, %v8217
    %v8282 = vadd.f32 %v8154, %v8218
    %v8283 = vadd.f32 %v8155, %v8219
    %v8284 = vadd.f32 %v8156, %v8220
    %v8285 = vmax.f32 %v8221, 0.0
    %v8286 = vmax.f32 %v8222, 0.0
    %v8287 = vmax.f32 %v8223, 0.0
    %v8288 = vmax.f32 %v8224, 0.0
    %v8289 = vmax.f32 %v8225, 0.0
    %v8290 = vmax.f32 %v8226, 0.0
    %v8291 = vmax.f32 %v8227, 0.0
    %v8292 = vmax.f32 %v8228, 0.0
    %v8293 = vmax.f32 %v8229, 0.0
    %v8294 = vmax.f32 %v8230, 0.0
    %v8295 = vmax.f32 %v8231, 0.0
    %v8296 = vmax.f32 %v8232, 0.0
    %v8297 = vmax.f32 %v8233, 0.0
    %v8298 = vmax.f32 %v8234, 0.0
    %v8299 = vmax.f32 %v8235, 0.0
    %v8300 = vmax.f32 %v8236, 0.0
    %v8301 = vmax.f32 %v8237, 0.0
    %v8302 = vmax.f32 %v8238, 0.0
    %v8303 = vmax.f32 %v8239, 0.0
    %v8304 = vmax.f32 %v8240, 0.0
    %v8305 = vmax.f32 %v8241, 0.0
    %v8306 = vmax.f32 %v8242, 0.0
    %v8307 = vmax.f32 %v8243, 0.0
    %v8308 = vmax.f32 %v8244, 0.0
    %v8309 = vmax.f32 %v8245, 0.0
    %v8310 = vmax.f32 %v8246, 0.0
    %v8311 = vmax.f32 %v8247, 0.0
    %v8312 = vmax.f32 %v8248, 0.0
    %v8313 = vmax.f32 %v8249, 0.0
    %v8314 = vmax.f32 %v8250, 0.0
    %v8315 = vmax.f32 %v8251, 0.0
    %v8316 = vmax.f32 %v8252, 0.0
    %v8317 = vmax.f32 %v8253, 0.0
    %v8318 = vmax.f32 %v8254, 0.0
    %v8319 = vmax.f32 %v8255, 0.0
    %v8320 = vmax.f32 %v8256, 0.0
    %v8321 = vmax.f32 %v8257, 0.0
    %v8322 = vmax.f32 %v8258, 0.0
    %v8323 = vmax.f32 %v8259, 0.0
    %v8324 = vmax.f32 %v8260, 0.0
    %v8325 = vmax.f32 %v8261, 0.0
    %v8326 = vmax.f32 %v8262, 0.0
    %v8327 = vmax.f32 %v8263, 0.0
    %v8328 = vmax.f32 %v8264, 0.0
    %v8329 = vmax.f32 %v8265, 0.0
    %v8330 = vmax.f32 %v8266, 0.0
    %v8331 = vmax.f32 %v8267, 0.0
    %v8332 = vmax.f32 %v8268, 0.0
    %v8333 = vmax.f32 %v8269, 0.0
    %v8334 = vmax.f32 %v8270, 0.0
    %v8335 = vmax.f32 %v8271, 0.0
    %v8336 = vmax.f32 %v8272, 0.0
    %v8337 = vmax.f32 %v8273, 0.0
    %v8338 = vmax.f32 %v8274, 0.0
    %v8339 = vmax.f32 %v8275, 0.0
    %v8340 = vmax.f32 %v8276, 0.0
    %v8341 = vmax.f32 %v8277, 0.0
    %v8342 = vmax.f32 %v8278, 0.0
    %v8343 = vmax.f32 %v8279, 0.0
    %v8344 = vmax.f32 %v8280, 0.0
    %v8345 = vmax.f32 %v8281, 0.0
    %v8346 = vmax.f32 %v8282, 0.0
    %v8347 = vmax.f32 %v8283, 0.0
    %v8348 = vmax.f32 %v8284, 0.0
    %8349 = vst.msk [vmem:[#allocation6] sm:$0xff] %vm155, %v8285
    %8350 = vst.msk [vmem:[#allocation6 + $0x8] sm:$0xff] %vm155, %v8286
    %8351 = vst.msk [vmem:[#allocation6 + $0x10] sm:$0xff] %vm155, %v8287
    %8352 = vst.msk [vmem:[#allocation6 + $0x18] sm:$0xff] %vm155, %v8288
    %8353 = vst.msk [vmem:[#allocation6 + $0x20] sm:$0xff] %vm155, %v8289
    %8354 = vst.msk [vmem:[#allocation6 + $0x28] sm:$0xff] %vm155, %v8290
    %8355 = vst.msk [vmem:[#allocation6 + $0x30] sm:$0xff] %vm155, %v8291
    %8356 = vst.msk [vmem:[#allocation6 + $0x38] sm:$0xff] %vm155, %v8292
    %8357 = vst.msk [vmem:[#allocation6 + $0x40] sm:$0xff] %vm155, %v8293
    %8358 = vst.msk [vmem:[#allocation6 + $0x48] sm:$0xff] %vm155, %v8294
    %8359 = vst.msk [vmem:[#allocation6 + $0x50] sm:$0xff] %vm155, %v8295
    %8360 = vst.msk [vmem:[#allocation6 + $0x58] sm:$0xff] %vm155, %v8296
    %8361 = vst.msk [vmem:[#allocation6 + $0x60] sm:$0xff] %vm155, %v8297
    %8362 = vst.msk [vmem:[#allocation6 + $0x68] sm:$0xff] %vm155, %v8298
    %8363 = vst.msk [vmem:[#allocation6 + $0x70] sm:$0xff] %vm155, %v8299
    %8364 = vst.msk [vmem:[#allocation6 + $0x78] sm:$0xff] %vm155, %v8300
    %8365 = vst.msk [vmem:[#allocation6 + $0x80] sm:$0xff] %vm155, %v8301
    %8366 = vst.msk [vmem:[#allocation6 + $0x88] sm:$0xff] %vm155, %v8302
    %8367 = vst.msk [vmem:[#allocation6 + $0x90] sm:$0xff] %vm155, %v8303
    %8368 = vst.msk [vmem:[#allocation6 + $0x98] sm:$0xff] %vm155, %v8304
    %8369 = vst.msk [vmem:[#allocation6 + $0xa0] sm:$0xff] %vm155, %v8305
    %8370 = vst.msk [vmem:[#allocation6 + $0xa8] sm:$0xff] %vm155, %v8306
    %8371 = vst.msk [vmem:[#allocation6 + $0xb0] sm:$0xff] %vm155, %v8307
    %8372 = vst.msk [vmem:[#allocation6 + $0xb8] sm:$0xff] %vm155, %v8308
    %8373 = vst.msk [vmem:[#allocation6 + $0xc0] sm:$0xff] %vm155, %v8309
    %8374 = vst.msk [vmem:[#allocation6 + $0xc8] sm:$0xff] %vm155, %v8310
    %8375 = vst.msk [vmem:[#allocation6 + $0xd0] sm:$0xff] %vm155, %v8311
    %8376 = vst.msk [vmem:[#allocation6 + $0xd8] sm:$0xff] %vm155, %v8312
    %8377 = vst.msk [vmem:[#allocation6 + $0xe0] sm:$0xff] %vm155, %v8313
    %8378 = vst.msk [vmem:[#allocation6 + $0xe8] sm:$0xff] %vm155, %v8314
    %8379 = vst.msk [vmem:[#allocation6 + $0xf0] sm:$0xff] %vm155, %v8315
    %8380 = vst.msk [vmem:[#allocation6 + $0xf8] sm:$0xff] %vm155, %v8316
    %8381 = vst.msk [vmem:[#allocation6 + $0x100] sm:$0xff] %vm155, %v8317
    %8382 = vst.msk [vmem:[#allocation6 + $0x108] sm:$0xff] %vm155, %v8318
    %8383 = vst.msk [vmem:[#allocation6 + $0x110] sm:$0xff] %vm155, %v8319
    %8384 = vst.msk [vmem:[#allocation6 + $0x118] sm:$0xff] %vm155, %v8320
    %8385 = vst.msk [vmem:[#allocation6 + $0x120] sm:$0xff] %vm155, %v8321
    %8386 = vst.msk [vmem:[#allocation6 + $0x128] sm:$0xff] %vm155, %v8322
    %8387 = vst.msk [vmem:[#allocation6 + $0x130] sm:$0xff] %vm155, %v8323
    %8388 = vst.msk [vmem:[#allocation6 + $0x138] sm:$0xff] %vm155, %v8324
    %8389 = vst.msk [vmem:[#allocation6 + $0x140] sm:$0xff] %vm155, %v8325
    %8390 = vst.msk [vmem:[#allocation6 + $0x148] sm:$0xff] %vm155, %v8326
    %8391 = vst.msk [vmem:[#allocation6 + $0x150] sm:$0xff] %vm155, %v8327
    %8392 = vst.msk [vmem:[#allocation6 + $0x158] sm:$0xff] %vm155, %v8328
    %8393 = vst.msk [vmem:[#allocation6 + $0x160] sm:$0xff] %vm155, %v8329
    %8394 = vst.msk [vmem:[#allocation6 + $0x168] sm:$0xff] %vm155, %v8330
    %8395 = vst.msk [vmem:[#allocation6 + $0x170] sm:$0xff] %vm155, %v8331
    %8396 = vst.msk [vmem:[#allocation6 + $0x178] sm:$0xff] %vm155, %v8332
    %8397 = vst.msk [vmem:[#allocation6 + $0x180] sm:$0xff] %vm155, %v8333
    %8398 = vst.msk [vmem:[#allocation6 + $0x188] sm:$0xff] %vm155, %v8334
    %8399 = vst.msk [vmem:[#allocation6 + $0x190] sm:$0xff] %vm155, %v8335
    %8400 = vst.msk [vmem:[#allocation6 + $0x198] sm:$0xff] %vm155, %v8336
    %8401 = vst.msk [vmem:[#allocation6 + $0x1a0] sm:$0xff] %vm155, %v8337
    %8402 = vst.msk [vmem:[#allocation6 + $0x1a8] sm:$0xff] %vm155, %v8338
    %8403 = vst.msk [vmem:[#allocation6 + $0x1b0] sm:$0xff] %vm155, %v8339
    %8404 = vst.msk [vmem:[#allocation6 + $0x1b8] sm:$0xff] %vm155, %v8340
    %8405 = vst.msk [vmem:[#allocation6 + $0x1c0] sm:$0xff] %vm155, %v8341
    %8406 = vst.msk [vmem:[#allocation6 + $0x1c8] sm:$0xff] %vm155, %v8342
    %8407 = vst.msk [vmem:[#allocation6 + $0x1d0] sm:$0xff] %vm155, %v8343
    %8408 = vst.msk [vmem:[#allocation6 + $0x1d8] sm:$0xff] %vm155, %v8344
    %8409 = vst.msk [vmem:[#allocation6 + $0x1e0] sm:$0xff] %vm155, %v8345
    %8410 = vst.msk [vmem:[#allocation6 + $0x1e8] sm:$0xff] %vm155, %v8346
    %8411 = vst.msk [vmem:[#allocation6 + $0x1f0] sm:$0xff] %vm155, %v8347
    %8412 = vst.msk [vmem:[#allocation6 + $0x1f8] sm:$0xff] %vm155, %v8348
    // Predicated region
    $region46: #{bottleneck_forward.1} parent=1 // pred_check
      _
    $region47: #{bottleneck_forward.1} parent=1 // pred_check_branch
      %8414 = sbr.rel (0) target = $region49
    $region48: #{bottleneck_forward.1} parent=1 // pred_region
      %s8416 = ssub.s32 8192, 8192
      %8417 = vsyncadd [#allocation5], %s8416
      %s8418 = sshll.u32 [#allocation6], 4
      %s8419 = int_to_ptr.vmem [resolvable:$true] %s8418
      %8424 = dma.vmem_to_hbm [thread:$0]  %s8419, 8192, %s10, [#allocation5], 128, 128, 8
    $region49: #{bottleneck_forward.1} parent=1 // pred_fallthru
      _
    // Predicated region
    $region50: #{bottleneck_forward.1} parent=1 // pred_check
      _
    $region51: #{bottleneck_forward.1} parent=1 // pred_check_branch
      %8426 = sbr.rel (0) target = $region53
    $region52: #{bottleneck_forward.1} parent=1 // pred_region
      %8427 = dma.done [#allocation5], 8192
    $region53: #{bottleneck_forward.1} parent=1 // pred_fallthru
      _
    %8428 = vsyncpa [#allocation4], 1
    %8429 = vsyncpa [#allocation5], 1

</llo_original>
